<compile_context>
chip_gen: v7x
topology: tpu7x:2x2x1
jax: 0.10.0
libtpu: 0.0.40
codegen_flags: <defaults>
</compile_context>

<pallas_src>
import functools

import numpy as np

import jax
import jax.numpy as jnp
from jax.experimental import pallas as pl
from jax.experimental.pallas import tpu as pltpu


# ---------------------------------------------------------------------------
# The fused LeNet kernel
# ---------------------------------------------------------------------------
def _lenet_kernel(x_ref, w1_ref, b1_ref, s1_ref, w2_ref, b2_ref, s2_ref,
                  fc1w_ref, fc1b_ref, fc2w_ref, fc2b_ref, fc3w_ref, fc3b_ref,
                  out_ref, *, batch):
    B = batch
    f32 = jnp.float32
    M1 = B * 28 * 28          # "wide" conv1 columns: one per input pixel (b, h, w)
    L1 = M1 - 29              # columns after the 2x2 neighbour max (shifts 0,1,28,29)
    M2 = B * 13 * 13          # "wide" conv2 columns: one per pool1 pixel (b, i, j)
    L2 = M2 - 14              # columns after the 2x2 neighbour max (shifts 0,1,13,14)

    # ---- conv1 (1->6, 3x3, valid) + bias + ReLU ---------------------------------
    # acc1[oc, b*784 + oh*28 + ow] = conv1 output; only oh,ow <= 25 are valid,
    # the remaining columns are garbage that the pool selection matrix never reads.
    xv = x_ref[...]                                   # (1, M1 + 64), zero padded tail
    w1 = w1_ref[...]                                  # (6, 9), taps ordered ki*3 + kj
    acc1 = jnp.zeros((6, M1), f32)
    for t in range(9):
        ki, kj = divmod(t, 3)
        off = ki * 28 + kj
        acc1 = acc1 + w1[:, t:t + 1] * xv[:, off:off + M1]
    acc1 = jnp.maximum(acc1 + b1_ref[...], 0.0)       # (6, M1)

    # ---- pool1: 2x2/2 max -> elementwise max over neighbours, then 0/1-matmul
    #      that keeps only even (oh, ow) and re-indexes to b*169 + i*13 + j.
    m1 = jnp.maximum(jnp.maximum(acc1[:, 0:L1], acc1[:, 1:1 + L1]),
                     jnp.maximum(acc1[:, 28:28 + L1], acc1[:, 29:29 + L1]))
    sel1 = s1_ref[...].astype(f32)                    # (L1, B*169 + 30), exact 0/1
    p1 = jnp.dot(m1, sel1, preferred_element_type=f32)    # (6, B*169 + 30)

    # ---- conv2 (6->16, 3x3, valid) + bias + ReLU: one MXU matmul per tap --------
    w2 = w2_ref[...]                                  # (9, 16, 6)
    acc2 = jnp.zeros((16, M2), f32)
    for t in range(9):
        ki, kj = divmod(t, 3)
        off = ki * 13 + kj
        acc2 = acc2 + jnp.dot(w2[t], p1[:, off:off + M2], preferred_element_type=f32)
    acc2 = jnp.maximum(acc2 + b2_ref[...], 0.0)       # (16, M2)

    # ---- pool2: 2x2/2 max (floor mode); output columns ordered s*B + b with
    #      s = ph*5 + pw so fc1 can consume contiguous column pairs per position.
    m2 = jnp.maximum(jnp.maximum(acc2[:, 0:L2], acc2[:, 1:1 + L2]),
                     jnp.maximum(acc2[:, 13:13 + L2], acc2[:, 14:14 + L2]))
    sel2 = s2_ref[...].astype(f32)                    # (L2, 25*B), exact 0/1
    p2 = jnp.dot(m2, sel2, preferred_element_type=f32)    # (16, 25*B)

    # ---- fc1 (400->120) + ReLU: PyTorch's view(-1, 400) flatten is folded into
    #      25 small matmuls, one per spatial position s (fc1 weights pre-permuted).
    fc1w = fc1w_ref[...]                              # (120, 400), columns = s*16 + c
    h1 = jnp.zeros((120, B), f32)
    for s in range(25):
        h1 = h1 + jnp.dot(fc1w[:, s * 16:(s + 1) * 16], p2[:, s * B:(s + 1) * B],
                          preferred_element_type=f32)
    h1 = jnp.maximum(h1 + fc1b_ref[...], 0.0)         # (120, B)

    # ---- fc2 (120->84) + ReLU, fc3 (84->10) -------------------------------------
    h2 = jnp.dot(fc2w_ref[...], h1, preferred_element_type=f32) + fc2b_ref[...]
    h2 = jnp.maximum(h2, 0.0)                         # (84, B)
    out = jnp.dot(fc3w_ref[...], h2, preferred_element_type=f32) + fc3b_ref[...]
    out_ref[...] = out                                # (10, B) logits (transposed)


# ---------------------------------------------------------------------------
# One-time packing: kernel-layout weights + 0/1 pooling selection matrices
# ---------------------------------------------------------------------------
def prepare(params, batch):
    B = batch

    # pool1 selector: wide conv1 column b*784 + (2i)*28 + 2j  ->  b*169 + i*13 + j
    L1, N1 = B * 784 - 29, B * 169 + 30
    s1 = np.zeros((L1, N1), np.float32)
    b_i, i_i, j_i = np.meshgrid(np.arange(B), np.arange(13), np.arange(13), indexing="ij")
    s1[(b_i * 784 + 2 * i_i * 28 + 2 * j_i).ravel(),
       (b_i * 169 + i_i * 13 + j_i).ravel()] = 1.0

    # pool2 selector: wide conv2 column b*169 + (2p)*13 + 2q  ->  (p*5 + q)*B + b
    L2, N2 = B * 169 - 14, 25 * B
    s2 = np.zeros((L2, N2), np.float32)
    b_i, p_i, q_i = np.meshgrid(np.arange(B), np.arange(5), np.arange(5), indexing="ij")
    s2[(b_i * 169 + 2 * p_i * 13 + 2 * q_i).ravel(),
       ((p_i * 5 + q_i) * B + b_i).ravel()] = 1.0

    return {
        # conv1: (6,1,3,3) -> (6, 9) taps ordered ki*3 + kj
        "w1": params["conv1_w"].reshape(6, 9),
        "b1": params["conv1_b"].reshape(6, 1),
        "s1": jnp.asarray(s1, jnp.bfloat16),   # 0/1 exact in bf16, halves DMA bytes
        # conv2: (16,6,3,3) -> (9, 16, 6): per tap a (OC, IC) matrix
        "w2": params["conv2_w"].transpose(2, 3, 0, 1).reshape(9, 16, 6),
        "b2": params["conv2_b"].reshape(16, 1),
        "s2": jnp.asarray(s2, jnp.bfloat16),
        # fc1: reorder columns from PyTorch's c*25 + s to s*16 + c
        "fc1_w": params["fc1_w"].reshape(120, 16, 25).transpose(0, 2, 1).reshape(120, 400),
        "fc1_b": params["fc1_b"].reshape(120, 1),
        "fc2_w": params["fc2_w"],
        "fc2_b": params["fc2_b"].reshape(84, 1),
        "fc3_w": params["fc3_w"],
        "fc3_b": params["fc3_b"].reshape(10, 1),
    }


def _zeros_map(ndim):
    return lambda: (0,) * ndim


@jax.jit
def forward(prep, x):
    """x: (B, 1, 28, 28) float32 -> logits (B, 10) float32."""
    B = x.shape[0]
    # Flatten to (1, B*784) (order b, h, w) and zero-pad 64 lanes so every shifted
    # conv tap slice stays in bounds.
    xflat = jnp.pad(x.reshape(1, B * 784), ((0, 0), (0, 64)))
    args = (xflat, prep["w1"], prep["b1"], prep["s1"], prep["w2"], prep["b2"],
            prep["s2"], prep["fc1_w"], prep["fc1_b"], prep["fc2_w"], prep["fc2_b"],
            prep["fc3_w"], prep["fc3_b"])
    in_specs = [pl.BlockSpec(a.shape, _zeros_map(a.ndim)) for a in args]
    out = pl.pallas_call(
        functools.partial(_lenet_kernel, batch=B),
        out_shape=jax.ShapeDtypeStruct((10, B), jnp.float32),
        in_specs=in_specs,
        out_specs=pl.BlockSpec((10, B), lambda: (0, 0)),
        compiler_params=pltpu.CompilerParams(vmem_limit_bytes=32 * 1024 * 1024),
    )(*args)
    return out.T                                      # (B, 10)


# ---------------------------------------------------------------------------
# Parameters (deterministic, PyTorch-default-style uniform init)
# ---------------------------------------------------------------------------
def init_params(key):
    ks = jax.random.split(key, 10)

    def unif(k, shape, fan_in):
        bound = 1.0 / (fan_in ** 0.5)
        return jax.random.uniform(k, shape, jnp.float32, -bound, bound)

    return {
        "conv1_w": unif(ks[0], (6, 1, 3, 3), 1 * 3 * 3),
        "conv1_b": unif(ks[1], (6,), 1 * 3 * 3),
        "conv2_w": unif(ks[2], (16, 6, 3, 3), 6 * 3 * 3),
        "conv2_b": unif(ks[3], (16,), 6 * 3 * 3),
        "fc1_w": unif(ks[4], (120, 400), 400),
        "fc1_b": unif(ks[5], (120,), 400),
        "fc2_w": unif(ks[6], (84, 120), 120),
        "fc2_b": unif(ks[7], (84,), 120),
        "fc3_w": unif(ks[8], (10, 84), 84),
        "fc3_b": unif(ks[9], (10,), 84),
    }


if __name__ == "__main__":
    key = jax.random.PRNGKey(0)
    pkey, xkey = jax.random.split(key)
    params = init_params(pkey)
    prep = prepare(params, batch=2)
    # MNIST-style input implied by fc1 = Linear(16*5*5, 120): 28x28, 1 channel.
    x = jax.random.normal(xkey, (2, 1, 28, 28), dtype=jnp.float32)
    out = forward(prep, x)
    out = jax.block_until_ready(out)
    assert out.shape == (2, 10) and out.dtype == jnp.float32
    print("KERNEL_OK")
</pallas_src>

<mosaic_0001>
module attributes {stable_mosaic.version = 11 : i64} {
  func.func @_lenet_kernel(%arg0: memref<1x1632xf32, #tpu.memory_space<vmem>>, %arg1: memref<6x9xf32, #tpu.memory_space<vmem>>, %arg2: memref<6x1xf32, #tpu.memory_space<vmem>>, %arg3: memref<1539x368xbf16, #tpu.memory_space<vmem>>, %arg4: memref<9x16x6xf32, #tpu.memory_space<vmem>>, %arg5: memref<16x1xf32, #tpu.memory_space<vmem>>, %arg6: memref<324x50xbf16, #tpu.memory_space<vmem>>, %arg7: memref<120x400xf32, #tpu.memory_space<vmem>>, %arg8: memref<120x1xf32, #tpu.memory_space<vmem>>, %arg9: memref<84x120xf32, #tpu.memory_space<vmem>>, %arg10: memref<84x1xf32, #tpu.memory_space<vmem>>, %arg11: memref<10x84xf32, #tpu.memory_space<vmem>>, %arg12: memref<10x1xf32, #tpu.memory_space<vmem>>, %arg13: memref<10x2xf32, #tpu.memory_space<vmem>>) attributes {dimension_semantics = [], scalar_prefetch = 0 : i64, scratch_operands = 0 : i64, tpu.core_type = #tpu.core_type<tc>} {
    %c0 = arith.constant 0 : index
    %c0_0 = arith.constant 0 : index
    %0 = vector.load %arg0[%c0, %c0_0] : memref<1x1632xf32, #tpu.memory_space<vmem>>, vector<1x1632xf32>
    %c0_1 = arith.constant 0 : index
    %c0_2 = arith.constant 0 : index
    %1 = vector.load %arg1[%c0_1, %c0_2] : memref<6x9xf32, #tpu.memory_space<vmem>>, vector<6x9xf32>
    %cst = arith.constant 0.000000e+00 : f32
    %2 = vector.broadcast %cst : f32 to vector<6x1568xf32>
    %3 = vector.extract_strided_slice %1 {offsets = [0, 0], sizes = [6, 1], strides = [1, 1]} : vector<6x9xf32> to vector<6x1xf32>
    %4 = vector.extract_strided_slice %0 {offsets = [0, 0], sizes = [1, 1568], strides = [1, 1]} : vector<1x1632xf32> to vector<1x1568xf32>
    %5 = vector.broadcast %3 : vector<6x1xf32> to vector<6x1568xf32>
    %6 = vector.broadcast %4 : vector<1x1568xf32> to vector<6x1568xf32>
    %7 = arith.mulf %5, %6 : vector<6x1568xf32>
    %8 = arith.addf %2, %7 : vector<6x1568xf32>
    %9 = vector.extract_strided_slice %1 {offsets = [0, 1], sizes = [6, 1], strides = [1, 1]} : vector<6x9xf32> to vector<6x1xf32>
    %10 = vector.extract_strided_slice %0 {offsets = [0, 1], sizes = [1, 1568], strides = [1, 1]} : vector<1x1632xf32> to vector<1x1568xf32>
    %11 = vector.broadcast %9 : vector<6x1xf32> to vector<6x1568xf32>
    %12 = vector.broadcast %10 : vector<1x1568xf32> to vector<6x1568xf32>
    %13 = arith.mulf %11, %12 : vector<6x1568xf32>
    %14 = arith.addf %8, %13 : vector<6x1568xf32>
    %15 = vector.extract_strided_slice %1 {offsets = [0, 2], sizes = [6, 1], strides = [1, 1]} : vector<6x9xf32> to vector<6x1xf32>
    %16 = vector.extract_strided_slice %0 {offsets = [0, 2], sizes = [1, 1568], strides = [1, 1]} : vector<1x1632xf32> to vector<1x1568xf32>
    %17 = vector.broadcast %15 : vector<6x1xf32> to vector<6x1568xf32>
    %18 = vector.broadcast %16 : vector<1x1568xf32> to vector<6x1568xf32>
    %19 = arith.mulf %17, %18 : vector<6x1568xf32>
    %20 = arith.addf %14, %19 : vector<6x1568xf32>
    %21 = vector.extract_strided_slice %1 {offsets = [0, 3], sizes = [6, 1], strides = [1, 1]} : vector<6x9xf32> to vector<6x1xf32>
    %22 = vector.extract_strided_slice %0 {offsets = [0, 28], sizes = [1, 1568], strides = [1, 1]} : vector<1x1632xf32> to vector<1x1568xf32>
    %23 = vector.broadcast %21 : vector<6x1xf32> to vector<6x1568xf32>
    %24 = vector.broadcast %22 : vector<1x1568xf32> to vector<6x1568xf32>
    %25 = arith.mulf %23, %24 : vector<6x1568xf32>
    %26 = arith.addf %20, %25 : vector<6x1568xf32>
    %27 = vector.extract_strided_slice %1 {offsets = [0, 4], sizes = [6, 1], strides = [1, 1]} : vector<6x9xf32> to vector<6x1xf32>
    %28 = vector.extract_strided_slice %0 {offsets = [0, 29], sizes = [1, 1568], strides = [1, 1]} : vector<1x1632xf32> to vector<1x1568xf32>
    %29 = vector.broadcast %27 : vector<6x1xf32> to vector<6x1568xf32>
    %30 = vector.broadcast %28 : vector<1x1568xf32> to vector<6x1568xf32>
    %31 = arith.mulf %29, %30 : vector<6x1568xf32>
    %32 = arith.addf %26, %31 : vector<6x1568xf32>
    %33 = vector.extract_strided_slice %1 {offsets = [0, 5], sizes = [6, 1], strides = [1, 1]} : vector<6x9xf32> to vector<6x1xf32>
    %34 = vector.extract_strided_slice %0 {offsets = [0, 30], sizes = [1, 1568], strides = [1, 1]} : vector<1x1632xf32> to vector<1x1568xf32>
    %35 = vector.broadcast %33 : vector<6x1xf32> to vector<6x1568xf32>
    %36 = vector.broadcast %34 : vector<1x1568xf32> to vector<6x1568xf32>
    %37 = arith.mulf %35, %36 : vector<6x1568xf32>
    %38 = arith.addf %32, %37 : vector<6x1568xf32>
    %39 = vector.extract_strided_slice %1 {offsets = [0, 6], sizes = [6, 1], strides = [1, 1]} : vector<6x9xf32> to vector<6x1xf32>
    %40 = vector.extract_strided_slice %0 {offsets = [0, 56], sizes = [1, 1568], strides = [1, 1]} : vector<1x1632xf32> to vector<1x1568xf32>
    %41 = vector.broadcast %39 : vector<6x1xf32> to vector<6x1568xf32>
    %42 = vector.broadcast %40 : vector<1x1568xf32> to vector<6x1568xf32>
    %43 = arith.mulf %41, %42 : vector<6x1568xf32>
    %44 = arith.addf %38, %43 : vector<6x1568xf32>
    %45 = vector.extract_strided_slice %1 {offsets = [0, 7], sizes = [6, 1], strides = [1, 1]} : vector<6x9xf32> to vector<6x1xf32>
    %46 = vector.extract_strided_slice %0 {offsets = [0, 57], sizes = [1, 1568], strides = [1, 1]} : vector<1x1632xf32> to vector<1x1568xf32>
    %47 = vector.broadcast %45 : vector<6x1xf32> to vector<6x1568xf32>
    %48 = vector.broadcast %46 : vector<1x1568xf32> to vector<6x1568xf32>
    %49 = arith.mulf %47, %48 : vector<6x1568xf32>
    %50 = arith.addf %44, %49 : vector<6x1568xf32>
    %51 = vector.extract_strided_slice %1 {offsets = [0, 8], sizes = [6, 1], strides = [1, 1]} : vector<6x9xf32> to vector<6x1xf32>
    %52 = vector.extract_strided_slice %0 {offsets = [0, 58], sizes = [1, 1568], strides = [1, 1]} : vector<1x1632xf32> to vector<1x1568xf32>
    %53 = vector.broadcast %51 : vector<6x1xf32> to vector<6x1568xf32>
    %54 = vector.broadcast %52 : vector<1x1568xf32> to vector<6x1568xf32>
    %55 = arith.mulf %53, %54 : vector<6x1568xf32>
    %56 = arith.addf %50, %55 : vector<6x1568xf32>
    %c0_3 = arith.constant 0 : index
    %c0_4 = arith.constant 0 : index
    %57 = vector.load %arg2[%c0_3, %c0_4] : memref<6x1xf32, #tpu.memory_space<vmem>>, vector<6x1xf32>
    %58 = vector.broadcast %57 : vector<6x1xf32> to vector<6x1568xf32>
    %59 = arith.addf %56, %58 : vector<6x1568xf32>
    %cst_5 = arith.constant 0.000000e+00 : f32
    %60 = vector.broadcast %cst_5 : f32 to vector<6x1568xf32>
    %61 = arith.maximumf %59, %60 : vector<6x1568xf32>
    %62 = vector.extract_strided_slice %61 {offsets = [0, 0], sizes = [6, 1539], strides = [1, 1]} : vector<6x1568xf32> to vector<6x1539xf32>
    %63 = vector.extract_strided_slice %61 {offsets = [0, 1], sizes = [6, 1539], strides = [1, 1]} : vector<6x1568xf32> to vector<6x1539xf32>
    %64 = arith.maximumf %62, %63 : vector<6x1539xf32>
    %65 = vector.extract_strided_slice %61 {offsets = [0, 28], sizes = [6, 1539], strides = [1, 1]} : vector<6x1568xf32> to vector<6x1539xf32>
    %66 = vector.extract_strided_slice %61 {offsets = [0, 29], sizes = [6, 1539], strides = [1, 1]} : vector<6x1568xf32> to vector<6x1539xf32>
    %67 = arith.maximumf %65, %66 : vector<6x1539xf32>
    %68 = arith.maximumf %64, %67 : vector<6x1539xf32>
    %c0_6 = arith.constant 0 : index
    %c0_7 = arith.constant 0 : index
    %69 = vector.load %arg3[%c0_6, %c0_7] : memref<1539x368xbf16, #tpu.memory_space<vmem>>, vector<1539x368xbf16>
    %70 = arith.extf %69 : vector<1539x368xbf16> to vector<1539x368xf32>
    %cst_8 = arith.constant dense<0.000000e+00> : vector<6x368xf32>
    %71 = tpu.matmul %68, %70, %cst_8 {dimension_numbers = #tpu.dot_dimension_numbers<[1], [0], [0], [1], [0, 0, 1, 1], [], []>} : vector<6x1539xf32>, vector<1539x368xf32>, vector<6x368xf32> -> vector<6x368xf32>
    %c0_9 = arith.constant 0 : index
    %c0_10 = arith.constant 0 : index
    %c0_11 = arith.constant 0 : index
    %72 = vector.load %arg4[%c0_9, %c0_10, %c0_11] : memref<9x16x6xf32, #tpu.memory_space<vmem>>, vector<9x16x6xf32>
    %cst_12 = arith.constant 0.000000e+00 : f32
    %73 = vector.broadcast %cst_12 : f32 to vector<16x338xf32>
    %74 = vector.extract_strided_slice %72 {offsets = [0, 0, 0], sizes = [1, 16, 6], strides = [1, 1, 1]} : vector<9x16x6xf32> to vector<1x16x6xf32>
    %75 = vector.shape_cast %74 : vector<1x16x6xf32> to vector<16x6xf32>
    %76 = vector.extract_strided_slice %71 {offsets = [0, 0], sizes = [6, 338], strides = [1, 1]} : vector<6x368xf32> to vector<6x338xf32>
    %cst_13 = arith.constant dense<0.000000e+00> : vector<16x338xf32>
    %77 = tpu.matmul %75, %76, %cst_13 {dimension_numbers = #tpu.dot_dimension_numbers<[1], [0], [0], [1], [0, 0, 1, 1], [], []>} : vector<16x6xf32>, vector<6x338xf32>, vector<16x338xf32> -> vector<16x338xf32>
    %78 = arith.addf %73, %77 : vector<16x338xf32>
    %79 = vector.extract_strided_slice %72 {offsets = [1, 0, 0], sizes = [1, 16, 6], strides = [1, 1, 1]} : vector<9x16x6xf32> to vector<1x16x6xf32>
    %80 = vector.shape_cast %79 : vector<1x16x6xf32> to vector<16x6xf32>
    %81 = vector.extract_strided_slice %71 {offsets = [0, 1], sizes = [6, 338], strides = [1, 1]} : vector<6x368xf32> to vector<6x338xf32>
    %cst_14 = arith.constant dense<0.000000e+00> : vector<16x338xf32>
    %82 = tpu.matmul %80, %81, %cst_14 {dimension_numbers = #tpu.dot_dimension_numbers<[1], [0], [0], [1], [0, 0, 1, 1], [], []>} : vector<16x6xf32>, vector<6x338xf32>, vector<16x338xf32> -> vector<16x338xf32>
    %83 = arith.addf %78, %82 : vector<16x338xf32>
    %84 = vector.extract_strided_slice %72 {offsets = [2, 0, 0], sizes = [1, 16, 6], strides = [1, 1, 1]} : vector<9x16x6xf32> to vector<1x16x6xf32>
    %85 = vector.shape_cast %84 : vector<1x16x6xf32> to vector<16x6xf32>
    %86 = vector.extract_strided_slice %71 {offsets = [0, 2], sizes = [6, 338], strides = [1, 1]} : vector<6x368xf32> to vector<6x338xf32>
    %cst_15 = arith.constant dense<0.000000e+00> : vector<16x338xf32>
    %87 = tpu.matmul %85, %86, %cst_15 {dimension_numbers = #tpu.dot_dimension_numbers<[1], [0], [0], [1], [0, 0, 1, 1], [], []>} : vector<16x6xf32>, vector<6x338xf32>, vector<16x338xf32> -> vector<16x338xf32>
    %88 = arith.addf %83, %87 : vector<16x338xf32>
    %89 = vector.extract_strided_slice %72 {offsets = [3, 0, 0], sizes = [1, 16, 6], strides = [1, 1, 1]} : vector<9x16x6xf32> to vector<1x16x6xf32>
    %90 = vector.shape_cast %89 : vector<1x16x6xf32> to vector<16x6xf32>
    %91 = vector.extract_strided_slice %71 {offsets = [0, 13], sizes = [6, 338], strides = [1, 1]} : vector<6x368xf32> to vector<6x338xf32>
    %cst_16 = arith.constant dense<0.000000e+00> : vector<16x338xf32>
    %92 = tpu.matmul %90, %91, %cst_16 {dimension_numbers = #tpu.dot_dimension_numbers<[1], [0], [0], [1], [0, 0, 1, 1], [], []>} : vector<16x6xf32>, vector<6x338xf32>, vector<16x338xf32> -> vector<16x338xf32>
    %93 = arith.addf %88, %92 : vector<16x338xf32>
    %94 = vector.extract_strided_slice %72 {offsets = [4, 0, 0], sizes = [1, 16, 6], strides = [1, 1, 1]} : vector<9x16x6xf32> to vector<1x16x6xf32>
    %95 = vector.shape_cast %94 : vector<1x16x6xf32> to vector<16x6xf32>
    %96 = vector.extract_strided_slice %71 {offsets = [0, 14], sizes = [6, 338], strides = [1, 1]} : vector<6x368xf32> to vector<6x338xf32>
    %cst_17 = arith.constant dense<0.000000e+00> : vector<16x338xf32>
    %97 = tpu.matmul %95, %96, %cst_17 {dimension_numbers = #tpu.dot_dimension_numbers<[1], [0], [0], [1], [0, 0, 1, 1], [], []>} : vector<16x6xf32>, vector<6x338xf32>, vector<16x338xf32> -> vector<16x338xf32>
    %98 = arith.addf %93, %97 : vector<16x338xf32>
    %99 = vector.extract_strided_slice %72 {offsets = [5, 0, 0], sizes = [1, 16, 6], strides = [1, 1, 1]} : vector<9x16x6xf32> to vector<1x16x6xf32>
    %100 = vector.shape_cast %99 : vector<1x16x6xf32> to vector<16x6xf32>
    %101 = vector.extract_strided_slice %71 {offsets = [0, 15], sizes = [6, 338], strides = [1, 1]} : vector<6x368xf32> to vector<6x338xf32>
    %cst_18 = arith.constant dense<0.000000e+00> : vector<16x338xf32>
    %102 = tpu.matmul %100, %101, %cst_18 {dimension_numbers = #tpu.dot_dimension_numbers<[1], [0], [0], [1], [0, 0, 1, 1], [], []>} : vector<16x6xf32>, vector<6x338xf32>, vector<16x338xf32> -> vector<16x338xf32>
    %103 = arith.addf %98, %102 : vector<16x338xf32>
    %104 = vector.extract_strided_slice %72 {offsets = [6, 0, 0], sizes = [1, 16, 6], strides = [1, 1, 1]} : vector<9x16x6xf32> to vector<1x16x6xf32>
    %105 = vector.shape_cast %104 : vector<1x16x6xf32> to vector<16x6xf32>
    %106 = vector.extract_strided_slice %71 {offsets = [0, 26], sizes = [6, 338], strides = [1, 1]} : vector<6x368xf32> to vector<6x338xf32>
    %cst_19 = arith.constant dense<0.000000e+00> : vector<16x338xf32>
    %107 = tpu.matmul %105, %106, %cst_19 {dimension_numbers = #tpu.dot_dimension_numbers<[1], [0], [0], [1], [0, 0, 1, 1], [], []>} : vector<16x6xf32>, vector<6x338xf32>, vector<16x338xf32> -> vector<16x338xf32>
    %108 = arith.addf %103, %107 : vector<16x338xf32>
    %109 = vector.extract_strided_slice %72 {offsets = [7, 0, 0], sizes = [1, 16, 6], strides = [1, 1, 1]} : vector<9x16x6xf32> to vector<1x16x6xf32>
    %110 = vector.shape_cast %109 : vector<1x16x6xf32> to vector<16x6xf32>
    %111 = vector.extract_strided_slice %71 {offsets = [0, 27], sizes = [6, 338], strides = [1, 1]} : vector<6x368xf32> to vector<6x338xf32>
    %cst_20 = arith.constant dense<0.000000e+00> : vector<16x338xf32>
    %112 = tpu.matmul %110, %111, %cst_20 {dimension_numbers = #tpu.dot_dimension_numbers<[1], [0], [0], [1], [0, 0, 1, 1], [], []>} : vector<16x6xf32>, vector<6x338xf32>, vector<16x338xf32> -> vector<16x338xf32>
    %113 = arith.addf %108, %112 : vector<16x338xf32>
    %114 = vector.extract_strided_slice %72 {offsets = [8, 0, 0], sizes = [1, 16, 6], strides = [1, 1, 1]} : vector<9x16x6xf32> to vector<1x16x6xf32>
    %115 = vector.shape_cast %114 : vector<1x16x6xf32> to vector<16x6xf32>
    %116 = vector.extract_strided_slice %71 {offsets = [0, 28], sizes = [6, 338], strides = [1, 1]} : vector<6x368xf32> to vector<6x338xf32>
    %cst_21 = arith.constant dense<0.000000e+00> : vector<16x338xf32>
    %117 = tpu.matmul %115, %116, %cst_21 {dimension_numbers = #tpu.dot_dimension_numbers<[1], [0], [0], [1], [0, 0, 1, 1], [], []>} : vector<16x6xf32>, vector<6x338xf32>, vector<16x338xf32> -> vector<16x338xf32>
    %118 = arith.addf %113, %117 : vector<16x338xf32>
    %c0_22 = arith.constant 0 : index
    %c0_23 = arith.constant 0 : index
    %119 = vector.load %arg5[%c0_22, %c0_23] : memref<16x1xf32, #tpu.memory_space<vmem>>, vector<16x1xf32>
    %120 = vector.broadcast %119 : vector<16x1xf32> to vector<16x338xf32>
    %121 = arith.addf %118, %120 : vector<16x338xf32>
    %cst_24 = arith.constant 0.000000e+00 : f32
    %122 = vector.broadcast %cst_24 : f32 to vector<16x338xf32>
    %123 = arith.maximumf %121, %122 : vector<16x338xf32>
    %124 = vector.extract_strided_slice %123 {offsets = [0, 0], sizes = [16, 324], strides = [1, 1]} : vector<16x338xf32> to vector<16x324xf32>
    %125 = vector.extract_strided_slice %123 {offsets = [0, 1], sizes = [16, 324], strides = [1, 1]} : vector<16x338xf32> to vector<16x324xf32>
    %126 = arith.maximumf %124, %125 : vector<16x324xf32>
    %127 = vector.extract_strided_slice %123 {offsets = [0, 13], sizes = [16, 324], strides = [1, 1]} : vector<16x338xf32> to vector<16x324xf32>
    %128 = vector.extract_strided_slice %123 {offsets = [0, 14], sizes = [16, 324], strides = [1, 1]} : vector<16x338xf32> to vector<16x324xf32>
    %129 = arith.maximumf %127, %128 : vector<16x324xf32>
    %130 = arith.maximumf %126, %129 : vector<16x324xf32>
    %c0_25 = arith.constant 0 : index
    %c0_26 = arith.constant 0 : index
    %131 = vector.load %arg6[%c0_25, %c0_26] : memref<324x50xbf16, #tpu.memory_space<vmem>>, vector<324x50xbf16>
    %132 = arith.extf %131 : vector<324x50xbf16> to vector<324x50xf32>
    %cst_27 = arith.constant dense<0.000000e+00> : vector<16x50xf32>
    %133 = tpu.matmul %130, %132, %cst_27 {dimension_numbers = #tpu.dot_dimension_numbers<[1], [0], [0], [1], [0, 0, 1, 1], [], []>} : vector<16x324xf32>, vector<324x50xf32>, vector<16x50xf32> -> vector<16x50xf32>
    %c0_28 = arith.constant 0 : index
    %c0_29 = arith.constant 0 : index
    %134 = vector.load %arg7[%c0_28, %c0_29] : memref<120x400xf32, #tpu.memory_space<vmem>>, vector<120x400xf32>
    %cst_30 = arith.constant 0.000000e+00 : f32
    %135 = vector.broadcast %cst_30 : f32 to vector<120x2xf32>
    %136 = vector.extract_strided_slice %134 {offsets = [0, 0], sizes = [120, 16], strides = [1, 1]} : vector<120x400xf32> to vector<120x16xf32>
    %137 = vector.extract_strided_slice %133 {offsets = [0, 0], sizes = [16, 2], strides = [1, 1]} : vector<16x50xf32> to vector<16x2xf32>
    %cst_31 = arith.constant dense<0.000000e+00> : vector<120x2xf32>
    %138 = tpu.matmul %136, %137, %cst_31 {dimension_numbers = #tpu.dot_dimension_numbers<[1], [0], [0], [1], [0, 0, 1, 1], [], []>} : vector<120x16xf32>, vector<16x2xf32>, vector<120x2xf32> -> vector<120x2xf32>
    %139 = arith.addf %135, %138 : vector<120x2xf32>
    %140 = vector.extract_strided_slice %134 {offsets = [0, 16], sizes = [120, 16], strides = [1, 1]} : vector<120x400xf32> to vector<120x16xf32>
    %141 = vector.extract_strided_slice %133 {offsets = [0, 2], sizes = [16, 2], strides = [1, 1]} : vector<16x50xf32> to vector<16x2xf32>
    %cst_32 = arith.constant dense<0.000000e+00> : vector<120x2xf32>
    %142 = tpu.matmul %140, %141, %cst_32 {dimension_numbers = #tpu.dot_dimension_numbers<[1], [0], [0], [1], [0, 0, 1, 1], [], []>} : vector<120x16xf32>, vector<16x2xf32>, vector<120x2xf32> -> vector<120x2xf32>
    %143 = arith.addf %139, %142 : vector<120x2xf32>
    %144 = vector.extract_strided_slice %134 {offsets = [0, 32], sizes = [120, 16], strides = [1, 1]} : vector<120x400xf32> to vector<120x16xf32>
    %145 = vector.extract_strided_slice %133 {offsets = [0, 4], sizes = [16, 2], strides = [1, 1]} : vector<16x50xf32> to vector<16x2xf32>
    %cst_33 = arith.constant dense<0.000000e+00> : vector<120x2xf32>
    %146 = tpu.matmul %144, %145, %cst_33 {dimension_numbers = #tpu.dot_dimension_numbers<[1], [0], [0], [1], [0, 0, 1, 1], [], []>} : vector<120x16xf32>, vector<16x2xf32>, vector<120x2xf32> -> vector<120x2xf32>
    %147 = arith.addf %143, %146 : vector<120x2xf32>
    %148 = vector.extract_strided_slice %134 {offsets = [0, 48], sizes = [120, 16], strides = [1, 1]} : vector<120x400xf32> to vector<120x16xf32>
    %149 = vector.extract_strided_slice %133 {offsets = [0, 6], sizes = [16, 2], strides = [1, 1]} : vector<16x50xf32> to vector<16x2xf32>
    %cst_34 = arith.constant dense<0.000000e+00> : vector<120x2xf32>
    %150 = tpu.matmul %148, %149, %cst_34 {dimension_numbers = #tpu.dot_dimension_numbers<[1], [0], [0], [1], [0, 0, 1, 1], [], []>} : vector<120x16xf32>, vector<16x2xf32>, vector<120x2xf32> -> vector<120x2xf32>
    %151 = arith.addf %147, %150 : vector<120x2xf32>
    %152 = vector.extract_strided_slice %134 {offsets = [0, 64], sizes = [120, 16], strides = [1, 1]} : vector<120x400xf32> to vector<120x16xf32>
    %153 = vector.extract_strided_slice %133 {offsets = [0, 8], sizes = [16, 2], strides = [1, 1]} : vector<16x50xf32> to vector<16x2xf32>
    %cst_35 = arith.constant dense<0.000000e+00> : vector<120x2xf32>
    %154 = tpu.matmul %152, %153, %cst_35 {dimension_numbers = #tpu.dot_dimension_numbers<[1], [0], [0], [1], [0, 0, 1, 1], [], []>} : vector<120x16xf32>, vector<16x2xf32>, vector<120x2xf32> -> vector<120x2xf32>
    %155 = arith.addf %151, %154 : vector<120x2xf32>
    %156 = vector.extract_strided_slice %134 {offsets = [0, 80], sizes = [120, 16], strides = [1, 1]} : vector<120x400xf32> to vector<120x16xf32>
    %157 = vector.extract_strided_slice %133 {offsets = [0, 10], sizes = [16, 2], strides = [1, 1]} : vector<16x50xf32> to vector<16x2xf32>
    %cst_36 = arith.constant dense<0.000000e+00> : vector<120x2xf32>
    %158 = tpu.matmul %156, %157, %cst_36 {dimension_numbers = #tpu.dot_dimension_numbers<[1], [0], [0], [1], [0, 0, 1, 1], [], []>} : vector<120x16xf32>, vector<16x2xf32>, vector<120x2xf32> -> vector<120x2xf32>
    %159 = arith.addf %155, %158 : vector<120x2xf32>
    %160 = vector.extract_strided_slice %134 {offsets = [0, 96], sizes = [120, 16], strides = [1, 1]} : vector<120x400xf32> to vector<120x16xf32>
    %161 = vector.extract_strided_slice %133 {offsets = [0, 12], sizes = [16, 2], strides = [1, 1]} : vector<16x50xf32> to vector<16x2xf32>
    %cst_37 = arith.constant dense<0.000000e+00> : vector<120x2xf32>
    %162 = tpu.matmul %160, %161, %cst_37 {dimension_numbers = #tpu.dot_dimension_numbers<[1], [0], [0], [1], [0, 0, 1, 1], [], []>} : vector<120x16xf32>, vector<16x2xf32>, vector<120x2xf32> -> vector<120x2xf32>
    %163 = arith.addf %159, %162 : vector<120x2xf32>
    %164 = vector.extract_strided_slice %134 {offsets = [0, 112], sizes = [120, 16], strides = [1, 1]} : vector<120x400xf32> to vector<120x16xf32>
    %165 = vector.extract_strided_slice %133 {offsets = [0, 14], sizes = [16, 2], strides = [1, 1]} : vector<16x50xf32> to vector<16x2xf32>
    %cst_38 = arith.constant dense<0.000000e+00> : vector<120x2xf32>
    %166 = tpu.matmul %164, %165, %cst_38 {dimension_numbers = #tpu.dot_dimension_numbers<[1], [0], [0], [1], [0, 0, 1, 1], [], []>} : vector<120x16xf32>, vector<16x2xf32>, vector<120x2xf32> -> vector<120x2xf32>
    %167 = arith.addf %163, %166 : vector<120x2xf32>
    %168 = vector.extract_strided_slice %134 {offsets = [0, 128], sizes = [120, 16], strides = [1, 1]} : vector<120x400xf32> to vector<120x16xf32>
    %169 = vector.extract_strided_slice %133 {offsets = [0, 16], sizes = [16, 2], strides = [1, 1]} : vector<16x50xf32> to vector<16x2xf32>
    %cst_39 = arith.constant dense<0.000000e+00> : vector<120x2xf32>
    %170 = tpu.matmul %168, %169, %cst_39 {dimension_numbers = #tpu.dot_dimension_numbers<[1], [0], [0], [1], [0, 0, 1, 1], [], []>} : vector<120x16xf32>, vector<16x2xf32>, vector<120x2xf32> -> vector<120x2xf32>
    %171 = arith.addf %167, %170 : vector<120x2xf32>
    %172 = vector.extract_strided_slice %134 {offsets = [0, 144], sizes = [120, 16], strides = [1, 1]} : vector<120x400xf32> to vector<120x16xf32>
    %173 = vector.extract_strided_slice %133 {offsets = [0, 18], sizes = [16, 2], strides = [1, 1]} : vector<16x50xf32> to vector<16x2xf32>
    %cst_40 = arith.constant dense<0.000000e+00> : vector<120x2xf32>
    %174 = tpu.matmul %172, %173, %cst_40 {dimension_numbers = #tpu.dot_dimension_numbers<[1], [0], [0], [1], [0, 0, 1, 1], [], []>} : vector<120x16xf32>, vector<16x2xf32>, vector<120x2xf32> -> vector<120x2xf32>
    %175 = arith.addf %171, %174 : vector<120x2xf32>
    %176 = vector.extract_strided_slice %134 {offsets = [0, 160], sizes = [120, 16], strides = [1, 1]} : vector<120x400xf32> to vector<120x16xf32>
    %177 = vector.extract_strided_slice %133 {offsets = [0, 20], sizes = [16, 2], strides = [1, 1]} : vector<16x50xf32> to vector<16x2xf32>
    %cst_41 = arith.constant dense<0.000000e+00> : vector<120x2xf32>
    %178 = tpu.matmul %176, %177, %cst_41 {dimension_numbers = #tpu.dot_dimension_numbers<[1], [0], [0], [1], [0, 0, 1, 1], [], []>} : vector<120x16xf32>, vector<16x2xf32>, vector<120x2xf32> -> vector<120x2xf32>
    %179 = arith.addf %175, %178 : vector<120x2xf32>
    %180 = vector.extract_strided_slice %134 {offsets = [0, 176], sizes = [120, 16], strides = [1, 1]} : vector<120x400xf32> to vector<120x16xf32>
    %181 = vector.extract_strided_slice %133 {offsets = [0, 22], sizes = [16, 2], strides = [1, 1]} : vector<16x50xf32> to vector<16x2xf32>
    %cst_42 = arith.constant dense<0.000000e+00> : vector<120x2xf32>
    %182 = tpu.matmul %180, %181, %cst_42 {dimension_numbers = #tpu.dot_dimension_numbers<[1], [0], [0], [1], [0, 0, 1, 1], [], []>} : vector<120x16xf32>, vector<16x2xf32>, vector<120x2xf32> -> vector<120x2xf32>
    %183 = arith.addf %179, %182 : vector<120x2xf32>
    %184 = vector.extract_strided_slice %134 {offsets = [0, 192], sizes = [120, 16], strides = [1, 1]} : vector<120x400xf32> to vector<120x16xf32>
    %185 = vector.extract_strided_slice %133 {offsets = [0, 24], sizes = [16, 2], strides = [1, 1]} : vector<16x50xf32> to vector<16x2xf32>
    %cst_43 = arith.constant dense<0.000000e+00> : vector<120x2xf32>
    %186 = tpu.matmul %184, %185, %cst_43 {dimension_numbers = #tpu.dot_dimension_numbers<[1], [0], [0], [1], [0, 0, 1, 1], [], []>} : vector<120x16xf32>, vector<16x2xf32>, vector<120x2xf32> -> vector<120x2xf32>
    %187 = arith.addf %183, %186 : vector<120x2xf32>
    %188 = vector.extract_strided_slice %134 {offsets = [0, 208], sizes = [120, 16], strides = [1, 1]} : vector<120x400xf32> to vector<120x16xf32>
    %189 = vector.extract_strided_slice %133 {offsets = [0, 26], sizes = [16, 2], strides = [1, 1]} : vector<16x50xf32> to vector<16x2xf32>
    %cst_44 = arith.constant dense<0.000000e+00> : vector<120x2xf32>
    %190 = tpu.matmul %188, %189, %cst_44 {dimension_numbers = #tpu.dot_dimension_numbers<[1], [0], [0], [1], [0, 0, 1, 1], [], []>} : vector<120x16xf32>, vector<16x2xf32>, vector<120x2xf32> -> vector<120x2xf32>
    %191 = arith.addf %187, %190 : vector<120x2xf32>
    %192 = vector.extract_strided_slice %134 {offsets = [0, 224], sizes = [120, 16], strides = [1, 1]} : vector<120x400xf32> to vector<120x16xf32>
    %193 = vector.extract_strided_slice %133 {offsets = [0, 28], sizes = [16, 2], strides = [1, 1]} : vector<16x50xf32> to vector<16x2xf32>
    %cst_45 = arith.constant dense<0.000000e+00> : vector<120x2xf32>
    %194 = tpu.matmul %192, %193, %cst_45 {dimension_numbers = #tpu.dot_dimension_numbers<[1], [0], [0], [1], [0, 0, 1, 1], [], []>} : vector<120x16xf32>, vector<16x2xf32>, vector<120x2xf32> -> vector<120x2xf32>
    %195 = arith.addf %191, %194 : vector<120x2xf32>
    %196 = vector.extract_strided_slice %134 {offsets = [0, 240], sizes = [120, 16], strides = [1, 1]} : vector<120x400xf32> to vector<120x16xf32>
    %197 = vector.extract_strided_slice %133 {offsets = [0, 30], sizes = [16, 2], strides = [1, 1]} : vector<16x50xf32> to vector<16x2xf32>
    %cst_46 = arith.constant dense<0.000000e+00> : vector<120x2xf32>
    %198 = tpu.matmul %196, %197, %cst_46 {dimension_numbers = #tpu.dot_dimension_numbers<[1], [0], [0], [1], [0, 0, 1, 1], [], []>} : vector<120x16xf32>, vector<16x2xf32>, vector<120x2xf32> -> vector<120x2xf32>
    %199 = arith.addf %195, %198 : vector<120x2xf32>
    %200 = vector.extract_strided_slice %134 {offsets = [0, 256], sizes = [120, 16], strides = [1, 1]} : vector<120x400xf32> to vector<120x16xf32>
    %201 = vector.extract_strided_slice %133 {offsets = [0, 32], sizes = [16, 2], strides = [1, 1]} : vector<16x50xf32> to vector<16x2xf32>
    %cst_47 = arith.constant dense<0.000000e+00> : vector<120x2xf32>
    %202 = tpu.matmul %200, %201, %cst_47 {dimension_numbers = #tpu.dot_dimension_numbers<[1], [0], [0], [1], [0, 0, 1, 1], [], []>} : vector<120x16xf32>, vector<16x2xf32>, vector<120x2xf32> -> vector<120x2xf32>
    %203 = arith.addf %199, %202 : vector<120x2xf32>
    %204 = vector.extract_strided_slice %134 {offsets = [0, 272], sizes = [120, 16], strides = [1, 1]} : vector<120x400xf32> to vector<120x16xf32>
    %205 = vector.extract_strided_slice %133 {offsets = [0, 34], sizes = [16, 2], strides = [1, 1]} : vector<16x50xf32> to vector<16x2xf32>
    %cst_48 = arith.constant dense<0.000000e+00> : vector<120x2xf32>
    %206 = tpu.matmul %204, %205, %cst_48 {dimension_numbers = #tpu.dot_dimension_numbers<[1], [0], [0], [1], [0, 0, 1, 1], [], []>} : vector<120x16xf32>, vector<16x2xf32>, vector<120x2xf32> -> vector<120x2xf32>
    %207 = arith.addf %203, %206 : vector<120x2xf32>
    %208 = vector.extract_strided_slice %134 {offsets = [0, 288], sizes = [120, 16], strides = [1, 1]} : vector<120x400xf32> to vector<120x16xf32>
    %209 = vector.extract_strided_slice %133 {offsets = [0, 36], sizes = [16, 2], strides = [1, 1]} : vector<16x50xf32> to vector<16x2xf32>
    %cst_49 = arith.constant dense<0.000000e+00> : vector<120x2xf32>
    %210 = tpu.matmul %208, %209, %cst_49 {dimension_numbers = #tpu.dot_dimension_numbers<[1], [0], [0], [1], [0, 0, 1, 1], [], []>} : vector<120x16xf32>, vector<16x2xf32>, vector<120x2xf32> -> vector<120x2xf32>
    %211 = arith.addf %207, %210 : vector<120x2xf32>
    %212 = vector.extract_strided_slice %134 {offsets = [0, 304], sizes = [120, 16], strides = [1, 1]} : vector<120x400xf32> to vector<120x16xf32>
    %213 = vector.extract_strided_slice %133 {offsets = [0, 38], sizes = [16, 2], strides = [1, 1]} : vector<16x50xf32> to vector<16x2xf32>
    %cst_50 = arith.constant dense<0.000000e+00> : vector<120x2xf32>
    %214 = tpu.matmul %212, %213, %cst_50 {dimension_numbers = #tpu.dot_dimension_numbers<[1], [0], [0], [1], [0, 0, 1, 1], [], []>} : vector<120x16xf32>, vector<16x2xf32>, vector<120x2xf32> -> vector<120x2xf32>
    %215 = arith.addf %211, %214 : vector<120x2xf32>
    %216 = vector.extract_strided_slice %134 {offsets = [0, 320], sizes = [120, 16], strides = [1, 1]} : vector<120x400xf32> to vector<120x16xf32>
    %217 = vector.extract_strided_slice %133 {offsets = [0, 40], sizes = [16, 2], strides = [1, 1]} : vector<16x50xf32> to vector<16x2xf32>
    %cst_51 = arith.constant dense<0.000000e+00> : vector<120x2xf32>
    %218 = tpu.matmul %216, %217, %cst_51 {dimension_numbers = #tpu.dot_dimension_numbers<[1], [0], [0], [1], [0, 0, 1, 1], [], []>} : vector<120x16xf32>, vector<16x2xf32>, vector<120x2xf32> -> vector<120x2xf32>
    %219 = arith.addf %215, %218 : vector<120x2xf32>
    %220 = vector.extract_strided_slice %134 {offsets = [0, 336], sizes = [120, 16], strides = [1, 1]} : vector<120x400xf32> to vector<120x16xf32>
    %221 = vector.extract_strided_slice %133 {offsets = [0, 42], sizes = [16, 2], strides = [1, 1]} : vector<16x50xf32> to vector<16x2xf32>
    %cst_52 = arith.constant dense<0.000000e+00> : vector<120x2xf32>
    %222 = tpu.matmul %220, %221, %cst_52 {dimension_numbers = #tpu.dot_dimension_numbers<[1], [0], [0], [1], [0, 0, 1, 1], [], []>} : vector<120x16xf32>, vector<16x2xf32>, vector<120x2xf32> -> vector<120x2xf32>
    %223 = arith.addf %219, %222 : vector<120x2xf32>
    %224 = vector.extract_strided_slice %134 {offsets = [0, 352], sizes = [120, 16], strides = [1, 1]} : vector<120x400xf32> to vector<120x16xf32>
    %225 = vector.extract_strided_slice %133 {offsets = [0, 44], sizes = [16, 2], strides = [1, 1]} : vector<16x50xf32> to vector<16x2xf32>
    %cst_53 = arith.constant dense<0.000000e+00> : vector<120x2xf32>
    %226 = tpu.matmul %224, %225, %cst_53 {dimension_numbers = #tpu.dot_dimension_numbers<[1], [0], [0], [1], [0, 0, 1, 1], [], []>} : vector<120x16xf32>, vector<16x2xf32>, vector<120x2xf32> -> vector<120x2xf32>
    %227 = arith.addf %223, %226 : vector<120x2xf32>
    %228 = vector.extract_strided_slice %134 {offsets = [0, 368], sizes = [120, 16], strides = [1, 1]} : vector<120x400xf32> to vector<120x16xf32>
    %229 = vector.extract_strided_slice %133 {offsets = [0, 46], sizes = [16, 2], strides = [1, 1]} : vector<16x50xf32> to vector<16x2xf32>
    %cst_54 = arith.constant dense<0.000000e+00> : vector<120x2xf32>
    %230 = tpu.matmul %228, %229, %cst_54 {dimension_numbers = #tpu.dot_dimension_numbers<[1], [0], [0], [1], [0, 0, 1, 1], [], []>} : vector<120x16xf32>, vector<16x2xf32>, vector<120x2xf32> -> vector<120x2xf32>
    %231 = arith.addf %227, %230 : vector<120x2xf32>
    %232 = vector.extract_strided_slice %134 {offsets = [0, 384], sizes = [120, 16], strides = [1, 1]} : vector<120x400xf32> to vector<120x16xf32>
    %233 = vector.extract_strided_slice %133 {offsets = [0, 48], sizes = [16, 2], strides = [1, 1]} : vector<16x50xf32> to vector<16x2xf32>
    %cst_55 = arith.constant dense<0.000000e+00> : vector<120x2xf32>
    %234 = tpu.matmul %232, %233, %cst_55 {dimension_numbers = #tpu.dot_dimension_numbers<[1], [0], [0], [1], [0, 0, 1, 1], [], []>} : vector<120x16xf32>, vector<16x2xf32>, vector<120x2xf32> -> vector<120x2xf32>
    %235 = arith.addf %231, %234 : vector<120x2xf32>
    %c0_56 = arith.constant 0 : index
    %c0_57 = arith.constant 0 : index
    %236 = vector.load %arg8[%c0_56, %c0_57] : memref<120x1xf32, #tpu.memory_space<vmem>>, vector<120x1xf32>
    %237 = vector.broadcast %236 : vector<120x1xf32> to vector<120x2xf32>
    %238 = arith.addf %235, %237 : vector<120x2xf32>
    %cst_58 = arith.constant 0.000000e+00 : f32
    %239 = vector.broadcast %cst_58 : f32 to vector<120x2xf32>
    %240 = arith.maximumf %238, %239 : vector<120x2xf32>
    %c0_59 = arith.constant 0 : index
    %c0_60 = arith.constant 0 : index
    %241 = vector.load %arg9[%c0_59, %c0_60] : memref<84x120xf32, #tpu.memory_space<vmem>>, vector<84x120xf32>
    %cst_61 = arith.constant dense<0.000000e+00> : vector<84x2xf32>
    %242 = tpu.matmul %241, %240, %cst_61 {dimension_numbers = #tpu.dot_dimension_numbers<[1], [0], [0], [1], [0, 0, 1, 1], [], []>} : vector<84x120xf32>, vector<120x2xf32>, vector<84x2xf32> -> vector<84x2xf32>
    %c0_62 = arith.constant 0 : index
    %c0_63 = arith.constant 0 : index
    %243 = vector.load %arg10[%c0_62, %c0_63] : memref<84x1xf32, #tpu.memory_space<vmem>>, vector<84x1xf32>
    %244 = vector.broadcast %243 : vector<84x1xf32> to vector<84x2xf32>
    %245 = arith.addf %242, %244 : vector<84x2xf32>
    %cst_64 = arith.constant 0.000000e+00 : f32
    %246 = vector.broadcast %cst_64 : f32 to vector<84x2xf32>
    %247 = arith.maximumf %245, %246 : vector<84x2xf32>
    %c0_65 = arith.constant 0 : index
    %c0_66 = arith.constant 0 : index
    %248 = vector.load %arg11[%c0_65, %c0_66] : memref<10x84xf32, #tpu.memory_space<vmem>>, vector<10x84xf32>
    %cst_67 = arith.constant dense<0.000000e+00> : vector<10x2xf32>
    %249 = tpu.matmul %248, %247, %cst_67 {dimension_numbers = #tpu.dot_dimension_numbers<[1], [0], [0], [1], [0, 0, 1, 1], [], []>} : vector<10x84xf32>, vector<84x2xf32>, vector<10x2xf32> -> vector<10x2xf32>
    %c0_68 = arith.constant 0 : index
    %c0_69 = arith.constant 0 : index
    %250 = vector.load %arg12[%c0_68, %c0_69] : memref<10x1xf32, #tpu.memory_space<vmem>>, vector<10x1xf32>
    %251 = vector.broadcast %250 : vector<10x1xf32> to vector<10x2xf32>
    %252 = arith.addf %249, %251 : vector<10x2xf32>
    %c0_70 = arith.constant 0 : index
    %c0_71 = arith.constant 0 : index
    %253 = vector.load %arg13[%c0_70, %c0_71] : memref<10x2xf32, #tpu.memory_space<vmem>>, vector<10x2xf32>
    tpu.vector_store %arg13[%c0_70, %c0_71], %252 {strides = array<i32>} : memref<10x2xf32, #tpu.memory_space<vmem>>, vector<10x2xf32>,
    return
  }
}

</mosaic_0001>

<llo_original>
// kernel: forward.1
$region0: #{forward.1}
  #allocation0 [shape = 'u32[]', space=smem, size = 0x4, offset = 0x4, fixed_abs, tag = 'smem constant byte address 0x4 - core index']
  #allocation1 [shape = 'u32[144,128]{1,0:T(1,128)}', space=vmem, size = 0x12000, scoped, tag = 'internal scratch']
  %s0 = inlined_call_operand.vmem [shape: f32[1,1632], index: 0, kind: input, shape index: {}]
  %s1 = inlined_call_operand.hbm [shape: f32[6,9], index: 1, kind: input, shape index: {}]
  %s2 = inlined_call_operand.vmem [shape: f32[6,1], index: 2, kind: input, shape index: {}]
  %s3 = inlined_call_operand.hbm [shape: bf16[1539,368], index: 3, kind: input, shape index: {}]
  %s4 = inlined_call_operand.vmem [shape: f32[9,16,6], index: 4, kind: input, shape index: {}]
  %s5 = inlined_call_operand.vmem [shape: f32[16,1], index: 5, kind: input, shape index: {}]
  %s6 = inlined_call_operand.vmem [shape: bf16[324,50], index: 6, kind: input, shape index: {}]
  %s7 = inlined_call_operand.vmem [shape: f32[120,400], index: 7, kind: input, shape index: {}]
  %s8 = inlined_call_operand.vmem [shape: f32[120,1], index: 8, kind: input, shape index: {}]
  %s9 = inlined_call_operand.hbm [shape: f32[84,120], index: 9, kind: input, shape index: {}]
  %s10 = inlined_call_operand.vmem [shape: f32[84,1], index: 10, kind: input, shape index: {}]
  %s11 = inlined_call_operand.hbm [shape: f32[10,84], index: 11, kind: input, shape index: {}]
  %s12 = inlined_call_operand.vmem [shape: f32[10,1], index: 12, kind: input, shape index: {}]
  %s13 = inlined_call_operand.vmem [shape: f32[10,2], index: 13, kind: output, shape index: {}]
  %s14 = sld [smem:[#allocation0]]
  $region78: #{forward.1} parent=0
    _
  %s16 = ssub.s32 1, %s14
  %s17 = scalar_select 0, %s16, %s14
  $region1: #{forward.1} parent=0
    #allocation2 [shape = 'u8[4096]{0}', space=vmem, size = 0x1000, scoped, tag = 'input window, operand 1, single buffered']
    #allocation3 [shape = 's32[1]{0}', space=sflag, size = 0x4, scoped, tag = 'scoped memory for forward.1']
    #allocation4 [shape = 'u8[1185792]{0}', space=vmem, size = 0x121800, scoped, tag = 'input window, operand 3, single buffered']
    #allocation5 [shape = 's32[1]{0}', space=sflag, size = 0x4, scoped, tag = 'scoped memory for forward.1']
    #allocation6 [shape = 'u8[45056]{0}', space=vmem, size = 0xb000, scoped, tag = 'input window, operand 9, single buffered']
    #allocation7 [shape = 'u8[8192]{0}', space=vmem, size = 0x2000, scoped, tag = 'input window, operand 11, single buffered']
    #allocation8 [shape = 's32[1]{0}', space=sflag, size = 0x4, scoped, tag = 'scoped memory for forward.1']
    %18 = vsyncpa [#allocation3], 0
    %19 = vsyncpa [#allocation5], 0
    %20 = vsyncpa [#allocation8], 0
    // Predicated region
    $region2: #{forward.1} parent=1 // pred_check
      _
    $region3: #{forward.1} parent=1 // pred_check_branch
      %22 = sbr.rel (0) target = $region5
    $region4: #{forward.1} parent=1 // pred_region
      _
    $region5: #{forward.1} parent=1 // pred_fallthru
      _
    // Predicated region
    $region6: #{forward.1} parent=1 // pred_check
      _
    $region7: #{forward.1} parent=1 // pred_check_branch
      %24 = sbr.rel (0) target = $region9
    $region8: #{forward.1} parent=1 // pred_region
      %s26 = ssub.s32 128, 128
      %27 = vsyncadd [#allocation3], %s26
      %s29 = sshll.u32 [#allocation2], 4
      %s30 = int_to_ptr.vmem [resolvable:$true] %s29
      %32 = dma.hbm_to_vmem [thread:$0]  %s1, 128, %s30, [#allocation3]
    $region9: #{forward.1} parent=1 // pred_fallthru
      _
    // Predicated region
    $region10: #{forward.1} parent=1 // pred_check
      _
    $region11: #{forward.1} parent=1 // pred_check_branch
      %34 = sbr.rel (0) target = $region13
    $region12: #{forward.1} parent=1 // pred_region
      _
    $region13: #{forward.1} parent=1 // pred_fallthru
      _
    // Predicated region
    $region14: #{forward.1} parent=1 // pred_check
      _
    $region15: #{forward.1} parent=1 // pred_check_branch
      %36 = sbr.rel (0) target = $region17
    $region16: #{forward.1} parent=1 // pred_region
      %s38 = ssub.s32 37056, 37056
      %39 = vsyncadd [#allocation5], %s38
      %s40 = sshll.u32 [#allocation4], 4
      %s41 = int_to_ptr.vmem [resolvable:$true] %s40
      %46 = dma.hbm_to_vmem [thread:$0]  %s3, 37056, %s41, [#allocation5], 192, 192, 12
    $region17: #{forward.1} parent=1 // pred_fallthru
      _
    // Predicated region
    $region18: #{forward.1} parent=1 // pred_check
      _
    $region19: #{forward.1} parent=1 // pred_check_branch
      %48 = sbr.rel (0) target = $region21
    $region20: #{forward.1} parent=1 // pred_region
      _
    $region21: #{forward.1} parent=1 // pred_fallthru
      _
    // Predicated region
    $region22: #{forward.1} parent=1 // pred_check
      _
    $region23: #{forward.1} parent=1 // pred_check_branch
      %50 = sbr.rel (0) target = $region25
    $region24: #{forward.1} parent=1 // pred_region
      _
    $region25: #{forward.1} parent=1 // pred_fallthru
      _
    // Predicated region
    $region26: #{forward.1} parent=1 // pred_check
      _
    $region27: #{forward.1} parent=1 // pred_check_branch
      %52 = sbr.rel (0) target = $region29
    $region28: #{forward.1} parent=1 // pred_region
      _
    $region29: #{forward.1} parent=1 // pred_fallthru
      _
    // Predicated region
    $region30: #{forward.1} parent=1 // pred_check
      _
    $region31: #{forward.1} parent=1 // pred_check_branch
      %54 = sbr.rel (0) target = $region33
    $region32: #{forward.1} parent=1 // pred_region
      _
    $region33: #{forward.1} parent=1 // pred_fallthru
      _
    // Predicated region
    $region34: #{forward.1} parent=1 // pred_check
      _
    $region35: #{forward.1} parent=1 // pred_check_branch
      %56 = sbr.rel (0) target = $region37
    $region36: #{forward.1} parent=1 // pred_region
      _
    $region37: #{forward.1} parent=1 // pred_fallthru
      _
    // Predicated region
    $region38: #{forward.1} parent=1 // pred_check
      _
    $region39: #{forward.1} parent=1 // pred_check_branch
      %58 = sbr.rel (0) target = $region41
    $region40: #{forward.1} parent=1 // pred_region
      %s60 = ssub.s32 1408, 1408
      %61 = vsyncadd [#allocation5], %s60
      %s62 = sshll.u32 [#allocation6], 4
      %s63 = int_to_ptr.vmem [resolvable:$true] %s62
      %68 = dma.hbm_to_vmem [thread:$0]  %s9, 1408, %s63, [#allocation5], 128, 128, 8
    $region41: #{forward.1} parent=1 // pred_fallthru
      _
    // Predicated region
    $region42: #{forward.1} parent=1 // pred_check
      _
    $region43: #{forward.1} parent=1 // pred_check_branch
      %70 = sbr.rel (0) target = $region45
    $region44: #{forward.1} parent=1 // pred_region
      _
    $region45: #{forward.1} parent=1 // pred_fallthru
      _
    // Predicated region
    $region46: #{forward.1} parent=1 // pred_check
      _
    $region47: #{forward.1} parent=1 // pred_check_branch
      %72 = sbr.rel (0) target = $region49
    $region48: #{forward.1} parent=1 // pred_region
      %s74 = ssub.s32 256, 256
      %75 = vsyncadd [#allocation8], %s74
      %s76 = sshll.u32 [#allocation7], 4
      %s77 = int_to_ptr.vmem [resolvable:$true] %s76
      %82 = dma.hbm_to_vmem [thread:$0]  %s11, 256, %s77, [#allocation8], 128, 128, 8
    $region49: #{forward.1} parent=1 // pred_fallthru
      _
    // Predicated region
    $region50: #{forward.1} parent=1 // pred_check
      _
    $region51: #{forward.1} parent=1 // pred_check_branch
      %84 = sbr.rel (0) target = $region53
    $region52: #{forward.1} parent=1 // pred_region
      _
    $region53: #{forward.1} parent=1 // pred_fallthru
      _
    // Predicated region
    $region54: #{forward.1} parent=1 // pred_check
      _
    $region55: #{forward.1} parent=1 // pred_check_branch
      %86 = sbr.rel (0) target = $region57
    $region56: #{forward.1} parent=1 // pred_region
      %87 = dma.done [#allocation3], 128
    $region57: #{forward.1} parent=1 // pred_fallthru
      _
    // Predicated region
    $region58: #{forward.1} parent=1 // pred_check
      _
    $region59: #{forward.1} parent=1 // pred_check_branch
      %89 = sbr.rel (0) target = $region61
    $region60: #{forward.1} parent=1 // pred_region
      %90 = dma.done [#allocation5], 37056
    $region61: #{forward.1} parent=1 // pred_fallthru
      _
    // Predicated region
    $region62: #{forward.1} parent=1 // pred_check
      _
    $region63: #{forward.1} parent=1 // pred_check_branch
      %92 = sbr.rel (0) target = $region65
    $region64: #{forward.1} parent=1 // pred_region
      %93 = dma.done [#allocation5], 1408
    $region65: #{forward.1} parent=1 // pred_fallthru
      _
    // Predicated region
    $region66: #{forward.1} parent=1 // pred_check
      _
    $region67: #{forward.1} parent=1 // pred_check_branch
      %95 = sbr.rel (0) target = $region69
    $region68: #{forward.1} parent=1 // pred_region
      %96 = dma.done [#allocation8], 256
    $region69: #{forward.1} parent=1 // pred_fallthru
      _
    %v97 = vld [vmem:[%s0] sm:$0xff]
    %v98 = vld [vmem:[%s0 + $0x8] sm:$0x1f]
    %v99 = vld [vmem:[#allocation2] sm:$0x3f]
    %101 = vset.pattern.permute.xlu0 0
    %102 = vperm.xlu0 %101, %v99
    %v103 = vpop.permute.xlu0 %102
    %v107 = vlaneseq
    %v108 = vshrl.u32 %v107, 7
    %v109 = vsub.s32 0, %v108
    %v110 = vrot.slane %v97, %v109
    %v111 = vlaneseq
    %v112 = vshrl.u32 %v111, 7
    %v113 = vsub.s32 1, %v112
    %v114 = vrot.slane %v97, %v113
    %v115 = vlaneseq
    %v116 = vshrl.u32 %v115, 7
    %v117 = vsub.s32 2, %v116
    %v118 = vrot.slane %v97, %v117
    %v119 = vlaneseq
    %v120 = vshrl.u32 %v119, 7
    %v121 = vsub.s32 3, %v120
    %v122 = vrot.slane %v97, %v121
    %v123 = vlaneseq
    %v124 = vshrl.u32 %v123, 7
    %v125 = vsub.s32 4, %v124
    %v126 = vrot.slane %v97, %v125
    %v127 = vlaneseq
    %v128 = vshrl.u32 %v127, 7
    %v129 = vsub.s32 5, %v128
    %v130 = vrot.slane %v97, %v129
    %v131 = vlaneseq
    %v132 = vshrl.u32 %v131, 7
    %v133 = vsub.s32 6, %v132
    %v134 = vrot.slane %v97, %v133
    %v135 = vlaneseq
    %v136 = vshrl.u32 %v135, 7
    %v137 = vsub.s32 7, %v136
    %v138 = vrot.slane %v97, %v137
    %v139 = vlaneseq
    %v140 = vshrl.u32 %v139, 7
    %v141 = vsub.s32 0, %v140
    %v142 = vrot.slane %v98, %v141
    %v143 = vlaneseq
    %v144 = vshrl.u32 %v143, 7
    %v145 = vsub.s32 1, %v144
    %v146 = vrot.slane %v98, %v145
    %v147 = vlaneseq
    %v148 = vshrl.u32 %v147, 7
    %v149 = vsub.s32 2, %v148
    %v150 = vrot.slane %v98, %v149
    %v151 = vlaneseq
    %v152 = vshrl.u32 %v151, 7
    %v153 = vsub.s32 3, %v152
    %v154 = vrot.slane %v98, %v153
    %v155 = vlaneseq
    %v156 = vshrl.u32 %v155, 7
    %v157 = vsub.s32 4, %v156
    %v158 = vrot.slane %v98, %v157
    %v172 = vmul.f32 %v103, %v110
    %v173 = vmul.f32 %v103, %v114
    %v174 = vmul.f32 %v103, %v118
    %v175 = vmul.f32 %v103, %v122
    %v176 = vmul.f32 %v103, %v126
    %v177 = vmul.f32 %v103, %v130
    %v178 = vmul.f32 %v103, %v134
    %v179 = vmul.f32 %v103, %v138
    %v180 = vmul.f32 %v103, %v142
    %v181 = vmul.f32 %v103, %v146
    %v182 = vmul.f32 %v103, %v150
    %v183 = vmul.f32 %v103, %v154
    %v184 = vmul.f32 %v103, %v158
    %v185 = vadd.f32 %v172, 0.0
    %v186 = vadd.f32 %v173, 0.0
    %v187 = vadd.f32 %v174, 0.0
    %v188 = vadd.f32 %v175, 0.0
    %v189 = vadd.f32 %v176, 0.0
    %v190 = vadd.f32 %v177, 0.0
    %v191 = vadd.f32 %v178, 0.0
    %v192 = vadd.f32 %v179, 0.0
    %v193 = vadd.f32 %v180, 0.0
    %v194 = vadd.f32 %v181, 0.0
    %v195 = vadd.f32 %v182, 0.0
    %v196 = vadd.f32 %v183, 0.0
    %v197 = vadd.f32 %v184, 0.0
    %198 = vset.pattern.permute.xlu0 1
    %199 = vperm.xlu0 %198, %v99
    %v200 = vpop.permute.xlu0 %199
    %v202 = vmul.f32 %v200, %v110
    %v203 = vmul.f32 %v200, %v114
    %v204 = vmul.f32 %v200, %v118
    %v205 = vmul.f32 %v200, %v122
    %v206 = vmul.f32 %v200, %v126
    %v207 = vmul.f32 %v200, %v130
    %v208 = vmul.f32 %v200, %v134
    %v209 = vmul.f32 %v200, %v138
    %v210 = vmul.f32 %v200, %v142
    %v211 = vmul.f32 %v200, %v146
    %v212 = vmul.f32 %v200, %v150
    %v213 = vmul.f32 %v200, %v154
    %v214 = vmul.f32 %v200, %v158
    %228 = vrot.lane.b32.xlu0 %v202, 127
    %v229 = vpop.permute.xlu0 %228
    %230 = vrot.lane.b32.xlu0 %v203, 127
    %v231 = vpop.permute.xlu0 %230
    %232 = vrot.lane.b32.xlu0 %v204, 127
    %v233 = vpop.permute.xlu0 %232
    %234 = vrot.lane.b32.xlu0 %v205, 127
    %v235 = vpop.permute.xlu0 %234
    %236 = vrot.lane.b32.xlu0 %v206, 127
    %v237 = vpop.permute.xlu0 %236
    %238 = vrot.lane.b32.xlu0 %v207, 127
    %v239 = vpop.permute.xlu0 %238
    %240 = vrot.lane.b32.xlu0 %v208, 127
    %v241 = vpop.permute.xlu0 %240
    %242 = vrot.lane.b32.xlu0 %v209, 127
    %v243 = vpop.permute.xlu0 %242
    %244 = vrot.lane.b32.xlu0 %v210, 127
    %v245 = vpop.permute.xlu0 %244
    %246 = vrot.lane.b32.xlu0 %v211, 127
    %v247 = vpop.permute.xlu0 %246
    %248 = vrot.lane.b32.xlu0 %v212, 127
    %v249 = vpop.permute.xlu0 %248
    %250 = vrot.lane.b32.xlu0 %v213, 127
    %v251 = vpop.permute.xlu0 %250
    %252 = vrot.lane.b32.xlu0 %v214, 127
    %v253 = vpop.permute.xlu0 %252
    %vm254 = vcmask 1039360
    %v255 = vsel %vm254, %v229, %v231
    %v256 = vsel %vm254, %v231, %v233
    %v257 = vsel %vm254, %v233, %v235
    %v258 = vsel %vm254, %v235, %v237
    %v259 = vsel %vm254, %v237, %v239
    %v260 = vsel %vm254, %v239, %v241
    %v261 = vsel %vm254, %v241, %v243
    %v262 = vsel %vm254, %v243, %v245
    %v263 = vsel %vm254, %v245, %v247
    %v264 = vsel %vm254, %v247, %v249
    %v265 = vsel %vm254, %v249, %v251
    %v266 = vsel %vm254, %v251, %v253
    %v280 = vadd.f32 %v185, %v255
    %v281 = vadd.f32 %v186, %v256
    %v282 = vadd.f32 %v187, %v257
    %v283 = vadd.f32 %v188, %v258
    %v284 = vadd.f32 %v189, %v259
    %v285 = vadd.f32 %v190, %v260
    %v286 = vadd.f32 %v191, %v261
    %v287 = vadd.f32 %v192, %v262
    %v288 = vadd.f32 %v193, %v263
    %v289 = vadd.f32 %v194, %v264
    %v290 = vadd.f32 %v195, %v265
    %v291 = vadd.f32 %v196, %v266
    %v292 = vadd.f32 %v197, %v253
    %293 = vset.pattern.permute.xlu0 2
    %294 = vperm.xlu0 %293, %v99
    %v295 = vpop.permute.xlu0 %294
    %v297 = vmul.f32 %v295, %v110
    %v298 = vmul.f32 %v295, %v114
    %v299 = vmul.f32 %v295, %v118
    %v300 = vmul.f32 %v295, %v122
    %v301 = vmul.f32 %v295, %v126
    %v302 = vmul.f32 %v295, %v130
    %v303 = vmul.f32 %v295, %v134
    %v304 = vmul.f32 %v295, %v138
    %v305 = vmul.f32 %v295, %v142
    %v306 = vmul.f32 %v295, %v146
    %v307 = vmul.f32 %v295, %v150
    %v308 = vmul.f32 %v295, %v154
    %v309 = vmul.f32 %v295, %v158
    %323 = vrot.lane.b32.xlu0 %v297, 126
    %v324 = vpop.permute.xlu0 %323
    %325 = vrot.lane.b32.xlu0 %v298, 126
    %v326 = vpop.permute.xlu0 %325
    %327 = vrot.lane.b32.xlu0 %v299, 126
    %v328 = vpop.permute.xlu0 %327
    %329 = vrot.lane.b32.xlu0 %v300, 126
    %v330 = vpop.permute.xlu0 %329
    %331 = vrot.lane.b32.xlu0 %v301, 126
    %v332 = vpop.permute.xlu0 %331
    %333 = vrot.lane.b32.xlu0 %v302, 126
    %v334 = vpop.permute.xlu0 %333
    %335 = vrot.lane.b32.xlu0 %v303, 126
    %v336 = vpop.permute.xlu0 %335
    %337 = vrot.lane.b32.xlu0 %v304, 126
    %v338 = vpop.permute.xlu0 %337
    %339 = vrot.lane.b32.xlu0 %v305, 126
    %v340 = vpop.permute.xlu0 %339
    %341 = vrot.lane.b32.xlu0 %v306, 126
    %v342 = vpop.permute.xlu0 %341
    %343 = vrot.lane.b32.xlu0 %v307, 126
    %v344 = vpop.permute.xlu0 %343
    %345 = vrot.lane.b32.xlu0 %v308, 126
    %v346 = vpop.permute.xlu0 %345
    %347 = vrot.lane.b32.xlu0 %v309, 126
    %v348 = vpop.permute.xlu0 %347
    %vm349 = vcmask 1031168
    %v350 = vsel %vm349, %v324, %v326
    %v351 = vsel %vm349, %v326, %v328
    %v352 = vsel %vm349, %v328, %v330
    %v353 = vsel %vm349, %v330, %v332
    %v354 = vsel %vm349, %v332, %v334
    %v355 = vsel %vm349, %v334, %v336
    %v356 = vsel %vm349, %v336, %v338
    %v357 = vsel %vm349, %v338, %v340
    %v358 = vsel %vm349, %v340, %v342
    %v359 = vsel %vm349, %v342, %v344
    %v360 = vsel %vm349, %v344, %v346
    %v361 = vsel %vm349, %v346, %v348
    %v375 = vadd.f32 %v280, %v350
    %v376 = vadd.f32 %v281, %v351
    %v377 = vadd.f32 %v282, %v352
    %v378 = vadd.f32 %v283, %v353
    %v379 = vadd.f32 %v284, %v354
    %v380 = vadd.f32 %v285, %v355
    %v381 = vadd.f32 %v286, %v356
    %v382 = vadd.f32 %v287, %v357
    %v383 = vadd.f32 %v288, %v358
    %v384 = vadd.f32 %v289, %v359
    %v385 = vadd.f32 %v290, %v360
    %v386 = vadd.f32 %v291, %v361
    %v387 = vadd.f32 %v292, %v348
    %388 = vset.pattern.permute.xlu0 3
    %389 = vperm.xlu0 %388, %v99
    %v390 = vpop.permute.xlu0 %389
    %v392 = vmul.f32 %v390, %v110
    %v393 = vmul.f32 %v390, %v114
    %v394 = vmul.f32 %v390, %v118
    %v395 = vmul.f32 %v390, %v122
    %v396 = vmul.f32 %v390, %v126
    %v397 = vmul.f32 %v390, %v130
    %v398 = vmul.f32 %v390, %v134
    %v399 = vmul.f32 %v390, %v138
    %v400 = vmul.f32 %v390, %v142
    %v401 = vmul.f32 %v390, %v146
    %v402 = vmul.f32 %v390, %v150
    %v403 = vmul.f32 %v390, %v154
    %v404 = vmul.f32 %v390, %v158
    %418 = vrot.lane.b32.xlu0 %v392, 100
    %v419 = vpop.permute.xlu0 %418
    %420 = vrot.lane.b32.xlu0 %v393, 100
    %v421 = vpop.permute.xlu0 %420
    %422 = vrot.lane.b32.xlu0 %v394, 100
    %v423 = vpop.permute.xlu0 %422
    %424 = vrot.lane.b32.xlu0 %v395, 100
    %v425 = vpop.permute.xlu0 %424
    %426 = vrot.lane.b32.xlu0 %v396, 100
    %v427 = vpop.permute.xlu0 %426
    %428 = vrot.lane.b32.xlu0 %v397, 100
    %v429 = vpop.permute.xlu0 %428
    %430 = vrot.lane.b32.xlu0 %v398, 100
    %v431 = vpop.permute.xlu0 %430
    %432 = vrot.lane.b32.xlu0 %v399, 100
    %v433 = vpop.permute.xlu0 %432
    %434 = vrot.lane.b32.xlu0 %v400, 100
    %v435 = vpop.permute.xlu0 %434
    %436 = vrot.lane.b32.xlu0 %v401, 100
    %v437 = vpop.permute.xlu0 %436
    %438 = vrot.lane.b32.xlu0 %v402, 100
    %v439 = vpop.permute.xlu0 %438
    %440 = vrot.lane.b32.xlu0 %v403, 100
    %v441 = vpop.permute.xlu0 %440
    %442 = vrot.lane.b32.xlu0 %v404, 100
    %v443 = vpop.permute.xlu0 %442
    %vm444 = vcmask 818176
    %v445 = vsel %vm444, %v419, %v421
    %v446 = vsel %vm444, %v421, %v423
    %v447 = vsel %vm444, %v423, %v425
    %v448 = vsel %vm444, %v425, %v427
    %v449 = vsel %vm444, %v427, %v429
    %v450 = vsel %vm444, %v429, %v431
    %v451 = vsel %vm444, %v431, %v433
    %v452 = vsel %vm444, %v433, %v435
    %v453 = vsel %vm444, %v435, %v437
    %v454 = vsel %vm444, %v437, %v439
    %v455 = vsel %vm444, %v439, %v441
    %v456 = vsel %vm444, %v441, %v443
    %v470 = vadd.f32 %v375, %v445
    %v471 = vadd.f32 %v376, %v446
    %v472 = vadd.f32 %v377, %v447
    %v473 = vadd.f32 %v378, %v448
    %v474 = vadd.f32 %v379, %v449
    %v475 = vadd.f32 %v380, %v450
    %v476 = vadd.f32 %v381, %v451
    %v477 = vadd.f32 %v382, %v452
    %v478 = vadd.f32 %v383, %v453
    %v479 = vadd.f32 %v384, %v454
    %v480 = vadd.f32 %v385, %v455
    %v481 = vadd.f32 %v386, %v456
    %v482 = vadd.f32 %v387, %v443
    %483 = vset.pattern.permute.xlu0 4
    %484 = vperm.xlu0 %483, %v99
    %v485 = vpop.permute.xlu0 %484
    %v487 = vmul.f32 %v485, %v110
    %v488 = vmul.f32 %v485, %v114
    %v489 = vmul.f32 %v485, %v118
    %v490 = vmul.f32 %v485, %v122
    %v491 = vmul.f32 %v485, %v126
    %v492 = vmul.f32 %v485, %v130
    %v493 = vmul.f32 %v485, %v134
    %v494 = vmul.f32 %v485, %v138
    %v495 = vmul.f32 %v485, %v142
    %v496 = vmul.f32 %v485, %v146
    %v497 = vmul.f32 %v485, %v150
    %v498 = vmul.f32 %v485, %v154
    %v499 = vmul.f32 %v485, %v158
    %513 = vrot.lane.b32.xlu0 %v487, 99
    %v514 = vpop.permute.xlu0 %513
    %515 = vrot.lane.b32.xlu0 %v488, 99
    %v516 = vpop.permute.xlu0 %515
    %517 = vrot.lane.b32.xlu0 %v489, 99
    %v518 = vpop.permute.xlu0 %517
    %519 = vrot.lane.b32.xlu0 %v490, 99
    %v520 = vpop.permute.xlu0 %519
    %521 = vrot.lane.b32.xlu0 %v491, 99
    %v522 = vpop.permute.xlu0 %521
    %523 = vrot.lane.b32.xlu0 %v492, 99
    %v524 = vpop.permute.xlu0 %523
    %525 = vrot.lane.b32.xlu0 %v493, 99
    %v526 = vpop.permute.xlu0 %525
    %527 = vrot.lane.b32.xlu0 %v494, 99
    %v528 = vpop.permute.xlu0 %527
    %529 = vrot.lane.b32.xlu0 %v495, 99
    %v530 = vpop.permute.xlu0 %529
    %531 = vrot.lane.b32.xlu0 %v496, 99
    %v532 = vpop.permute.xlu0 %531
    %533 = vrot.lane.b32.xlu0 %v497, 99
    %v534 = vpop.permute.xlu0 %533
    %535 = vrot.lane.b32.xlu0 %v498, 99
    %v536 = vpop.permute.xlu0 %535
    %537 = vrot.lane.b32.xlu0 %v499, 99
    %v538 = vpop.permute.xlu0 %537
    %vm539 = vcmask 809984
    %v540 = vsel %vm539, %v514, %v516
    %v541 = vsel %vm539, %v516, %v518
    %v542 = vsel %vm539, %v518, %v520
    %v543 = vsel %vm539, %v520, %v522
    %v544 = vsel %vm539, %v522, %v524
    %v545 = vsel %vm539, %v524, %v526
    %v546 = vsel %vm539, %v526, %v528
    %v547 = vsel %vm539, %v528, %v530
    %v548 = vsel %vm539, %v530, %v532
    %v549 = vsel %vm539, %v532, %v534
    %v550 = vsel %vm539, %v534, %v536
    %v551 = vsel %vm539, %v536, %v538
    %v565 = vadd.f32 %v470, %v540
    %v566 = vadd.f32 %v471, %v541
    %v567 = vadd.f32 %v472, %v542
    %v568 = vadd.f32 %v473, %v543
    %v569 = vadd.f32 %v474, %v544
    %v570 = vadd.f32 %v475, %v545
    %v571 = vadd.f32 %v476, %v546
    %v572 = vadd.f32 %v477, %v547
    %v573 = vadd.f32 %v478, %v548
    %v574 = vadd.f32 %v479, %v549
    %v575 = vadd.f32 %v480, %v550
    %v576 = vadd.f32 %v481, %v551
    %v577 = vadd.f32 %v482, %v538
    %578 = vset.pattern.permute.xlu0 5
    %579 = vperm.xlu0 %578, %v99
    %v580 = vpop.permute.xlu0 %579
    %v582 = vmul.f32 %v580, %v110
    %v583 = vmul.f32 %v580, %v114
    %v584 = vmul.f32 %v580, %v118
    %v585 = vmul.f32 %v580, %v122
    %v586 = vmul.f32 %v580, %v126
    %v587 = vmul.f32 %v580, %v130
    %v588 = vmul.f32 %v580, %v134
    %v589 = vmul.f32 %v580, %v138
    %v590 = vmul.f32 %v580, %v142
    %v591 = vmul.f32 %v580, %v146
    %v592 = vmul.f32 %v580, %v150
    %v593 = vmul.f32 %v580, %v154
    %v594 = vmul.f32 %v580, %v158
    %608 = vrot.lane.b32.xlu0 %v582, 98
    %v609 = vpop.permute.xlu0 %608
    %610 = vrot.lane.b32.xlu0 %v583, 98
    %v611 = vpop.permute.xlu0 %610
    %612 = vrot.lane.b32.xlu0 %v584, 98
    %v613 = vpop.permute.xlu0 %612
    %614 = vrot.lane.b32.xlu0 %v585, 98
    %v615 = vpop.permute.xlu0 %614
    %616 = vrot.lane.b32.xlu0 %v586, 98
    %v617 = vpop.permute.xlu0 %616
    %618 = vrot.lane.b32.xlu0 %v587, 98
    %v619 = vpop.permute.xlu0 %618
    %620 = vrot.lane.b32.xlu0 %v588, 98
    %v621 = vpop.permute.xlu0 %620
    %622 = vrot.lane.b32.xlu0 %v589, 98
    %v623 = vpop.permute.xlu0 %622
    %624 = vrot.lane.b32.xlu0 %v590, 98
    %v625 = vpop.permute.xlu0 %624
    %626 = vrot.lane.b32.xlu0 %v591, 98
    %v627 = vpop.permute.xlu0 %626
    %628 = vrot.lane.b32.xlu0 %v592, 98
    %v629 = vpop.permute.xlu0 %628
    %630 = vrot.lane.b32.xlu0 %v593, 98
    %v631 = vpop.permute.xlu0 %630
    %632 = vrot.lane.b32.xlu0 %v594, 98
    %v633 = vpop.permute.xlu0 %632
    %vm634 = vcmask 801792
    %v635 = vsel %vm634, %v609, %v611
    %v636 = vsel %vm634, %v611, %v613
    %v637 = vsel %vm634, %v613, %v615
    %v638 = vsel %vm634, %v615, %v617
    %v639 = vsel %vm634, %v617, %v619
    %v640 = vsel %vm634, %v619, %v621
    %v641 = vsel %vm634, %v621, %v623
    %v642 = vsel %vm634, %v623, %v625
    %v643 = vsel %vm634, %v625, %v627
    %v644 = vsel %vm634, %v627, %v629
    %v645 = vsel %vm634, %v629, %v631
    %v646 = vsel %vm634, %v631, %v633
    %v660 = vadd.f32 %v565, %v635
    %v661 = vadd.f32 %v566, %v636
    %v662 = vadd.f32 %v567, %v637
    %v663 = vadd.f32 %v568, %v638
    %v664 = vadd.f32 %v569, %v639
    %v665 = vadd.f32 %v570, %v640
    %v666 = vadd.f32 %v571, %v641
    %v667 = vadd.f32 %v572, %v642
    %v668 = vadd.f32 %v573, %v643
    %v669 = vadd.f32 %v574, %v644
    %v670 = vadd.f32 %v575, %v645
    %v671 = vadd.f32 %v576, %v646
    %v672 = vadd.f32 %v577, %v633
    %673 = vset.pattern.permute.xlu0 6
    %674 = vperm.xlu0 %673, %v99
    %v675 = vpop.permute.xlu0 %674
    %v677 = vmul.f32 %v675, %v110
    %v678 = vmul.f32 %v675, %v114
    %v679 = vmul.f32 %v675, %v118
    %v680 = vmul.f32 %v675, %v122
    %v681 = vmul.f32 %v675, %v126
    %v682 = vmul.f32 %v675, %v130
    %v683 = vmul.f32 %v675, %v134
    %v684 = vmul.f32 %v675, %v138
    %v685 = vmul.f32 %v675, %v142
    %v686 = vmul.f32 %v675, %v146
    %v687 = vmul.f32 %v675, %v150
    %v688 = vmul.f32 %v675, %v154
    %v689 = vmul.f32 %v675, %v158
    %703 = vrot.lane.b32.xlu0 %v677, 72
    %v704 = vpop.permute.xlu0 %703
    %705 = vrot.lane.b32.xlu0 %v678, 72
    %v706 = vpop.permute.xlu0 %705
    %707 = vrot.lane.b32.xlu0 %v679, 72
    %v708 = vpop.permute.xlu0 %707
    %709 = vrot.lane.b32.xlu0 %v680, 72
    %v710 = vpop.permute.xlu0 %709
    %711 = vrot.lane.b32.xlu0 %v681, 72
    %v712 = vpop.permute.xlu0 %711
    %713 = vrot.lane.b32.xlu0 %v682, 72
    %v714 = vpop.permute.xlu0 %713
    %715 = vrot.lane.b32.xlu0 %v683, 72
    %v716 = vpop.permute.xlu0 %715
    %717 = vrot.lane.b32.xlu0 %v684, 72
    %v718 = vpop.permute.xlu0 %717
    %719 = vrot.lane.b32.xlu0 %v685, 72
    %v720 = vpop.permute.xlu0 %719
    %721 = vrot.lane.b32.xlu0 %v686, 72
    %v722 = vpop.permute.xlu0 %721
    %723 = vrot.lane.b32.xlu0 %v687, 72
    %v724 = vpop.permute.xlu0 %723
    %725 = vrot.lane.b32.xlu0 %v688, 72
    %v726 = vpop.permute.xlu0 %725
    %727 = vrot.lane.b32.xlu0 %v689, 72
    %v728 = vpop.permute.xlu0 %727
    %vm729 = vcmask 588800
    %v730 = vsel %vm729, %v704, %v706
    %v731 = vsel %vm729, %v706, %v708
    %v732 = vsel %vm729, %v708, %v710
    %v733 = vsel %vm729, %v710, %v712
    %v734 = vsel %vm729, %v712, %v714
    %v735 = vsel %vm729, %v714, %v716
    %v736 = vsel %vm729, %v716, %v718
    %v737 = vsel %vm729, %v718, %v720
    %v738 = vsel %vm729, %v720, %v722
    %v739 = vsel %vm729, %v722, %v724
    %v740 = vsel %vm729, %v724, %v726
    %v741 = vsel %vm729, %v726, %v728
    %v755 = vadd.f32 %v660, %v730
    %v756 = vadd.f32 %v661, %v731
    %v757 = vadd.f32 %v662, %v732
    %v758 = vadd.f32 %v663, %v733
    %v759 = vadd.f32 %v664, %v734
    %v760 = vadd.f32 %v665, %v735
    %v761 = vadd.f32 %v666, %v736
    %v762 = vadd.f32 %v667, %v737
    %v763 = vadd.f32 %v668, %v738
    %v764 = vadd.f32 %v669, %v739
    %v765 = vadd.f32 %v670, %v740
    %v766 = vadd.f32 %v671, %v741
    %v767 = vadd.f32 %v672, %v728
    %768 = vset.pattern.permute.xlu0 7
    %769 = vperm.xlu0 %768, %v99
    %v770 = vpop.permute.xlu0 %769
    %v772 = vmul.f32 %v770, %v110
    %v773 = vmul.f32 %v770, %v114
    %v774 = vmul.f32 %v770, %v118
    %v775 = vmul.f32 %v770, %v122
    %v776 = vmul.f32 %v770, %v126
    %v777 = vmul.f32 %v770, %v130
    %v778 = vmul.f32 %v770, %v134
    %v779 = vmul.f32 %v770, %v138
    %v780 = vmul.f32 %v770, %v142
    %v781 = vmul.f32 %v770, %v146
    %v782 = vmul.f32 %v770, %v150
    %v783 = vmul.f32 %v770, %v154
    %v784 = vmul.f32 %v770, %v158
    %798 = vrot.lane.b32.xlu0 %v772, 71
    %v799 = vpop.permute.xlu0 %798
    %800 = vrot.lane.b32.xlu0 %v773, 71
    %v801 = vpop.permute.xlu0 %800
    %802 = vrot.lane.b32.xlu0 %v774, 71
    %v803 = vpop.permute.xlu0 %802
    %804 = vrot.lane.b32.xlu0 %v775, 71
    %v805 = vpop.permute.xlu0 %804
    %806 = vrot.lane.b32.xlu0 %v776, 71
    %v807 = vpop.permute.xlu0 %806
    %808 = vrot.lane.b32.xlu0 %v777, 71
    %v809 = vpop.permute.xlu0 %808
    %810 = vrot.lane.b32.xlu0 %v778, 71
    %v811 = vpop.permute.xlu0 %810
    %812 = vrot.lane.b32.xlu0 %v779, 71
    %v813 = vpop.permute.xlu0 %812
    %814 = vrot.lane.b32.xlu0 %v780, 71
    %v815 = vpop.permute.xlu0 %814
    %816 = vrot.lane.b32.xlu0 %v781, 71
    %v817 = vpop.permute.xlu0 %816
    %818 = vrot.lane.b32.xlu0 %v782, 71
    %v819 = vpop.permute.xlu0 %818
    %820 = vrot.lane.b32.xlu0 %v783, 71
    %v821 = vpop.permute.xlu0 %820
    %822 = vrot.lane.b32.xlu0 %v784, 71
    %v823 = vpop.permute.xlu0 %822
    %vm824 = vcmask 580608
    %v825 = vsel %vm824, %v799, %v801
    %v826 = vsel %vm824, %v801, %v803
    %v827 = vsel %vm824, %v803, %v805
    %v828 = vsel %vm824, %v805, %v807
    %v829 = vsel %vm824, %v807, %v809
    %v830 = vsel %vm824, %v809, %v811
    %v831 = vsel %vm824, %v811, %v813
    %v832 = vsel %vm824, %v813, %v815
    %v833 = vsel %vm824, %v815, %v817
    %v834 = vsel %vm824, %v817, %v819
    %v835 = vsel %vm824, %v819, %v821
    %v836 = vsel %vm824, %v821, %v823
    %v850 = vadd.f32 %v755, %v825
    %v851 = vadd.f32 %v756, %v826
    %v852 = vadd.f32 %v757, %v827
    %v853 = vadd.f32 %v758, %v828
    %v854 = vadd.f32 %v759, %v829
    %v855 = vadd.f32 %v760, %v830
    %v856 = vadd.f32 %v761, %v831
    %v857 = vadd.f32 %v762, %v832
    %v858 = vadd.f32 %v763, %v833
    %v859 = vadd.f32 %v764, %v834
    %v860 = vadd.f32 %v765, %v835
    %v861 = vadd.f32 %v766, %v836
    %v862 = vadd.f32 %v767, %v823
    %863 = vset.pattern.permute.xlu0 8
    %864 = vperm.xlu0 %863, %v99
    %v865 = vpop.permute.xlu0 %864
    %v867 = vmul.f32 %v865, %v110
    %v868 = vmul.f32 %v865, %v114
    %v869 = vmul.f32 %v865, %v118
    %v870 = vmul.f32 %v865, %v122
    %v871 = vmul.f32 %v865, %v126
    %v872 = vmul.f32 %v865, %v130
    %v873 = vmul.f32 %v865, %v134
    %v874 = vmul.f32 %v865, %v138
    %v875 = vmul.f32 %v865, %v142
    %v876 = vmul.f32 %v865, %v146
    %v877 = vmul.f32 %v865, %v150
    %v878 = vmul.f32 %v865, %v154
    %v879 = vmul.f32 %v865, %v158
    %893 = vrot.lane.b32.xlu0 %v867, 70
    %v894 = vpop.permute.xlu0 %893
    %895 = vrot.lane.b32.xlu0 %v868, 70
    %v896 = vpop.permute.xlu0 %895
    %897 = vrot.lane.b32.xlu0 %v869, 70
    %v898 = vpop.permute.xlu0 %897
    %899 = vrot.lane.b32.xlu0 %v870, 70
    %v900 = vpop.permute.xlu0 %899
    %901 = vrot.lane.b32.xlu0 %v871, 70
    %v902 = vpop.permute.xlu0 %901
    %903 = vrot.lane.b32.xlu0 %v872, 70
    %v904 = vpop.permute.xlu0 %903
    %905 = vrot.lane.b32.xlu0 %v873, 70
    %v906 = vpop.permute.xlu0 %905
    %907 = vrot.lane.b32.xlu0 %v874, 70
    %v908 = vpop.permute.xlu0 %907
    %909 = vrot.lane.b32.xlu0 %v875, 70
    %v910 = vpop.permute.xlu0 %909
    %911 = vrot.lane.b32.xlu0 %v876, 70
    %v912 = vpop.permute.xlu0 %911
    %913 = vrot.lane.b32.xlu0 %v877, 70
    %v914 = vpop.permute.xlu0 %913
    %915 = vrot.lane.b32.xlu0 %v878, 70
    %v916 = vpop.permute.xlu0 %915
    %917 = vrot.lane.b32.xlu0 %v879, 70
    %v918 = vpop.permute.xlu0 %917
    %vm919 = vcmask 572416
    %v920 = vsel %vm919, %v894, %v896
    %v921 = vsel %vm919, %v896, %v898
    %v922 = vsel %vm919, %v898, %v900
    %v923 = vsel %vm919, %v900, %v902
    %v924 = vsel %vm919, %v902, %v904
    %v925 = vsel %vm919, %v904, %v906
    %v926 = vsel %vm919, %v906, %v908
    %v927 = vsel %vm919, %v908, %v910
    %v928 = vsel %vm919, %v910, %v912
    %v929 = vsel %vm919, %v912, %v914
    %v930 = vsel %vm919, %v914, %v916
    %v931 = vsel %vm919, %v916, %v918
    %v945 = vadd.f32 %v850, %v920
    %v946 = vadd.f32 %v851, %v921
    %v947 = vadd.f32 %v852, %v922
    %v948 = vadd.f32 %v853, %v923
    %v949 = vadd.f32 %v854, %v924
    %v950 = vadd.f32 %v855, %v925
    %v951 = vadd.f32 %v856, %v926
    %v952 = vadd.f32 %v857, %v927
    %v953 = vadd.f32 %v858, %v928
    %v954 = vadd.f32 %v859, %v929
    %v955 = vadd.f32 %v860, %v930
    %v956 = vadd.f32 %v861, %v931
    %v957 = vadd.f32 %v862, %v918
    %v958 = vld [vmem:[%s2] sm:$0x3f]
    %960 = vset.pattern.permute.xlu0 0
    %961 = vperm.xlu0 %960, %v958
    %v962 = vpop.permute.xlu0 %961
    %v964 = vadd.f32 %v945, %v962
    %v965 = vadd.f32 %v946, %v962
    %v966 = vadd.f32 %v947, %v962
    %v967 = vadd.f32 %v948, %v962
    %v968 = vadd.f32 %v949, %v962
    %v969 = vadd.f32 %v950, %v962
    %v970 = vadd.f32 %v951, %v962
    %v971 = vadd.f32 %v952, %v962
    %v972 = vadd.f32 %v953, %v962
    %v973 = vadd.f32 %v954, %v962
    %v974 = vadd.f32 %v955, %v962
    %v975 = vadd.f32 %v956, %v962
    %v976 = vadd.f32 %v957, %v962
    %v977 = vmax.f32 %v964, 0.0
    %v978 = vmax.f32 %v965, 0.0
    %v979 = vmax.f32 %v966, 0.0
    %v980 = vmax.f32 %v967, 0.0
    %v981 = vmax.f32 %v968, 0.0
    %v982 = vmax.f32 %v969, 0.0
    %v983 = vmax.f32 %v970, 0.0
    %v984 = vmax.f32 %v971, 0.0
    %v985 = vmax.f32 %v972, 0.0
    %v986 = vmax.f32 %v973, 0.0
    %v987 = vmax.f32 %v974, 0.0
    %v988 = vmax.f32 %v975, 0.0
    %v989 = vmax.f32 %v976, 0.0
    %1003 = vrot.lane.b32.xlu0 %v977, 127
    %v1004 = vpop.permute.xlu0 %1003
    %1005 = vrot.lane.b32.xlu0 %v978, 127
    %v1006 = vpop.permute.xlu0 %1005
    %1007 = vrot.lane.b32.xlu0 %v979, 127
    %v1008 = vpop.permute.xlu0 %1007
    %1009 = vrot.lane.b32.xlu0 %v980, 127
    %v1010 = vpop.permute.xlu0 %1009
    %1011 = vrot.lane.b32.xlu0 %v981, 127
    %v1012 = vpop.permute.xlu0 %1011
    %1013 = vrot.lane.b32.xlu0 %v982, 127
    %v1014 = vpop.permute.xlu0 %1013
    %1015 = vrot.lane.b32.xlu0 %v983, 127
    %v1016 = vpop.permute.xlu0 %1015
    %1017 = vrot.lane.b32.xlu0 %v984, 127
    %v1018 = vpop.permute.xlu0 %1017
    %1019 = vrot.lane.b32.xlu0 %v985, 127
    %v1020 = vpop.permute.xlu0 %1019
    %1021 = vrot.lane.b32.xlu0 %v986, 127
    %v1022 = vpop.permute.xlu0 %1021
    %1023 = vrot.lane.b32.xlu0 %v987, 127
    %v1024 = vpop.permute.xlu0 %1023
    %1025 = vrot.lane.b32.xlu0 %v988, 127
    %v1026 = vpop.permute.xlu0 %1025
    %1027 = vrot.lane.b32.xlu0 %v989, 127
    %v1028 = vpop.permute.xlu0 %1027
    %v1029 = vsel %vm254, %v1004, %v1006
    %v1030 = vsel %vm254, %v1006, %v1008
    %v1031 = vsel %vm254, %v1008, %v1010
    %v1032 = vsel %vm254, %v1010, %v1012
    %v1033 = vsel %vm254, %v1012, %v1014
    %v1034 = vsel %vm254, %v1014, %v1016
    %v1035 = vsel %vm254, %v1016, %v1018
    %v1036 = vsel %vm254, %v1018, %v1020
    %v1037 = vsel %vm254, %v1020, %v1022
    %v1038 = vsel %vm254, %v1022, %v1024
    %v1039 = vsel %vm254, %v1024, %v1026
    %v1040 = vsel %vm254, %v1026, %v1028
    %v1054 = vmax.f32 %v977, %v1029
    %v1055 = vmax.f32 %v978, %v1030
    %v1056 = vmax.f32 %v979, %v1031
    %v1057 = vmax.f32 %v980, %v1032
    %v1058 = vmax.f32 %v981, %v1033
    %v1059 = vmax.f32 %v982, %v1034
    %v1060 = vmax.f32 %v983, %v1035
    %v1061 = vmax.f32 %v984, %v1036
    %v1062 = vmax.f32 %v985, %v1037
    %v1063 = vmax.f32 %v986, %v1038
    %v1064 = vmax.f32 %v987, %v1039
    %v1065 = vmax.f32 %v988, %v1040
    %v1066 = vmax.f32 %v989, %v1028
    %1080 = vrot.lane.b32.xlu0 %v1054, 100
    %v1081 = vpop.permute.xlu0 %1080
    %1082 = vrot.lane.b32.xlu0 %v1055, 100
    %v1083 = vpop.permute.xlu0 %1082
    %1084 = vrot.lane.b32.xlu0 %v1056, 100
    %v1085 = vpop.permute.xlu0 %1084
    %1086 = vrot.lane.b32.xlu0 %v1057, 100
    %v1087 = vpop.permute.xlu0 %1086
    %1088 = vrot.lane.b32.xlu0 %v1058, 100
    %v1089 = vpop.permute.xlu0 %1088
    %1090 = vrot.lane.b32.xlu0 %v1059, 100
    %v1091 = vpop.permute.xlu0 %1090
    %1092 = vrot.lane.b32.xlu0 %v1060, 100
    %v1093 = vpop.permute.xlu0 %1092
    %1094 = vrot.lane.b32.xlu0 %v1061, 100
    %v1095 = vpop.permute.xlu0 %1094
    %1096 = vrot.lane.b32.xlu0 %v1062, 100
    %v1097 = vpop.permute.xlu0 %1096
    %1098 = vrot.lane.b32.xlu0 %v1063, 100
    %v1099 = vpop.permute.xlu0 %1098
    %1100 = vrot.lane.b32.xlu0 %v1064, 100
    %v1101 = vpop.permute.xlu0 %1100
    %1102 = vrot.lane.b32.xlu0 %v1065, 100
    %v1103 = vpop.permute.xlu0 %1102
    %1104 = vrot.lane.b32.xlu0 %v1066, 100
    %v1105 = vpop.permute.xlu0 %1104
    %v1106 = vsel %vm444, %v1081, %v1083
    %v1107 = vsel %vm444, %v1083, %v1085
    %v1108 = vsel %vm444, %v1085, %v1087
    %v1109 = vsel %vm444, %v1087, %v1089
    %v1110 = vsel %vm444, %v1089, %v1091
    %v1111 = vsel %vm444, %v1091, %v1093
    %v1112 = vsel %vm444, %v1093, %v1095
    %v1113 = vsel %vm444, %v1095, %v1097
    %v1114 = vsel %vm444, %v1097, %v1099
    %v1115 = vsel %vm444, %v1099, %v1101
    %v1116 = vsel %vm444, %v1101, %v1103
    %v1117 = vsel %vm444, %v1103, %v1105
    %v1131 = vmax.f32 %v1054, %v1106
    %v1132 = vmax.f32 %v1055, %v1107
    %v1133 = vmax.f32 %v1056, %v1108
    %v1134 = vmax.f32 %v1057, %v1109
    %v1135 = vmax.f32 %v1058, %v1110
    %v1136 = vmax.f32 %v1059, %v1111
    %v1137 = vmax.f32 %v1060, %v1112
    %v1138 = vmax.f32 %v1061, %v1113
    %v1139 = vmax.f32 %v1062, %v1114
    %v1140 = vmax.f32 %v1063, %v1115
    %v1141 = vmax.f32 %v1064, %v1116
    %v1142 = vmax.f32 %v1065, %v1117
    %v1143 = vmax.f32 %v1066, %v1105
    %v1144 = vld [vmem:[#allocation4] sm:$0xff]
    %v1145 = vld [vmem:[#allocation4 + $0x8] sm:$0xf]
    %v1146 = vld [vmem:[#allocation4 + $0xc] sm:$0xff]
    %v1147 = vld [vmem:[#allocation4 + $0x14] sm:$0xf]
    %v1148 = vld [vmem:[#allocation4 + $0x18] sm:$0xff]
    %v1149 = vld [vmem:[#allocation4 + $0x20] sm:$0xf]
    %v1150 = vld [vmem:[#allocation4 + $0x24] sm:$0xff]
    %v1151 = vld [vmem:[#allocation4 + $0x2c] sm:$0xf]
    %v1152 = vld [vmem:[#allocation4 + $0x30] sm:$0xff]
    %v1153 = vld [vmem:[#allocation4 + $0x38] sm:$0xf]
    %v1154 = vld [vmem:[#allocation4 + $0x3c] sm:$0xff]
    %v1155 = vld [vmem:[#allocation4 + $0x44] sm:$0xf]
    %v1156 = vld [vmem:[#allocation4 + $0x48] sm:$0xff]
    %v1157 = vld [vmem:[#allocation4 + $0x50] sm:$0xf]
    %v1158 = vld [vmem:[#allocation4 + $0x54] sm:$0xff]
    %v1159 = vld [vmem:[#allocation4 + $0x5c] sm:$0xf]
    %v1160 = vld [vmem:[#allocation4 + $0x60] sm:$0xff]
    %v1161 = vld [vmem:[#allocation4 + $0x68] sm:$0xf]
    %v1162 = vld [vmem:[#allocation4 + $0x6c] sm:$0xff]
    %v1163 = vld [vmem:[#allocation4 + $0x74] sm:$0xf]
    %v1164 = vld [vmem:[#allocation4 + $0x78] sm:$0xff]
    %v1165 = vld [vmem:[#allocation4 + $0x80] sm:$0xf]
    %v1166 = vld [vmem:[#allocation4 + $0x84] sm:$0xff]
    %v1167 = vld [vmem:[#allocation4 + $0x8c] sm:$0xf]
    %v1168 = vld [vmem:[#allocation4 + $0x90] sm:$0xff]
    %v1169 = vld [vmem:[#allocation4 + $0x98] sm:$0xf]
    %v1170 = vld [vmem:[#allocation4 + $0x9c] sm:$0xff]
    %v1171 = vld [vmem:[#allocation4 + $0xa4] sm:$0xf]
    %v1172 = vld [vmem:[#allocation4 + $0xa8] sm:$0xff]
    %v1173 = vld [vmem:[#allocation4 + $0xb0] sm:$0xf]
    %v1174 = vld [vmem:[#allocation4 + $0xb4] sm:$0xff]
    %v1175 = vld [vmem:[#allocation4 + $0xbc] sm:$0xf]
    %v1176 = vld [vmem:[#allocation4 + $0xc0] sm:$0xff]
    %v1177 = vld [vmem:[#allocation4 + $0xc8] sm:$0xf]
    %v1178 = vld [vmem:[#allocation4 + $0xcc] sm:$0xff]
    %v1179 = vld [vmem:[#allocation4 + $0xd4] sm:$0xf]
    %v1180 = vld [vmem:[#allocation4 + $0xd8] sm:$0xff]
    %v1181 = vld [vmem:[#allocation4 + $0xe0] sm:$0xf]
    %v1182 = vld [vmem:[#allocation4 + $0xe4] sm:$0xff]
    %v1183 = vld [vmem:[#allocation4 + $0xec] sm:$0xf]
    %v1184 = vld [vmem:[#allocation4 + $0xf0] sm:$0xff]
    %v1185 = vld [vmem:[#allocation4 + $0xf8] sm:$0xf]
    %v1186 = vld [vmem:[#allocation4 + $0xfc] sm:$0xff]
    %v1187 = vld [vmem:[#allocation4 + $0x104] sm:$0xf]
    %v1188 = vld [vmem:[#allocation4 + $0x108] sm:$0xff]
    %v1189 = vld [vmem:[#allocation4 + $0x110] sm:$0xf]
    %v1190 = vld [vmem:[#allocation4 + $0x114] sm:$0xff]
    %v1191 = vld [vmem:[#allocation4 + $0x11c] sm:$0xf]
    %v1192 = vld [vmem:[#allocation4 + $0x120] sm:$0xff]
    %v1193 = vld [vmem:[#allocation4 + $0x128] sm:$0xf]
    %v1194 = vld [vmem:[#allocation4 + $0x12c] sm:$0xff]
    %v1195 = vld [vmem:[#allocation4 + $0x134] sm:$0xf]
    %v1196 = vld [vmem:[#allocation4 + $0x138] sm:$0xff]
    %v1197 = vld [vmem:[#allocation4 + $0x140] sm:$0xf]
    %v1198 = vld [vmem:[#allocation4 + $0x144] sm:$0xff]
    %v1199 = vld [vmem:[#allocation4 + $0x14c] sm:$0xf]
    %v1200 = vld [vmem:[#allocation4 + $0x150] sm:$0xff]
    %v1201 = vld [vmem:[#allocation4 + $0x158] sm:$0xf]
    %v1202 = vld [vmem:[#allocation4 + $0x15c] sm:$0xff]
    %v1203 = vld [vmem:[#allocation4 + $0x164] sm:$0xf]
    %v1204 = vld [vmem:[#allocation4 + $0x168] sm:$0xff]
    %v1205 = vld [vmem:[#allocation4 + $0x170] sm:$0xf]
    %v1206 = vld [vmem:[#allocation4 + $0x174] sm:$0xff]
    %v1207 = vld [vmem:[#allocation4 + $0x17c] sm:$0xf]
    %v1208 = vld [vmem:[#allocation4 + $0x180] sm:$0xff]
    %v1209 = vld [vmem:[#allocation4 + $0x188] sm:$0xf]
    %v1210 = vld [vmem:[#allocation4 + $0x18c] sm:$0xff]
    %v1211 = vld [vmem:[#allocation4 + $0x194] sm:$0xf]
    %v1212 = vld [vmem:[#allocation4 + $0x198] sm:$0xff]
    %v1213 = vld [vmem:[#allocation4 + $0x1a0] sm:$0xf]
    %v1214 = vld [vmem:[#allocation4 + $0x1a4] sm:$0xff]
    %v1215 = vld [vmem:[#allocation4 + $0x1ac] sm:$0xf]
    %v1216 = vld [vmem:[#allocation4 + $0x1b0] sm:$0xff]
    %v1217 = vld [vmem:[#allocation4 + $0x1b8] sm:$0xf]
    %v1218 = vld [vmem:[#allocation4 + $0x1bc] sm:$0xff]
    %v1219 = vld [vmem:[#allocation4 + $0x1c4] sm:$0xf]
    %v1220 = vld [vmem:[#allocation4 + $0x1c8] sm:$0xff]
    %v1221 = vld [vmem:[#allocation4 + $0x1d0] sm:$0xf]
    %v1222 = vld [vmem:[#allocation4 + $0x1d4] sm:$0xff]
    %v1223 = vld [vmem:[#allocation4 + $0x1dc] sm:$0xf]
    %v1224 = vld [vmem:[#allocation4 + $0x1e0] sm:$0xff]
    %v1225 = vld [vmem:[#allocation4 + $0x1e8] sm:$0xf]
    %v1226 = vld [vmem:[#allocation4 + $0x1ec] sm:$0xff]
    %v1227 = vld [vmem:[#allocation4 + $0x1f4] sm:$0xf]
    %v1228 = vld [vmem:[#allocation4 + $0x1f8] sm:$0xff]
    %v1229 = vld [vmem:[#allocation4 + $0x200] sm:$0xf]
    %v1230 = vld [vmem:[#allocation4 + $0x204] sm:$0xff]
    %v1231 = vld [vmem:[#allocation4 + $0x20c] sm:$0xf]
    %v1232 = vld [vmem:[#allocation4 + $0x210] sm:$0xff]
    %v1233 = vld [vmem:[#allocation4 + $0x218] sm:$0xf]
    %v1234 = vld [vmem:[#allocation4 + $0x21c] sm:$0xff]
    %v1235 = vld [vmem:[#allocation4 + $0x224] sm:$0xf]
    %v1236 = vld [vmem:[#allocation4 + $0x228] sm:$0xff]
    %v1237 = vld [vmem:[#allocation4 + $0x230] sm:$0xf]
    %v1238 = vld [vmem:[#allocation4 + $0x234] sm:$0xff]
    %v1239 = vld [vmem:[#allocation4 + $0x23c] sm:$0xf]
    %v1240 = vld [vmem:[#allocation4 + $0x240] sm:$0xff]
    %v1241 = vld [vmem:[#allocation4 + $0x248] sm:$0xf]
    %v1242 = vld [vmem:[#allocation4 + $0x24c] sm:$0xff]
    %v1243 = vld [vmem:[#allocation4 + $0x254] sm:$0xf]
    %v1244 = vld [vmem:[#allocation4 + $0x258] sm:$0xff]
    %v1245 = vld [vmem:[#allocation4 + $0x260] sm:$0xf]
    %v1246 = vld [vmem:[#allocation4 + $0x264] sm:$0xff]
    %v1247 = vld [vmem:[#allocation4 + $0x26c] sm:$0xf]
    %v1248 = vld [vmem:[#allocation4 + $0x270] sm:$0xff]
    %v1249 = vld [vmem:[#allocation4 + $0x278] sm:$0xf]
    %v1250 = vld [vmem:[#allocation4 + $0x27c] sm:$0xff]
    %v1251 = vld [vmem:[#allocation4 + $0x284] sm:$0xf]
    %v1252 = vld [vmem:[#allocation4 + $0x288] sm:$0xff]
    %v1253 = vld [vmem:[#allocation4 + $0x290] sm:$0xf]
    %v1254 = vld [vmem:[#allocation4 + $0x294] sm:$0xff]
    %v1255 = vld [vmem:[#allocation4 + $0x29c] sm:$0xf]
    %v1256 = vld [vmem:[#allocation4 + $0x2a0] sm:$0xff]
    %v1257 = vld [vmem:[#allocation4 + $0x2a8] sm:$0xf]
    %v1258 = vld [vmem:[#allocation4 + $0x2ac] sm:$0xff]
    %v1259 = vld [vmem:[#allocation4 + $0x2b4] sm:$0xf]
    %v1260 = vld [vmem:[#allocation4 + $0x2b8] sm:$0xff]
    %v1261 = vld [vmem:[#allocation4 + $0x2c0] sm:$0xf]
    %v1262 = vld [vmem:[#allocation4 + $0x2c4] sm:$0xff]
    %v1263 = vld [vmem:[#allocation4 + $0x2cc] sm:$0xf]
    %v1264 = vld [vmem:[#allocation4 + $0x2d0] sm:$0xff]
    %v1265 = vld [vmem:[#allocation4 + $0x2d8] sm:$0xf]
    %v1266 = vld [vmem:[#allocation4 + $0x2dc] sm:$0xff]
    %v1267 = vld [vmem:[#allocation4 + $0x2e4] sm:$0xf]
    %v1268 = vld [vmem:[#allocation4 + $0x2e8] sm:$0xff]
    %v1269 = vld [vmem:[#allocation4 + $0x2f0] sm:$0xf]
    %v1270 = vld [vmem:[#allocation4 + $0x2f4] sm:$0xff]
    %v1271 = vld [vmem:[#allocation4 + $0x2fc] sm:$0xf]
    %v1272 = vld [vmem:[#allocation4 + $0x300] sm:$0xff]
    %v1273 = vld [vmem:[#allocation4 + $0x308] sm:$0xf]
    %v1274 = vld [vmem:[#allocation4 + $0x30c] sm:$0xff]
    %v1275 = vld [vmem:[#allocation4 + $0x314] sm:$0xf]
    %v1276 = vld [vmem:[#allocation4 + $0x318] sm:$0xff]
    %v1277 = vld [vmem:[#allocation4 + $0x320] sm:$0xf]
    %v1278 = vld [vmem:[#allocation4 + $0x324] sm:$0xff]
    %v1279 = vld [vmem:[#allocation4 + $0x32c] sm:$0xf]
    %v1280 = vld [vmem:[#allocation4 + $0x330] sm:$0xff]
    %v1281 = vld [vmem:[#allocation4 + $0x338] sm:$0xf]
    %v1282 = vld [vmem:[#allocation4 + $0x33c] sm:$0xff]
    %v1283 = vld [vmem:[#allocation4 + $0x344] sm:$0xf]
    %v1284 = vld [vmem:[#allocation4 + $0x348] sm:$0xff]
    %v1285 = vld [vmem:[#allocation4 + $0x350] sm:$0xf]
    %v1286 = vld [vmem:[#allocation4 + $0x354] sm:$0xff]
    %v1287 = vld [vmem:[#allocation4 + $0x35c] sm:$0xf]
    %v1288 = vld [vmem:[#allocation4 + $0x360] sm:$0xff]
    %v1289 = vld [vmem:[#allocation4 + $0x368] sm:$0xf]
    %v1290 = vld [vmem:[#allocation4 + $0x36c] sm:$0xff]
    %v1291 = vld [vmem:[#allocation4 + $0x374] sm:$0xf]
    %v1292 = vld [vmem:[#allocation4 + $0x378] sm:$0xff]
    %v1293 = vld [vmem:[#allocation4 + $0x380] sm:$0xf]
    %v1294 = vld [vmem:[#allocation4 + $0x384] sm:$0xff]
    %v1295 = vld [vmem:[#allocation4 + $0x38c] sm:$0xf]
    %v1296 = vld [vmem:[#allocation4 + $0x390] sm:$0xff]
    %v1297 = vld [vmem:[#allocation4 + $0x398] sm:$0xf]
    %v1298 = vld [vmem:[#allocation4 + $0x39c] sm:$0xff]
    %v1299 = vld [vmem:[#allocation4 + $0x3a4] sm:$0xf]
    %v1300 = vld [vmem:[#allocation4 + $0x3a8] sm:$0xff]
    %v1301 = vld [vmem:[#allocation4 + $0x3b0] sm:$0xf]
    %v1302 = vld [vmem:[#allocation4 + $0x3b4] sm:$0xff]
    %v1303 = vld [vmem:[#allocation4 + $0x3bc] sm:$0xf]
    %v1304 = vld [vmem:[#allocation4 + $0x3c0] sm:$0xff]
    %v1305 = vld [vmem:[#allocation4 + $0x3c8] sm:$0xf]
    %v1306 = vld [vmem:[#allocation4 + $0x3cc] sm:$0xff]
    %v1307 = vld [vmem:[#allocation4 + $0x3d4] sm:$0xf]
    %v1308 = vld [vmem:[#allocation4 + $0x3d8] sm:$0xff]
    %v1309 = vld [vmem:[#allocation4 + $0x3e0] sm:$0xf]
    %v1310 = vld [vmem:[#allocation4 + $0x3e4] sm:$0xff]
    %v1311 = vld [vmem:[#allocation4 + $0x3ec] sm:$0xf]
    %v1312 = vld [vmem:[#allocation4 + $0x3f0] sm:$0xff]
    %v1313 = vld [vmem:[#allocation4 + $0x3f8] sm:$0xf]
    %v1314 = vld [vmem:[#allocation4 + $0x3fc] sm:$0xff]
    %v1315 = vld [vmem:[#allocation4 + $0x404] sm:$0xf]
    %v1316 = vld [vmem:[#allocation4 + $0x408] sm:$0xff]
    %v1317 = vld [vmem:[#allocation4 + $0x410] sm:$0xf]
    %v1318 = vld [vmem:[#allocation4 + $0x414] sm:$0xff]
    %v1319 = vld [vmem:[#allocation4 + $0x41c] sm:$0xf]
    %v1320 = vld [vmem:[#allocation4 + $0x420] sm:$0xff]
    %v1321 = vld [vmem:[#allocation4 + $0x428] sm:$0xf]
    %v1322 = vld [vmem:[#allocation4 + $0x42c] sm:$0xff]
    %v1323 = vld [vmem:[#allocation4 + $0x434] sm:$0xf]
    %v1324 = vld [vmem:[#allocation4 + $0x438] sm:$0xff]
    %v1325 = vld [vmem:[#allocation4 + $0x440] sm:$0xf]
    %v1326 = vld [vmem:[#allocation4 + $0x444] sm:$0xff]
    %v1327 = vld [vmem:[#allocation4 + $0x44c] sm:$0xf]
    %v1328 = vld [vmem:[#allocation4 + $0x450] sm:$0xff]
    %v1329 = vld [vmem:[#allocation4 + $0x458] sm:$0xf]
    %v1330 = vld [vmem:[#allocation4 + $0x45c] sm:$0xff]
    %v1331 = vld [vmem:[#allocation4 + $0x464] sm:$0xf]
    %v1332 = vld [vmem:[#allocation4 + $0x468] sm:$0xff]
    %v1333 = vld [vmem:[#allocation4 + $0x470] sm:$0xf]
    %v1334 = vld [vmem:[#allocation4 + $0x474] sm:$0xff]
    %v1335 = vld [vmem:[#allocation4 + $0x47c] sm:$0xf]
    %v1336 = vld [vmem:[#allocation4 + $0x480] sm:$0xff]
    %v1337 = vld [vmem:[#allocation4 + $0x488] sm:$0xf]
    %v1338 = vld [vmem:[#allocation4 + $0x48c] sm:$0xff]
    %v1339 = vld [vmem:[#allocation4 + $0x494] sm:$0xf]
    %v1340 = vld [vmem:[#allocation4 + $0x498] sm:$0xff]
    %v1341 = vld [vmem:[#allocation4 + $0x4a0] sm:$0xf]
    %v1342 = vld [vmem:[#allocation4 + $0x4a4] sm:$0xff]
    %v1343 = vld [vmem:[#allocation4 + $0x4ac] sm:$0xf]
    %v1344 = vld [vmem:[#allocation4 + $0x4b0] sm:$0xff]
    %v1345 = vld [vmem:[#allocation4 + $0x4b8] sm:$0xf]
    %v1346 = vld [vmem:[#allocation4 + $0x4bc] sm:$0xff]
    %v1347 = vld [vmem:[#allocation4 + $0x4c4] sm:$0xf]
    %v1348 = vld [vmem:[#allocation4 + $0x4c8] sm:$0xff]
    %v1349 = vld [vmem:[#allocation4 + $0x4d0] sm:$0xf]
    %v1350 = vld [vmem:[#allocation4 + $0x4d4] sm:$0xff]
    %v1351 = vld [vmem:[#allocation4 + $0x4dc] sm:$0xf]
    %v1352 = vld [vmem:[#allocation4 + $0x4e0] sm:$0xff]
    %v1353 = vld [vmem:[#allocation4 + $0x4e8] sm:$0xf]
    %v1354 = vld [vmem:[#allocation4 + $0x4ec] sm:$0xff]
    %v1355 = vld [vmem:[#allocation4 + $0x4f4] sm:$0xf]
    %v1356 = vld [vmem:[#allocation4 + $0x4f8] sm:$0xff]
    %v1357 = vld [vmem:[#allocation4 + $0x500] sm:$0xf]
    %v1358 = vld [vmem:[#allocation4 + $0x504] sm:$0xff]
    %v1359 = vld [vmem:[#allocation4 + $0x50c] sm:$0xf]
    %v1360 = vld [vmem:[#allocation4 + $0x510] sm:$0xff]
    %v1361 = vld [vmem:[#allocation4 + $0x518] sm:$0xf]
    %v1362 = vld [vmem:[#allocation4 + $0x51c] sm:$0xff]
    %v1363 = vld [vmem:[#allocation4 + $0x524] sm:$0xf]
    %v1364 = vld [vmem:[#allocation4 + $0x528] sm:$0xff]
    %v1365 = vld [vmem:[#allocation4 + $0x530] sm:$0xf]
    %v1366 = vld [vmem:[#allocation4 + $0x534] sm:$0xff]
    %v1367 = vld [vmem:[#allocation4 + $0x53c] sm:$0xf]
    %v1368 = vld [vmem:[#allocation4 + $0x540] sm:$0xff]
    %v1369 = vld [vmem:[#allocation4 + $0x548] sm:$0xf]
    %v1370 = vld [vmem:[#allocation4 + $0x54c] sm:$0xff]
    %v1371 = vld [vmem:[#allocation4 + $0x554] sm:$0xf]
    %v1372 = vld [vmem:[#allocation4 + $0x558] sm:$0xff]
    %v1373 = vld [vmem:[#allocation4 + $0x560] sm:$0xf]
    %v1374 = vld [vmem:[#allocation4 + $0x564] sm:$0xff]
    %v1375 = vld [vmem:[#allocation4 + $0x56c] sm:$0xf]
    %v1376 = vld [vmem:[#allocation4 + $0x570] sm:$0xff]
    %v1377 = vld [vmem:[#allocation4 + $0x578] sm:$0xf]
    %v1378 = vld [vmem:[#allocation4 + $0x57c] sm:$0xff]
    %v1379 = vld [vmem:[#allocation4 + $0x584] sm:$0xf]
    %v1380 = vld [vmem:[#allocation4 + $0x588] sm:$0xff]
    %v1381 = vld [vmem:[#allocation4 + $0x590] sm:$0xf]
    %v1382 = vld [vmem:[#allocation4 + $0x594] sm:$0xff]
    %v1383 = vld [vmem:[#allocation4 + $0x59c] sm:$0xf]
    %v1384 = vld [vmem:[#allocation4 + $0x5a0] sm:$0xff]
    %v1385 = vld [vmem:[#allocation4 + $0x5a8] sm:$0xf]
    %v1386 = vld [vmem:[#allocation4 + $0x5ac] sm:$0xff]
    %v1387 = vld [vmem:[#allocation4 + $0x5b4] sm:$0xf]
    %v1388 = vld [vmem:[#allocation4 + $0x5b8] sm:$0xff]
    %v1389 = vld [vmem:[#allocation4 + $0x5c0] sm:$0xf]
    %v1390 = vld [vmem:[#allocation4 + $0x5c4] sm:$0xff]
    %v1391 = vld [vmem:[#allocation4 + $0x5cc] sm:$0xf]
    %v1392 = vld [vmem:[#allocation4 + $0x5d0] sm:$0xff]
    %v1393 = vld [vmem:[#allocation4 + $0x5d8] sm:$0xf]
    %v1394 = vld [vmem:[#allocation4 + $0x5dc] sm:$0xff]
    %v1395 = vld [vmem:[#allocation4 + $0x5e4] sm:$0xf]
    %v1396 = vld [vmem:[#allocation4 + $0x5e8] sm:$0xff]
    %v1397 = vld [vmem:[#allocation4 + $0x5f0] sm:$0xf]
    %v1398 = vld [vmem:[#allocation4 + $0x5f4] sm:$0xff]
    %v1399 = vld [vmem:[#allocation4 + $0x5fc] sm:$0xf]
    %v1400 = vld [vmem:[#allocation4 + $0x600] sm:$0xff]
    %v1401 = vld [vmem:[#allocation4 + $0x608] sm:$0xf]
    %v1402 = vld [vmem:[#allocation4 + $0x60c] sm:$0xff]
    %v1403 = vld [vmem:[#allocation4 + $0x614] sm:$0xf]
    %v1404 = vld [vmem:[#allocation4 + $0x618] sm:$0xff]
    %v1405 = vld [vmem:[#allocation4 + $0x620] sm:$0xf]
    %v1406 = vld [vmem:[#allocation4 + $0x624] sm:$0xff]
    %v1407 = vld [vmem:[#allocation4 + $0x62c] sm:$0xf]
    %v1408 = vld [vmem:[#allocation4 + $0x630] sm:$0xff]
    %v1409 = vld [vmem:[#allocation4 + $0x638] sm:$0xf]
    %v1410 = vld [vmem:[#allocation4 + $0x63c] sm:$0xff]
    %v1411 = vld [vmem:[#allocation4 + $0x644] sm:$0xf]
    %v1412 = vld [vmem:[#allocation4 + $0x648] sm:$0xff]
    %v1413 = vld [vmem:[#allocation4 + $0x650] sm:$0xf]
    %v1414 = vld [vmem:[#allocation4 + $0x654] sm:$0xff]
    %v1415 = vld [vmem:[#allocation4 + $0x65c] sm:$0xf]
    %v1416 = vld [vmem:[#allocation4 + $0x660] sm:$0xff]
    %v1417 = vld [vmem:[#allocation4 + $0x668] sm:$0xf]
    %v1418 = vld [vmem:[#allocation4 + $0x66c] sm:$0xff]
    %v1419 = vld [vmem:[#allocation4 + $0x674] sm:$0xf]
    %v1420 = vld [vmem:[#allocation4 + $0x678] sm:$0xff]
    %v1421 = vld [vmem:[#allocation4 + $0x680] sm:$0xf]
    %v1422 = vld [vmem:[#allocation4 + $0x684] sm:$0xff]
    %v1423 = vld [vmem:[#allocation4 + $0x68c] sm:$0xf]
    %v1424 = vld [vmem:[#allocation4 + $0x690] sm:$0xff]
    %v1425 = vld [vmem:[#allocation4 + $0x698] sm:$0xf]
    %v1426 = vld [vmem:[#allocation4 + $0x69c] sm:$0xff]
    %v1427 = vld [vmem:[#allocation4 + $0x6a4] sm:$0xf]
    %v1428 = vld [vmem:[#allocation4 + $0x6a8] sm:$0xff]
    %v1429 = vld [vmem:[#allocation4 + $0x6b0] sm:$0xf]
    %v1430 = vld [vmem:[#allocation4 + $0x6b4] sm:$0xff]
    %v1431 = vld [vmem:[#allocation4 + $0x6bc] sm:$0xf]
    %v1432 = vld [vmem:[#allocation4 + $0x6c0] sm:$0xff]
    %v1433 = vld [vmem:[#allocation4 + $0x6c8] sm:$0xf]
    %v1434 = vld [vmem:[#allocation4 + $0x6cc] sm:$0xff]
    %v1435 = vld [vmem:[#allocation4 + $0x6d4] sm:$0xf]
    %v1436 = vld [vmem:[#allocation4 + $0x6d8] sm:$0xff]
    %v1437 = vld [vmem:[#allocation4 + $0x6e0] sm:$0xf]
    %v1438 = vld [vmem:[#allocation4 + $0x6e4] sm:$0xff]
    %v1439 = vld [vmem:[#allocation4 + $0x6ec] sm:$0xf]
    %v1440 = vld [vmem:[#allocation4 + $0x6f0] sm:$0xff]
    %v1441 = vld [vmem:[#allocation4 + $0x6f8] sm:$0xf]
    %v1442 = vld [vmem:[#allocation4 + $0x6fc] sm:$0xff]
    %v1443 = vld [vmem:[#allocation4 + $0x704] sm:$0xf]
    %v1444 = vld [vmem:[#allocation4 + $0x708] sm:$0xff]
    %v1445 = vld [vmem:[#allocation4 + $0x710] sm:$0xf]
    %v1446 = vld [vmem:[#allocation4 + $0x714] sm:$0xff]
    %v1447 = vld [vmem:[#allocation4 + $0x71c] sm:$0xf]
    %v1448 = vld [vmem:[#allocation4 + $0x720] sm:$0xff]
    %v1449 = vld [vmem:[#allocation4 + $0x728] sm:$0xf]
    %v1450 = vld [vmem:[#allocation4 + $0x72c] sm:$0xff]
    %v1451 = vld [vmem:[#allocation4 + $0x734] sm:$0xf]
    %v1452 = vld [vmem:[#allocation4 + $0x738] sm:$0xff]
    %v1453 = vld [vmem:[#allocation4 + $0x740] sm:$0xf]
    %v1454 = vld [vmem:[#allocation4 + $0x744] sm:$0xff]
    %v1455 = vld [vmem:[#allocation4 + $0x74c] sm:$0xf]
    %v1456 = vld [vmem:[#allocation4 + $0x750] sm:$0xff]
    %v1457 = vld [vmem:[#allocation4 + $0x758] sm:$0xf]
    %v1458 = vld [vmem:[#allocation4 + $0x75c] sm:$0xff]
    %v1459 = vld [vmem:[#allocation4 + $0x764] sm:$0xf]
    %v1460 = vld [vmem:[#allocation4 + $0x768] sm:$0xff]
    %v1461 = vld [vmem:[#allocation4 + $0x770] sm:$0xf]
    %v1462 = vld [vmem:[#allocation4 + $0x774] sm:$0xff]
    %v1463 = vld [vmem:[#allocation4 + $0x77c] sm:$0xf]
    %v1464 = vld [vmem:[#allocation4 + $0x780] sm:$0xff]
    %v1465 = vld [vmem:[#allocation4 + $0x788] sm:$0xf]
    %v1466 = vld [vmem:[#allocation4 + $0x78c] sm:$0xff]
    %v1467 = vld [vmem:[#allocation4 + $0x794] sm:$0xf]
    %v1468 = vld [vmem:[#allocation4 + $0x798] sm:$0xff]
    %v1469 = vld [vmem:[#allocation4 + $0x7a0] sm:$0xf]
    %v1470 = vld [vmem:[#allocation4 + $0x7a4] sm:$0xff]
    %v1471 = vld [vmem:[#allocation4 + $0x7ac] sm:$0xf]
    %v1472 = vld [vmem:[#allocation4 + $0x7b0] sm:$0xff]
    %v1473 = vld [vmem:[#allocation4 + $0x7b8] sm:$0xf]
    %v1474 = vld [vmem:[#allocation4 + $0x7bc] sm:$0xff]
    %v1475 = vld [vmem:[#allocation4 + $0x7c4] sm:$0xf]
    %v1476 = vld [vmem:[#allocation4 + $0x7c8] sm:$0xff]
    %v1477 = vld [vmem:[#allocation4 + $0x7d0] sm:$0xf]
    %v1478 = vld [vmem:[#allocation4 + $0x7d4] sm:$0xff]
    %v1479 = vld [vmem:[#allocation4 + $0x7dc] sm:$0xf]
    %v1480 = vld [vmem:[#allocation4 + $0x7e0] sm:$0xff]
    %v1481 = vld [vmem:[#allocation4 + $0x7e8] sm:$0xf]
    %v1482 = vld [vmem:[#allocation4 + $0x7ec] sm:$0xff]
    %v1483 = vld [vmem:[#allocation4 + $0x7f4] sm:$0xf]
    %v1484 = vld [vmem:[#allocation4 + $0x7f8] sm:$0xff]
    %v1485 = vld [vmem:[#allocation4 + $0x800] sm:$0xf]
    %v1486 = vld [vmem:[#allocation4 + $0x804] sm:$0xff]
    %v1487 = vld [vmem:[#allocation4 + $0x80c] sm:$0xf]
    %v1488 = vld [vmem:[#allocation4 + $0x810] sm:$0xff]
    %v1489 = vld [vmem:[#allocation4 + $0x818] sm:$0xf]
    %v1490 = vld [vmem:[#allocation4 + $0x81c] sm:$0xff]
    %v1491 = vld [vmem:[#allocation4 + $0x824] sm:$0xf]
    %v1492 = vld [vmem:[#allocation4 + $0x828] sm:$0xff]
    %v1493 = vld [vmem:[#allocation4 + $0x830] sm:$0xf]
    %v1494 = vld [vmem:[#allocation4 + $0x834] sm:$0xff]
    %v1495 = vld [vmem:[#allocation4 + $0x83c] sm:$0xf]
    %v1496 = vld [vmem:[#allocation4 + $0x840] sm:$0xff]
    %v1497 = vld [vmem:[#allocation4 + $0x848] sm:$0xf]
    %v1498 = vld [vmem:[#allocation4 + $0x84c] sm:$0xff]
    %v1499 = vld [vmem:[#allocation4 + $0x854] sm:$0xf]
    %v1500 = vld [vmem:[#allocation4 + $0x858] sm:$0xff]
    %v1501 = vld [vmem:[#allocation4 + $0x860] sm:$0xf]
    %v1502 = vld [vmem:[#allocation4 + $0x864] sm:$0xff]
    %v1503 = vld [vmem:[#allocation4 + $0x86c] sm:$0xf]
    %v1504 = vld [vmem:[#allocation4 + $0x870] sm:$0xff]
    %v1505 = vld [vmem:[#allocation4 + $0x878] sm:$0xf]
    %v1506 = vld [vmem:[#allocation4 + $0x87c] sm:$0xff]
    %v1507 = vld [vmem:[#allocation4 + $0x884] sm:$0xf]
    %v1508 = vld [vmem:[#allocation4 + $0x888] sm:$0xff]
    %v1509 = vld [vmem:[#allocation4 + $0x890] sm:$0xf]
    %v1510 = vld [vmem:[#allocation4 + $0x894] sm:$0xff]
    %v1511 = vld [vmem:[#allocation4 + $0x89c] sm:$0xf]
    %v1512 = vld [vmem:[#allocation4 + $0x8a0] sm:$0xff]
    %v1513 = vld [vmem:[#allocation4 + $0x8a8] sm:$0xf]
    %v1514 = vld [vmem:[#allocation4 + $0x8ac] sm:$0xff]
    %v1515 = vld [vmem:[#allocation4 + $0x8b4] sm:$0xf]
    %v1516 = vld [vmem:[#allocation4 + $0x8b8] sm:$0xff]
    %v1517 = vld [vmem:[#allocation4 + $0x8c0] sm:$0xf]
    %v1518 = vld [vmem:[#allocation4 + $0x8c4] sm:$0xff]
    %v1519 = vld [vmem:[#allocation4 + $0x8cc] sm:$0xf]
    %v1520 = vld [vmem:[#allocation4 + $0x8d0] sm:$0xff]
    %v1521 = vld [vmem:[#allocation4 + $0x8d8] sm:$0xf]
    %v1522 = vld [vmem:[#allocation4 + $0x8dc] sm:$0xff]
    %v1523 = vld [vmem:[#allocation4 + $0x8e4] sm:$0xf]
    %v1524 = vld [vmem:[#allocation4 + $0x8e8] sm:$0xff]
    %v1525 = vld [vmem:[#allocation4 + $0x8f0] sm:$0xf]
    %v1526 = vld [vmem:[#allocation4 + $0x8f4] sm:$0xff]
    %v1527 = vld [vmem:[#allocation4 + $0x8fc] sm:$0xf]
    %v1528 = vld [vmem:[#allocation4 + $0x900] sm:$0x33]
    %v1529 = vld [vmem:[#allocation4 + $0x908] sm:$0x3]
    %v1530 = vunpack.c.l.bf16 %v1144
    %v1531 = vunpack.c.h.bf16 %v1144
    %v1532 = vunpack.c.l.bf16 %v1145
    %v1533 = vunpack.c.l.bf16 %v1146
    %v1534 = vunpack.c.h.bf16 %v1146
    %v1535 = vunpack.c.l.bf16 %v1147
    %v1536 = vunpack.c.l.bf16 %v1148
    %v1537 = vunpack.c.h.bf16 %v1148
    %v1538 = vunpack.c.l.bf16 %v1149
    %v1539 = vunpack.c.l.bf16 %v1150
    %v1540 = vunpack.c.h.bf16 %v1150
    %v1541 = vunpack.c.l.bf16 %v1151
    %v1542 = vunpack.c.l.bf16 %v1152
    %v1543 = vunpack.c.h.bf16 %v1152
    %v1544 = vunpack.c.l.bf16 %v1153
    %v1545 = vunpack.c.l.bf16 %v1154
    %v1546 = vunpack.c.h.bf16 %v1154
    %v1547 = vunpack.c.l.bf16 %v1155
    %v1548 = vunpack.c.l.bf16 %v1156
    %v1549 = vunpack.c.h.bf16 %v1156
    %v1550 = vunpack.c.l.bf16 %v1157
    %v1551 = vunpack.c.l.bf16 %v1158
    %v1552 = vunpack.c.h.bf16 %v1158
    %v1553 = vunpack.c.l.bf16 %v1159
    %v1554 = vunpack.c.l.bf16 %v1160
    %v1555 = vunpack.c.h.bf16 %v1160
    %v1556 = vunpack.c.l.bf16 %v1161
    %v1557 = vunpack.c.l.bf16 %v1162
    %v1558 = vunpack.c.h.bf16 %v1162
    %v1559 = vunpack.c.l.bf16 %v1163
    %v1560 = vunpack.c.l.bf16 %v1164
    %v1561 = vunpack.c.h.bf16 %v1164
    %v1562 = vunpack.c.l.bf16 %v1165
    %v1563 = vunpack.c.l.bf16 %v1166
    %v1564 = vunpack.c.h.bf16 %v1166
    %v1565 = vunpack.c.l.bf16 %v1167
    %v1566 = vunpack.c.l.bf16 %v1168
    %v1567 = vunpack.c.h.bf16 %v1168
    %v1568 = vunpack.c.l.bf16 %v1169
    %v1569 = vunpack.c.l.bf16 %v1170
    %v1570 = vunpack.c.h.bf16 %v1170
    %v1571 = vunpack.c.l.bf16 %v1171
    %v1572 = vunpack.c.l.bf16 %v1172
    %v1573 = vunpack.c.h.bf16 %v1172
    %v1574 = vunpack.c.l.bf16 %v1173
    %v1575 = vunpack.c.l.bf16 %v1174
    %v1576 = vunpack.c.h.bf16 %v1174
    %v1577 = vunpack.c.l.bf16 %v1175
    %v1578 = vunpack.c.l.bf16 %v1176
    %v1579 = vunpack.c.h.bf16 %v1176
    %v1580 = vunpack.c.l.bf16 %v1177
    %v1581 = vunpack.c.l.bf16 %v1178
    %v1582 = vunpack.c.h.bf16 %v1178
    %v1583 = vunpack.c.l.bf16 %v1179
    %v1584 = vunpack.c.l.bf16 %v1180
    %v1585 = vunpack.c.h.bf16 %v1180
    %v1586 = vunpack.c.l.bf16 %v1181
    %v1587 = vunpack.c.l.bf16 %v1182
    %v1588 = vunpack.c.h.bf16 %v1182
    %v1589 = vunpack.c.l.bf16 %v1183
    %v1590 = vunpack.c.l.bf16 %v1184
    %v1591 = vunpack.c.h.bf16 %v1184
    %v1592 = vunpack.c.l.bf16 %v1185
    %v1593 = vunpack.c.l.bf16 %v1186
    %v1594 = vunpack.c.h.bf16 %v1186
    %v1595 = vunpack.c.l.bf16 %v1187
    %v1596 = vunpack.c.l.bf16 %v1188
    %v1597 = vunpack.c.h.bf16 %v1188
    %v1598 = vunpack.c.l.bf16 %v1189
    %v1599 = vunpack.c.l.bf16 %v1190
    %v1600 = vunpack.c.h.bf16 %v1190
    %v1601 = vunpack.c.l.bf16 %v1191
    %v1602 = vunpack.c.l.bf16 %v1192
    %v1603 = vunpack.c.h.bf16 %v1192
    %v1604 = vunpack.c.l.bf16 %v1193
    %v1605 = vunpack.c.l.bf16 %v1194
    %v1606 = vunpack.c.h.bf16 %v1194
    %v1607 = vunpack.c.l.bf16 %v1195
    %v1608 = vunpack.c.l.bf16 %v1196
    %v1609 = vunpack.c.h.bf16 %v1196
    %v1610 = vunpack.c.l.bf16 %v1197
    %v1611 = vunpack.c.l.bf16 %v1198
    %v1612 = vunpack.c.h.bf16 %v1198
    %v1613 = vunpack.c.l.bf16 %v1199
    %v1614 = vunpack.c.l.bf16 %v1200
    %v1615 = vunpack.c.h.bf16 %v1200
    %v1616 = vunpack.c.l.bf16 %v1201
    %v1617 = vunpack.c.l.bf16 %v1202
    %v1618 = vunpack.c.h.bf16 %v1202
    %v1619 = vunpack.c.l.bf16 %v1203
    %v1620 = vunpack.c.l.bf16 %v1204
    %v1621 = vunpack.c.h.bf16 %v1204
    %v1622 = vunpack.c.l.bf16 %v1205
    %v1623 = vunpack.c.l.bf16 %v1206
    %v1624 = vunpack.c.h.bf16 %v1206
    %v1625 = vunpack.c.l.bf16 %v1207
    %v1626 = vunpack.c.l.bf16 %v1208
    %v1627 = vunpack.c.h.bf16 %v1208
    %v1628 = vunpack.c.l.bf16 %v1209
    %v1629 = vunpack.c.l.bf16 %v1210
    %v1630 = vunpack.c.h.bf16 %v1210
    %v1631 = vunpack.c.l.bf16 %v1211
    %v1632 = vunpack.c.l.bf16 %v1212
    %v1633 = vunpack.c.h.bf16 %v1212
    %v1634 = vunpack.c.l.bf16 %v1213
    %v1635 = vunpack.c.l.bf16 %v1214
    %v1636 = vunpack.c.h.bf16 %v1214
    %v1637 = vunpack.c.l.bf16 %v1215
    %v1638 = vunpack.c.l.bf16 %v1216
    %v1639 = vunpack.c.h.bf16 %v1216
    %v1640 = vunpack.c.l.bf16 %v1217
    %v1641 = vunpack.c.l.bf16 %v1218
    %v1642 = vunpack.c.h.bf16 %v1218
    %v1643 = vunpack.c.l.bf16 %v1219
    %v1644 = vunpack.c.l.bf16 %v1220
    %v1645 = vunpack.c.h.bf16 %v1220
    %v1646 = vunpack.c.l.bf16 %v1221
    %v1647 = vunpack.c.l.bf16 %v1222
    %v1648 = vunpack.c.h.bf16 %v1222
    %v1649 = vunpack.c.l.bf16 %v1223
    %v1650 = vunpack.c.l.bf16 %v1224
    %v1651 = vunpack.c.h.bf16 %v1224
    %v1652 = vunpack.c.l.bf16 %v1225
    %v1653 = vunpack.c.l.bf16 %v1226
    %v1654 = vunpack.c.h.bf16 %v1226
    %v1655 = vunpack.c.l.bf16 %v1227
    %v1656 = vunpack.c.l.bf16 %v1228
    %v1657 = vunpack.c.h.bf16 %v1228
    %v1658 = vunpack.c.l.bf16 %v1229
    %v1659 = vunpack.c.l.bf16 %v1230
    %v1660 = vunpack.c.h.bf16 %v1230
    %v1661 = vunpack.c.l.bf16 %v1231
    %v1662 = vunpack.c.l.bf16 %v1232
    %v1663 = vunpack.c.h.bf16 %v1232
    %v1664 = vunpack.c.l.bf16 %v1233
    %v1665 = vunpack.c.l.bf16 %v1234
    %v1666 = vunpack.c.h.bf16 %v1234
    %v1667 = vunpack.c.l.bf16 %v1235
    %v1668 = vunpack.c.l.bf16 %v1236
    %v1669 = vunpack.c.h.bf16 %v1236
    %v1670 = vunpack.c.l.bf16 %v1237
    %v1671 = vunpack.c.l.bf16 %v1238
    %v1672 = vunpack.c.h.bf16 %v1238
    %v1673 = vunpack.c.l.bf16 %v1239
    %v1674 = vunpack.c.l.bf16 %v1240
    %v1675 = vunpack.c.h.bf16 %v1240
    %v1676 = vunpack.c.l.bf16 %v1241
    %v1677 = vunpack.c.l.bf16 %v1242
    %v1678 = vunpack.c.h.bf16 %v1242
    %v1679 = vunpack.c.l.bf16 %v1243
    %v1680 = vunpack.c.l.bf16 %v1244
    %v1681 = vunpack.c.h.bf16 %v1244
    %v1682 = vunpack.c.l.bf16 %v1245
    %v1683 = vunpack.c.l.bf16 %v1246
    %v1684 = vunpack.c.h.bf16 %v1246
    %v1685 = vunpack.c.l.bf16 %v1247
    %v1686 = vunpack.c.l.bf16 %v1248
    %v1687 = vunpack.c.h.bf16 %v1248
    %v1688 = vunpack.c.l.bf16 %v1249
    %v1689 = vunpack.c.l.bf16 %v1250
    %v1690 = vunpack.c.h.bf16 %v1250
    %v1691 = vunpack.c.l.bf16 %v1251
    %v1692 = vunpack.c.l.bf16 %v1252
    %v1693 = vunpack.c.h.bf16 %v1252
    %v1694 = vunpack.c.l.bf16 %v1253
    %v1695 = vunpack.c.l.bf16 %v1254
    %v1696 = vunpack.c.h.bf16 %v1254
    %v1697 = vunpack.c.l.bf16 %v1255
    %v1698 = vunpack.c.l.bf16 %v1256
    %v1699 = vunpack.c.h.bf16 %v1256
    %v1700 = vunpack.c.l.bf16 %v1257
    %v1701 = vunpack.c.l.bf16 %v1258
    %v1702 = vunpack.c.h.bf16 %v1258
    %v1703 = vunpack.c.l.bf16 %v1259
    %v1704 = vunpack.c.l.bf16 %v1260
    %v1705 = vunpack.c.h.bf16 %v1260
    %v1706 = vunpack.c.l.bf16 %v1261
    %v1707 = vunpack.c.l.bf16 %v1262
    %v1708 = vunpack.c.h.bf16 %v1262
    %v1709 = vunpack.c.l.bf16 %v1263
    %v1710 = vunpack.c.l.bf16 %v1264
    %v1711 = vunpack.c.h.bf16 %v1264
    %v1712 = vunpack.c.l.bf16 %v1265
    %v1713 = vunpack.c.l.bf16 %v1266
    %v1714 = vunpack.c.h.bf16 %v1266
    %v1715 = vunpack.c.l.bf16 %v1267
    %v1716 = vunpack.c.l.bf16 %v1268
    %v1717 = vunpack.c.h.bf16 %v1268
    %v1718 = vunpack.c.l.bf16 %v1269
    %v1719 = vunpack.c.l.bf16 %v1270
    %v1720 = vunpack.c.h.bf16 %v1270
    %v1721 = vunpack.c.l.bf16 %v1271
    %v1722 = vunpack.c.l.bf16 %v1272
    %v1723 = vunpack.c.h.bf16 %v1272
    %v1724 = vunpack.c.l.bf16 %v1273
    %v1725 = vunpack.c.l.bf16 %v1274
    %v1726 = vunpack.c.h.bf16 %v1274
    %v1727 = vunpack.c.l.bf16 %v1275
    %v1728 = vunpack.c.l.bf16 %v1276
    %v1729 = vunpack.c.h.bf16 %v1276
    %v1730 = vunpack.c.l.bf16 %v1277
    %v1731 = vunpack.c.l.bf16 %v1278
    %v1732 = vunpack.c.h.bf16 %v1278
    %v1733 = vunpack.c.l.bf16 %v1279
    %v1734 = vunpack.c.l.bf16 %v1280
    %v1735 = vunpack.c.h.bf16 %v1280
    %v1736 = vunpack.c.l.bf16 %v1281
    %v1737 = vunpack.c.l.bf16 %v1282
    %v1738 = vunpack.c.h.bf16 %v1282
    %v1739 = vunpack.c.l.bf16 %v1283
    %v1740 = vunpack.c.l.bf16 %v1284
    %v1741 = vunpack.c.h.bf16 %v1284
    %v1742 = vunpack.c.l.bf16 %v1285
    %v1743 = vunpack.c.l.bf16 %v1286
    %v1744 = vunpack.c.h.bf16 %v1286
    %v1745 = vunpack.c.l.bf16 %v1287
    %v1746 = vunpack.c.l.bf16 %v1288
    %v1747 = vunpack.c.h.bf16 %v1288
    %v1748 = vunpack.c.l.bf16 %v1289
    %v1749 = vunpack.c.l.bf16 %v1290
    %v1750 = vunpack.c.h.bf16 %v1290
    %v1751 = vunpack.c.l.bf16 %v1291
    %v1752 = vunpack.c.l.bf16 %v1292
    %v1753 = vunpack.c.h.bf16 %v1292
    %v1754 = vunpack.c.l.bf16 %v1293
    %v1755 = vunpack.c.l.bf16 %v1294
    %v1756 = vunpack.c.h.bf16 %v1294
    %v1757 = vunpack.c.l.bf16 %v1295
    %v1758 = vunpack.c.l.bf16 %v1296
    %v1759 = vunpack.c.h.bf16 %v1296
    %v1760 = vunpack.c.l.bf16 %v1297
    %v1761 = vunpack.c.l.bf16 %v1298
    %v1762 = vunpack.c.h.bf16 %v1298
    %v1763 = vunpack.c.l.bf16 %v1299
    %v1764 = vunpack.c.l.bf16 %v1300
    %v1765 = vunpack.c.h.bf16 %v1300
    %v1766 = vunpack.c.l.bf16 %v1301
    %v1767 = vunpack.c.l.bf16 %v1302
    %v1768 = vunpack.c.h.bf16 %v1302
    %v1769 = vunpack.c.l.bf16 %v1303
    %v1770 = vunpack.c.l.bf16 %v1304
    %v1771 = vunpack.c.h.bf16 %v1304
    %v1772 = vunpack.c.l.bf16 %v1305
    %v1773 = vunpack.c.l.bf16 %v1306
    %v1774 = vunpack.c.h.bf16 %v1306
    %v1775 = vunpack.c.l.bf16 %v1307
    %v1776 = vunpack.c.l.bf16 %v1308
    %v1777 = vunpack.c.h.bf16 %v1308
    %v1778 = vunpack.c.l.bf16 %v1309
    %v1779 = vunpack.c.l.bf16 %v1310
    %v1780 = vunpack.c.h.bf16 %v1310
    %v1781 = vunpack.c.l.bf16 %v1311
    %v1782 = vunpack.c.l.bf16 %v1312
    %v1783 = vunpack.c.h.bf16 %v1312
    %v1784 = vunpack.c.l.bf16 %v1313
    %v1785 = vunpack.c.l.bf16 %v1314
    %v1786 = vunpack.c.h.bf16 %v1314
    %v1787 = vunpack.c.l.bf16 %v1315
    %v1788 = vunpack.c.l.bf16 %v1316
    %v1789 = vunpack.c.h.bf16 %v1316
    %v1790 = vunpack.c.l.bf16 %v1317
    %v1791 = vunpack.c.l.bf16 %v1318
    %v1792 = vunpack.c.h.bf16 %v1318
    %v1793 = vunpack.c.l.bf16 %v1319
    %v1794 = vunpack.c.l.bf16 %v1320
    %v1795 = vunpack.c.h.bf16 %v1320
    %v1796 = vunpack.c.l.bf16 %v1321
    %v1797 = vunpack.c.l.bf16 %v1322
    %v1798 = vunpack.c.h.bf16 %v1322
    %v1799 = vunpack.c.l.bf16 %v1323
    %v1800 = vunpack.c.l.bf16 %v1324
    %v1801 = vunpack.c.h.bf16 %v1324
    %v1802 = vunpack.c.l.bf16 %v1325
    %v1803 = vunpack.c.l.bf16 %v1326
    %v1804 = vunpack.c.h.bf16 %v1326
    %v1805 = vunpack.c.l.bf16 %v1327
    %v1806 = vunpack.c.l.bf16 %v1328
    %v1807 = vunpack.c.h.bf16 %v1328
    %v1808 = vunpack.c.l.bf16 %v1329
    %v1809 = vunpack.c.l.bf16 %v1330
    %v1810 = vunpack.c.h.bf16 %v1330
    %v1811 = vunpack.c.l.bf16 %v1331
    %v1812 = vunpack.c.l.bf16 %v1332
    %v1813 = vunpack.c.h.bf16 %v1332
    %v1814 = vunpack.c.l.bf16 %v1333
    %v1815 = vunpack.c.l.bf16 %v1334
    %v1816 = vunpack.c.h.bf16 %v1334
    %v1817 = vunpack.c.l.bf16 %v1335
    %v1818 = vunpack.c.l.bf16 %v1336
    %v1819 = vunpack.c.h.bf16 %v1336
    %v1820 = vunpack.c.l.bf16 %v1337
    %v1821 = vunpack.c.l.bf16 %v1338
    %v1822 = vunpack.c.h.bf16 %v1338
    %v1823 = vunpack.c.l.bf16 %v1339
    %v1824 = vunpack.c.l.bf16 %v1340
    %v1825 = vunpack.c.h.bf16 %v1340
    %v1826 = vunpack.c.l.bf16 %v1341
    %v1827 = vunpack.c.l.bf16 %v1342
    %v1828 = vunpack.c.h.bf16 %v1342
    %v1829 = vunpack.c.l.bf16 %v1343
    %v1830 = vunpack.c.l.bf16 %v1344
    %v1831 = vunpack.c.h.bf16 %v1344
    %v1832 = vunpack.c.l.bf16 %v1345
    %v1833 = vunpack.c.l.bf16 %v1346
    %v1834 = vunpack.c.h.bf16 %v1346
    %v1835 = vunpack.c.l.bf16 %v1347
    %v1836 = vunpack.c.l.bf16 %v1348
    %v1837 = vunpack.c.h.bf16 %v1348
    %v1838 = vunpack.c.l.bf16 %v1349
    %v1839 = vunpack.c.l.bf16 %v1350
    %v1840 = vunpack.c.h.bf16 %v1350
    %v1841 = vunpack.c.l.bf16 %v1351
    %v1842 = vunpack.c.l.bf16 %v1352
    %v1843 = vunpack.c.h.bf16 %v1352
    %v1844 = vunpack.c.l.bf16 %v1353
    %v1845 = vunpack.c.l.bf16 %v1354
    %v1846 = vunpack.c.h.bf16 %v1354
    %v1847 = vunpack.c.l.bf16 %v1355
    %v1848 = vunpack.c.l.bf16 %v1356
    %v1849 = vunpack.c.h.bf16 %v1356
    %v1850 = vunpack.c.l.bf16 %v1357
    %v1851 = vunpack.c.l.bf16 %v1358
    %v1852 = vunpack.c.h.bf16 %v1358
    %v1853 = vunpack.c.l.bf16 %v1359
    %v1854 = vunpack.c.l.bf16 %v1360
    %v1855 = vunpack.c.h.bf16 %v1360
    %v1856 = vunpack.c.l.bf16 %v1361
    %v1857 = vunpack.c.l.bf16 %v1362
    %v1858 = vunpack.c.h.bf16 %v1362
    %v1859 = vunpack.c.l.bf16 %v1363
    %v1860 = vunpack.c.l.bf16 %v1364
    %v1861 = vunpack.c.h.bf16 %v1364
    %v1862 = vunpack.c.l.bf16 %v1365
    %v1863 = vunpack.c.l.bf16 %v1366
    %v1864 = vunpack.c.h.bf16 %v1366
    %v1865 = vunpack.c.l.bf16 %v1367
    %v1866 = vunpack.c.l.bf16 %v1368
    %v1867 = vunpack.c.h.bf16 %v1368
    %v1868 = vunpack.c.l.bf16 %v1369
    %v1869 = vunpack.c.l.bf16 %v1370
    %v1870 = vunpack.c.h.bf16 %v1370
    %v1871 = vunpack.c.l.bf16 %v1371
    %v1872 = vunpack.c.l.bf16 %v1372
    %v1873 = vunpack.c.h.bf16 %v1372
    %v1874 = vunpack.c.l.bf16 %v1373
    %v1875 = vunpack.c.l.bf16 %v1374
    %v1876 = vunpack.c.h.bf16 %v1374
    %v1877 = vunpack.c.l.bf16 %v1375
    %v1878 = vunpack.c.l.bf16 %v1376
    %v1879 = vunpack.c.h.bf16 %v1376
    %v1880 = vunpack.c.l.bf16 %v1377
    %v1881 = vunpack.c.l.bf16 %v1378
    %v1882 = vunpack.c.h.bf16 %v1378
    %v1883 = vunpack.c.l.bf16 %v1379
    %v1884 = vunpack.c.l.bf16 %v1380
    %v1885 = vunpack.c.h.bf16 %v1380
    %v1886 = vunpack.c.l.bf16 %v1381
    %v1887 = vunpack.c.l.bf16 %v1382
    %v1888 = vunpack.c.h.bf16 %v1382
    %v1889 = vunpack.c.l.bf16 %v1383
    %v1890 = vunpack.c.l.bf16 %v1384
    %v1891 = vunpack.c.h.bf16 %v1384
    %v1892 = vunpack.c.l.bf16 %v1385
    %v1893 = vunpack.c.l.bf16 %v1386
    %v1894 = vunpack.c.h.bf16 %v1386
    %v1895 = vunpack.c.l.bf16 %v1387
    %v1896 = vunpack.c.l.bf16 %v1388
    %v1897 = vunpack.c.h.bf16 %v1388
    %v1898 = vunpack.c.l.bf16 %v1389
    %v1899 = vunpack.c.l.bf16 %v1390
    %v1900 = vunpack.c.h.bf16 %v1390
    %v1901 = vunpack.c.l.bf16 %v1391
    %v1902 = vunpack.c.l.bf16 %v1392
    %v1903 = vunpack.c.h.bf16 %v1392
    %v1904 = vunpack.c.l.bf16 %v1393
    %v1905 = vunpack.c.l.bf16 %v1394
    %v1906 = vunpack.c.h.bf16 %v1394
    %v1907 = vunpack.c.l.bf16 %v1395
    %v1908 = vunpack.c.l.bf16 %v1396
    %v1909 = vunpack.c.h.bf16 %v1396
    %v1910 = vunpack.c.l.bf16 %v1397
    %v1911 = vunpack.c.l.bf16 %v1398
    %v1912 = vunpack.c.h.bf16 %v1398
    %v1913 = vunpack.c.l.bf16 %v1399
    %v1914 = vunpack.c.l.bf16 %v1400
    %v1915 = vunpack.c.h.bf16 %v1400
    %v1916 = vunpack.c.l.bf16 %v1401
    %v1917 = vunpack.c.l.bf16 %v1402
    %v1918 = vunpack.c.h.bf16 %v1402
    %v1919 = vunpack.c.l.bf16 %v1403
    %v1920 = vunpack.c.l.bf16 %v1404
    %v1921 = vunpack.c.h.bf16 %v1404
    %v1922 = vunpack.c.l.bf16 %v1405
    %v1923 = vunpack.c.l.bf16 %v1406
    %v1924 = vunpack.c.h.bf16 %v1406
    %v1925 = vunpack.c.l.bf16 %v1407
    %v1926 = vunpack.c.l.bf16 %v1408
    %v1927 = vunpack.c.h.bf16 %v1408
    %v1928 = vunpack.c.l.bf16 %v1409
    %v1929 = vunpack.c.l.bf16 %v1410
    %v1930 = vunpack.c.h.bf16 %v1410
    %v1931 = vunpack.c.l.bf16 %v1411
    %v1932 = vunpack.c.l.bf16 %v1412
    %v1933 = vunpack.c.h.bf16 %v1412
    %v1934 = vunpack.c.l.bf16 %v1413
    %v1935 = vunpack.c.l.bf16 %v1414
    %v1936 = vunpack.c.h.bf16 %v1414
    %v1937 = vunpack.c.l.bf16 %v1415
    %v1938 = vunpack.c.l.bf16 %v1416
    %v1939 = vunpack.c.h.bf16 %v1416
    %v1940 = vunpack.c.l.bf16 %v1417
    %v1941 = vunpack.c.l.bf16 %v1418
    %v1942 = vunpack.c.h.bf16 %v1418
    %v1943 = vunpack.c.l.bf16 %v1419
    %v1944 = vunpack.c.l.bf16 %v1420
    %v1945 = vunpack.c.h.bf16 %v1420
    %v1946 = vunpack.c.l.bf16 %v1421
    %v1947 = vunpack.c.l.bf16 %v1422
    %v1948 = vunpack.c.h.bf16 %v1422
    %v1949 = vunpack.c.l.bf16 %v1423
    %v1950 = vunpack.c.l.bf16 %v1424
    %v1951 = vunpack.c.h.bf16 %v1424
    %v1952 = vunpack.c.l.bf16 %v1425
    %v1953 = vunpack.c.l.bf16 %v1426
    %v1954 = vunpack.c.h.bf16 %v1426
    %v1955 = vunpack.c.l.bf16 %v1427
    %v1956 = vunpack.c.l.bf16 %v1428
    %v1957 = vunpack.c.h.bf16 %v1428
    %v1958 = vunpack.c.l.bf16 %v1429
    %v1959 = vunpack.c.l.bf16 %v1430
    %v1960 = vunpack.c.h.bf16 %v1430
    %v1961 = vunpack.c.l.bf16 %v1431
    %v1962 = vunpack.c.l.bf16 %v1432
    %v1963 = vunpack.c.h.bf16 %v1432
    %v1964 = vunpack.c.l.bf16 %v1433
    %v1965 = vunpack.c.l.bf16 %v1434
    %v1966 = vunpack.c.h.bf16 %v1434
    %v1967 = vunpack.c.l.bf16 %v1435
    %v1968 = vunpack.c.l.bf16 %v1436
    %v1969 = vunpack.c.h.bf16 %v1436
    %v1970 = vunpack.c.l.bf16 %v1437
    %v1971 = vunpack.c.l.bf16 %v1438
    %v1972 = vunpack.c.h.bf16 %v1438
    %v1973 = vunpack.c.l.bf16 %v1439
    %v1974 = vunpack.c.l.bf16 %v1440
    %v1975 = vunpack.c.h.bf16 %v1440
    %v1976 = vunpack.c.l.bf16 %v1441
    %v1977 = vunpack.c.l.bf16 %v1442
    %v1978 = vunpack.c.h.bf16 %v1442
    %v1979 = vunpack.c.l.bf16 %v1443
    %v1980 = vunpack.c.l.bf16 %v1444
    %v1981 = vunpack.c.h.bf16 %v1444
    %v1982 = vunpack.c.l.bf16 %v1445
    %v1983 = vunpack.c.l.bf16 %v1446
    %v1984 = vunpack.c.h.bf16 %v1446
    %v1985 = vunpack.c.l.bf16 %v1447
    %v1986 = vunpack.c.l.bf16 %v1448
    %v1987 = vunpack.c.h.bf16 %v1448
    %v1988 = vunpack.c.l.bf16 %v1449
    %v1989 = vunpack.c.l.bf16 %v1450
    %v1990 = vunpack.c.h.bf16 %v1450
    %v1991 = vunpack.c.l.bf16 %v1451
    %v1992 = vunpack.c.l.bf16 %v1452
    %v1993 = vunpack.c.h.bf16 %v1452
    %v1994 = vunpack.c.l.bf16 %v1453
    %v1995 = vunpack.c.l.bf16 %v1454
    %v1996 = vunpack.c.h.bf16 %v1454
    %v1997 = vunpack.c.l.bf16 %v1455
    %v1998 = vunpack.c.l.bf16 %v1456
    %v1999 = vunpack.c.h.bf16 %v1456
    %v2000 = vunpack.c.l.bf16 %v1457
    %v2001 = vunpack.c.l.bf16 %v1458
    %v2002 = vunpack.c.h.bf16 %v1458
    %v2003 = vunpack.c.l.bf16 %v1459
    %v2004 = vunpack.c.l.bf16 %v1460
    %v2005 = vunpack.c.h.bf16 %v1460
    %v2006 = vunpack.c.l.bf16 %v1461
    %v2007 = vunpack.c.l.bf16 %v1462
    %v2008 = vunpack.c.h.bf16 %v1462
    %v2009 = vunpack.c.l.bf16 %v1463
    %v2010 = vunpack.c.l.bf16 %v1464
    %v2011 = vunpack.c.h.bf16 %v1464
    %v2012 = vunpack.c.l.bf16 %v1465
    %v2013 = vunpack.c.l.bf16 %v1466
    %v2014 = vunpack.c.h.bf16 %v1466
    %v2015 = vunpack.c.l.bf16 %v1467
    %v2016 = vunpack.c.l.bf16 %v1468
    %v2017 = vunpack.c.h.bf16 %v1468
    %v2018 = vunpack.c.l.bf16 %v1469
    %v2019 = vunpack.c.l.bf16 %v1470
    %v2020 = vunpack.c.h.bf16 %v1470
    %v2021 = vunpack.c.l.bf16 %v1471
    %v2022 = vunpack.c.l.bf16 %v1472
    %v2023 = vunpack.c.h.bf16 %v1472
    %v2024 = vunpack.c.l.bf16 %v1473
    %v2025 = vunpack.c.l.bf16 %v1474
    %v2026 = vunpack.c.h.bf16 %v1474
    %v2027 = vunpack.c.l.bf16 %v1475
    %v2028 = vunpack.c.l.bf16 %v1476
    %v2029 = vunpack.c.h.bf16 %v1476
    %v2030 = vunpack.c.l.bf16 %v1477
    %v2031 = vunpack.c.l.bf16 %v1478
    %v2032 = vunpack.c.h.bf16 %v1478
    %v2033 = vunpack.c.l.bf16 %v1479
    %v2034 = vunpack.c.l.bf16 %v1480
    %v2035 = vunpack.c.h.bf16 %v1480
    %v2036 = vunpack.c.l.bf16 %v1481
    %v2037 = vunpack.c.l.bf16 %v1482
    %v2038 = vunpack.c.h.bf16 %v1482
    %v2039 = vunpack.c.l.bf16 %v1483
    %v2040 = vunpack.c.l.bf16 %v1484
    %v2041 = vunpack.c.h.bf16 %v1484
    %v2042 = vunpack.c.l.bf16 %v1485
    %v2043 = vunpack.c.l.bf16 %v1486
    %v2044 = vunpack.c.h.bf16 %v1486
    %v2045 = vunpack.c.l.bf16 %v1487
    %v2046 = vunpack.c.l.bf16 %v1488
    %v2047 = vunpack.c.h.bf16 %v1488
    %v2048 = vunpack.c.l.bf16 %v1489
    %v2049 = vunpack.c.l.bf16 %v1490
    %v2050 = vunpack.c.h.bf16 %v1490
    %v2051 = vunpack.c.l.bf16 %v1491
    %v2052 = vunpack.c.l.bf16 %v1492
    %v2053 = vunpack.c.h.bf16 %v1492
    %v2054 = vunpack.c.l.bf16 %v1493
    %v2055 = vunpack.c.l.bf16 %v1494
    %v2056 = vunpack.c.h.bf16 %v1494
    %v2057 = vunpack.c.l.bf16 %v1495
    %v2058 = vunpack.c.l.bf16 %v1496
    %v2059 = vunpack.c.h.bf16 %v1496
    %v2060 = vunpack.c.l.bf16 %v1497
    %v2061 = vunpack.c.l.bf16 %v1498
    %v2062 = vunpack.c.h.bf16 %v1498
    %v2063 = vunpack.c.l.bf16 %v1499
    %v2064 = vunpack.c.l.bf16 %v1500
    %v2065 = vunpack.c.h.bf16 %v1500
    %v2066 = vunpack.c.l.bf16 %v1501
    %v2067 = vunpack.c.l.bf16 %v1502
    %v2068 = vunpack.c.h.bf16 %v1502
    %v2069 = vunpack.c.l.bf16 %v1503
    %v2070 = vunpack.c.l.bf16 %v1504
    %v2071 = vunpack.c.h.bf16 %v1504
    %v2072 = vunpack.c.l.bf16 %v1505
    %v2073 = vunpack.c.l.bf16 %v1506
    %v2074 = vunpack.c.h.bf16 %v1506
    %v2075 = vunpack.c.l.bf16 %v1507
    %v2076 = vunpack.c.l.bf16 %v1508
    %v2077 = vunpack.c.h.bf16 %v1508
    %v2078 = vunpack.c.l.bf16 %v1509
    %v2079 = vunpack.c.l.bf16 %v1510
    %v2080 = vunpack.c.h.bf16 %v1510
    %v2081 = vunpack.c.l.bf16 %v1511
    %v2082 = vunpack.c.l.bf16 %v1512
    %v2083 = vunpack.c.h.bf16 %v1512
    %v2084 = vunpack.c.l.bf16 %v1513
    %v2085 = vunpack.c.l.bf16 %v1514
    %v2086 = vunpack.c.h.bf16 %v1514
    %v2087 = vunpack.c.l.bf16 %v1515
    %v2088 = vunpack.c.l.bf16 %v1516
    %v2089 = vunpack.c.h.bf16 %v1516
    %v2090 = vunpack.c.l.bf16 %v1517
    %v2091 = vunpack.c.l.bf16 %v1518
    %v2092 = vunpack.c.h.bf16 %v1518
    %v2093 = vunpack.c.l.bf16 %v1519
    %v2094 = vunpack.c.l.bf16 %v1520
    %v2095 = vunpack.c.h.bf16 %v1520
    %v2096 = vunpack.c.l.bf16 %v1521
    %v2097 = vunpack.c.l.bf16 %v1522
    %v2098 = vunpack.c.h.bf16 %v1522
    %v2099 = vunpack.c.l.bf16 %v1523
    %v2100 = vunpack.c.l.bf16 %v1524
    %v2101 = vunpack.c.h.bf16 %v1524
    %v2102 = vunpack.c.l.bf16 %v1525
    %v2103 = vunpack.c.l.bf16 %v1526
    %v2104 = vunpack.c.h.bf16 %v1526
    %v2105 = vunpack.c.l.bf16 %v1527
    %v2106 = vunpack.c.l.bf16 %v1528
    %v2107 = vunpack.c.h.bf16 %v1528
    %v2108 = vunpack.c.l.bf16 %v1529
    %vm2109 = vcmask 23552
    %v2111 = vsel %vm2109, %v1143, 0
    %vm2113 = vcmask 1042432
    %v2115 = vsel %vm2113, %v2106, 0
    %v2118 = vsel %vm2113, %v2107, 0
    %v2121 = vsel %vm2113, %v2108, 0
    %2123 = vmatprep.subr.mxu0 %v1531
    %2124 = vmatpush1.msra.mxu0 %v1530
    %2125 = vmatprep.subr.mxu0 %v1534
    %2126 = vmatpush1.msra.mxu0 %v1533
    %2127 = vmatprep.subr.mxu0 %v1537
    %2128 = vmatpush1.msra.mxu0 %v1536
    %2129 = vmatprep.subr.mxu0 %v1540
    %2130 = vmatpush1.msra.mxu0 %v1539
    %2131 = vmatprep.subr.mxu0 %v1543
    %2132 = vmatpush1.msra.mxu0 %v1542
    %2133 = vmatprep.subr.mxu0 %v1546
    %2134 = vmatpush1.msra.mxu0 %v1545
    %2135 = vmatprep.subr.mxu0 %v1549
    %2136 = vmatpush1.msra.mxu0 %v1548
    %2137 = vmatprep.subr.mxu0 %v1552
    %2138 = vmatpush1.msra.mxu0 %v1551
    %2139 = vmatprep.subr.mxu0 %v1555
    %2140 = vmatpush1.msra.mxu0 %v1554
    %2141 = vmatprep.subr.mxu0 %v1558
    %2142 = vmatpush1.msra.mxu0 %v1557
    %2143 = vmatprep.subr.mxu0 %v1561
    %2144 = vmatpush1.msra.mxu0 %v1560
    %2145 = vmatprep.subr.mxu0 %v1564
    %2146 = vmatpush1.msra.mxu0 %v1563
    %2147 = vmatprep.subr.mxu0 %v1567
    %2148 = vmatpush1.msra.mxu0 %v1566
    %2149 = vmatprep.subr.mxu0 %v1570
    %2150 = vmatpush1.msra.mxu0 %v1569
    %2151 = vmatprep.subr.mxu0 %v1573
    %2152 = vmatpush1.msra.mxu0 %v1572
    %2153 = vmatprep.subr.mxu0 %v1576
    %2154 = vmatpush1.msra.mxu0 %v1575
    %2155 = vmatprep.subr.mxu0 %v1579
    %2156 = vmatpush1.msra.mxu0 %v1578
    %2157 = vmatprep.subr.mxu0 %v1582
    %2158 = vmatpush1.msra.mxu0 %v1581
    %2159 = vmatprep.subr.mxu0 %v1585
    %2160 = vmatpush1.msra.mxu0 %v1584
    %2161 = vmatprep.subr.mxu0 %v1588
    %2162 = vmatpush1.msra.mxu0 %v1587
    %2163 = vmatprep.subr.mxu0 %v1591
    %2164 = vmatpush1.msra.mxu0 %v1590
    %2165 = vmatprep.subr.mxu0 %v1594
    %2166 = vmatpush1.msra.mxu0 %v1593
    %2167 = vmatprep.subr.mxu0 %v1597
    %2168 = vmatpush1.msra.mxu0 %v1596
    %2169 = vmatprep.subr.mxu0 %v1600
    %2170 = vmatpush1.msra.mxu0 %v1599
    %2171 = vmatprep.subr.mxu0 %v1603
    %2172 = vmatpush1.msra.mxu0 %v1602
    %2173 = vmatprep.subr.mxu0 %v1606
    %2174 = vmatpush1.msra.mxu0 %v1605
    %2175 = vmatprep.subr.mxu0 %v1609
    %2176 = vmatpush1.msra.mxu0 %v1608
    %2177 = vmatprep.subr.mxu0 %v1612
    %2178 = vmatpush1.msra.mxu0 %v1611
    %2179 = vmatprep.subr.mxu0 %v1615
    %2180 = vmatpush1.msra.mxu0 %v1614
    %2181 = vmatprep.subr.mxu0 %v1618
    %2182 = vmatpush1.msra.mxu0 %v1617
    %2183 = vmatprep.subr.mxu0 %v1621
    %2184 = vmatpush1.msra.mxu0 %v1620
    %2185 = vmatprep.subr.mxu0 %v1624
    %2186 = vmatpush1.msra.mxu0 %v1623
    %2187 = vmatprep.mubr.f32.mxu0 %v1132
    %2188 = vmatmul.mubr.f32.gmra.mrb[0].mxu0 %v1131
    %v2189 = vpop.f32.mrb[0].mxu0
    %v2190 = vadd.f32 0.0, %v2189
    %v2191 = vpop.f32.mrb[0].mxu0
    %v2192 = vadd.f32 0.0, %v2191
    %2193 = vdwg.mxu0
    %2194 = vmatprep.subr.mxu0 %v1627
    %2195 = vmatpush1.msra.mxu0 %v1626
    %2196 = vmatprep.subr.mxu0 %v1630
    %2197 = vmatpush1.msra.mxu0 %v1629
    %2198 = vmatprep.subr.mxu0 %v1633
    %2199 = vmatpush1.msra.mxu0 %v1632
    %2200 = vmatprep.subr.mxu0 %v1636
    %2201 = vmatpush1.msra.mxu0 %v1635
    %2202 = vmatprep.subr.mxu0 %v1639
    %2203 = vmatpush1.msra.mxu0 %v1638
    %2204 = vmatprep.subr.mxu0 %v1642
    %2205 = vmatpush1.msra.mxu0 %v1641
    %2206 = vmatprep.subr.mxu0 %v1645
    %2207 = vmatpush1.msra.mxu0 %v1644
    %2208 = vmatprep.subr.mxu0 %v1648
    %2209 = vmatpush1.msra.mxu0 %v1647
    %2210 = vmatprep.subr.mxu0 %v1651
    %2211 = vmatpush1.msra.mxu0 %v1650
    %2212 = vmatprep.subr.mxu0 %v1654
    %2213 = vmatpush1.msra.mxu0 %v1653
    %2214 = vmatprep.subr.mxu0 %v1657
    %2215 = vmatpush1.msra.mxu0 %v1656
    %2216 = vmatprep.subr.mxu0 %v1660
    %2217 = vmatpush1.msra.mxu0 %v1659
    %2218 = vmatprep.subr.mxu0 %v1663
    %2219 = vmatpush1.msra.mxu0 %v1662
    %2220 = vmatprep.subr.mxu0 %v1666
    %2221 = vmatpush1.msra.mxu0 %v1665
    %2222 = vmatprep.subr.mxu0 %v1669
    %2223 = vmatpush1.msra.mxu0 %v1668
    %2224 = vmatprep.subr.mxu0 %v1672
    %2225 = vmatpush1.msra.mxu0 %v1671
    %2226 = vmatprep.subr.mxu0 %v1675
    %2227 = vmatpush1.msra.mxu0 %v1674
    %2228 = vmatprep.subr.mxu0 %v1678
    %2229 = vmatpush1.msra.mxu0 %v1677
    %2230 = vmatprep.subr.mxu0 %v1681
    %2231 = vmatpush1.msra.mxu0 %v1680
    %2232 = vmatprep.subr.mxu0 %v1684
    %2233 = vmatpush1.msra.mxu0 %v1683
    %2234 = vmatprep.subr.mxu0 %v1687
    %2235 = vmatpush1.msra.mxu0 %v1686
    %2236 = vmatprep.subr.mxu0 %v1690
    %2237 = vmatpush1.msra.mxu0 %v1689
    %2238 = vmatprep.subr.mxu0 %v1693
    %2239 = vmatpush1.msra.mxu0 %v1692
    %2240 = vmatprep.subr.mxu0 %v1696
    %2241 = vmatpush1.msra.mxu0 %v1695
    %2242 = vmatprep.subr.mxu0 %v1699
    %2243 = vmatpush1.msra.mxu0 %v1698
    %2244 = vmatprep.subr.mxu0 %v1702
    %2245 = vmatpush1.msra.mxu0 %v1701
    %2246 = vmatprep.subr.mxu0 %v1705
    %2247 = vmatpush1.msra.mxu0 %v1704
    %2248 = vmatprep.subr.mxu0 %v1708
    %2249 = vmatpush1.msra.mxu0 %v1707
    %2250 = vmatprep.subr.mxu0 %v1711
    %2251 = vmatpush1.msra.mxu0 %v1710
    %2252 = vmatprep.subr.mxu0 %v1714
    %2253 = vmatpush1.msra.mxu0 %v1713
    %2254 = vmatprep.subr.mxu0 %v1717
    %2255 = vmatpush1.msra.mxu0 %v1716
    %2256 = vmatprep.subr.mxu0 %v1720
    %2257 = vmatpush1.msra.mxu0 %v1719
    %2258 = vmatprep.mubr.f32.mxu0 %v1134
    %2259 = vmatmul.mubr.f32.gmra.mrb[0].mxu0 %v1133
    %v2260 = vpop.f32.mrb[0].mxu0
    %v2261 = vadd.f32 %v2190, %v2260
    %v2262 = vpop.f32.mrb[0].mxu0
    %v2263 = vadd.f32 %v2192, %v2262
    %2264 = vdwg.mxu0
    %2265 = vmatprep.subr.mxu0 %v1723
    %2266 = vmatpush1.msra.mxu0 %v1722
    %2267 = vmatprep.subr.mxu0 %v1726
    %2268 = vmatpush1.msra.mxu0 %v1725
    %2269 = vmatprep.subr.mxu0 %v1729
    %2270 = vmatpush1.msra.mxu0 %v1728
    %2271 = vmatprep.subr.mxu0 %v1732
    %2272 = vmatpush1.msra.mxu0 %v1731
    %2273 = vmatprep.subr.mxu0 %v1735
    %2274 = vmatpush1.msra.mxu0 %v1734
    %2275 = vmatprep.subr.mxu0 %v1738
    %2276 = vmatpush1.msra.mxu0 %v1737
    %2277 = vmatprep.subr.mxu0 %v1741
    %2278 = vmatpush1.msra.mxu0 %v1740
    %2279 = vmatprep.subr.mxu0 %v1744
    %2280 = vmatpush1.msra.mxu0 %v1743
    %2281 = vmatprep.subr.mxu0 %v1747
    %2282 = vmatpush1.msra.mxu0 %v1746
    %2283 = vmatprep.subr.mxu0 %v1750
    %2284 = vmatpush1.msra.mxu0 %v1749
    %2285 = vmatprep.subr.mxu0 %v1753
    %2286 = vmatpush1.msra.mxu0 %v1752
    %2287 = vmatprep.subr.mxu0 %v1756
    %2288 = vmatpush1.msra.mxu0 %v1755
    %2289 = vmatprep.subr.mxu0 %v1759
    %2290 = vmatpush1.msra.mxu0 %v1758
    %2291 = vmatprep.subr.mxu0 %v1762
    %2292 = vmatpush1.msra.mxu0 %v1761
    %2293 = vmatprep.subr.mxu0 %v1765
    %2294 = vmatpush1.msra.mxu0 %v1764
    %2295 = vmatprep.subr.mxu0 %v1768
    %2296 = vmatpush1.msra.mxu0 %v1767
    %2297 = vmatprep.subr.mxu0 %v1771
    %2298 = vmatpush1.msra.mxu0 %v1770
    %2299 = vmatprep.subr.mxu0 %v1774
    %2300 = vmatpush1.msra.mxu0 %v1773
    %2301 = vmatprep.subr.mxu0 %v1777
    %2302 = vmatpush1.msra.mxu0 %v1776
    %2303 = vmatprep.subr.mxu0 %v1780
    %2304 = vmatpush1.msra.mxu0 %v1779
    %2305 = vmatprep.subr.mxu0 %v1783
    %2306 = vmatpush1.msra.mxu0 %v1782
    %2307 = vmatprep.subr.mxu0 %v1786
    %2308 = vmatpush1.msra.mxu0 %v1785
    %2309 = vmatprep.subr.mxu0 %v1789
    %2310 = vmatpush1.msra.mxu0 %v1788
    %2311 = vmatprep.subr.mxu0 %v1792
    %2312 = vmatpush1.msra.mxu0 %v1791
    %2313 = vmatprep.subr.mxu0 %v1795
    %2314 = vmatpush1.msra.mxu0 %v1794
    %2315 = vmatprep.subr.mxu0 %v1798
    %2316 = vmatpush1.msra.mxu0 %v1797
    %2317 = vmatprep.subr.mxu0 %v1801
    %2318 = vmatpush1.msra.mxu0 %v1800
    %2319 = vmatprep.subr.mxu0 %v1804
    %2320 = vmatpush1.msra.mxu0 %v1803
    %2321 = vmatprep.subr.mxu0 %v1807
    %2322 = vmatpush1.msra.mxu0 %v1806
    %2323 = vmatprep.subr.mxu0 %v1810
    %2324 = vmatpush1.msra.mxu0 %v1809
    %2325 = vmatprep.subr.mxu0 %v1813
    %2326 = vmatpush1.msra.mxu0 %v1812
    %2327 = vmatprep.subr.mxu0 %v1816
    %2328 = vmatpush1.msra.mxu0 %v1815
    %2329 = vmatprep.mubr.f32.mxu0 %v1136
    %2330 = vmatmul.mubr.f32.gmra.mrb[0].mxu0 %v1135
    %v2331 = vpop.f32.mrb[0].mxu0
    %v2332 = vadd.f32 %v2261, %v2331
    %v2333 = vpop.f32.mrb[0].mxu0
    %v2334 = vadd.f32 %v2263, %v2333
    %2335 = vdwg.mxu0
    %2336 = vmatprep.subr.mxu0 %v1819
    %2337 = vmatpush1.msra.mxu0 %v1818
    %2338 = vmatprep.subr.mxu0 %v1822
    %2339 = vmatpush1.msra.mxu0 %v1821
    %2340 = vmatprep.subr.mxu0 %v1825
    %2341 = vmatpush1.msra.mxu0 %v1824
    %2342 = vmatprep.subr.mxu0 %v1828
    %2343 = vmatpush1.msra.mxu0 %v1827
    %2344 = vmatprep.subr.mxu0 %v1831
    %2345 = vmatpush1.msra.mxu0 %v1830
    %2346 = vmatprep.subr.mxu0 %v1834
    %2347 = vmatpush1.msra.mxu0 %v1833
    %2348 = vmatprep.subr.mxu0 %v1837
    %2349 = vmatpush1.msra.mxu0 %v1836
    %2350 = vmatprep.subr.mxu0 %v1840
    %2351 = vmatpush1.msra.mxu0 %v1839
    %2352 = vmatprep.subr.mxu0 %v1843
    %2353 = vmatpush1.msra.mxu0 %v1842
    %2354 = vmatprep.subr.mxu0 %v1846
    %2355 = vmatpush1.msra.mxu0 %v1845
    %2356 = vmatprep.subr.mxu0 %v1849
    %2357 = vmatpush1.msra.mxu0 %v1848
    %2358 = vmatprep.subr.mxu0 %v1852
    %2359 = vmatpush1.msra.mxu0 %v1851
    %2360 = vmatprep.subr.mxu0 %v1855
    %2361 = vmatpush1.msra.mxu0 %v1854
    %2362 = vmatprep.subr.mxu0 %v1858
    %2363 = vmatpush1.msra.mxu0 %v1857
    %2364 = vmatprep.subr.mxu0 %v1861
    %2365 = vmatpush1.msra.mxu0 %v1860
    %2366 = vmatprep.subr.mxu0 %v1864
    %2367 = vmatpush1.msra.mxu0 %v1863
    %2368 = vmatprep.subr.mxu0 %v1867
    %2369 = vmatpush1.msra.mxu0 %v1866
    %2370 = vmatprep.subr.mxu0 %v1870
    %2371 = vmatpush1.msra.mxu0 %v1869
    %2372 = vmatprep.subr.mxu0 %v1873
    %2373 = vmatpush1.msra.mxu0 %v1872
    %2374 = vmatprep.subr.mxu0 %v1876
    %2375 = vmatpush1.msra.mxu0 %v1875
    %2376 = vmatprep.subr.mxu0 %v1879
    %2377 = vmatpush1.msra.mxu0 %v1878
    %2378 = vmatprep.subr.mxu0 %v1882
    %2379 = vmatpush1.msra.mxu0 %v1881
    %2380 = vmatprep.subr.mxu0 %v1885
    %2381 = vmatpush1.msra.mxu0 %v1884
    %2382 = vmatprep.subr.mxu0 %v1888
    %2383 = vmatpush1.msra.mxu0 %v1887
    %2384 = vmatprep.subr.mxu0 %v1891
    %2385 = vmatpush1.msra.mxu0 %v1890
    %2386 = vmatprep.subr.mxu0 %v1894
    %2387 = vmatpush1.msra.mxu0 %v1893
    %2388 = vmatprep.subr.mxu0 %v1897
    %2389 = vmatpush1.msra.mxu0 %v1896
    %2390 = vmatprep.subr.mxu0 %v1900
    %2391 = vmatpush1.msra.mxu0 %v1899
    %2392 = vmatprep.subr.mxu0 %v1903
    %2393 = vmatpush1.msra.mxu0 %v1902
    %2394 = vmatprep.subr.mxu0 %v1906
    %2395 = vmatpush1.msra.mxu0 %v1905
    %2396 = vmatprep.subr.mxu0 %v1909
    %2397 = vmatpush1.msra.mxu0 %v1908
    %2398 = vmatprep.subr.mxu0 %v1912
    %2399 = vmatpush1.msra.mxu0 %v1911
    %2400 = vmatprep.mubr.f32.mxu0 %v1138
    %2401 = vmatmul.mubr.f32.gmra.mrb[0].mxu0 %v1137
    %v2402 = vpop.f32.mrb[0].mxu0
    %v2403 = vadd.f32 %v2332, %v2402
    %v2404 = vpop.f32.mrb[0].mxu0
    %v2405 = vadd.f32 %v2334, %v2404
    %2406 = vdwg.mxu0
    %2407 = vmatprep.subr.mxu0 %v1915
    %2408 = vmatpush1.msra.mxu0 %v1914
    %2409 = vmatprep.subr.mxu0 %v1918
    %2410 = vmatpush1.msra.mxu0 %v1917
    %2411 = vmatprep.subr.mxu0 %v1921
    %2412 = vmatpush1.msra.mxu0 %v1920
    %2413 = vmatprep.subr.mxu0 %v1924
    %2414 = vmatpush1.msra.mxu0 %v1923
    %2415 = vmatprep.subr.mxu0 %v1927
    %2416 = vmatpush1.msra.mxu0 %v1926
    %2417 = vmatprep.subr.mxu0 %v1930
    %2418 = vmatpush1.msra.mxu0 %v1929
    %2419 = vmatprep.subr.mxu0 %v1933
    %2420 = vmatpush1.msra.mxu0 %v1932
    %2421 = vmatprep.subr.mxu0 %v1936
    %2422 = vmatpush1.msra.mxu0 %v1935
    %2423 = vmatprep.subr.mxu0 %v1939
    %2424 = vmatpush1.msra.mxu0 %v1938
    %2425 = vmatprep.subr.mxu0 %v1942
    %2426 = vmatpush1.msra.mxu0 %v1941
    %2427 = vmatprep.subr.mxu0 %v1945
    %2428 = vmatpush1.msra.mxu0 %v1944
    %2429 = vmatprep.subr.mxu0 %v1948
    %2430 = vmatpush1.msra.mxu0 %v1947
    %2431 = vmatprep.subr.mxu0 %v1951
    %2432 = vmatpush1.msra.mxu0 %v1950
    %2433 = vmatprep.subr.mxu0 %v1954
    %2434 = vmatpush1.msra.mxu0 %v1953
    %2435 = vmatprep.subr.mxu0 %v1957
    %2436 = vmatpush1.msra.mxu0 %v1956
    %2437 = vmatprep.subr.mxu0 %v1960
    %2438 = vmatpush1.msra.mxu0 %v1959
    %2439 = vmatprep.subr.mxu0 %v1963
    %2440 = vmatpush1.msra.mxu0 %v1962
    %2441 = vmatprep.subr.mxu0 %v1966
    %2442 = vmatpush1.msra.mxu0 %v1965
    %2443 = vmatprep.subr.mxu0 %v1969
    %2444 = vmatpush1.msra.mxu0 %v1968
    %2445 = vmatprep.subr.mxu0 %v1972
    %2446 = vmatpush1.msra.mxu0 %v1971
    %2447 = vmatprep.subr.mxu0 %v1975
    %2448 = vmatpush1.msra.mxu0 %v1974
    %2449 = vmatprep.subr.mxu0 %v1978
    %2450 = vmatpush1.msra.mxu0 %v1977
    %2451 = vmatprep.subr.mxu0 %v1981
    %2452 = vmatpush1.msra.mxu0 %v1980
    %2453 = vmatprep.subr.mxu0 %v1984
    %2454 = vmatpush1.msra.mxu0 %v1983
    %2455 = vmatprep.subr.mxu0 %v1987
    %2456 = vmatpush1.msra.mxu0 %v1986
    %2457 = vmatprep.subr.mxu0 %v1990
    %2458 = vmatpush1.msra.mxu0 %v1989
    %2459 = vmatprep.subr.mxu0 %v1993
    %2460 = vmatpush1.msra.mxu0 %v1992
    %2461 = vmatprep.subr.mxu0 %v1996
    %2462 = vmatpush1.msra.mxu0 %v1995
    %2463 = vmatprep.subr.mxu0 %v1999
    %2464 = vmatpush1.msra.mxu0 %v1998
    %2465 = vmatprep.subr.mxu0 %v2002
    %2466 = vmatpush1.msra.mxu0 %v2001
    %2467 = vmatprep.subr.mxu0 %v2005
    %2468 = vmatpush1.msra.mxu0 %v2004
    %2469 = vmatprep.subr.mxu0 %v2008
    %2470 = vmatpush1.msra.mxu0 %v2007
    %2471 = vmatprep.mubr.f32.mxu0 %v1140
    %2472 = vmatmul.mubr.f32.gmra.mrb[0].mxu0 %v1139
    %v2473 = vpop.f32.mrb[0].mxu0
    %v2474 = vadd.f32 %v2403, %v2473
    %v2475 = vpop.f32.mrb[0].mxu0
    %v2476 = vadd.f32 %v2405, %v2475
    %2477 = vdwg.mxu0
    %2478 = vmatprep.subr.mxu0 %v2011
    %2479 = vmatpush1.msra.mxu0 %v2010
    %2480 = vmatprep.subr.mxu0 %v2014
    %2481 = vmatpush1.msra.mxu0 %v2013
    %2482 = vmatprep.subr.mxu0 %v2017
    %2483 = vmatpush1.msra.mxu0 %v2016
    %2484 = vmatprep.subr.mxu0 %v2020
    %2485 = vmatpush1.msra.mxu0 %v2019
    %2486 = vmatprep.subr.mxu0 %v2023
    %2487 = vmatpush1.msra.mxu0 %v2022
    %2488 = vmatprep.subr.mxu0 %v2026
    %2489 = vmatpush1.msra.mxu0 %v2025
    %2490 = vmatprep.subr.mxu0 %v2029
    %2491 = vmatpush1.msra.mxu0 %v2028
    %2492 = vmatprep.subr.mxu0 %v2032
    %2493 = vmatpush1.msra.mxu0 %v2031
    %2494 = vmatprep.subr.mxu0 %v2035
    %2495 = vmatpush1.msra.mxu0 %v2034
    %2496 = vmatprep.subr.mxu0 %v2038
    %2497 = vmatpush1.msra.mxu0 %v2037
    %2498 = vmatprep.subr.mxu0 %v2041
    %2499 = vmatpush1.msra.mxu0 %v2040
    %2500 = vmatprep.subr.mxu0 %v2044
    %2501 = vmatpush1.msra.mxu0 %v2043
    %2502 = vmatprep.subr.mxu0 %v2047
    %2503 = vmatpush1.msra.mxu0 %v2046
    %2504 = vmatprep.subr.mxu0 %v2050
    %2505 = vmatpush1.msra.mxu0 %v2049
    %2506 = vmatprep.subr.mxu0 %v2053
    %2507 = vmatpush1.msra.mxu0 %v2052
    %2508 = vmatprep.subr.mxu0 %v2056
    %2509 = vmatpush1.msra.mxu0 %v2055
    %2510 = vmatprep.subr.mxu0 %v2059
    %2511 = vmatpush1.msra.mxu0 %v2058
    %2512 = vmatprep.subr.mxu0 %v2062
    %2513 = vmatpush1.msra.mxu0 %v2061
    %2514 = vmatprep.subr.mxu0 %v2065
    %2515 = vmatpush1.msra.mxu0 %v2064
    %2516 = vmatprep.subr.mxu0 %v2068
    %2517 = vmatpush1.msra.mxu0 %v2067
    %2518 = vmatprep.subr.mxu0 %v2071
    %2519 = vmatpush1.msra.mxu0 %v2070
    %2520 = vmatprep.subr.mxu0 %v2074
    %2521 = vmatpush1.msra.mxu0 %v2073
    %2522 = vmatprep.subr.mxu0 %v2077
    %2523 = vmatpush1.msra.mxu0 %v2076
    %2524 = vmatprep.subr.mxu0 %v2080
    %2525 = vmatpush1.msra.mxu0 %v2079
    %2526 = vmatprep.subr.mxu0 %v2083
    %2527 = vmatpush1.msra.mxu0 %v2082
    %2528 = vmatprep.subr.mxu0 %v2086
    %2529 = vmatpush1.msra.mxu0 %v2085
    %2530 = vmatprep.subr.mxu0 %v2089
    %2531 = vmatpush1.msra.mxu0 %v2088
    %2532 = vmatprep.subr.mxu0 %v2092
    %2533 = vmatpush1.msra.mxu0 %v2091
    %2534 = vmatprep.subr.mxu0 %v2095
    %2535 = vmatpush1.msra.mxu0 %v2094
    %2536 = vmatprep.subr.mxu0 %v2098
    %2537 = vmatpush1.msra.mxu0 %v2097
    %2538 = vmatprep.subr.mxu0 %v2101
    %2539 = vmatpush1.msra.mxu0 %v2100
    %2540 = vmatprep.subr.mxu0 %v2104
    %2541 = vmatpush1.msra.mxu0 %v2103
    %2542 = vmatprep.mubr.f32.mxu0 %v1142
    %2543 = vmatmul.mubr.f32.gmra.mrb[0].mxu0 %v1141
    %v2544 = vpop.f32.mrb[0].mxu0
    %v2545 = vadd.f32 %v2474, %v2544
    %v2546 = vpop.f32.mrb[0].mxu0
    %v2547 = vadd.f32 %v2476, %v2546
    %2548 = vdwg.mxu0
    %2549 = vmatprep.subr.mxu0 %v2118
    %2550 = vmatpush1.msra.mxu0 %v2115
    %2551 = vmatprep.subr.mxu0 0.0
    %2552 = vmatpush1.msra.mxu0 0.0
    %2553 = vmatprep.subr.mxu0 0.0
    %2554 = vmatpush1.msra.mxu0 0.0
    %2555 = vmatprep.subr.mxu0 0.0
    %2556 = vmatpush1.msra.mxu0 0.0
    %2557 = vmatprep.subr.mxu0 0.0
    %2558 = vmatpush1.msra.mxu0 0.0
    %2559 = vmatprep.subr.mxu0 0.0
    %2560 = vmatpush1.msra.mxu0 0.0
    %2561 = vmatprep.subr.mxu0 0.0
    %2562 = vmatpush1.msra.mxu0 0.0
    %2563 = vmatprep.subr.mxu0 0.0
    %2564 = vmatpush1.msra.mxu0 0.0
    %2565 = vmatprep.subr.mxu0 0.0
    %2566 = vmatpush1.msra.mxu0 0.0
    %2567 = vmatprep.subr.mxu0 0.0
    %2568 = vmatpush1.msra.mxu0 0.0
    %2569 = vmatprep.subr.mxu0 0.0
    %2570 = vmatpush1.msra.mxu0 0.0
    %2571 = vmatprep.subr.mxu0 0.0
    %2572 = vmatpush1.msra.mxu0 0.0
    %2573 = vmatprep.subr.mxu0 0.0
    %2574 = vmatpush1.msra.mxu0 0.0
    %2575 = vmatprep.subr.mxu0 0.0
    %2576 = vmatpush1.msra.mxu0 0.0
    %2577 = vmatprep.subr.mxu0 0.0
    %2578 = vmatpush1.msra.mxu0 0.0
    %2579 = vmatprep.subr.mxu0 0.0
    %2580 = vmatpush1.msra.mxu0 0.0
    %2581 = vmatprep.subr.mxu0 0.0
    %2582 = vmatpush1.msra.mxu0 0.0
    %2583 = vmatprep.subr.mxu0 0.0
    %2584 = vmatpush1.msra.mxu0 0.0
    %2585 = vmatprep.subr.mxu0 0.0
    %2586 = vmatpush1.msra.mxu0 0.0
    %2587 = vmatprep.subr.mxu0 0.0
    %2588 = vmatpush1.msra.mxu0 0.0
    %2589 = vmatprep.subr.mxu0 0.0
    %2590 = vmatpush1.msra.mxu0 0.0
    %2591 = vmatprep.subr.mxu0 0.0
    %2592 = vmatpush1.msra.mxu0 0.0
    %2593 = vmatprep.subr.mxu0 0.0
    %2594 = vmatpush1.msra.mxu0 0.0
    %2595 = vmatprep.subr.mxu0 0.0
    %2596 = vmatpush1.msra.mxu0 0.0
    %2597 = vmatprep.subr.mxu0 0.0
    %2598 = vmatpush1.msra.mxu0 0.0
    %2599 = vmatprep.subr.mxu0 0.0
    %2600 = vmatpush1.msra.mxu0 0.0
    %2601 = vmatprep.subr.mxu0 0.0
    %2602 = vmatpush1.msra.mxu0 0.0
    %2603 = vmatprep.subr.mxu0 0.0
    %2604 = vmatpush1.msra.mxu0 0.0
    %2605 = vmatprep.subr.mxu0 0.0
    %2606 = vmatpush1.msra.mxu0 0.0
    %2607 = vmatprep.subr.mxu0 0.0
    %2608 = vmatpush1.msra.mxu0 0.0
    %2609 = vmatprep.subr.mxu0 0.0
    %2610 = vmatpush1.msra.mxu0 0.0
    %2611 = vmatprep.subr.mxu0 0.0
    %2612 = vmatpush1.msra.mxu0 0.0
    %2613 = vmatprep.mubr.f32.mxu0 0.0
    %2614 = vmatmul.mubr.f32.gmra.mrb[0].mxu0 %v2111
    %v2615 = vpop.f32.mrb[0].mxu0
    %v2616 = vadd.f32 %v2545, %v2615
    %v2617 = vpop.f32.mrb[0].mxu0
    %v2618 = vadd.f32 %v2547, %v2617
    %2619 = vdwg.mxu0
    %2620 = vmatprep.subr.mxu0 0.0
    %2621 = vmatpush1.msra.mxu0 %v1532
    %2622 = vmatprep.subr.mxu0 0.0
    %2623 = vmatpush1.msra.mxu0 %v1535
    %2624 = vmatprep.subr.mxu0 0.0
    %2625 = vmatpush1.msra.mxu0 %v1538
    %2626 = vmatprep.subr.mxu0 0.0
    %2627 = vmatpush1.msra.mxu0 %v1541
    %2628 = vmatprep.subr.mxu0 0.0
    %2629 = vmatpush1.msra.mxu0 %v1544
    %2630 = vmatprep.subr.mxu0 0.0
    %2631 = vmatpush1.msra.mxu0 %v1547
    %2632 = vmatprep.subr.mxu0 0.0
    %2633 = vmatpush1.msra.mxu0 %v1550
    %2634 = vmatprep.subr.mxu0 0.0
    %2635 = vmatpush1.msra.mxu0 %v1553
    %2636 = vmatprep.subr.mxu0 0.0
    %2637 = vmatpush1.msra.mxu0 %v1556
    %2638 = vmatprep.subr.mxu0 0.0
    %2639 = vmatpush1.msra.mxu0 %v1559
    %2640 = vmatprep.subr.mxu0 0.0
    %2641 = vmatpush1.msra.mxu0 %v1562
    %2642 = vmatprep.subr.mxu0 0.0
    %2643 = vmatpush1.msra.mxu0 %v1565
    %2644 = vmatprep.subr.mxu0 0.0
    %2645 = vmatpush1.msra.mxu0 %v1568
    %2646 = vmatprep.subr.mxu0 0.0
    %2647 = vmatpush1.msra.mxu0 %v1571
    %2648 = vmatprep.subr.mxu0 0.0
    %2649 = vmatpush1.msra.mxu0 %v1574
    %2650 = vmatprep.subr.mxu0 0.0
    %2651 = vmatpush1.msra.mxu0 %v1577
    %2652 = vmatprep.subr.mxu0 0.0
    %2653 = vmatpush1.msra.mxu0 %v1580
    %2654 = vmatprep.subr.mxu0 0.0
    %2655 = vmatpush1.msra.mxu0 %v1583
    %2656 = vmatprep.subr.mxu0 0.0
    %2657 = vmatpush1.msra.mxu0 %v1586
    %2658 = vmatprep.subr.mxu0 0.0
    %2659 = vmatpush1.msra.mxu0 %v1589
    %2660 = vmatprep.subr.mxu0 0.0
    %2661 = vmatpush1.msra.mxu0 %v1592
    %2662 = vmatprep.subr.mxu0 0.0
    %2663 = vmatpush1.msra.mxu0 %v1595
    %2664 = vmatprep.subr.mxu0 0.0
    %2665 = vmatpush1.msra.mxu0 %v1598
    %2666 = vmatprep.subr.mxu0 0.0
    %2667 = vmatpush1.msra.mxu0 %v1601
    %2668 = vmatprep.subr.mxu0 0.0
    %2669 = vmatpush1.msra.mxu0 %v1604
    %2670 = vmatprep.subr.mxu0 0.0
    %2671 = vmatpush1.msra.mxu0 %v1607
    %2672 = vmatprep.subr.mxu0 0.0
    %2673 = vmatpush1.msra.mxu0 %v1610
    %2674 = vmatprep.subr.mxu0 0.0
    %2675 = vmatpush1.msra.mxu0 %v1613
    %2676 = vmatprep.subr.mxu0 0.0
    %2677 = vmatpush1.msra.mxu0 %v1616
    %2678 = vmatprep.subr.mxu0 0.0
    %2679 = vmatpush1.msra.mxu0 %v1619
    %2680 = vmatprep.subr.mxu0 0.0
    %2681 = vmatpush1.msra.mxu0 %v1622
    %2682 = vmatprep.subr.mxu0 0.0
    %2683 = vmatpush1.msra.mxu0 %v1625
    %2684 = vmatprep.mubr.f32.mxu0 %v1132
    %2685 = vmatmul.mubr.f32.gmra.mrb[0].mxu0 %v1131
    %v2686 = vpop.f32.mrb[0].mxu0
    %v2687 = vadd.f32 0.0, %v2686
    %v2688 = vpop.f32.mrb[0].mxu0
    %2689 = vdwg.mxu0
    %2690 = vmatprep.subr.mxu0 0.0
    %2691 = vmatpush1.msra.mxu0 %v1628
    %2692 = vmatprep.subr.mxu0 0.0
    %2693 = vmatpush1.msra.mxu0 %v1631
    %2694 = vmatprep.subr.mxu0 0.0
    %2695 = vmatpush1.msra.mxu0 %v1634
    %2696 = vmatprep.subr.mxu0 0.0
    %2697 = vmatpush1.msra.mxu0 %v1637
    %2698 = vmatprep.subr.mxu0 0.0
    %2699 = vmatpush1.msra.mxu0 %v1640
    %2700 = vmatprep.subr.mxu0 0.0
    %2701 = vmatpush1.msra.mxu0 %v1643
    %2702 = vmatprep.subr.mxu0 0.0
    %2703 = vmatpush1.msra.mxu0 %v1646
    %2704 = vmatprep.subr.mxu0 0.0
    %2705 = vmatpush1.msra.mxu0 %v1649
    %2706 = vmatprep.subr.mxu0 0.0
    %2707 = vmatpush1.msra.mxu0 %v1652
    %2708 = vmatprep.subr.mxu0 0.0
    %2709 = vmatpush1.msra.mxu0 %v1655
    %2710 = vmatprep.subr.mxu0 0.0
    %2711 = vmatpush1.msra.mxu0 %v1658
    %2712 = vmatprep.subr.mxu0 0.0
    %2713 = vmatpush1.msra.mxu0 %v1661
    %2714 = vmatprep.subr.mxu0 0.0
    %2715 = vmatpush1.msra.mxu0 %v1664
    %2716 = vmatprep.subr.mxu0 0.0
    %2717 = vmatpush1.msra.mxu0 %v1667
    %2718 = vmatprep.subr.mxu0 0.0
    %2719 = vmatpush1.msra.mxu0 %v1670
    %2720 = vmatprep.subr.mxu0 0.0
    %2721 = vmatpush1.msra.mxu0 %v1673
    %2722 = vmatprep.subr.mxu0 0.0
    %2723 = vmatpush1.msra.mxu0 %v1676
    %2724 = vmatprep.subr.mxu0 0.0
    %2725 = vmatpush1.msra.mxu0 %v1679
    %2726 = vmatprep.subr.mxu0 0.0
    %2727 = vmatpush1.msra.mxu0 %v1682
    %2728 = vmatprep.subr.mxu0 0.0
    %2729 = vmatpush1.msra.mxu0 %v1685
    %2730 = vmatprep.subr.mxu0 0.0
    %2731 = vmatpush1.msra.mxu0 %v1688
    %2732 = vmatprep.subr.mxu0 0.0
    %2733 = vmatpush1.msra.mxu0 %v1691
    %2734 = vmatprep.subr.mxu0 0.0
    %2735 = vmatpush1.msra.mxu0 %v1694
    %2736 = vmatprep.subr.mxu0 0.0
    %2737 = vmatpush1.msra.mxu0 %v1697
    %2738 = vmatprep.subr.mxu0 0.0
    %2739 = vmatpush1.msra.mxu0 %v1700
    %2740 = vmatprep.subr.mxu0 0.0
    %2741 = vmatpush1.msra.mxu0 %v1703
    %2742 = vmatprep.subr.mxu0 0.0
    %2743 = vmatpush1.msra.mxu0 %v1706
    %2744 = vmatprep.subr.mxu0 0.0
    %2745 = vmatpush1.msra.mxu0 %v1709
    %2746 = vmatprep.subr.mxu0 0.0
    %2747 = vmatpush1.msra.mxu0 %v1712
    %2748 = vmatprep.subr.mxu0 0.0
    %2749 = vmatpush1.msra.mxu0 %v1715
    %2750 = vmatprep.subr.mxu0 0.0
    %2751 = vmatpush1.msra.mxu0 %v1718
    %2752 = vmatprep.subr.mxu0 0.0
    %2753 = vmatpush1.msra.mxu0 %v1721
    %2754 = vmatprep.mubr.f32.mxu0 %v1134
    %2755 = vmatmul.mubr.f32.gmra.mrb[0].mxu0 %v1133
    %v2756 = vpop.f32.mrb[0].mxu0
    %v2757 = vadd.f32 %v2687, %v2756
    %v2758 = vpop.f32.mrb[0].mxu0
    %2759 = vdwg.mxu0
    %2760 = vmatprep.subr.mxu0 0.0
    %2761 = vmatpush1.msra.mxu0 %v1724
    %2762 = vmatprep.subr.mxu0 0.0
    %2763 = vmatpush1.msra.mxu0 %v1727
    %2764 = vmatprep.subr.mxu0 0.0
    %2765 = vmatpush1.msra.mxu0 %v1730
    %2766 = vmatprep.subr.mxu0 0.0
    %2767 = vmatpush1.msra.mxu0 %v1733
    %2768 = vmatprep.subr.mxu0 0.0
    %2769 = vmatpush1.msra.mxu0 %v1736
    %2770 = vmatprep.subr.mxu0 0.0
    %2771 = vmatpush1.msra.mxu0 %v1739
    %2772 = vmatprep.subr.mxu0 0.0
    %2773 = vmatpush1.msra.mxu0 %v1742
    %2774 = vmatprep.subr.mxu0 0.0
    %2775 = vmatpush1.msra.mxu0 %v1745
    %2776 = vmatprep.subr.mxu0 0.0
    %2777 = vmatpush1.msra.mxu0 %v1748
    %2778 = vmatprep.subr.mxu0 0.0
    %2779 = vmatpush1.msra.mxu0 %v1751
    %2780 = vmatprep.subr.mxu0 0.0
    %2781 = vmatpush1.msra.mxu0 %v1754
    %2782 = vmatprep.subr.mxu0 0.0
    %2783 = vmatpush1.msra.mxu0 %v1757
    %2784 = vmatprep.subr.mxu0 0.0
    %2785 = vmatpush1.msra.mxu0 %v1760
    %2786 = vmatprep.subr.mxu0 0.0
    %2787 = vmatpush1.msra.mxu0 %v1763
    %2788 = vmatprep.subr.mxu0 0.0
    %2789 = vmatpush1.msra.mxu0 %v1766
    %2790 = vmatprep.subr.mxu0 0.0
    %2791 = vmatpush1.msra.mxu0 %v1769
    %2792 = vmatprep.subr.mxu0 0.0
    %2793 = vmatpush1.msra.mxu0 %v1772
    %2794 = vmatprep.subr.mxu0 0.0
    %2795 = vmatpush1.msra.mxu0 %v1775
    %2796 = vmatprep.subr.mxu0 0.0
    %2797 = vmatpush1.msra.mxu0 %v1778
    %2798 = vmatprep.subr.mxu0 0.0
    %2799 = vmatpush1.msra.mxu0 %v1781
    %2800 = vmatprep.subr.mxu0 0.0
    %2801 = vmatpush1.msra.mxu0 %v1784
    %2802 = vmatprep.subr.mxu0 0.0
    %2803 = vmatpush1.msra.mxu0 %v1787
    %2804 = vmatprep.subr.mxu0 0.0
    %2805 = vmatpush1.msra.mxu0 %v1790
    %2806 = vmatprep.subr.mxu0 0.0
    %2807 = vmatpush1.msra.mxu0 %v1793
    %2808 = vmatprep.subr.mxu0 0.0
    %2809 = vmatpush1.msra.mxu0 %v1796
    %2810 = vmatprep.subr.mxu0 0.0
    %2811 = vmatpush1.msra.mxu0 %v1799
    %2812 = vmatprep.subr.mxu0 0.0
    %2813 = vmatpush1.msra.mxu0 %v1802
    %2814 = vmatprep.subr.mxu0 0.0
    %2815 = vmatpush1.msra.mxu0 %v1805
    %2816 = vmatprep.subr.mxu0 0.0
    %2817 = vmatpush1.msra.mxu0 %v1808
    %2818 = vmatprep.subr.mxu0 0.0
    %2819 = vmatpush1.msra.mxu0 %v1811
    %2820 = vmatprep.subr.mxu0 0.0
    %2821 = vmatpush1.msra.mxu0 %v1814
    %2822 = vmatprep.subr.mxu0 0.0
    %2823 = vmatpush1.msra.mxu0 %v1817
    %2824 = vmatprep.mubr.f32.mxu0 %v1136
    %2825 = vmatmul.mubr.f32.gmra.mrb[0].mxu0 %v1135
    %v2826 = vpop.f32.mrb[0].mxu0
    %v2827 = vadd.f32 %v2757, %v2826
    %v2828 = vpop.f32.mrb[0].mxu0
    %2829 = vdwg.mxu0
    %2830 = vmatprep.subr.mxu0 0.0
    %2831 = vmatpush1.msra.mxu0 %v1820
    %2832 = vmatprep.subr.mxu0 0.0
    %2833 = vmatpush1.msra.mxu0 %v1823
    %2834 = vmatprep.subr.mxu0 0.0
    %2835 = vmatpush1.msra.mxu0 %v1826
    %2836 = vmatprep.subr.mxu0 0.0
    %2837 = vmatpush1.msra.mxu0 %v1829
    %2838 = vmatprep.subr.mxu0 0.0
    %2839 = vmatpush1.msra.mxu0 %v1832
    %2840 = vmatprep.subr.mxu0 0.0
    %2841 = vmatpush1.msra.mxu0 %v1835
    %2842 = vmatprep.subr.mxu0 0.0
    %2843 = vmatpush1.msra.mxu0 %v1838
    %2844 = vmatprep.subr.mxu0 0.0
    %2845 = vmatpush1.msra.mxu0 %v1841
    %2846 = vmatprep.subr.mxu0 0.0
    %2847 = vmatpush1.msra.mxu0 %v1844
    %2848 = vmatprep.subr.mxu0 0.0
    %2849 = vmatpush1.msra.mxu0 %v1847
    %2850 = vmatprep.subr.mxu0 0.0
    %2851 = vmatpush1.msra.mxu0 %v1850
    %2852 = vmatprep.subr.mxu0 0.0
    %2853 = vmatpush1.msra.mxu0 %v1853
    %2854 = vmatprep.subr.mxu0 0.0
    %2855 = vmatpush1.msra.mxu0 %v1856
    %2856 = vmatprep.subr.mxu0 0.0
    %2857 = vmatpush1.msra.mxu0 %v1859
    %2858 = vmatprep.subr.mxu0 0.0
    %2859 = vmatpush1.msra.mxu0 %v1862
    %2860 = vmatprep.subr.mxu0 0.0
    %2861 = vmatpush1.msra.mxu0 %v1865
    %2862 = vmatprep.subr.mxu0 0.0
    %2863 = vmatpush1.msra.mxu0 %v1868
    %2864 = vmatprep.subr.mxu0 0.0
    %2865 = vmatpush1.msra.mxu0 %v1871
    %2866 = vmatprep.subr.mxu0 0.0
    %2867 = vmatpush1.msra.mxu0 %v1874
    %2868 = vmatprep.subr.mxu0 0.0
    %2869 = vmatpush1.msra.mxu0 %v1877
    %2870 = vmatprep.subr.mxu0 0.0
    %2871 = vmatpush1.msra.mxu0 %v1880
    %2872 = vmatprep.subr.mxu0 0.0
    %2873 = vmatpush1.msra.mxu0 %v1883
    %2874 = vmatprep.subr.mxu0 0.0
    %2875 = vmatpush1.msra.mxu0 %v1886
    %2876 = vmatprep.subr.mxu0 0.0
    %2877 = vmatpush1.msra.mxu0 %v1889
    %2878 = vmatprep.subr.mxu0 0.0
    %2879 = vmatpush1.msra.mxu0 %v1892
    %2880 = vmatprep.subr.mxu0 0.0
    %2881 = vmatpush1.msra.mxu0 %v1895
    %2882 = vmatprep.subr.mxu0 0.0
    %2883 = vmatpush1.msra.mxu0 %v1898
    %2884 = vmatprep.subr.mxu0 0.0
    %2885 = vmatpush1.msra.mxu0 %v1901
    %2886 = vmatprep.subr.mxu0 0.0
    %2887 = vmatpush1.msra.mxu0 %v1904
    %2888 = vmatprep.subr.mxu0 0.0
    %2889 = vmatpush1.msra.mxu0 %v1907
    %2890 = vmatprep.subr.mxu0 0.0
    %2891 = vmatpush1.msra.mxu0 %v1910
    %2892 = vmatprep.subr.mxu0 0.0
    %2893 = vmatpush1.msra.mxu0 %v1913
    %2894 = vmatprep.mubr.f32.mxu0 %v1138
    %2895 = vmatmul.mubr.f32.gmra.mrb[0].mxu0 %v1137
    %v2896 = vpop.f32.mrb[0].mxu0
    %v2897 = vadd.f32 %v2827, %v2896
    %v2898 = vpop.f32.mrb[0].mxu0
    %2899 = vdwg.mxu0
    %2900 = vmatprep.subr.mxu0 0.0
    %2901 = vmatpush1.msra.mxu0 %v1916
    %2902 = vmatprep.subr.mxu0 0.0
    %2903 = vmatpush1.msra.mxu0 %v1919
    %2904 = vmatprep.subr.mxu0 0.0
    %2905 = vmatpush1.msra.mxu0 %v1922
    %2906 = vmatprep.subr.mxu0 0.0
    %2907 = vmatpush1.msra.mxu0 %v1925
    %2908 = vmatprep.subr.mxu0 0.0
    %2909 = vmatpush1.msra.mxu0 %v1928
    %2910 = vmatprep.subr.mxu0 0.0
    %2911 = vmatpush1.msra.mxu0 %v1931
    %2912 = vmatprep.subr.mxu0 0.0
    %2913 = vmatpush1.msra.mxu0 %v1934
    %2914 = vmatprep.subr.mxu0 0.0
    %2915 = vmatpush1.msra.mxu0 %v1937
    %2916 = vmatprep.subr.mxu0 0.0
    %2917 = vmatpush1.msra.mxu0 %v1940
    %2918 = vmatprep.subr.mxu0 0.0
    %2919 = vmatpush1.msra.mxu0 %v1943
    %2920 = vmatprep.subr.mxu0 0.0
    %2921 = vmatpush1.msra.mxu0 %v1946
    %2922 = vmatprep.subr.mxu0 0.0
    %2923 = vmatpush1.msra.mxu0 %v1949
    %2924 = vmatprep.subr.mxu0 0.0
    %2925 = vmatpush1.msra.mxu0 %v1952
    %2926 = vmatprep.subr.mxu0 0.0
    %2927 = vmatpush1.msra.mxu0 %v1955
    %2928 = vmatprep.subr.mxu0 0.0
    %2929 = vmatpush1.msra.mxu0 %v1958
    %2930 = vmatprep.subr.mxu0 0.0
    %2931 = vmatpush1.msra.mxu0 %v1961
    %2932 = vmatprep.subr.mxu0 0.0
    %2933 = vmatpush1.msra.mxu0 %v1964
    %2934 = vmatprep.subr.mxu0 0.0
    %2935 = vmatpush1.msra.mxu0 %v1967
    %2936 = vmatprep.subr.mxu0 0.0
    %2937 = vmatpush1.msra.mxu0 %v1970
    %2938 = vmatprep.subr.mxu0 0.0
    %2939 = vmatpush1.msra.mxu0 %v1973
    %2940 = vmatprep.subr.mxu0 0.0
    %2941 = vmatpush1.msra.mxu0 %v1976
    %2942 = vmatprep.subr.mxu0 0.0
    %2943 = vmatpush1.msra.mxu0 %v1979
    %2944 = vmatprep.subr.mxu0 0.0
    %2945 = vmatpush1.msra.mxu0 %v1982
    %2946 = vmatprep.subr.mxu0 0.0
    %2947 = vmatpush1.msra.mxu0 %v1985
    %2948 = vmatprep.subr.mxu0 0.0
    %2949 = vmatpush1.msra.mxu0 %v1988
    %2950 = vmatprep.subr.mxu0 0.0
    %2951 = vmatpush1.msra.mxu0 %v1991
    %2952 = vmatprep.subr.mxu0 0.0
    %2953 = vmatpush1.msra.mxu0 %v1994
    %2954 = vmatprep.subr.mxu0 0.0
    %2955 = vmatpush1.msra.mxu0 %v1997
    %2956 = vmatprep.subr.mxu0 0.0
    %2957 = vmatpush1.msra.mxu0 %v2000
    %2958 = vmatprep.subr.mxu0 0.0
    %2959 = vmatpush1.msra.mxu0 %v2003
    %2960 = vmatprep.subr.mxu0 0.0
    %2961 = vmatpush1.msra.mxu0 %v2006
    %2962 = vmatprep.subr.mxu0 0.0
    %2963 = vmatpush1.msra.mxu0 %v2009
    %2964 = vmatprep.mubr.f32.mxu0 %v1140
    %2965 = vmatmul.mubr.f32.gmra.mrb[0].mxu0 %v1139
    %v2966 = vpop.f32.mrb[0].mxu0
    %v2967 = vadd.f32 %v2897, %v2966
    %v2968 = vpop.f32.mrb[0].mxu0
    %2969 = vdwg.mxu0
    %2970 = vmatprep.subr.mxu0 0.0
    %2971 = vmatpush1.msra.mxu0 %v2012
    %2972 = vmatprep.subr.mxu0 0.0
    %2973 = vmatpush1.msra.mxu0 %v2015
    %2974 = vmatprep.subr.mxu0 0.0
    %2975 = vmatpush1.msra.mxu0 %v2018
    %2976 = vmatprep.subr.mxu0 0.0
    %2977 = vmatpush1.msra.mxu0 %v2021
    %2978 = vmatprep.subr.mxu0 0.0
    %2979 = vmatpush1.msra.mxu0 %v2024
    %2980 = vmatprep.subr.mxu0 0.0
    %2981 = vmatpush1.msra.mxu0 %v2027
    %2982 = vmatprep.subr.mxu0 0.0
    %2983 = vmatpush1.msra.mxu0 %v2030
    %2984 = vmatprep.subr.mxu0 0.0
    %2985 = vmatpush1.msra.mxu0 %v2033
    %2986 = vmatprep.subr.mxu0 0.0
    %2987 = vmatpush1.msra.mxu0 %v2036
    %2988 = vmatprep.subr.mxu0 0.0
    %2989 = vmatpush1.msra.mxu0 %v2039
    %2990 = vmatprep.subr.mxu0 0.0
    %2991 = vmatpush1.msra.mxu0 %v2042
    %2992 = vmatprep.subr.mxu0 0.0
    %2993 = vmatpush1.msra.mxu0 %v2045
    %2994 = vmatprep.subr.mxu0 0.0
    %2995 = vmatpush1.msra.mxu0 %v2048
    %2996 = vmatprep.subr.mxu0 0.0
    %2997 = vmatpush1.msra.mxu0 %v2051
    %2998 = vmatprep.subr.mxu0 0.0
    %2999 = vmatpush1.msra.mxu0 %v2054
    %3000 = vmatprep.subr.mxu0 0.0
    %3001 = vmatpush1.msra.mxu0 %v2057
    %3002 = vmatprep.subr.mxu0 0.0
    %3003 = vmatpush1.msra.mxu0 %v2060
    %3004 = vmatprep.subr.mxu0 0.0
    %3005 = vmatpush1.msra.mxu0 %v2063
    %3006 = vmatprep.subr.mxu0 0.0
    %3007 = vmatpush1.msra.mxu0 %v2066
    %3008 = vmatprep.subr.mxu0 0.0
    %3009 = vmatpush1.msra.mxu0 %v2069
    %3010 = vmatprep.subr.mxu0 0.0
    %3011 = vmatpush1.msra.mxu0 %v2072
    %3012 = vmatprep.subr.mxu0 0.0
    %3013 = vmatpush1.msra.mxu0 %v2075
    %3014 = vmatprep.subr.mxu0 0.0
    %3015 = vmatpush1.msra.mxu0 %v2078
    %3016 = vmatprep.subr.mxu0 0.0
    %3017 = vmatpush1.msra.mxu0 %v2081
    %3018 = vmatprep.subr.mxu0 0.0
    %3019 = vmatpush1.msra.mxu0 %v2084
    %3020 = vmatprep.subr.mxu0 0.0
    %3021 = vmatpush1.msra.mxu0 %v2087
    %3022 = vmatprep.subr.mxu0 0.0
    %3023 = vmatpush1.msra.mxu0 %v2090
    %3024 = vmatprep.subr.mxu0 0.0
    %3025 = vmatpush1.msra.mxu0 %v2093
    %3026 = vmatprep.subr.mxu0 0.0
    %3027 = vmatpush1.msra.mxu0 %v2096
    %3028 = vmatprep.subr.mxu0 0.0
    %3029 = vmatpush1.msra.mxu0 %v2099
    %3030 = vmatprep.subr.mxu0 0.0
    %3031 = vmatpush1.msra.mxu0 %v2102
    %3032 = vmatprep.subr.mxu0 0.0
    %3033 = vmatpush1.msra.mxu0 %v2105
    %3034 = vmatprep.mubr.f32.mxu0 %v1142
    %3035 = vmatmul.mubr.f32.gmra.mrb[0].mxu0 %v1141
    %v3036 = vpop.f32.mrb[0].mxu0
    %v3037 = vadd.f32 %v2967, %v3036
    %v3038 = vpop.f32.mrb[0].mxu0
    %3039 = vdwg.mxu0
    %3040 = vmatprep.subr.mxu0 0.0
    %3041 = vmatpush1.msra.mxu0 %v2121
    %3042 = vmatprep.subr.mxu0 0.0
    %3043 = vmatpush1.msra.mxu0 0.0
    %3044 = vmatprep.subr.mxu0 0.0
    %3045 = vmatpush1.msra.mxu0 0.0
    %3046 = vmatprep.subr.mxu0 0.0
    %3047 = vmatpush1.msra.mxu0 0.0
    %3048 = vmatprep.subr.mxu0 0.0
    %3049 = vmatpush1.msra.mxu0 0.0
    %3050 = vmatprep.subr.mxu0 0.0
    %3051 = vmatpush1.msra.mxu0 0.0
    %3052 = vmatprep.subr.mxu0 0.0
    %3053 = vmatpush1.msra.mxu0 0.0
    %3054 = vmatprep.subr.mxu0 0.0
    %3055 = vmatpush1.msra.mxu0 0.0
    %3056 = vmatprep.subr.mxu0 0.0
    %3057 = vmatpush1.msra.mxu0 0.0
    %3058 = vmatprep.subr.mxu0 0.0
    %3059 = vmatpush1.msra.mxu0 0.0
    %3060 = vmatprep.subr.mxu0 0.0
    %3061 = vmatpush1.msra.mxu0 0.0
    %3062 = vmatprep.subr.mxu0 0.0
    %3063 = vmatpush1.msra.mxu0 0.0
    %3064 = vmatprep.subr.mxu0 0.0
    %3065 = vmatpush1.msra.mxu0 0.0
    %3066 = vmatprep.subr.mxu0 0.0
    %3067 = vmatpush1.msra.mxu0 0.0
    %3068 = vmatprep.subr.mxu0 0.0
    %3069 = vmatpush1.msra.mxu0 0.0
    %3070 = vmatprep.subr.mxu0 0.0
    %3071 = vmatpush1.msra.mxu0 0.0
    %3072 = vmatprep.subr.mxu0 0.0
    %3073 = vmatpush1.msra.mxu0 0.0
    %3074 = vmatprep.subr.mxu0 0.0
    %3075 = vmatpush1.msra.mxu0 0.0
    %3076 = vmatprep.subr.mxu0 0.0
    %3077 = vmatpush1.msra.mxu0 0.0
    %3078 = vmatprep.subr.mxu0 0.0
    %3079 = vmatpush1.msra.mxu0 0.0
    %3080 = vmatprep.subr.mxu0 0.0
    %3081 = vmatpush1.msra.mxu0 0.0
    %3082 = vmatprep.subr.mxu0 0.0
    %3083 = vmatpush1.msra.mxu0 0.0
    %3084 = vmatprep.subr.mxu0 0.0
    %3085 = vmatpush1.msra.mxu0 0.0
    %3086 = vmatprep.subr.mxu0 0.0
    %3087 = vmatpush1.msra.mxu0 0.0
    %3088 = vmatprep.subr.mxu0 0.0
    %3089 = vmatpush1.msra.mxu0 0.0
    %3090 = vmatprep.subr.mxu0 0.0
    %3091 = vmatpush1.msra.mxu0 0.0
    %3092 = vmatprep.subr.mxu0 0.0
    %3093 = vmatpush1.msra.mxu0 0.0
    %3094 = vmatprep.subr.mxu0 0.0
    %3095 = vmatpush1.msra.mxu0 0.0
    %3096 = vmatprep.subr.mxu0 0.0
    %3097 = vmatpush1.msra.mxu0 0.0
    %3098 = vmatprep.subr.mxu0 0.0
    %3099 = vmatpush1.msra.mxu0 0.0
    %3100 = vmatprep.subr.mxu0 0.0
    %3101 = vmatpush1.msra.mxu0 0.0
    %3102 = vmatprep.subr.mxu0 0.0
    %3103 = vmatpush1.msra.mxu0 0.0
    %3104 = vmatprep.mubr.f32.mxu0 0.0
    %3105 = vmatmul.mubr.f32.gmra.mrb[0].mxu0 %v2111
    %v3106 = vpop.f32.mrb[0].mxu0
    %v3107 = vadd.f32 %v3037, %v3106
    %v3108 = vpop.f32.mrb[0].mxu0
    %3109 = vdwg.mxu0
    %v3110 = vld [vmem:[%s4] sm:$0xff]
    %v3111 = vld [vmem:[%s4 + $0x8] sm:$0xff]
    %v3112 = vld [vmem:[%s4 + $0x10] sm:$0xff]
    %v3113 = vld [vmem:[%s4 + $0x18] sm:$0xff]
    %v3114 = vld [vmem:[%s4 + $0x20] sm:$0xff]
    %v3115 = vld [vmem:[%s4 + $0x28] sm:$0xff]
    %v3116 = vld [vmem:[%s4 + $0x30] sm:$0xff]
    %v3117 = vld [vmem:[%s4 + $0x38] sm:$0xff]
    %v3118 = vld [vmem:[%s4 + $0x40] sm:$0xff]
    %v3119 = vld [vmem:[%s4 + $0x48] sm:$0xff]
    %v3120 = vld [vmem:[%s4 + $0x50] sm:$0xff]
    %v3121 = vld [vmem:[%s4 + $0x58] sm:$0xff]
    %v3122 = vld [vmem:[%s4 + $0x60] sm:$0xff]
    %v3123 = vld [vmem:[%s4 + $0x68] sm:$0xff]
    %v3124 = vld [vmem:[%s4 + $0x70] sm:$0xff]
    %v3125 = vld [vmem:[%s4 + $0x78] sm:$0xff]
    %v3126 = vld [vmem:[%s4 + $0x80] sm:$0xff]
    %v3127 = vld [vmem:[%s4 + $0x88] sm:$0xff]
    %3131 = vrot.lane.b32.xlu0 %v2616, 127
    %v3132 = vpop.permute.xlu0 %3131
    %3133 = vrot.lane.b32.xlu0 %v2618, 127
    %v3134 = vpop.permute.xlu0 %3133
    %3135 = vrot.lane.b32.xlu0 %v3107, 127
    %v3136 = vpop.permute.xlu0 %3135
    %v3137 = vsel %vm254, %v3132, %v3134
    %v3138 = vsel %vm254, %v3134, %v3136
    %vm3139 = vcmask 48128
    %v3141 = vsel %vm3139, %v3112, 0
    %v3144 = vsel %vm3139, %v3113, 0
    %vm3146 = vcmask 1045504
    %v3147 = vsel %vm3146, %v3137, 0
    %v3149 = vsel %vm3146, %v3138, 0
    %v3151 = vsel %vm3146, %v3136, 0
    %3153 = vmatprep.subr.mxu0 %v3149
    %3154 = vmatpush1.msra.mxu0 %v3147
    %3155 = vmatprep.subr.mxu0 0.0
    %3156 = vmatpush1.msra.mxu0 0.0
    %3157 = vmatprep.subr.mxu0 0.0
    %3158 = vmatpush1.msra.mxu0 0.0
    %3159 = vmatprep.subr.mxu0 0.0
    %3160 = vmatpush1.msra.mxu0 0.0
    %3161 = vmatprep.subr.mxu0 0.0
    %3162 = vmatpush1.msra.mxu0 0.0
    %3163 = vmatprep.subr.mxu0 0.0
    %3164 = vmatpush1.msra.mxu0 0.0
    %3165 = vmatprep.subr.mxu0 0.0
    %3166 = vmatpush1.msra.mxu0 0.0
    %3167 = vmatprep.subr.mxu0 0.0
    %3168 = vmatpush1.msra.mxu0 0.0
    %3169 = vmatprep.subr.mxu0 0.0
    %3170 = vmatpush1.msra.mxu0 0.0
    %3171 = vmatprep.subr.mxu0 0.0
    %3172 = vmatpush1.msra.mxu0 0.0
    %3173 = vmatprep.subr.mxu0 0.0
    %3174 = vmatpush1.msra.mxu0 0.0
    %3175 = vmatprep.subr.mxu0 0.0
    %3176 = vmatpush1.msra.mxu0 0.0
    %3177 = vmatprep.subr.mxu0 0.0
    %3178 = vmatpush1.msra.mxu0 0.0
    %3179 = vmatprep.subr.mxu0 0.0
    %3180 = vmatpush1.msra.mxu0 0.0
    %3181 = vmatprep.subr.mxu0 0.0
    %3182 = vmatpush1.msra.mxu0 0.0
    %3183 = vmatprep.subr.mxu0 0.0
    %3184 = vmatpush1.msra.mxu0 0.0
    %3185 = vmatprep.subr.mxu0 0.0
    %3186 = vmatpush1.msra.mxu0 0.0
    %3187 = vmatprep.subr.mxu0 0.0
    %3188 = vmatpush1.msra.mxu0 0.0
    %3189 = vmatprep.subr.mxu0 0.0
    %3190 = vmatpush1.msra.mxu0 0.0
    %3191 = vmatprep.subr.mxu0 0.0
    %3192 = vmatpush1.msra.mxu0 0.0
    %3193 = vmatprep.subr.mxu0 0.0
    %3194 = vmatpush1.msra.mxu0 0.0
    %3195 = vmatprep.subr.mxu0 0.0
    %3196 = vmatpush1.msra.mxu0 0.0
    %3197 = vmatprep.subr.mxu0 0.0
    %3198 = vmatpush1.msra.mxu0 0.0
    %3199 = vmatprep.subr.mxu0 0.0
    %3200 = vmatpush1.msra.mxu0 0.0
    %3201 = vmatprep.subr.mxu0 0.0
    %3202 = vmatpush1.msra.mxu0 0.0
    %3203 = vmatprep.subr.mxu0 0.0
    %3204 = vmatpush1.msra.mxu0 0.0
    %3205 = vmatprep.subr.mxu0 0.0
    %3206 = vmatpush1.msra.mxu0 0.0
    %3207 = vmatprep.subr.mxu0 0.0
    %3208 = vmatpush1.msra.mxu0 0.0
    %3209 = vmatprep.subr.mxu0 0.0
    %3210 = vmatpush1.msra.mxu0 0.0
    %3211 = vmatprep.subr.mxu0 0.0
    %3212 = vmatpush1.msra.mxu0 0.0
    %3213 = vmatprep.subr.mxu0 0.0
    %3214 = vmatpush1.msra.mxu0 0.0
    %3215 = vmatprep.subr.mxu0 0.0
    %3216 = vmatpush1.msra.mxu0 0.0
    %3217 = vmatprep.mubr.f32.mxu0 0.0
    %3218 = vmatmul.mubr.f32.gmra.mrb[0].mxu0 %v3141
    %v3219 = vpop.f32.mrb[0].mxu0
    %v3220 = vadd.f32 0.0, %v3219
    %v3221 = vpop.f32.mrb[0].mxu0
    %v3222 = vadd.f32 0.0, %v3221
    %3223 = vmatprep.mubr.f32.mxu0 0.0
    %3224 = vmatmul.mubr.f32.gmra.mrb[0].mxu0 %v3144
    %v3225 = vpop.f32.mrb[0].mxu0
    %v3226 = vadd.f32 0.0, %v3225
    %v3227 = vpop.f32.mrb[0].mxu0
    %v3228 = vadd.f32 0.0, %v3227
    %3229 = vdwg.mxu0
    %3230 = vmatprep.subr.mxu0 0.0
    %3231 = vmatpush1.msra.mxu0 %v3151
    %3232 = vmatprep.subr.mxu0 0.0
    %3233 = vmatpush1.msra.mxu0 0.0
    %3234 = vmatprep.subr.mxu0 0.0
    %3235 = vmatpush1.msra.mxu0 0.0
    %3236 = vmatprep.subr.mxu0 0.0
    %3237 = vmatpush1.msra.mxu0 0.0
    %3238 = vmatprep.subr.mxu0 0.0
    %3239 = vmatpush1.msra.mxu0 0.0
    %3240 = vmatprep.subr.mxu0 0.0
    %3241 = vmatpush1.msra.mxu0 0.0
    %3242 = vmatprep.subr.mxu0 0.0
    %3243 = vmatpush1.msra.mxu0 0.0
    %3244 = vmatprep.subr.mxu0 0.0
    %3245 = vmatpush1.msra.mxu0 0.0
    %3246 = vmatprep.subr.mxu0 0.0
    %3247 = vmatpush1.msra.mxu0 0.0
    %3248 = vmatprep.subr.mxu0 0.0
    %3249 = vmatpush1.msra.mxu0 0.0
    %3250 = vmatprep.subr.mxu0 0.0
    %3251 = vmatpush1.msra.mxu0 0.0
    %3252 = vmatprep.subr.mxu0 0.0
    %3253 = vmatpush1.msra.mxu0 0.0
    %3254 = vmatprep.subr.mxu0 0.0
    %3255 = vmatpush1.msra.mxu0 0.0
    %3256 = vmatprep.subr.mxu0 0.0
    %3257 = vmatpush1.msra.mxu0 0.0
    %3258 = vmatprep.subr.mxu0 0.0
    %3259 = vmatpush1.msra.mxu0 0.0
    %3260 = vmatprep.subr.mxu0 0.0
    %3261 = vmatpush1.msra.mxu0 0.0
    %3262 = vmatprep.subr.mxu0 0.0
    %3263 = vmatpush1.msra.mxu0 0.0
    %3264 = vmatprep.subr.mxu0 0.0
    %3265 = vmatpush1.msra.mxu0 0.0
    %3266 = vmatprep.subr.mxu0 0.0
    %3267 = vmatpush1.msra.mxu0 0.0
    %3268 = vmatprep.subr.mxu0 0.0
    %3269 = vmatpush1.msra.mxu0 0.0
    %3270 = vmatprep.subr.mxu0 0.0
    %3271 = vmatpush1.msra.mxu0 0.0
    %3272 = vmatprep.subr.mxu0 0.0
    %3273 = vmatpush1.msra.mxu0 0.0
    %3274 = vmatprep.subr.mxu0 0.0
    %3275 = vmatpush1.msra.mxu0 0.0
    %3276 = vmatprep.subr.mxu0 0.0
    %3277 = vmatpush1.msra.mxu0 0.0
    %3278 = vmatprep.subr.mxu0 0.0
    %3279 = vmatpush1.msra.mxu0 0.0
    %3280 = vmatprep.subr.mxu0 0.0
    %3281 = vmatpush1.msra.mxu0 0.0
    %3282 = vmatprep.subr.mxu0 0.0
    %3283 = vmatpush1.msra.mxu0 0.0
    %3284 = vmatprep.subr.mxu0 0.0
    %3285 = vmatpush1.msra.mxu0 0.0
    %3286 = vmatprep.subr.mxu0 0.0
    %3287 = vmatpush1.msra.mxu0 0.0
    %3288 = vmatprep.subr.mxu0 0.0
    %3289 = vmatpush1.msra.mxu0 0.0
    %3290 = vmatprep.subr.mxu0 0.0
    %3291 = vmatpush1.msra.mxu0 0.0
    %3292 = vmatprep.subr.mxu0 0.0
    %3293 = vmatpush1.msra.mxu0 0.0
    %3294 = vmatprep.mubr.f32.mxu0 0.0
    %3295 = vmatmul.mubr.f32.gmra.mrb[0].mxu0 %v3141
    %v3296 = vpop.f32.mrb[0].mxu0
    %v3297 = vadd.f32 0.0, %v3296
    %v3298 = vpop.f32.mrb[0].mxu0
    %3299 = vmatprep.mubr.f32.mxu0 0.0
    %3300 = vmatmul.mubr.f32.gmra.mrb[0].mxu0 %v3144
    %v3301 = vpop.f32.mrb[0].mxu0
    %v3302 = vadd.f32 0.0, %v3301
    %v3303 = vpop.f32.mrb[0].mxu0
    %3304 = vdwg.mxu0
    %v3306 = vsel %vm3139, %v3110, 0
    %v3309 = vsel %vm3139, %v3111, 0
    %v3311 = vsel %vm3146, %v2616, 0
    %v3313 = vsel %vm3146, %v2618, 0
    %v3315 = vsel %vm3146, %v3107, 0
    %3317 = vmatprep.subr.mxu0 %v3313
    %3318 = vmatpush1.msra.mxu0 %v3311
    %3319 = vmatprep.subr.mxu0 0.0
    %3320 = vmatpush1.msra.mxu0 0.0
    %3321 = vmatprep.subr.mxu0 0.0
    %3322 = vmatpush1.msra.mxu0 0.0
    %3323 = vmatprep.subr.mxu0 0.0
    %3324 = vmatpush1.msra.mxu0 0.0
    %3325 = vmatprep.subr.mxu0 0.0
    %3326 = vmatpush1.msra.mxu0 0.0
    %3327 = vmatprep.subr.mxu0 0.0
    %3328 = vmatpush1.msra.mxu0 0.0
    %3329 = vmatprep.subr.mxu0 0.0
    %3330 = vmatpush1.msra.mxu0 0.0
    %3331 = vmatprep.subr.mxu0 0.0
    %3332 = vmatpush1.msra.mxu0 0.0
    %3333 = vmatprep.subr.mxu0 0.0
    %3334 = vmatpush1.msra.mxu0 0.0
    %3335 = vmatprep.subr.mxu0 0.0
    %3336 = vmatpush1.msra.mxu0 0.0
    %3337 = vmatprep.subr.mxu0 0.0
    %3338 = vmatpush1.msra.mxu0 0.0
    %3339 = vmatprep.subr.mxu0 0.0
    %3340 = vmatpush1.msra.mxu0 0.0
    %3341 = vmatprep.subr.mxu0 0.0
    %3342 = vmatpush1.msra.mxu0 0.0
    %3343 = vmatprep.subr.mxu0 0.0
    %3344 = vmatpush1.msra.mxu0 0.0
    %3345 = vmatprep.subr.mxu0 0.0
    %3346 = vmatpush1.msra.mxu0 0.0
    %3347 = vmatprep.subr.mxu0 0.0
    %3348 = vmatpush1.msra.mxu0 0.0
    %3349 = vmatprep.subr.mxu0 0.0
    %3350 = vmatpush1.msra.mxu0 0.0
    %3351 = vmatprep.subr.mxu0 0.0
    %3352 = vmatpush1.msra.mxu0 0.0
    %3353 = vmatprep.subr.mxu0 0.0
    %3354 = vmatpush1.msra.mxu0 0.0
    %3355 = vmatprep.subr.mxu0 0.0
    %3356 = vmatpush1.msra.mxu0 0.0
    %3357 = vmatprep.subr.mxu0 0.0
    %3358 = vmatpush1.msra.mxu0 0.0
    %3359 = vmatprep.subr.mxu0 0.0
    %3360 = vmatpush1.msra.mxu0 0.0
    %3361 = vmatprep.subr.mxu0 0.0
    %3362 = vmatpush1.msra.mxu0 0.0
    %3363 = vmatprep.subr.mxu0 0.0
    %3364 = vmatpush1.msra.mxu0 0.0
    %3365 = vmatprep.subr.mxu0 0.0
    %3366 = vmatpush1.msra.mxu0 0.0
    %3367 = vmatprep.subr.mxu0 0.0
    %3368 = vmatpush1.msra.mxu0 0.0
    %3369 = vmatprep.subr.mxu0 0.0
    %3370 = vmatpush1.msra.mxu0 0.0
    %3371 = vmatprep.subr.mxu0 0.0
    %3372 = vmatpush1.msra.mxu0 0.0
    %3373 = vmatprep.subr.mxu0 0.0
    %3374 = vmatpush1.msra.mxu0 0.0
    %3375 = vmatprep.subr.mxu0 0.0
    %3376 = vmatpush1.msra.mxu0 0.0
    %3377 = vmatprep.subr.mxu0 0.0
    %3378 = vmatpush1.msra.mxu0 0.0
    %3379 = vmatprep.subr.mxu0 0.0
    %3380 = vmatpush1.msra.mxu0 0.0
    %3381 = vmatprep.mubr.f32.mxu0 0.0
    %3382 = vmatmul.mubr.f32.gmra.mrb[0].mxu0 %v3306
    %v3383 = vpop.f32.mrb[0].mxu0
    %v3384 = vadd.f32 %v3220, %v3383
    %v3385 = vpop.f32.mrb[0].mxu0
    %v3386 = vadd.f32 %v3222, %v3385
    %3387 = vmatprep.mubr.f32.mxu0 0.0
    %3388 = vmatmul.mubr.f32.gmra.mrb[0].mxu0 %v3309
    %v3389 = vpop.f32.mrb[0].mxu0
    %v3390 = vadd.f32 %v3226, %v3389
    %v3391 = vpop.f32.mrb[0].mxu0
    %v3392 = vadd.f32 %v3228, %v3391
    %3393 = vdwg.mxu0
    %3394 = vmatprep.subr.mxu0 0.0
    %3395 = vmatpush1.msra.mxu0 %v3315
    %3396 = vmatprep.subr.mxu0 0.0
    %3397 = vmatpush1.msra.mxu0 0.0
    %3398 = vmatprep.subr.mxu0 0.0
    %3399 = vmatpush1.msra.mxu0 0.0
    %3400 = vmatprep.subr.mxu0 0.0
    %3401 = vmatpush1.msra.mxu0 0.0
    %3402 = vmatprep.subr.mxu0 0.0
    %3403 = vmatpush1.msra.mxu0 0.0
    %3404 = vmatprep.subr.mxu0 0.0
    %3405 = vmatpush1.msra.mxu0 0.0
    %3406 = vmatprep.subr.mxu0 0.0
    %3407 = vmatpush1.msra.mxu0 0.0
    %3408 = vmatprep.subr.mxu0 0.0
    %3409 = vmatpush1.msra.mxu0 0.0
    %3410 = vmatprep.subr.mxu0 0.0
    %3411 = vmatpush1.msra.mxu0 0.0
    %3412 = vmatprep.subr.mxu0 0.0
    %3413 = vmatpush1.msra.mxu0 0.0
    %3414 = vmatprep.subr.mxu0 0.0
    %3415 = vmatpush1.msra.mxu0 0.0
    %3416 = vmatprep.subr.mxu0 0.0
    %3417 = vmatpush1.msra.mxu0 0.0
    %3418 = vmatprep.subr.mxu0 0.0
    %3419 = vmatpush1.msra.mxu0 0.0
    %3420 = vmatprep.subr.mxu0 0.0
    %3421 = vmatpush1.msra.mxu0 0.0
    %3422 = vmatprep.subr.mxu0 0.0
    %3423 = vmatpush1.msra.mxu0 0.0
    %3424 = vmatprep.subr.mxu0 0.0
    %3425 = vmatpush1.msra.mxu0 0.0
    %3426 = vmatprep.subr.mxu0 0.0
    %3427 = vmatpush1.msra.mxu0 0.0
    %3428 = vmatprep.subr.mxu0 0.0
    %3429 = vmatpush1.msra.mxu0 0.0
    %3430 = vmatprep.subr.mxu0 0.0
    %3431 = vmatpush1.msra.mxu0 0.0
    %3432 = vmatprep.subr.mxu0 0.0
    %3433 = vmatpush1.msra.mxu0 0.0
    %3434 = vmatprep.subr.mxu0 0.0
    %3435 = vmatpush1.msra.mxu0 0.0
    %3436 = vmatprep.subr.mxu0 0.0
    %3437 = vmatpush1.msra.mxu0 0.0
    %3438 = vmatprep.subr.mxu0 0.0
    %3439 = vmatpush1.msra.mxu0 0.0
    %3440 = vmatprep.subr.mxu0 0.0
    %3441 = vmatpush1.msra.mxu0 0.0
    %3442 = vmatprep.subr.mxu0 0.0
    %3443 = vmatpush1.msra.mxu0 0.0
    %3444 = vmatprep.subr.mxu0 0.0
    %3445 = vmatpush1.msra.mxu0 0.0
    %3446 = vmatprep.subr.mxu0 0.0
    %3447 = vmatpush1.msra.mxu0 0.0
    %3448 = vmatprep.subr.mxu0 0.0
    %3449 = vmatpush1.msra.mxu0 0.0
    %3450 = vmatprep.subr.mxu0 0.0
    %3451 = vmatpush1.msra.mxu0 0.0
    %3452 = vmatprep.subr.mxu0 0.0
    %3453 = vmatpush1.msra.mxu0 0.0
    %3454 = vmatprep.subr.mxu0 0.0
    %3455 = vmatpush1.msra.mxu0 0.0
    %3456 = vmatprep.subr.mxu0 0.0
    %3457 = vmatpush1.msra.mxu0 0.0
    %3458 = vmatprep.mubr.f32.mxu0 0.0
    %3459 = vmatmul.mubr.f32.gmra.mrb[0].mxu0 %v3306
    %v3460 = vpop.f32.mrb[0].mxu0
    %v3461 = vadd.f32 %v3297, %v3460
    %v3462 = vpop.f32.mrb[0].mxu0
    %3463 = vmatprep.mubr.f32.mxu0 0.0
    %3464 = vmatmul.mubr.f32.gmra.mrb[0].mxu0 %v3309
    %v3465 = vpop.f32.mrb[0].mxu0
    %v3466 = vadd.f32 %v3302, %v3465
    %v3467 = vpop.f32.mrb[0].mxu0
    %3468 = vdwg.mxu0
    %3469 = vrot.lane.b32.xlu0 %v2616, 126
    %v3470 = vpop.permute.xlu0 %3469
    %3471 = vrot.lane.b32.xlu0 %v2618, 126
    %v3472 = vpop.permute.xlu0 %3471
    %3473 = vrot.lane.b32.xlu0 %v3107, 126
    %v3474 = vpop.permute.xlu0 %3473
    %v3475 = vsel %vm349, %v3470, %v3472
    %v3476 = vsel %vm349, %v3472, %v3474
    %v3478 = vsel %vm3139, %v3114, 0
    %v3481 = vsel %vm3139, %v3115, 0
    %v3483 = vsel %vm3146, %v3475, 0
    %v3485 = vsel %vm3146, %v3476, 0
    %v3487 = vsel %vm3146, %v3474, 0
    %3489 = vmatprep.subr.mxu0 %v3485
    %3490 = vmatpush1.msra.mxu0 %v3483
    %3491 = vmatprep.subr.mxu0 0.0
    %3492 = vmatpush1.msra.mxu0 0.0
    %3493 = vmatprep.subr.mxu0 0.0
    %3494 = vmatpush1.msra.mxu0 0.0
    %3495 = vmatprep.subr.mxu0 0.0
    %3496 = vmatpush1.msra.mxu0 0.0
    %3497 = vmatprep.subr.mxu0 0.0
    %3498 = vmatpush1.msra.mxu0 0.0
    %3499 = vmatprep.subr.mxu0 0.0
    %3500 = vmatpush1.msra.mxu0 0.0
    %3501 = vmatprep.subr.mxu0 0.0
    %3502 = vmatpush1.msra.mxu0 0.0
    %3503 = vmatprep.subr.mxu0 0.0
    %3504 = vmatpush1.msra.mxu0 0.0
    %3505 = vmatprep.subr.mxu0 0.0
    %3506 = vmatpush1.msra.mxu0 0.0
    %3507 = vmatprep.subr.mxu0 0.0
    %3508 = vmatpush1.msra.mxu0 0.0
    %3509 = vmatprep.subr.mxu0 0.0
    %3510 = vmatpush1.msra.mxu0 0.0
    %3511 = vmatprep.subr.mxu0 0.0
    %3512 = vmatpush1.msra.mxu0 0.0
    %3513 = vmatprep.subr.mxu0 0.0
    %3514 = vmatpush1.msra.mxu0 0.0
    %3515 = vmatprep.subr.mxu0 0.0
    %3516 = vmatpush1.msra.mxu0 0.0
    %3517 = vmatprep.subr.mxu0 0.0
    %3518 = vmatpush1.msra.mxu0 0.0
    %3519 = vmatprep.subr.mxu0 0.0
    %3520 = vmatpush1.msra.mxu0 0.0
    %3521 = vmatprep.subr.mxu0 0.0
    %3522 = vmatpush1.msra.mxu0 0.0
    %3523 = vmatprep.subr.mxu0 0.0
    %3524 = vmatpush1.msra.mxu0 0.0
    %3525 = vmatprep.subr.mxu0 0.0
    %3526 = vmatpush1.msra.mxu0 0.0
    %3527 = vmatprep.subr.mxu0 0.0
    %3528 = vmatpush1.msra.mxu0 0.0
    %3529 = vmatprep.subr.mxu0 0.0
    %3530 = vmatpush1.msra.mxu0 0.0
    %3531 = vmatprep.subr.mxu0 0.0
    %3532 = vmatpush1.msra.mxu0 0.0
    %3533 = vmatprep.subr.mxu0 0.0
    %3534 = vmatpush1.msra.mxu0 0.0
    %3535 = vmatprep.subr.mxu0 0.0
    %3536 = vmatpush1.msra.mxu0 0.0
    %3537 = vmatprep.subr.mxu0 0.0
    %3538 = vmatpush1.msra.mxu0 0.0
    %3539 = vmatprep.subr.mxu0 0.0
    %3540 = vmatpush1.msra.mxu0 0.0
    %3541 = vmatprep.subr.mxu0 0.0
    %3542 = vmatpush1.msra.mxu0 0.0
    %3543 = vmatprep.subr.mxu0 0.0
    %3544 = vmatpush1.msra.mxu0 0.0
    %3545 = vmatprep.subr.mxu0 0.0
    %3546 = vmatpush1.msra.mxu0 0.0
    %3547 = vmatprep.subr.mxu0 0.0
    %3548 = vmatpush1.msra.mxu0 0.0
    %3549 = vmatprep.subr.mxu0 0.0
    %3550 = vmatpush1.msra.mxu0 0.0
    %3551 = vmatprep.subr.mxu0 0.0
    %3552 = vmatpush1.msra.mxu0 0.0
    %3553 = vmatprep.mubr.f32.mxu0 0.0
    %3554 = vmatmul.mubr.f32.gmra.mrb[0].mxu0 %v3478
    %v3555 = vpop.f32.mrb[0].mxu0
    %v3556 = vadd.f32 0.0, %v3555
    %v3557 = vpop.f32.mrb[0].mxu0
    %v3558 = vadd.f32 0.0, %v3557
    %3559 = vmatprep.mubr.f32.mxu0 0.0
    %3560 = vmatmul.mubr.f32.gmra.mrb[0].mxu0 %v3481
    %v3561 = vpop.f32.mrb[0].mxu0
    %v3562 = vadd.f32 0.0, %v3561
    %v3563 = vpop.f32.mrb[0].mxu0
    %v3564 = vadd.f32 0.0, %v3563
    %3565 = vdwg.mxu0
    %3566 = vmatprep.subr.mxu0 0.0
    %3567 = vmatpush1.msra.mxu0 %v3487
    %3568 = vmatprep.subr.mxu0 0.0
    %3569 = vmatpush1.msra.mxu0 0.0
    %3570 = vmatprep.subr.mxu0 0.0
    %3571 = vmatpush1.msra.mxu0 0.0
    %3572 = vmatprep.subr.mxu0 0.0
    %3573 = vmatpush1.msra.mxu0 0.0
    %3574 = vmatprep.subr.mxu0 0.0
    %3575 = vmatpush1.msra.mxu0 0.0
    %3576 = vmatprep.subr.mxu0 0.0
    %3577 = vmatpush1.msra.mxu0 0.0
    %3578 = vmatprep.subr.mxu0 0.0
    %3579 = vmatpush1.msra.mxu0 0.0
    %3580 = vmatprep.subr.mxu0 0.0
    %3581 = vmatpush1.msra.mxu0 0.0
    %3582 = vmatprep.subr.mxu0 0.0
    %3583 = vmatpush1.msra.mxu0 0.0
    %3584 = vmatprep.subr.mxu0 0.0
    %3585 = vmatpush1.msra.mxu0 0.0
    %3586 = vmatprep.subr.mxu0 0.0
    %3587 = vmatpush1.msra.mxu0 0.0
    %3588 = vmatprep.subr.mxu0 0.0
    %3589 = vmatpush1.msra.mxu0 0.0
    %3590 = vmatprep.subr.mxu0 0.0
    %3591 = vmatpush1.msra.mxu0 0.0
    %3592 = vmatprep.subr.mxu0 0.0
    %3593 = vmatpush1.msra.mxu0 0.0
    %3594 = vmatprep.subr.mxu0 0.0
    %3595 = vmatpush1.msra.mxu0 0.0
    %3596 = vmatprep.subr.mxu0 0.0
    %3597 = vmatpush1.msra.mxu0 0.0
    %3598 = vmatprep.subr.mxu0 0.0
    %3599 = vmatpush1.msra.mxu0 0.0
    %3600 = vmatprep.subr.mxu0 0.0
    %3601 = vmatpush1.msra.mxu0 0.0
    %3602 = vmatprep.subr.mxu0 0.0
    %3603 = vmatpush1.msra.mxu0 0.0
    %3604 = vmatprep.subr.mxu0 0.0
    %3605 = vmatpush1.msra.mxu0 0.0
    %3606 = vmatprep.subr.mxu0 0.0
    %3607 = vmatpush1.msra.mxu0 0.0
    %3608 = vmatprep.subr.mxu0 0.0
    %3609 = vmatpush1.msra.mxu0 0.0
    %3610 = vmatprep.subr.mxu0 0.0
    %3611 = vmatpush1.msra.mxu0 0.0
    %3612 = vmatprep.subr.mxu0 0.0
    %3613 = vmatpush1.msra.mxu0 0.0
    %3614 = vmatprep.subr.mxu0 0.0
    %3615 = vmatpush1.msra.mxu0 0.0
    %3616 = vmatprep.subr.mxu0 0.0
    %3617 = vmatpush1.msra.mxu0 0.0
    %3618 = vmatprep.subr.mxu0 0.0
    %3619 = vmatpush1.msra.mxu0 0.0
    %3620 = vmatprep.subr.mxu0 0.0
    %3621 = vmatpush1.msra.mxu0 0.0
    %3622 = vmatprep.subr.mxu0 0.0
    %3623 = vmatpush1.msra.mxu0 0.0
    %3624 = vmatprep.subr.mxu0 0.0
    %3625 = vmatpush1.msra.mxu0 0.0
    %3626 = vmatprep.subr.mxu0 0.0
    %3627 = vmatpush1.msra.mxu0 0.0
    %3628 = vmatprep.subr.mxu0 0.0
    %3629 = vmatpush1.msra.mxu0 0.0
    %3630 = vmatprep.mubr.f32.mxu0 0.0
    %3631 = vmatmul.mubr.f32.gmra.mrb[0].mxu0 %v3478
    %v3632 = vpop.f32.mrb[0].mxu0
    %v3633 = vadd.f32 0.0, %v3632
    %v3634 = vpop.f32.mrb[0].mxu0
    %3635 = vmatprep.mubr.f32.mxu0 0.0
    %3636 = vmatmul.mubr.f32.gmra.mrb[0].mxu0 %v3481
    %v3637 = vpop.f32.mrb[0].mxu0
    %v3638 = vadd.f32 0.0, %v3637
    %v3639 = vpop.f32.mrb[0].mxu0
    %3640 = vdwg.mxu0
    %v3641 = vadd.f32 %v3384, %v3556
    %v3642 = vadd.f32 %v3386, %v3558
    %v3643 = vadd.f32 %v3461, %v3633
    %v3644 = vadd.f32 %v3390, %v3562
    %v3645 = vadd.f32 %v3392, %v3564
    %v3646 = vadd.f32 %v3466, %v3638
    %3647 = vrot.lane.b32.xlu0 %v2616, 115
    %v3648 = vpop.permute.xlu0 %3647
    %3649 = vrot.lane.b32.xlu0 %v2618, 115
    %v3650 = vpop.permute.xlu0 %3649
    %3651 = vrot.lane.b32.xlu0 %v3107, 115
    %v3652 = vpop.permute.xlu0 %3651
    %vm3653 = vcmask 941056
    %v3654 = vsel %vm3653, %v3648, %v3650
    %v3655 = vsel %vm3653, %v3650, %v3652
    %v3657 = vsel %vm3139, %v3116, 0
    %v3660 = vsel %vm3139, %v3117, 0
    %v3662 = vsel %vm3146, %v3654, 0
    %v3664 = vsel %vm3146, %v3655, 0
    %v3666 = vsel %vm3146, %v3652, 0
    %3668 = vmatprep.subr.mxu0 %v3664
    %3669 = vmatpush1.msra.mxu0 %v3662
    %3670 = vmatprep.subr.mxu0 0.0
    %3671 = vmatpush1.msra.mxu0 0.0
    %3672 = vmatprep.subr.mxu0 0.0
    %3673 = vmatpush1.msra.mxu0 0.0
    %3674 = vmatprep.subr.mxu0 0.0
    %3675 = vmatpush1.msra.mxu0 0.0
    %3676 = vmatprep.subr.mxu0 0.0
    %3677 = vmatpush1.msra.mxu0 0.0
    %3678 = vmatprep.subr.mxu0 0.0
    %3679 = vmatpush1.msra.mxu0 0.0
    %3680 = vmatprep.subr.mxu0 0.0
    %3681 = vmatpush1.msra.mxu0 0.0
    %3682 = vmatprep.subr.mxu0 0.0
    %3683 = vmatpush1.msra.mxu0 0.0
    %3684 = vmatprep.subr.mxu0 0.0
    %3685 = vmatpush1.msra.mxu0 0.0
    %3686 = vmatprep.subr.mxu0 0.0
    %3687 = vmatpush1.msra.mxu0 0.0
    %3688 = vmatprep.subr.mxu0 0.0
    %3689 = vmatpush1.msra.mxu0 0.0
    %3690 = vmatprep.subr.mxu0 0.0
    %3691 = vmatpush1.msra.mxu0 0.0
    %3692 = vmatprep.subr.mxu0 0.0
    %3693 = vmatpush1.msra.mxu0 0.0
    %3694 = vmatprep.subr.mxu0 0.0
    %3695 = vmatpush1.msra.mxu0 0.0
    %3696 = vmatprep.subr.mxu0 0.0
    %3697 = vmatpush1.msra.mxu0 0.0
    %3698 = vmatprep.subr.mxu0 0.0
    %3699 = vmatpush1.msra.mxu0 0.0
    %3700 = vmatprep.subr.mxu0 0.0
    %3701 = vmatpush1.msra.mxu0 0.0
    %3702 = vmatprep.subr.mxu0 0.0
    %3703 = vmatpush1.msra.mxu0 0.0
    %3704 = vmatprep.subr.mxu0 0.0
    %3705 = vmatpush1.msra.mxu0 0.0
    %3706 = vmatprep.subr.mxu0 0.0
    %3707 = vmatpush1.msra.mxu0 0.0
    %3708 = vmatprep.subr.mxu0 0.0
    %3709 = vmatpush1.msra.mxu0 0.0
    %3710 = vmatprep.subr.mxu0 0.0
    %3711 = vmatpush1.msra.mxu0 0.0
    %3712 = vmatprep.subr.mxu0 0.0
    %3713 = vmatpush1.msra.mxu0 0.0
    %3714 = vmatprep.subr.mxu0 0.0
    %3715 = vmatpush1.msra.mxu0 0.0
    %3716 = vmatprep.subr.mxu0 0.0
    %3717 = vmatpush1.msra.mxu0 0.0
    %3718 = vmatprep.subr.mxu0 0.0
    %3719 = vmatpush1.msra.mxu0 0.0
    %3720 = vmatprep.subr.mxu0 0.0
    %3721 = vmatpush1.msra.mxu0 0.0
    %3722 = vmatprep.subr.mxu0 0.0
    %3723 = vmatpush1.msra.mxu0 0.0
    %3724 = vmatprep.subr.mxu0 0.0
    %3725 = vmatpush1.msra.mxu0 0.0
    %3726 = vmatprep.subr.mxu0 0.0
    %3727 = vmatpush1.msra.mxu0 0.0
    %3728 = vmatprep.subr.mxu0 0.0
    %3729 = vmatpush1.msra.mxu0 0.0
    %3730 = vmatprep.subr.mxu0 0.0
    %3731 = vmatpush1.msra.mxu0 0.0
    %3732 = vmatprep.mubr.f32.mxu0 0.0
    %3733 = vmatmul.mubr.f32.gmra.mrb[0].mxu0 %v3657
    %v3734 = vpop.f32.mrb[0].mxu0
    %v3735 = vadd.f32 0.0, %v3734
    %v3736 = vpop.f32.mrb[0].mxu0
    %v3737 = vadd.f32 0.0, %v3736
    %3738 = vmatprep.mubr.f32.mxu0 0.0
    %3739 = vmatmul.mubr.f32.gmra.mrb[0].mxu0 %v3660
    %v3740 = vpop.f32.mrb[0].mxu0
    %v3741 = vadd.f32 0.0, %v3740
    %v3742 = vpop.f32.mrb[0].mxu0
    %v3743 = vadd.f32 0.0, %v3742
    %3744 = vdwg.mxu0
    %3745 = vmatprep.subr.mxu0 0.0
    %3746 = vmatpush1.msra.mxu0 %v3666
    %3747 = vmatprep.subr.mxu0 0.0
    %3748 = vmatpush1.msra.mxu0 0.0
    %3749 = vmatprep.subr.mxu0 0.0
    %3750 = vmatpush1.msra.mxu0 0.0
    %3751 = vmatprep.subr.mxu0 0.0
    %3752 = vmatpush1.msra.mxu0 0.0
    %3753 = vmatprep.subr.mxu0 0.0
    %3754 = vmatpush1.msra.mxu0 0.0
    %3755 = vmatprep.subr.mxu0 0.0
    %3756 = vmatpush1.msra.mxu0 0.0
    %3757 = vmatprep.subr.mxu0 0.0
    %3758 = vmatpush1.msra.mxu0 0.0
    %3759 = vmatprep.subr.mxu0 0.0
    %3760 = vmatpush1.msra.mxu0 0.0
    %3761 = vmatprep.subr.mxu0 0.0
    %3762 = vmatpush1.msra.mxu0 0.0
    %3763 = vmatprep.subr.mxu0 0.0
    %3764 = vmatpush1.msra.mxu0 0.0
    %3765 = vmatprep.subr.mxu0 0.0
    %3766 = vmatpush1.msra.mxu0 0.0
    %3767 = vmatprep.subr.mxu0 0.0
    %3768 = vmatpush1.msra.mxu0 0.0
    %3769 = vmatprep.subr.mxu0 0.0
    %3770 = vmatpush1.msra.mxu0 0.0
    %3771 = vmatprep.subr.mxu0 0.0
    %3772 = vmatpush1.msra.mxu0 0.0
    %3773 = vmatprep.subr.mxu0 0.0
    %3774 = vmatpush1.msra.mxu0 0.0
    %3775 = vmatprep.subr.mxu0 0.0
    %3776 = vmatpush1.msra.mxu0 0.0
    %3777 = vmatprep.subr.mxu0 0.0
    %3778 = vmatpush1.msra.mxu0 0.0
    %3779 = vmatprep.subr.mxu0 0.0
    %3780 = vmatpush1.msra.mxu0 0.0
    %3781 = vmatprep.subr.mxu0 0.0
    %3782 = vmatpush1.msra.mxu0 0.0
    %3783 = vmatprep.subr.mxu0 0.0
    %3784 = vmatpush1.msra.mxu0 0.0
    %3785 = vmatprep.subr.mxu0 0.0
    %3786 = vmatpush1.msra.mxu0 0.0
    %3787 = vmatprep.subr.mxu0 0.0
    %3788 = vmatpush1.msra.mxu0 0.0
    %3789 = vmatprep.subr.mxu0 0.0
    %3790 = vmatpush1.msra.mxu0 0.0
    %3791 = vmatprep.subr.mxu0 0.0
    %3792 = vmatpush1.msra.mxu0 0.0
    %3793 = vmatprep.subr.mxu0 0.0
    %3794 = vmatpush1.msra.mxu0 0.0
    %3795 = vmatprep.subr.mxu0 0.0
    %3796 = vmatpush1.msra.mxu0 0.0
    %3797 = vmatprep.subr.mxu0 0.0
    %3798 = vmatpush1.msra.mxu0 0.0
    %3799 = vmatprep.subr.mxu0 0.0
    %3800 = vmatpush1.msra.mxu0 0.0
    %3801 = vmatprep.subr.mxu0 0.0
    %3802 = vmatpush1.msra.mxu0 0.0
    %3803 = vmatprep.subr.mxu0 0.0
    %3804 = vmatpush1.msra.mxu0 0.0
    %3805 = vmatprep.subr.mxu0 0.0
    %3806 = vmatpush1.msra.mxu0 0.0
    %3807 = vmatprep.subr.mxu0 0.0
    %3808 = vmatpush1.msra.mxu0 0.0
    %3809 = vmatprep.mubr.f32.mxu0 0.0
    %3810 = vmatmul.mubr.f32.gmra.mrb[0].mxu0 %v3657
    %v3811 = vpop.f32.mrb[0].mxu0
    %v3812 = vadd.f32 0.0, %v3811
    %v3813 = vpop.f32.mrb[0].mxu0
    %3814 = vmatprep.mubr.f32.mxu0 0.0
    %3815 = vmatmul.mubr.f32.gmra.mrb[0].mxu0 %v3660
    %v3816 = vpop.f32.mrb[0].mxu0
    %v3817 = vadd.f32 0.0, %v3816
    %v3818 = vpop.f32.mrb[0].mxu0
    %3819 = vdwg.mxu0
    %v3820 = vadd.f32 %v3641, %v3735
    %v3821 = vadd.f32 %v3642, %v3737
    %v3822 = vadd.f32 %v3643, %v3812
    %v3823 = vadd.f32 %v3644, %v3741
    %v3824 = vadd.f32 %v3645, %v3743
    %v3825 = vadd.f32 %v3646, %v3817
    %3826 = vrot.lane.b32.xlu0 %v2616, 114
    %v3827 = vpop.permute.xlu0 %3826
    %3828 = vrot.lane.b32.xlu0 %v2618, 114
    %v3829 = vpop.permute.xlu0 %3828
    %3830 = vrot.lane.b32.xlu0 %v3107, 114
    %v3831 = vpop.permute.xlu0 %3830
    %vm3832 = vcmask 932864
    %v3833 = vsel %vm3832, %v3827, %v3829
    %v3834 = vsel %vm3832, %v3829, %v3831
    %v3836 = vsel %vm3139, %v3118, 0
    %v3839 = vsel %vm3139, %v3119, 0
    %v3841 = vsel %vm3146, %v3833, 0
    %v3843 = vsel %vm3146, %v3834, 0
    %v3845 = vsel %vm3146, %v3831, 0
    %3847 = vmatprep.subr.mxu0 %v3843
    %3848 = vmatpush1.msra.mxu0 %v3841
    %3849 = vmatprep.subr.mxu0 0.0
    %3850 = vmatpush1.msra.mxu0 0.0
    %3851 = vmatprep.subr.mxu0 0.0
    %3852 = vmatpush1.msra.mxu0 0.0
    %3853 = vmatprep.subr.mxu0 0.0
    %3854 = vmatpush1.msra.mxu0 0.0
    %3855 = vmatprep.subr.mxu0 0.0
    %3856 = vmatpush1.msra.mxu0 0.0
    %3857 = vmatprep.subr.mxu0 0.0
    %3858 = vmatpush1.msra.mxu0 0.0
    %3859 = vmatprep.subr.mxu0 0.0
    %3860 = vmatpush1.msra.mxu0 0.0
    %3861 = vmatprep.subr.mxu0 0.0
    %3862 = vmatpush1.msra.mxu0 0.0
    %3863 = vmatprep.subr.mxu0 0.0
    %3864 = vmatpush1.msra.mxu0 0.0
    %3865 = vmatprep.subr.mxu0 0.0
    %3866 = vmatpush1.msra.mxu0 0.0
    %3867 = vmatprep.subr.mxu0 0.0
    %3868 = vmatpush1.msra.mxu0 0.0
    %3869 = vmatprep.subr.mxu0 0.0
    %3870 = vmatpush1.msra.mxu0 0.0
    %3871 = vmatprep.subr.mxu0 0.0
    %3872 = vmatpush1.msra.mxu0 0.0
    %3873 = vmatprep.subr.mxu0 0.0
    %3874 = vmatpush1.msra.mxu0 0.0
    %3875 = vmatprep.subr.mxu0 0.0
    %3876 = vmatpush1.msra.mxu0 0.0
    %3877 = vmatprep.subr.mxu0 0.0
    %3878 = vmatpush1.msra.mxu0 0.0
    %3879 = vmatprep.subr.mxu0 0.0
    %3880 = vmatpush1.msra.mxu0 0.0
    %3881 = vmatprep.subr.mxu0 0.0
    %3882 = vmatpush1.msra.mxu0 0.0
    %3883 = vmatprep.subr.mxu0 0.0
    %3884 = vmatpush1.msra.mxu0 0.0
    %3885 = vmatprep.subr.mxu0 0.0
    %3886 = vmatpush1.msra.mxu0 0.0
    %3887 = vmatprep.subr.mxu0 0.0
    %3888 = vmatpush1.msra.mxu0 0.0
    %3889 = vmatprep.subr.mxu0 0.0
    %3890 = vmatpush1.msra.mxu0 0.0
    %3891 = vmatprep.subr.mxu0 0.0
    %3892 = vmatpush1.msra.mxu0 0.0
    %3893 = vmatprep.subr.mxu0 0.0
    %3894 = vmatpush1.msra.mxu0 0.0
    %3895 = vmatprep.subr.mxu0 0.0
    %3896 = vmatpush1.msra.mxu0 0.0
    %3897 = vmatprep.subr.mxu0 0.0
    %3898 = vmatpush1.msra.mxu0 0.0
    %3899 = vmatprep.subr.mxu0 0.0
    %3900 = vmatpush1.msra.mxu0 0.0
    %3901 = vmatprep.subr.mxu0 0.0
    %3902 = vmatpush1.msra.mxu0 0.0
    %3903 = vmatprep.subr.mxu0 0.0
    %3904 = vmatpush1.msra.mxu0 0.0
    %3905 = vmatprep.subr.mxu0 0.0
    %3906 = vmatpush1.msra.mxu0 0.0
    %3907 = vmatprep.subr.mxu0 0.0
    %3908 = vmatpush1.msra.mxu0 0.0
    %3909 = vmatprep.subr.mxu0 0.0
    %3910 = vmatpush1.msra.mxu0 0.0
    %3911 = vmatprep.mubr.f32.mxu0 0.0
    %3912 = vmatmul.mubr.f32.gmra.mrb[0].mxu0 %v3836
    %v3913 = vpop.f32.mrb[0].mxu0
    %v3914 = vadd.f32 0.0, %v3913
    %v3915 = vpop.f32.mrb[0].mxu0
    %v3916 = vadd.f32 0.0, %v3915
    %3917 = vmatprep.mubr.f32.mxu0 0.0
    %3918 = vmatmul.mubr.f32.gmra.mrb[0].mxu0 %v3839
    %v3919 = vpop.f32.mrb[0].mxu0
    %v3920 = vadd.f32 0.0, %v3919
    %v3921 = vpop.f32.mrb[0].mxu0
    %v3922 = vadd.f32 0.0, %v3921
    %3923 = vdwg.mxu0
    %3924 = vmatprep.subr.mxu0 0.0
    %3925 = vmatpush1.msra.mxu0 %v3845
    %3926 = vmatprep.subr.mxu0 0.0
    %3927 = vmatpush1.msra.mxu0 0.0
    %3928 = vmatprep.subr.mxu0 0.0
    %3929 = vmatpush1.msra.mxu0 0.0
    %3930 = vmatprep.subr.mxu0 0.0
    %3931 = vmatpush1.msra.mxu0 0.0
    %3932 = vmatprep.subr.mxu0 0.0
    %3933 = vmatpush1.msra.mxu0 0.0
    %3934 = vmatprep.subr.mxu0 0.0
    %3935 = vmatpush1.msra.mxu0 0.0
    %3936 = vmatprep.subr.mxu0 0.0
    %3937 = vmatpush1.msra.mxu0 0.0
    %3938 = vmatprep.subr.mxu0 0.0
    %3939 = vmatpush1.msra.mxu0 0.0
    %3940 = vmatprep.subr.mxu0 0.0
    %3941 = vmatpush1.msra.mxu0 0.0
    %3942 = vmatprep.subr.mxu0 0.0
    %3943 = vmatpush1.msra.mxu0 0.0
    %3944 = vmatprep.subr.mxu0 0.0
    %3945 = vmatpush1.msra.mxu0 0.0
    %3946 = vmatprep.subr.mxu0 0.0
    %3947 = vmatpush1.msra.mxu0 0.0
    %3948 = vmatprep.subr.mxu0 0.0
    %3949 = vmatpush1.msra.mxu0 0.0
    %3950 = vmatprep.subr.mxu0 0.0
    %3951 = vmatpush1.msra.mxu0 0.0
    %3952 = vmatprep.subr.mxu0 0.0
    %3953 = vmatpush1.msra.mxu0 0.0
    %3954 = vmatprep.subr.mxu0 0.0
    %3955 = vmatpush1.msra.mxu0 0.0
    %3956 = vmatprep.subr.mxu0 0.0
    %3957 = vmatpush1.msra.mxu0 0.0
    %3958 = vmatprep.subr.mxu0 0.0
    %3959 = vmatpush1.msra.mxu0 0.0
    %3960 = vmatprep.subr.mxu0 0.0
    %3961 = vmatpush1.msra.mxu0 0.0
    %3962 = vmatprep.subr.mxu0 0.0
    %3963 = vmatpush1.msra.mxu0 0.0
    %3964 = vmatprep.subr.mxu0 0.0
    %3965 = vmatpush1.msra.mxu0 0.0
    %3966 = vmatprep.subr.mxu0 0.0
    %3967 = vmatpush1.msra.mxu0 0.0
    %3968 = vmatprep.subr.mxu0 0.0
    %3969 = vmatpush1.msra.mxu0 0.0
    %3970 = vmatprep.subr.mxu0 0.0
    %3971 = vmatpush1.msra.mxu0 0.0
    %3972 = vmatprep.subr.mxu0 0.0
    %3973 = vmatpush1.msra.mxu0 0.0
    %3974 = vmatprep.subr.mxu0 0.0
    %3975 = vmatpush1.msra.mxu0 0.0
    %3976 = vmatprep.subr.mxu0 0.0
    %3977 = vmatpush1.msra.mxu0 0.0
    %3978 = vmatprep.subr.mxu0 0.0
    %3979 = vmatpush1.msra.mxu0 0.0
    %3980 = vmatprep.subr.mxu0 0.0
    %3981 = vmatpush1.msra.mxu0 0.0
    %3982 = vmatprep.subr.mxu0 0.0
    %3983 = vmatpush1.msra.mxu0 0.0
    %3984 = vmatprep.subr.mxu0 0.0
    %3985 = vmatpush1.msra.mxu0 0.0
    %3986 = vmatprep.subr.mxu0 0.0
    %3987 = vmatpush1.msra.mxu0 0.0
    %3988 = vmatprep.mubr.f32.mxu0 0.0
    %3989 = vmatmul.mubr.f32.gmra.mrb[0].mxu0 %v3836
    %v3990 = vpop.f32.mrb[0].mxu0
    %v3991 = vadd.f32 0.0, %v3990
    %v3992 = vpop.f32.mrb[0].mxu0
    %3993 = vmatprep.mubr.f32.mxu0 0.0
    %3994 = vmatmul.mubr.f32.gmra.mrb[0].mxu0 %v3839
    %v3995 = vpop.f32.mrb[0].mxu0
    %v3996 = vadd.f32 0.0, %v3995
    %v3997 = vpop.f32.mrb[0].mxu0
    %3998 = vdwg.mxu0
    %v3999 = vadd.f32 %v3820, %v3914
    %v4000 = vadd.f32 %v3821, %v3916
    %v4001 = vadd.f32 %v3822, %v3991
    %v4002 = vadd.f32 %v3823, %v3920
    %v4003 = vadd.f32 %v3824, %v3922
    %v4004 = vadd.f32 %v3825, %v3996
    %4005 = vrot.lane.b32.xlu0 %v2616, 113
    %v4006 = vpop.permute.xlu0 %4005
    %4007 = vrot.lane.b32.xlu0 %v2618, 113
    %v4008 = vpop.permute.xlu0 %4007
    %4009 = vrot.lane.b32.xlu0 %v3107, 113
    %v4010 = vpop.permute.xlu0 %4009
    %vm4011 = vcmask 924672
    %v4012 = vsel %vm4011, %v4006, %v4008
    %v4013 = vsel %vm4011, %v4008, %v4010
    %v4015 = vsel %vm3139, %v3120, 0
    %v4018 = vsel %vm3139, %v3121, 0
    %v4020 = vsel %vm3146, %v4012, 0
    %v4022 = vsel %vm3146, %v4013, 0
    %v4024 = vsel %vm3146, %v4010, 0
    %4026 = vmatprep.subr.mxu0 %v4022
    %4027 = vmatpush1.msra.mxu0 %v4020
    %4028 = vmatprep.subr.mxu0 0.0
    %4029 = vmatpush1.msra.mxu0 0.0
    %4030 = vmatprep.subr.mxu0 0.0
    %4031 = vmatpush1.msra.mxu0 0.0
    %4032 = vmatprep.subr.mxu0 0.0
    %4033 = vmatpush1.msra.mxu0 0.0
    %4034 = vmatprep.subr.mxu0 0.0
    %4035 = vmatpush1.msra.mxu0 0.0
    %4036 = vmatprep.subr.mxu0 0.0
    %4037 = vmatpush1.msra.mxu0 0.0
    %4038 = vmatprep.subr.mxu0 0.0
    %4039 = vmatpush1.msra.mxu0 0.0
    %4040 = vmatprep.subr.mxu0 0.0
    %4041 = vmatpush1.msra.mxu0 0.0
    %4042 = vmatprep.subr.mxu0 0.0
    %4043 = vmatpush1.msra.mxu0 0.0
    %4044 = vmatprep.subr.mxu0 0.0
    %4045 = vmatpush1.msra.mxu0 0.0
    %4046 = vmatprep.subr.mxu0 0.0
    %4047 = vmatpush1.msra.mxu0 0.0
    %4048 = vmatprep.subr.mxu0 0.0
    %4049 = vmatpush1.msra.mxu0 0.0
    %4050 = vmatprep.subr.mxu0 0.0
    %4051 = vmatpush1.msra.mxu0 0.0
    %4052 = vmatprep.subr.mxu0 0.0
    %4053 = vmatpush1.msra.mxu0 0.0
    %4054 = vmatprep.subr.mxu0 0.0
    %4055 = vmatpush1.msra.mxu0 0.0
    %4056 = vmatprep.subr.mxu0 0.0
    %4057 = vmatpush1.msra.mxu0 0.0
    %4058 = vmatprep.subr.mxu0 0.0
    %4059 = vmatpush1.msra.mxu0 0.0
    %4060 = vmatprep.subr.mxu0 0.0
    %4061 = vmatpush1.msra.mxu0 0.0
    %4062 = vmatprep.subr.mxu0 0.0
    %4063 = vmatpush1.msra.mxu0 0.0
    %4064 = vmatprep.subr.mxu0 0.0
    %4065 = vmatpush1.msra.mxu0 0.0
    %4066 = vmatprep.subr.mxu0 0.0
    %4067 = vmatpush1.msra.mxu0 0.0
    %4068 = vmatprep.subr.mxu0 0.0
    %4069 = vmatpush1.msra.mxu0 0.0
    %4070 = vmatprep.subr.mxu0 0.0
    %4071 = vmatpush1.msra.mxu0 0.0
    %4072 = vmatprep.subr.mxu0 0.0
    %4073 = vmatpush1.msra.mxu0 0.0
    %4074 = vmatprep.subr.mxu0 0.0
    %4075 = vmatpush1.msra.mxu0 0.0
    %4076 = vmatprep.subr.mxu0 0.0
    %4077 = vmatpush1.msra.mxu0 0.0
    %4078 = vmatprep.subr.mxu0 0.0
    %4079 = vmatpush1.msra.mxu0 0.0
    %4080 = vmatprep.subr.mxu0 0.0
    %4081 = vmatpush1.msra.mxu0 0.0
    %4082 = vmatprep.subr.mxu0 0.0
    %4083 = vmatpush1.msra.mxu0 0.0
    %4084 = vmatprep.subr.mxu0 0.0
    %4085 = vmatpush1.msra.mxu0 0.0
    %4086 = vmatprep.subr.mxu0 0.0
    %4087 = vmatpush1.msra.mxu0 0.0
    %4088 = vmatprep.subr.mxu0 0.0
    %4089 = vmatpush1.msra.mxu0 0.0
    %4090 = vmatprep.mubr.f32.mxu0 0.0
    %4091 = vmatmul.mubr.f32.gmra.mrb[0].mxu0 %v4015
    %v4092 = vpop.f32.mrb[0].mxu0
    %v4093 = vadd.f32 0.0, %v4092
    %v4094 = vpop.f32.mrb[0].mxu0
    %v4095 = vadd.f32 0.0, %v4094
    %4096 = vmatprep.mubr.f32.mxu0 0.0
    %4097 = vmatmul.mubr.f32.gmra.mrb[0].mxu0 %v4018
    %v4098 = vpop.f32.mrb[0].mxu0
    %v4099 = vadd.f32 0.0, %v4098
    %v4100 = vpop.f32.mrb[0].mxu0
    %v4101 = vadd.f32 0.0, %v4100
    %4102 = vdwg.mxu0
    %4103 = vmatprep.subr.mxu0 0.0
    %4104 = vmatpush1.msra.mxu0 %v4024
    %4105 = vmatprep.subr.mxu0 0.0
    %4106 = vmatpush1.msra.mxu0 0.0
    %4107 = vmatprep.subr.mxu0 0.0
    %4108 = vmatpush1.msra.mxu0 0.0
    %4109 = vmatprep.subr.mxu0 0.0
    %4110 = vmatpush1.msra.mxu0 0.0
    %4111 = vmatprep.subr.mxu0 0.0
    %4112 = vmatpush1.msra.mxu0 0.0
    %4113 = vmatprep.subr.mxu0 0.0
    %4114 = vmatpush1.msra.mxu0 0.0
    %4115 = vmatprep.subr.mxu0 0.0
    %4116 = vmatpush1.msra.mxu0 0.0
    %4117 = vmatprep.subr.mxu0 0.0
    %4118 = vmatpush1.msra.mxu0 0.0
    %4119 = vmatprep.subr.mxu0 0.0
    %4120 = vmatpush1.msra.mxu0 0.0
    %4121 = vmatprep.subr.mxu0 0.0
    %4122 = vmatpush1.msra.mxu0 0.0
    %4123 = vmatprep.subr.mxu0 0.0
    %4124 = vmatpush1.msra.mxu0 0.0
    %4125 = vmatprep.subr.mxu0 0.0
    %4126 = vmatpush1.msra.mxu0 0.0
    %4127 = vmatprep.subr.mxu0 0.0
    %4128 = vmatpush1.msra.mxu0 0.0
    %4129 = vmatprep.subr.mxu0 0.0
    %4130 = vmatpush1.msra.mxu0 0.0
    %4131 = vmatprep.subr.mxu0 0.0
    %4132 = vmatpush1.msra.mxu0 0.0
    %4133 = vmatprep.subr.mxu0 0.0
    %4134 = vmatpush1.msra.mxu0 0.0
    %4135 = vmatprep.subr.mxu0 0.0
    %4136 = vmatpush1.msra.mxu0 0.0
    %4137 = vmatprep.subr.mxu0 0.0
    %4138 = vmatpush1.msra.mxu0 0.0
    %4139 = vmatprep.subr.mxu0 0.0
    %4140 = vmatpush1.msra.mxu0 0.0
    %4141 = vmatprep.subr.mxu0 0.0
    %4142 = vmatpush1.msra.mxu0 0.0
    %4143 = vmatprep.subr.mxu0 0.0
    %4144 = vmatpush1.msra.mxu0 0.0
    %4145 = vmatprep.subr.mxu0 0.0
    %4146 = vmatpush1.msra.mxu0 0.0
    %4147 = vmatprep.subr.mxu0 0.0
    %4148 = vmatpush1.msra.mxu0 0.0
    %4149 = vmatprep.subr.mxu0 0.0
    %4150 = vmatpush1.msra.mxu0 0.0
    %4151 = vmatprep.subr.mxu0 0.0
    %4152 = vmatpush1.msra.mxu0 0.0
    %4153 = vmatprep.subr.mxu0 0.0
    %4154 = vmatpush1.msra.mxu0 0.0
    %4155 = vmatprep.subr.mxu0 0.0
    %4156 = vmatpush1.msra.mxu0 0.0
    %4157 = vmatprep.subr.mxu0 0.0
    %4158 = vmatpush1.msra.mxu0 0.0
    %4159 = vmatprep.subr.mxu0 0.0
    %4160 = vmatpush1.msra.mxu0 0.0
    %4161 = vmatprep.subr.mxu0 0.0
    %4162 = vmatpush1.msra.mxu0 0.0
    %4163 = vmatprep.subr.mxu0 0.0
    %4164 = vmatpush1.msra.mxu0 0.0
    %4165 = vmatprep.subr.mxu0 0.0
    %4166 = vmatpush1.msra.mxu0 0.0
    %4167 = vmatprep.mubr.f32.mxu0 0.0
    %4168 = vmatmul.mubr.f32.gmra.mrb[0].mxu0 %v4015
    %v4169 = vpop.f32.mrb[0].mxu0
    %v4170 = vadd.f32 0.0, %v4169
    %v4171 = vpop.f32.mrb[0].mxu0
    %4172 = vmatprep.mubr.f32.mxu0 0.0
    %4173 = vmatmul.mubr.f32.gmra.mrb[0].mxu0 %v4018
    %v4174 = vpop.f32.mrb[0].mxu0
    %v4175 = vadd.f32 0.0, %v4174
    %v4176 = vpop.f32.mrb[0].mxu0
    %4177 = vdwg.mxu0
    %v4178 = vadd.f32 %v3999, %v4093
    %v4179 = vadd.f32 %v4000, %v4095
    %v4180 = vadd.f32 %v4001, %v4170
    %v4181 = vadd.f32 %v4002, %v4099
    %v4182 = vadd.f32 %v4003, %v4101
    %v4183 = vadd.f32 %v4004, %v4175
    %4184 = vrot.lane.b32.xlu0 %v2616, 102
    %v4185 = vpop.permute.xlu0 %4184
    %4186 = vrot.lane.b32.xlu0 %v2618, 102
    %v4187 = vpop.permute.xlu0 %4186
    %4188 = vrot.lane.b32.xlu0 %v3107, 102
    %v4189 = vpop.permute.xlu0 %4188
    %vm4190 = vcmask 834560
    %v4191 = vsel %vm4190, %v4185, %v4187
    %v4192 = vsel %vm4190, %v4187, %v4189
    %v4194 = vsel %vm3139, %v3122, 0
    %v4197 = vsel %vm3139, %v3123, 0
    %v4199 = vsel %vm3146, %v4191, 0
    %v4201 = vsel %vm3146, %v4192, 0
    %v4203 = vsel %vm3146, %v4189, 0
    %4205 = vmatprep.subr.mxu0 %v4201
    %4206 = vmatpush1.msra.mxu0 %v4199
    %4207 = vmatprep.subr.mxu0 0.0
    %4208 = vmatpush1.msra.mxu0 0.0
    %4209 = vmatprep.subr.mxu0 0.0
    %4210 = vmatpush1.msra.mxu0 0.0
    %4211 = vmatprep.subr.mxu0 0.0
    %4212 = vmatpush1.msra.mxu0 0.0
    %4213 = vmatprep.subr.mxu0 0.0
    %4214 = vmatpush1.msra.mxu0 0.0
    %4215 = vmatprep.subr.mxu0 0.0
    %4216 = vmatpush1.msra.mxu0 0.0
    %4217 = vmatprep.subr.mxu0 0.0
    %4218 = vmatpush1.msra.mxu0 0.0
    %4219 = vmatprep.subr.mxu0 0.0
    %4220 = vmatpush1.msra.mxu0 0.0
    %4221 = vmatprep.subr.mxu0 0.0
    %4222 = vmatpush1.msra.mxu0 0.0
    %4223 = vmatprep.subr.mxu0 0.0
    %4224 = vmatpush1.msra.mxu0 0.0
    %4225 = vmatprep.subr.mxu0 0.0
    %4226 = vmatpush1.msra.mxu0 0.0
    %4227 = vmatprep.subr.mxu0 0.0
    %4228 = vmatpush1.msra.mxu0 0.0
    %4229 = vmatprep.subr.mxu0 0.0
    %4230 = vmatpush1.msra.mxu0 0.0
    %4231 = vmatprep.subr.mxu0 0.0
    %4232 = vmatpush1.msra.mxu0 0.0
    %4233 = vmatprep.subr.mxu0 0.0
    %4234 = vmatpush1.msra.mxu0 0.0
    %4235 = vmatprep.subr.mxu0 0.0
    %4236 = vmatpush1.msra.mxu0 0.0
    %4237 = vmatprep.subr.mxu0 0.0
    %4238 = vmatpush1.msra.mxu0 0.0
    %4239 = vmatprep.subr.mxu0 0.0
    %4240 = vmatpush1.msra.mxu0 0.0
    %4241 = vmatprep.subr.mxu0 0.0
    %4242 = vmatpush1.msra.mxu0 0.0
    %4243 = vmatprep.subr.mxu0 0.0
    %4244 = vmatpush1.msra.mxu0 0.0
    %4245 = vmatprep.subr.mxu0 0.0
    %4246 = vmatpush1.msra.mxu0 0.0
    %4247 = vmatprep.subr.mxu0 0.0
    %4248 = vmatpush1.msra.mxu0 0.0
    %4249 = vmatprep.subr.mxu0 0.0
    %4250 = vmatpush1.msra.mxu0 0.0
    %4251 = vmatprep.subr.mxu0 0.0
    %4252 = vmatpush1.msra.mxu0 0.0
    %4253 = vmatprep.subr.mxu0 0.0
    %4254 = vmatpush1.msra.mxu0 0.0
    %4255 = vmatprep.subr.mxu0 0.0
    %4256 = vmatpush1.msra.mxu0 0.0
    %4257 = vmatprep.subr.mxu0 0.0
    %4258 = vmatpush1.msra.mxu0 0.0
    %4259 = vmatprep.subr.mxu0 0.0
    %4260 = vmatpush1.msra.mxu0 0.0
    %4261 = vmatprep.subr.mxu0 0.0
    %4262 = vmatpush1.msra.mxu0 0.0
    %4263 = vmatprep.subr.mxu0 0.0
    %4264 = vmatpush1.msra.mxu0 0.0
    %4265 = vmatprep.subr.mxu0 0.0
    %4266 = vmatpush1.msra.mxu0 0.0
    %4267 = vmatprep.subr.mxu0 0.0
    %4268 = vmatpush1.msra.mxu0 0.0
    %4269 = vmatprep.mubr.f32.mxu0 0.0
    %4270 = vmatmul.mubr.f32.gmra.mrb[0].mxu0 %v4194
    %v4271 = vpop.f32.mrb[0].mxu0
    %v4272 = vadd.f32 0.0, %v4271
    %v4273 = vpop.f32.mrb[0].mxu0
    %v4274 = vadd.f32 0.0, %v4273
    %4275 = vmatprep.mubr.f32.mxu0 0.0
    %4276 = vmatmul.mubr.f32.gmra.mrb[0].mxu0 %v4197
    %v4277 = vpop.f32.mrb[0].mxu0
    %v4278 = vadd.f32 0.0, %v4277
    %v4279 = vpop.f32.mrb[0].mxu0
    %v4280 = vadd.f32 0.0, %v4279
    %4281 = vdwg.mxu0
    %4282 = vmatprep.subr.mxu0 0.0
    %4283 = vmatpush1.msra.mxu0 %v4203
    %4284 = vmatprep.subr.mxu0 0.0
    %4285 = vmatpush1.msra.mxu0 0.0
    %4286 = vmatprep.subr.mxu0 0.0
    %4287 = vmatpush1.msra.mxu0 0.0
    %4288 = vmatprep.subr.mxu0 0.0
    %4289 = vmatpush1.msra.mxu0 0.0
    %4290 = vmatprep.subr.mxu0 0.0
    %4291 = vmatpush1.msra.mxu0 0.0
    %4292 = vmatprep.subr.mxu0 0.0
    %4293 = vmatpush1.msra.mxu0 0.0
    %4294 = vmatprep.subr.mxu0 0.0
    %4295 = vmatpush1.msra.mxu0 0.0
    %4296 = vmatprep.subr.mxu0 0.0
    %4297 = vmatpush1.msra.mxu0 0.0
    %4298 = vmatprep.subr.mxu0 0.0
    %4299 = vmatpush1.msra.mxu0 0.0
    %4300 = vmatprep.subr.mxu0 0.0
    %4301 = vmatpush1.msra.mxu0 0.0
    %4302 = vmatprep.subr.mxu0 0.0
    %4303 = vmatpush1.msra.mxu0 0.0
    %4304 = vmatprep.subr.mxu0 0.0
    %4305 = vmatpush1.msra.mxu0 0.0
    %4306 = vmatprep.subr.mxu0 0.0
    %4307 = vmatpush1.msra.mxu0 0.0
    %4308 = vmatprep.subr.mxu0 0.0
    %4309 = vmatpush1.msra.mxu0 0.0
    %4310 = vmatprep.subr.mxu0 0.0
    %4311 = vmatpush1.msra.mxu0 0.0
    %4312 = vmatprep.subr.mxu0 0.0
    %4313 = vmatpush1.msra.mxu0 0.0
    %4314 = vmatprep.subr.mxu0 0.0
    %4315 = vmatpush1.msra.mxu0 0.0
    %4316 = vmatprep.subr.mxu0 0.0
    %4317 = vmatpush1.msra.mxu0 0.0
    %4318 = vmatprep.subr.mxu0 0.0
    %4319 = vmatpush1.msra.mxu0 0.0
    %4320 = vmatprep.subr.mxu0 0.0
    %4321 = vmatpush1.msra.mxu0 0.0
    %4322 = vmatprep.subr.mxu0 0.0
    %4323 = vmatpush1.msra.mxu0 0.0
    %4324 = vmatprep.subr.mxu0 0.0
    %4325 = vmatpush1.msra.mxu0 0.0
    %4326 = vmatprep.subr.mxu0 0.0
    %4327 = vmatpush1.msra.mxu0 0.0
    %4328 = vmatprep.subr.mxu0 0.0
    %4329 = vmatpush1.msra.mxu0 0.0
    %4330 = vmatprep.subr.mxu0 0.0
    %4331 = vmatpush1.msra.mxu0 0.0
    %4332 = vmatprep.subr.mxu0 0.0
    %4333 = vmatpush1.msra.mxu0 0.0
    %4334 = vmatprep.subr.mxu0 0.0
    %4335 = vmatpush1.msra.mxu0 0.0
    %4336 = vmatprep.subr.mxu0 0.0
    %4337 = vmatpush1.msra.mxu0 0.0
    %4338 = vmatprep.subr.mxu0 0.0
    %4339 = vmatpush1.msra.mxu0 0.0
    %4340 = vmatprep.subr.mxu0 0.0
    %4341 = vmatpush1.msra.mxu0 0.0
    %4342 = vmatprep.subr.mxu0 0.0
    %4343 = vmatpush1.msra.mxu0 0.0
    %4344 = vmatprep.subr.mxu0 0.0
    %4345 = vmatpush1.msra.mxu0 0.0
    %4346 = vmatprep.mubr.f32.mxu0 0.0
    %4347 = vmatmul.mubr.f32.gmra.mrb[0].mxu0 %v4194
    %v4348 = vpop.f32.mrb[0].mxu0
    %v4349 = vadd.f32 0.0, %v4348
    %v4350 = vpop.f32.mrb[0].mxu0
    %4351 = vmatprep.mubr.f32.mxu0 0.0
    %4352 = vmatmul.mubr.f32.gmra.mrb[0].mxu0 %v4197
    %v4353 = vpop.f32.mrb[0].mxu0
    %v4354 = vadd.f32 0.0, %v4353
    %v4355 = vpop.f32.mrb[0].mxu0
    %4356 = vdwg.mxu0
    %v4357 = vadd.f32 %v4178, %v4272
    %v4358 = vadd.f32 %v4179, %v4274
    %v4359 = vadd.f32 %v4180, %v4349
    %v4360 = vadd.f32 %v4181, %v4278
    %v4361 = vadd.f32 %v4182, %v4280
    %v4362 = vadd.f32 %v4183, %v4354
    %4363 = vrot.lane.b32.xlu0 %v2616, 101
    %v4364 = vpop.permute.xlu0 %4363
    %4365 = vrot.lane.b32.xlu0 %v2618, 101
    %v4366 = vpop.permute.xlu0 %4365
    %4367 = vrot.lane.b32.xlu0 %v3107, 101
    %v4368 = vpop.permute.xlu0 %4367
    %vm4369 = vcmask 826368
    %v4370 = vsel %vm4369, %v4364, %v4366
    %v4371 = vsel %vm4369, %v4366, %v4368
    %v4373 = vsel %vm3139, %v3124, 0
    %v4376 = vsel %vm3139, %v3125, 0
    %v4378 = vsel %vm3146, %v4370, 0
    %v4380 = vsel %vm3146, %v4371, 0
    %v4382 = vsel %vm3146, %v4368, 0
    %4384 = vmatprep.subr.mxu0 %v4380
    %4385 = vmatpush1.msra.mxu0 %v4378
    %4386 = vmatprep.subr.mxu0 0.0
    %4387 = vmatpush1.msra.mxu0 0.0
    %4388 = vmatprep.subr.mxu0 0.0
    %4389 = vmatpush1.msra.mxu0 0.0
    %4390 = vmatprep.subr.mxu0 0.0
    %4391 = vmatpush1.msra.mxu0 0.0
    %4392 = vmatprep.subr.mxu0 0.0
    %4393 = vmatpush1.msra.mxu0 0.0
    %4394 = vmatprep.subr.mxu0 0.0
    %4395 = vmatpush1.msra.mxu0 0.0
    %4396 = vmatprep.subr.mxu0 0.0
    %4397 = vmatpush1.msra.mxu0 0.0
    %4398 = vmatprep.subr.mxu0 0.0
    %4399 = vmatpush1.msra.mxu0 0.0
    %4400 = vmatprep.subr.mxu0 0.0
    %4401 = vmatpush1.msra.mxu0 0.0
    %4402 = vmatprep.subr.mxu0 0.0
    %4403 = vmatpush1.msra.mxu0 0.0
    %4404 = vmatprep.subr.mxu0 0.0
    %4405 = vmatpush1.msra.mxu0 0.0
    %4406 = vmatprep.subr.mxu0 0.0
    %4407 = vmatpush1.msra.mxu0 0.0
    %4408 = vmatprep.subr.mxu0 0.0
    %4409 = vmatpush1.msra.mxu0 0.0
    %4410 = vmatprep.subr.mxu0 0.0
    %4411 = vmatpush1.msra.mxu0 0.0
    %4412 = vmatprep.subr.mxu0 0.0
    %4413 = vmatpush1.msra.mxu0 0.0
    %4414 = vmatprep.subr.mxu0 0.0
    %4415 = vmatpush1.msra.mxu0 0.0
    %4416 = vmatprep.subr.mxu0 0.0
    %4417 = vmatpush1.msra.mxu0 0.0
    %4418 = vmatprep.subr.mxu0 0.0
    %4419 = vmatpush1.msra.mxu0 0.0
    %4420 = vmatprep.subr.mxu0 0.0
    %4421 = vmatpush1.msra.mxu0 0.0
    %4422 = vmatprep.subr.mxu0 0.0
    %4423 = vmatpush1.msra.mxu0 0.0
    %4424 = vmatprep.subr.mxu0 0.0
    %4425 = vmatpush1.msra.mxu0 0.0
    %4426 = vmatprep.subr.mxu0 0.0
    %4427 = vmatpush1.msra.mxu0 0.0
    %4428 = vmatprep.subr.mxu0 0.0
    %4429 = vmatpush1.msra.mxu0 0.0
    %4430 = vmatprep.subr.mxu0 0.0
    %4431 = vmatpush1.msra.mxu0 0.0
    %4432 = vmatprep.subr.mxu0 0.0
    %4433 = vmatpush1.msra.mxu0 0.0
    %4434 = vmatprep.subr.mxu0 0.0
    %4435 = vmatpush1.msra.mxu0 0.0
    %4436 = vmatprep.subr.mxu0 0.0
    %4437 = vmatpush1.msra.mxu0 0.0
    %4438 = vmatprep.subr.mxu0 0.0
    %4439 = vmatpush1.msra.mxu0 0.0
    %4440 = vmatprep.subr.mxu0 0.0
    %4441 = vmatpush1.msra.mxu0 0.0
    %4442 = vmatprep.subr.mxu0 0.0
    %4443 = vmatpush1.msra.mxu0 0.0
    %4444 = vmatprep.subr.mxu0 0.0
    %4445 = vmatpush1.msra.mxu0 0.0
    %4446 = vmatprep.subr.mxu0 0.0
    %4447 = vmatpush1.msra.mxu0 0.0
    %4448 = vmatprep.mubr.f32.mxu0 0.0
    %4449 = vmatmul.mubr.f32.gmra.mrb[0].mxu0 %v4373
    %v4450 = vpop.f32.mrb[0].mxu0
    %v4451 = vadd.f32 0.0, %v4450
    %v4452 = vpop.f32.mrb[0].mxu0
    %v4453 = vadd.f32 0.0, %v4452
    %4454 = vmatprep.mubr.f32.mxu0 0.0
    %4455 = vmatmul.mubr.f32.gmra.mrb[0].mxu0 %v4376
    %v4456 = vpop.f32.mrb[0].mxu0
    %v4457 = vadd.f32 0.0, %v4456
    %v4458 = vpop.f32.mrb[0].mxu0
    %v4459 = vadd.f32 0.0, %v4458
    %4460 = vdwg.mxu0
    %4461 = vmatprep.subr.mxu0 0.0
    %4462 = vmatpush1.msra.mxu0 %v4382
    %4463 = vmatprep.subr.mxu0 0.0
    %4464 = vmatpush1.msra.mxu0 0.0
    %4465 = vmatprep.subr.mxu0 0.0
    %4466 = vmatpush1.msra.mxu0 0.0
    %4467 = vmatprep.subr.mxu0 0.0
    %4468 = vmatpush1.msra.mxu0 0.0
    %4469 = vmatprep.subr.mxu0 0.0
    %4470 = vmatpush1.msra.mxu0 0.0
    %4471 = vmatprep.subr.mxu0 0.0
    %4472 = vmatpush1.msra.mxu0 0.0
    %4473 = vmatprep.subr.mxu0 0.0
    %4474 = vmatpush1.msra.mxu0 0.0
    %4475 = vmatprep.subr.mxu0 0.0
    %4476 = vmatpush1.msra.mxu0 0.0
    %4477 = vmatprep.subr.mxu0 0.0
    %4478 = vmatpush1.msra.mxu0 0.0
    %4479 = vmatprep.subr.mxu0 0.0
    %4480 = vmatpush1.msra.mxu0 0.0
    %4481 = vmatprep.subr.mxu0 0.0
    %4482 = vmatpush1.msra.mxu0 0.0
    %4483 = vmatprep.subr.mxu0 0.0
    %4484 = vmatpush1.msra.mxu0 0.0
    %4485 = vmatprep.subr.mxu0 0.0
    %4486 = vmatpush1.msra.mxu0 0.0
    %4487 = vmatprep.subr.mxu0 0.0
    %4488 = vmatpush1.msra.mxu0 0.0
    %4489 = vmatprep.subr.mxu0 0.0
    %4490 = vmatpush1.msra.mxu0 0.0
    %4491 = vmatprep.subr.mxu0 0.0
    %4492 = vmatpush1.msra.mxu0 0.0
    %4493 = vmatprep.subr.mxu0 0.0
    %4494 = vmatpush1.msra.mxu0 0.0
    %4495 = vmatprep.subr.mxu0 0.0
    %4496 = vmatpush1.msra.mxu0 0.0
    %4497 = vmatprep.subr.mxu0 0.0
    %4498 = vmatpush1.msra.mxu0 0.0
    %4499 = vmatprep.subr.mxu0 0.0
    %4500 = vmatpush1.msra.mxu0 0.0
    %4501 = vmatprep.subr.mxu0 0.0
    %4502 = vmatpush1.msra.mxu0 0.0
    %4503 = vmatprep.subr.mxu0 0.0
    %4504 = vmatpush1.msra.mxu0 0.0
    %4505 = vmatprep.subr.mxu0 0.0
    %4506 = vmatpush1.msra.mxu0 0.0
    %4507 = vmatprep.subr.mxu0 0.0
    %4508 = vmatpush1.msra.mxu0 0.0
    %4509 = vmatprep.subr.mxu0 0.0
    %4510 = vmatpush1.msra.mxu0 0.0
    %4511 = vmatprep.subr.mxu0 0.0
    %4512 = vmatpush1.msra.mxu0 0.0
    %4513 = vmatprep.subr.mxu0 0.0
    %4514 = vmatpush1.msra.mxu0 0.0
    %4515 = vmatprep.subr.mxu0 0.0
    %4516 = vmatpush1.msra.mxu0 0.0
    %4517 = vmatprep.subr.mxu0 0.0
    %4518 = vmatpush1.msra.mxu0 0.0
    %4519 = vmatprep.subr.mxu0 0.0
    %4520 = vmatpush1.msra.mxu0 0.0
    %4521 = vmatprep.subr.mxu0 0.0
    %4522 = vmatpush1.msra.mxu0 0.0
    %4523 = vmatprep.subr.mxu0 0.0
    %4524 = vmatpush1.msra.mxu0 0.0
    %4525 = vmatprep.mubr.f32.mxu0 0.0
    %4526 = vmatmul.mubr.f32.gmra.mrb[0].mxu0 %v4373
    %v4527 = vpop.f32.mrb[0].mxu0
    %v4528 = vadd.f32 0.0, %v4527
    %v4529 = vpop.f32.mrb[0].mxu0
    %4530 = vmatprep.mubr.f32.mxu0 0.0
    %4531 = vmatmul.mubr.f32.gmra.mrb[0].mxu0 %v4376
    %v4532 = vpop.f32.mrb[0].mxu0
    %v4533 = vadd.f32 0.0, %v4532
    %v4534 = vpop.f32.mrb[0].mxu0
    %4535 = vdwg.mxu0
    %v4536 = vadd.f32 %v4357, %v4451
    %v4537 = vadd.f32 %v4358, %v4453
    %v4538 = vadd.f32 %v4359, %v4528
    %v4539 = vadd.f32 %v4360, %v4457
    %v4540 = vadd.f32 %v4361, %v4459
    %v4541 = vadd.f32 %v4362, %v4533
    %4542 = vrot.lane.b32.xlu0 %v2616, 100
    %v4543 = vpop.permute.xlu0 %4542
    %4544 = vrot.lane.b32.xlu0 %v2618, 100
    %v4545 = vpop.permute.xlu0 %4544
    %4546 = vrot.lane.b32.xlu0 %v3107, 100
    %v4547 = vpop.permute.xlu0 %4546
    %v4548 = vsel %vm444, %v4543, %v4545
    %v4549 = vsel %vm444, %v4545, %v4547
    %v4551 = vsel %vm3139, %v3126, 0
    %v4554 = vsel %vm3139, %v3127, 0
    %v4556 = vsel %vm3146, %v4548, 0
    %v4558 = vsel %vm3146, %v4549, 0
    %v4560 = vsel %vm3146, %v4547, 0
    %4562 = vmatprep.subr.mxu0 %v4558
    %4563 = vmatpush1.msra.mxu0 %v4556
    %4564 = vmatprep.subr.mxu0 0.0
    %4565 = vmatpush1.msra.mxu0 0.0
    %4566 = vmatprep.subr.mxu0 0.0
    %4567 = vmatpush1.msra.mxu0 0.0
    %4568 = vmatprep.subr.mxu0 0.0
    %4569 = vmatpush1.msra.mxu0 0.0
    %4570 = vmatprep.subr.mxu0 0.0
    %4571 = vmatpush1.msra.mxu0 0.0
    %4572 = vmatprep.subr.mxu0 0.0
    %4573 = vmatpush1.msra.mxu0 0.0
    %4574 = vmatprep.subr.mxu0 0.0
    %4575 = vmatpush1.msra.mxu0 0.0
    %4576 = vmatprep.subr.mxu0 0.0
    %4577 = vmatpush1.msra.mxu0 0.0
    %4578 = vmatprep.subr.mxu0 0.0
    %4579 = vmatpush1.msra.mxu0 0.0
    %4580 = vmatprep.subr.mxu0 0.0
    %4581 = vmatpush1.msra.mxu0 0.0
    %4582 = vmatprep.subr.mxu0 0.0
    %4583 = vmatpush1.msra.mxu0 0.0
    %4584 = vmatprep.subr.mxu0 0.0
    %4585 = vmatpush1.msra.mxu0 0.0
    %4586 = vmatprep.subr.mxu0 0.0
    %4587 = vmatpush1.msra.mxu0 0.0
    %4588 = vmatprep.subr.mxu0 0.0
    %4589 = vmatpush1.msra.mxu0 0.0
    %4590 = vmatprep.subr.mxu0 0.0
    %4591 = vmatpush1.msra.mxu0 0.0
    %4592 = vmatprep.subr.mxu0 0.0
    %4593 = vmatpush1.msra.mxu0 0.0
    %4594 = vmatprep.subr.mxu0 0.0
    %4595 = vmatpush1.msra.mxu0 0.0
    %4596 = vmatprep.subr.mxu0 0.0
    %4597 = vmatpush1.msra.mxu0 0.0
    %4598 = vmatprep.subr.mxu0 0.0
    %4599 = vmatpush1.msra.mxu0 0.0
    %4600 = vmatprep.subr.mxu0 0.0
    %4601 = vmatpush1.msra.mxu0 0.0
    %4602 = vmatprep.subr.mxu0 0.0
    %4603 = vmatpush1.msra.mxu0 0.0
    %4604 = vmatprep.subr.mxu0 0.0
    %4605 = vmatpush1.msra.mxu0 0.0
    %4606 = vmatprep.subr.mxu0 0.0
    %4607 = vmatpush1.msra.mxu0 0.0
    %4608 = vmatprep.subr.mxu0 0.0
    %4609 = vmatpush1.msra.mxu0 0.0
    %4610 = vmatprep.subr.mxu0 0.0
    %4611 = vmatpush1.msra.mxu0 0.0
    %4612 = vmatprep.subr.mxu0 0.0
    %4613 = vmatpush1.msra.mxu0 0.0
    %4614 = vmatprep.subr.mxu0 0.0
    %4615 = vmatpush1.msra.mxu0 0.0
    %4616 = vmatprep.subr.mxu0 0.0
    %4617 = vmatpush1.msra.mxu0 0.0
    %4618 = vmatprep.subr.mxu0 0.0
    %4619 = vmatpush1.msra.mxu0 0.0
    %4620 = vmatprep.subr.mxu0 0.0
    %4621 = vmatpush1.msra.mxu0 0.0
    %4622 = vmatprep.subr.mxu0 0.0
    %4623 = vmatpush1.msra.mxu0 0.0
    %4624 = vmatprep.subr.mxu0 0.0
    %4625 = vmatpush1.msra.mxu0 0.0
    %4626 = vmatprep.mubr.f32.mxu0 0.0
    %4627 = vmatmul.mubr.f32.gmra.mrb[0].mxu0 %v4551
    %v4628 = vpop.f32.mrb[0].mxu0
    %v4629 = vadd.f32 0.0, %v4628
    %v4630 = vpop.f32.mrb[0].mxu0
    %v4631 = vadd.f32 0.0, %v4630
    %4632 = vmatprep.mubr.f32.mxu0 0.0
    %4633 = vmatmul.mubr.f32.gmra.mrb[0].mxu0 %v4554
    %v4634 = vpop.f32.mrb[0].mxu0
    %v4635 = vadd.f32 0.0, %v4634
    %v4636 = vpop.f32.mrb[0].mxu0
    %v4637 = vadd.f32 0.0, %v4636
    %4638 = vdwg.mxu0
    %4639 = vmatprep.subr.mxu0 0.0
    %4640 = vmatpush1.msra.mxu0 %v4560
    %4641 = vmatprep.subr.mxu0 0.0
    %4642 = vmatpush1.msra.mxu0 0.0
    %4643 = vmatprep.subr.mxu0 0.0
    %4644 = vmatpush1.msra.mxu0 0.0
    %4645 = vmatprep.subr.mxu0 0.0
    %4646 = vmatpush1.msra.mxu0 0.0
    %4647 = vmatprep.subr.mxu0 0.0
    %4648 = vmatpush1.msra.mxu0 0.0
    %4649 = vmatprep.subr.mxu0 0.0
    %4650 = vmatpush1.msra.mxu0 0.0
    %4651 = vmatprep.subr.mxu0 0.0
    %4652 = vmatpush1.msra.mxu0 0.0
    %4653 = vmatprep.subr.mxu0 0.0
    %4654 = vmatpush1.msra.mxu0 0.0
    %4655 = vmatprep.subr.mxu0 0.0
    %4656 = vmatpush1.msra.mxu0 0.0
    %4657 = vmatprep.subr.mxu0 0.0
    %4658 = vmatpush1.msra.mxu0 0.0
    %4659 = vmatprep.subr.mxu0 0.0
    %4660 = vmatpush1.msra.mxu0 0.0
    %4661 = vmatprep.subr.mxu0 0.0
    %4662 = vmatpush1.msra.mxu0 0.0
    %4663 = vmatprep.subr.mxu0 0.0
    %4664 = vmatpush1.msra.mxu0 0.0
    %4665 = vmatprep.subr.mxu0 0.0
    %4666 = vmatpush1.msra.mxu0 0.0
    %4667 = vmatprep.subr.mxu0 0.0
    %4668 = vmatpush1.msra.mxu0 0.0
    %4669 = vmatprep.subr.mxu0 0.0
    %4670 = vmatpush1.msra.mxu0 0.0
    %4671 = vmatprep.subr.mxu0 0.0
    %4672 = vmatpush1.msra.mxu0 0.0
    %4673 = vmatprep.subr.mxu0 0.0
    %4674 = vmatpush1.msra.mxu0 0.0
    %4675 = vmatprep.subr.mxu0 0.0
    %4676 = vmatpush1.msra.mxu0 0.0
    %4677 = vmatprep.subr.mxu0 0.0
    %4678 = vmatpush1.msra.mxu0 0.0
    %4679 = vmatprep.subr.mxu0 0.0
    %4680 = vmatpush1.msra.mxu0 0.0
    %4681 = vmatprep.subr.mxu0 0.0
    %4682 = vmatpush1.msra.mxu0 0.0
    %4683 = vmatprep.subr.mxu0 0.0
    %4684 = vmatpush1.msra.mxu0 0.0
    %4685 = vmatprep.subr.mxu0 0.0
    %4686 = vmatpush1.msra.mxu0 0.0
    %4687 = vmatprep.subr.mxu0 0.0
    %4688 = vmatpush1.msra.mxu0 0.0
    %4689 = vmatprep.subr.mxu0 0.0
    %4690 = vmatpush1.msra.mxu0 0.0
    %4691 = vmatprep.subr.mxu0 0.0
    %4692 = vmatpush1.msra.mxu0 0.0
    %4693 = vmatprep.subr.mxu0 0.0
    %4694 = vmatpush1.msra.mxu0 0.0
    %4695 = vmatprep.subr.mxu0 0.0
    %4696 = vmatpush1.msra.mxu0 0.0
    %4697 = vmatprep.subr.mxu0 0.0
    %4698 = vmatpush1.msra.mxu0 0.0
    %4699 = vmatprep.subr.mxu0 0.0
    %4700 = vmatpush1.msra.mxu0 0.0
    %4701 = vmatprep.subr.mxu0 0.0
    %4702 = vmatpush1.msra.mxu0 0.0
    %4703 = vmatprep.mubr.f32.mxu0 0.0
    %4704 = vmatmul.mubr.f32.gmra.mrb[0].mxu0 %v4551
    %v4705 = vpop.f32.mrb[0].mxu0
    %v4706 = vadd.f32 0.0, %v4705
    %v4707 = vpop.f32.mrb[0].mxu0
    %4708 = vmatprep.mubr.f32.mxu0 0.0
    %4709 = vmatmul.mubr.f32.gmra.mrb[0].mxu0 %v4554
    %v4710 = vpop.f32.mrb[0].mxu0
    %v4711 = vadd.f32 0.0, %v4710
    %v4712 = vpop.f32.mrb[0].mxu0
    %4713 = vdwg.mxu0
    %v4714 = vadd.f32 %v4536, %v4629
    %v4715 = vadd.f32 %v4537, %v4631
    %v4716 = vadd.f32 %v4538, %v4706
    %v4717 = vadd.f32 %v4539, %v4635
    %v4718 = vadd.f32 %v4540, %v4637
    %v4719 = vadd.f32 %v4541, %v4711
    %v4720 = vld [vmem:[%s5] sm:$0xff]
    %v4721 = vld [vmem:[%s5 + $0x8] sm:$0xff]
    %4723 = vset.pattern.permute.xlu0 0
    %4724 = vperm.xlu0 %4723, %v4720
    %v4725 = vpop.permute.xlu0 %4724
    %4728 = vset.pattern.permute.xlu0 0
    %4729 = vperm.xlu0 %4728, %v4721
    %v4730 = vpop.permute.xlu0 %4729
    %v4732 = vadd.f32 %v4714, %v4725
    %v4733 = vadd.f32 %v4715, %v4725
    %v4734 = vadd.f32 %v4716, %v4725
    %v4735 = vadd.f32 %v4717, %v4730
    %v4736 = vadd.f32 %v4718, %v4730
    %v4737 = vadd.f32 %v4719, %v4730
    %v4738 = vmax.f32 %v4732, 0.0
    %v4739 = vmax.f32 %v4733, 0.0
    %v4740 = vmax.f32 %v4734, 0.0
    %v4741 = vmax.f32 %v4735, 0.0
    %v4742 = vmax.f32 %v4736, 0.0
    %v4743 = vmax.f32 %v4737, 0.0
    %4750 = vrot.lane.b32.xlu0 %v4738, 127
    %v4751 = vpop.permute.xlu0 %4750
    %4752 = vrot.lane.b32.xlu0 %v4739, 127
    %v4753 = vpop.permute.xlu0 %4752
    %4754 = vrot.lane.b32.xlu0 %v4740, 127
    %v4755 = vpop.permute.xlu0 %4754
    %4756 = vrot.lane.b32.xlu0 %v4741, 127
    %v4757 = vpop.permute.xlu0 %4756
    %4758 = vrot.lane.b32.xlu0 %v4742, 127
    %v4759 = vpop.permute.xlu0 %4758
    %4760 = vrot.lane.b32.xlu0 %v4743, 127
    %v4761 = vpop.permute.xlu0 %4760
    %v4762 = vsel %vm254, %v4751, %v4753
    %v4763 = vsel %vm254, %v4753, %v4755
    %v4764 = vsel %vm254, %v4757, %v4759
    %v4765 = vsel %vm254, %v4759, %v4761
    %v4772 = vmax.f32 %v4738, %v4762
    %v4773 = vmax.f32 %v4739, %v4763
    %v4774 = vmax.f32 %v4740, %v4755
    %v4775 = vmax.f32 %v4741, %v4764
    %v4776 = vmax.f32 %v4742, %v4765
    %v4777 = vmax.f32 %v4743, %v4761
    %4784 = vrot.lane.b32.xlu0 %v4772, 115
    %v4785 = vpop.permute.xlu0 %4784
    %4786 = vrot.lane.b32.xlu0 %v4773, 115
    %v4787 = vpop.permute.xlu0 %4786
    %4788 = vrot.lane.b32.xlu0 %v4774, 115
    %v4789 = vpop.permute.xlu0 %4788
    %4790 = vrot.lane.b32.xlu0 %v4775, 115
    %v4791 = vpop.permute.xlu0 %4790
    %4792 = vrot.lane.b32.xlu0 %v4776, 115
    %v4793 = vpop.permute.xlu0 %4792
    %4794 = vrot.lane.b32.xlu0 %v4777, 115
    %v4795 = vpop.permute.xlu0 %4794
    %v4796 = vsel %vm3653, %v4785, %v4787
    %v4797 = vsel %vm3653, %v4787, %v4789
    %v4798 = vsel %vm3653, %v4791, %v4793
    %v4799 = vsel %vm3653, %v4793, %v4795
    %v4806 = vmax.f32 %v4772, %v4796
    %v4807 = vmax.f32 %v4773, %v4797
    %v4808 = vmax.f32 %v4774, %v4789
    %v4809 = vmax.f32 %v4775, %v4798
    %v4810 = vmax.f32 %v4776, %v4799
    %v4811 = vmax.f32 %v4777, %v4795
    %v4812 = vld [vmem:[%s6] sm:$0xf]
    %v4813 = vld [vmem:[%s6 + $0x4] sm:$0xf]
    %v4814 = vld [vmem:[%s6 + $0x8] sm:$0xf]
    %v4815 = vld [vmem:[%s6 + $0xc] sm:$0xf]
    %v4816 = vld [vmem:[%s6 + $0x10] sm:$0xf]
    %v4817 = vld [vmem:[%s6 + $0x14] sm:$0xf]
    %v4818 = vld [vmem:[%s6 + $0x18] sm:$0xf]
    %v4819 = vld [vmem:[%s6 + $0x1c] sm:$0xf]
    %v4820 = vld [vmem:[%s6 + $0x20] sm:$0xf]
    %v4821 = vld [vmem:[%s6 + $0x24] sm:$0xf]
    %v4822 = vld [vmem:[%s6 + $0x28] sm:$0xf]
    %v4823 = vld [vmem:[%s6 + $0x2c] sm:$0xf]
    %v4824 = vld [vmem:[%s6 + $0x30] sm:$0xf]
    %v4825 = vld [vmem:[%s6 + $0x34] sm:$0xf]
    %v4826 = vld [vmem:[%s6 + $0x38] sm:$0xf]
    %v4827 = vld [vmem:[%s6 + $0x3c] sm:$0xf]
    %v4828 = vld [vmem:[%s6 + $0x40] sm:$0xf]
    %v4829 = vld [vmem:[%s6 + $0x44] sm:$0xf]
    %v4830 = vld [vmem:[%s6 + $0x48] sm:$0xf]
    %v4831 = vld [vmem:[%s6 + $0x4c] sm:$0xf]
    %v4832 = vld [vmem:[%s6 + $0x50] sm:$0xf]
    %v4833 = vld [vmem:[%s6 + $0x54] sm:$0xf]
    %v4834 = vld [vmem:[%s6 + $0x58] sm:$0xf]
    %v4835 = vld [vmem:[%s6 + $0x5c] sm:$0xf]
    %v4836 = vld [vmem:[%s6 + $0x60] sm:$0xf]
    %v4837 = vld [vmem:[%s6 + $0x64] sm:$0xf]
    %v4838 = vld [vmem:[%s6 + $0x68] sm:$0xf]
    %v4839 = vld [vmem:[%s6 + $0x6c] sm:$0xf]
    %v4840 = vld [vmem:[%s6 + $0x70] sm:$0xf]
    %v4841 = vld [vmem:[%s6 + $0x74] sm:$0xf]
    %v4842 = vld [vmem:[%s6 + $0x78] sm:$0xf]
    %v4843 = vld [vmem:[%s6 + $0x7c] sm:$0xf]
    %v4844 = vld [vmem:[%s6 + $0x80] sm:$0xf]
    %v4845 = vld [vmem:[%s6 + $0x84] sm:$0xf]
    %v4846 = vld [vmem:[%s6 + $0x88] sm:$0xf]
    %v4847 = vld [vmem:[%s6 + $0x8c] sm:$0xf]
    %v4848 = vld [vmem:[%s6 + $0x90] sm:$0xf]
    %v4849 = vld [vmem:[%s6 + $0x94] sm:$0xf]
    %v4850 = vld [vmem:[%s6 + $0x98] sm:$0xf]
    %v4851 = vld [vmem:[%s6 + $0x9c] sm:$0xf]
    %v4852 = vld [vmem:[%s6 + $0xa0] sm:$0x3]
    %v4853 = vunpack.c.l.bf16 %v4812
    %v4854 = vunpack.c.l.bf16 %v4813
    %v4855 = vunpack.c.l.bf16 %v4814
    %v4856 = vunpack.c.l.bf16 %v4815
    %v4857 = vunpack.c.l.bf16 %v4816
    %v4858 = vunpack.c.l.bf16 %v4817
    %v4859 = vunpack.c.l.bf16 %v4818
    %v4860 = vunpack.c.l.bf16 %v4819
    %v4861 = vunpack.c.l.bf16 %v4820
    %v4862 = vunpack.c.l.bf16 %v4821
    %v4863 = vunpack.c.l.bf16 %v4822
    %v4864 = vunpack.c.l.bf16 %v4823
    %v4865 = vunpack.c.l.bf16 %v4824
    %v4866 = vunpack.c.l.bf16 %v4825
    %v4867 = vunpack.c.l.bf16 %v4826
    %v4868 = vunpack.c.l.bf16 %v4827
    %v4869 = vunpack.c.l.bf16 %v4828
    %v4870 = vunpack.c.l.bf16 %v4829
    %v4871 = vunpack.c.l.bf16 %v4830
    %v4872 = vunpack.c.l.bf16 %v4831
    %v4873 = vunpack.c.l.bf16 %v4832
    %v4874 = vunpack.c.l.bf16 %v4833
    %v4875 = vunpack.c.l.bf16 %v4834
    %v4876 = vunpack.c.l.bf16 %v4835
    %v4877 = vunpack.c.l.bf16 %v4836
    %v4878 = vunpack.c.l.bf16 %v4837
    %v4879 = vunpack.c.l.bf16 %v4838
    %v4880 = vunpack.c.l.bf16 %v4839
    %v4881 = vunpack.c.l.bf16 %v4840
    %v4882 = vunpack.c.l.bf16 %v4841
    %v4883 = vunpack.c.l.bf16 %v4842
    %v4884 = vunpack.c.l.bf16 %v4843
    %v4885 = vunpack.c.l.bf16 %v4844
    %v4886 = vunpack.c.l.bf16 %v4845
    %v4887 = vunpack.c.l.bf16 %v4846
    %v4888 = vunpack.c.l.bf16 %v4847
    %v4889 = vunpack.c.l.bf16 %v4848
    %v4890 = vunpack.c.l.bf16 %v4849
    %v4891 = vunpack.c.l.bf16 %v4850
    %v4892 = vunpack.c.l.bf16 %v4851
    %v4893 = vunpack.c.l.bf16 %v4852
    %vm4894 = vcmask 556032
    %v4896 = vsel %vm4894, %v4808, 0
    %v4899 = vsel %vm4894, %v4811, 0
    %vm4901 = vcmask 1043456
    %v4903 = vsel %vm4901, %v4893, 0
    %4905 = vmatprep.subr.mxu0 0.0
    %4906 = vmatpush1.msra.mxu0 %v4853
    %4907 = vmatprep.subr.mxu0 0.0
    %4908 = vmatpush1.msra.mxu0 %v4854
    %4909 = vmatprep.subr.mxu0 0.0
    %4910 = vmatpush1.msra.mxu0 %v4855
    %4911 = vmatprep.subr.mxu0 0.0
    %4912 = vmatpush1.msra.mxu0 %v4856
    %4913 = vmatprep.subr.mxu0 0.0
    %4914 = vmatpush1.msra.mxu0 %v4857
    %4915 = vmatprep.subr.mxu0 0.0
    %4916 = vmatpush1.msra.mxu0 %v4858
    %4917 = vmatprep.subr.mxu0 0.0
    %4918 = vmatpush1.msra.mxu0 %v4859
    %4919 = vmatprep.subr.mxu0 0.0
    %4920 = vmatpush1.msra.mxu0 %v4860
    %4921 = vmatprep.subr.mxu0 0.0
    %4922 = vmatpush1.msra.mxu0 %v4861
    %4923 = vmatprep.subr.mxu0 0.0
    %4924 = vmatpush1.msra.mxu0 %v4862
    %4925 = vmatprep.subr.mxu0 0.0
    %4926 = vmatpush1.msra.mxu0 %v4863
    %4927 = vmatprep.subr.mxu0 0.0
    %4928 = vmatpush1.msra.mxu0 %v4864
    %4929 = vmatprep.subr.mxu0 0.0
    %4930 = vmatpush1.msra.mxu0 %v4865
    %4931 = vmatprep.subr.mxu0 0.0
    %4932 = vmatpush1.msra.mxu0 %v4866
    %4933 = vmatprep.subr.mxu0 0.0
    %4934 = vmatpush1.msra.mxu0 %v4867
    %4935 = vmatprep.subr.mxu0 0.0
    %4936 = vmatpush1.msra.mxu0 %v4868
    %4937 = vmatprep.subr.mxu0 0.0
    %4938 = vmatpush1.msra.mxu0 %v4869
    %4939 = vmatprep.subr.mxu0 0.0
    %4940 = vmatpush1.msra.mxu0 %v4870
    %4941 = vmatprep.subr.mxu0 0.0
    %4942 = vmatpush1.msra.mxu0 %v4871
    %4943 = vmatprep.subr.mxu0 0.0
    %4944 = vmatpush1.msra.mxu0 %v4872
    %4945 = vmatprep.subr.mxu0 0.0
    %4946 = vmatpush1.msra.mxu0 %v4873
    %4947 = vmatprep.subr.mxu0 0.0
    %4948 = vmatpush1.msra.mxu0 %v4874
    %4949 = vmatprep.subr.mxu0 0.0
    %4950 = vmatpush1.msra.mxu0 %v4875
    %4951 = vmatprep.subr.mxu0 0.0
    %4952 = vmatpush1.msra.mxu0 %v4876
    %4953 = vmatprep.subr.mxu0 0.0
    %4954 = vmatpush1.msra.mxu0 %v4877
    %4955 = vmatprep.subr.mxu0 0.0
    %4956 = vmatpush1.msra.mxu0 %v4878
    %4957 = vmatprep.subr.mxu0 0.0
    %4958 = vmatpush1.msra.mxu0 %v4879
    %4959 = vmatprep.subr.mxu0 0.0
    %4960 = vmatpush1.msra.mxu0 %v4880
    %4961 = vmatprep.subr.mxu0 0.0
    %4962 = vmatpush1.msra.mxu0 %v4881
    %4963 = vmatprep.subr.mxu0 0.0
    %4964 = vmatpush1.msra.mxu0 %v4882
    %4965 = vmatprep.subr.mxu0 0.0
    %4966 = vmatpush1.msra.mxu0 %v4883
    %4967 = vmatprep.subr.mxu0 0.0
    %4968 = vmatpush1.msra.mxu0 %v4884
    %4969 = vmatprep.mubr.f32.mxu0 %v4807
    %4970 = vmatmul.mubr.f32.gmra.mrb[0].mxu0 %v4806
    %v4971 = vpop.f32.mrb[0].mxu0
    %v4972 = vadd.f32 0.0, %v4971
    %v4973 = vpop.f32.mrb[0].mxu0
    %4974 = vmatprep.mubr.f32.mxu0 %v4810
    %4975 = vmatmul.mubr.f32.gmra.mrb[0].mxu0 %v4809
    %v4976 = vpop.f32.mrb[0].mxu0
    %v4977 = vadd.f32 0.0, %v4976
    %v4978 = vpop.f32.mrb[0].mxu0
    %4979 = vdwg.mxu0
    %4980 = vmatprep.subr.mxu0 0.0
    %4981 = vmatpush1.msra.mxu0 %v4885
    %4982 = vmatprep.subr.mxu0 0.0
    %4983 = vmatpush1.msra.mxu0 %v4886
    %4984 = vmatprep.subr.mxu0 0.0
    %4985 = vmatpush1.msra.mxu0 %v4887
    %4986 = vmatprep.subr.mxu0 0.0
    %4987 = vmatpush1.msra.mxu0 %v4888
    %4988 = vmatprep.subr.mxu0 0.0
    %4989 = vmatpush1.msra.mxu0 %v4889
    %4990 = vmatprep.subr.mxu0 0.0
    %4991 = vmatpush1.msra.mxu0 %v4890
    %4992 = vmatprep.subr.mxu0 0.0
    %4993 = vmatpush1.msra.mxu0 %v4891
    %4994 = vmatprep.subr.mxu0 0.0
    %4995 = vmatpush1.msra.mxu0 %v4892
    %4996 = vmatprep.subr.mxu0 0.0
    %4997 = vmatpush1.msra.mxu0 %v4903
    %4998 = vmatprep.subr.mxu0 0.0
    %4999 = vmatpush1.msra.mxu0 0.0
    %5000 = vmatprep.subr.mxu0 0.0
    %5001 = vmatpush1.msra.mxu0 0.0
    %5002 = vmatprep.subr.mxu0 0.0
    %5003 = vmatpush1.msra.mxu0 0.0
    %5004 = vmatprep.subr.mxu0 0.0
    %5005 = vmatpush1.msra.mxu0 0.0
    %5006 = vmatprep.subr.mxu0 0.0
    %5007 = vmatpush1.msra.mxu0 0.0
    %5008 = vmatprep.subr.mxu0 0.0
    %5009 = vmatpush1.msra.mxu0 0.0
    %5010 = vmatprep.subr.mxu0 0.0
    %5011 = vmatpush1.msra.mxu0 0.0
    %5012 = vmatprep.subr.mxu0 0.0
    %5013 = vmatpush1.msra.mxu0 0.0
    %5014 = vmatprep.subr.mxu0 0.0
    %5015 = vmatpush1.msra.mxu0 0.0
    %5016 = vmatprep.subr.mxu0 0.0
    %5017 = vmatpush1.msra.mxu0 0.0
    %5018 = vmatprep.subr.mxu0 0.0
    %5019 = vmatpush1.msra.mxu0 0.0
    %5020 = vmatprep.subr.mxu0 0.0
    %5021 = vmatpush1.msra.mxu0 0.0
    %5022 = vmatprep.subr.mxu0 0.0
    %5023 = vmatpush1.msra.mxu0 0.0
    %5024 = vmatprep.subr.mxu0 0.0
    %5025 = vmatpush1.msra.mxu0 0.0
    %5026 = vmatprep.subr.mxu0 0.0
    %5027 = vmatpush1.msra.mxu0 0.0
    %5028 = vmatprep.subr.mxu0 0.0
    %5029 = vmatpush1.msra.mxu0 0.0
    %5030 = vmatprep.subr.mxu0 0.0
    %5031 = vmatpush1.msra.mxu0 0.0
    %5032 = vmatprep.subr.mxu0 0.0
    %5033 = vmatpush1.msra.mxu0 0.0
    %5034 = vmatprep.subr.mxu0 0.0
    %5035 = vmatpush1.msra.mxu0 0.0
    %5036 = vmatprep.subr.mxu0 0.0
    %5037 = vmatpush1.msra.mxu0 0.0
    %5038 = vmatprep.subr.mxu0 0.0
    %5039 = vmatpush1.msra.mxu0 0.0
    %5040 = vmatprep.subr.mxu0 0.0
    %5041 = vmatpush1.msra.mxu0 0.0
    %5042 = vmatprep.subr.mxu0 0.0
    %5043 = vmatpush1.msra.mxu0 0.0
    %5044 = vmatprep.mubr.f32.mxu0 0.0
    %5045 = vmatmul.mubr.f32.gmra.mrb[0].mxu0 %v4896
    %v5046 = vpop.f32.mrb[0].mxu0
    %v5047 = vadd.f32 %v4972, %v5046
    %v5048 = vpop.f32.mrb[0].mxu0
    %5049 = vmatprep.mubr.f32.mxu0 0.0
    %5050 = vmatmul.mubr.f32.gmra.mrb[0].mxu0 %v4899
    %v5051 = vpop.f32.mrb[0].mxu0
    %v5052 = vadd.f32 %v4977, %v5051
    %v5053 = vpop.f32.mrb[0].mxu0
    %5054 = vdwg.mxu0
    %v5055 = vld [vmem:[%s7] sm:$0xff]
    %v5056 = vld [vmem:[%s7 + $0x8] sm:$0xff]
    %v5057 = vld [vmem:[%s7 + $0x10] sm:$0xff]
    %v5058 = vld [vmem:[%s7 + $0x18] sm:$0xff]
    %v5059 = vld [vmem:[%s7 + $0x20] sm:$0xff]
    %v5060 = vld [vmem:[%s7 + $0x28] sm:$0xff]
    %v5061 = vld [vmem:[%s7 + $0x30] sm:$0xff]
    %v5062 = vld [vmem:[%s7 + $0x38] sm:$0xff]
    %v5063 = vld [vmem:[%s7 + $0x40] sm:$0xff]
    %v5064 = vld [vmem:[%s7 + $0x48] sm:$0xff]
    %v5065 = vld [vmem:[%s7 + $0x50] sm:$0xff]
    %v5066 = vld [vmem:[%s7 + $0x58] sm:$0xff]
    %v5067 = vld [vmem:[%s7 + $0x60] sm:$0xff]
    %v5068 = vld [vmem:[%s7 + $0x68] sm:$0xff]
    %v5069 = vld [vmem:[%s7 + $0x70] sm:$0xff]
    %v5070 = vld [vmem:[%s7 + $0x78] sm:$0xff]
    %v5071 = vld [vmem:[%s7 + $0x80] sm:$0xff]
    %v5072 = vld [vmem:[%s7 + $0x88] sm:$0xff]
    %v5073 = vld [vmem:[%s7 + $0x90] sm:$0xff]
    %v5074 = vld [vmem:[%s7 + $0x98] sm:$0xff]
    %v5075 = vld [vmem:[%s7 + $0xa0] sm:$0xff]
    %v5076 = vld [vmem:[%s7 + $0xa8] sm:$0xff]
    %v5077 = vld [vmem:[%s7 + $0xb0] sm:$0xff]
    %v5078 = vld [vmem:[%s7 + $0xb8] sm:$0xff]
    %v5079 = vld [vmem:[%s7 + $0xc0] sm:$0xff]
    %v5080 = vld [vmem:[%s7 + $0xc8] sm:$0xff]
    %v5081 = vld [vmem:[%s7 + $0xd0] sm:$0xff]
    %v5082 = vld [vmem:[%s7 + $0xd8] sm:$0xff]
    %v5083 = vld [vmem:[%s7 + $0xe0] sm:$0xff]
    %v5084 = vld [vmem:[%s7 + $0xe8] sm:$0xff]
    %v5085 = vld [vmem:[%s7 + $0xf0] sm:$0xff]
    %v5086 = vld [vmem:[%s7 + $0xf8] sm:$0xff]
    %v5087 = vld [vmem:[%s7 + $0x100] sm:$0xff]
    %v5088 = vld [vmem:[%s7 + $0x108] sm:$0xff]
    %v5089 = vld [vmem:[%s7 + $0x110] sm:$0xff]
    %v5090 = vld [vmem:[%s7 + $0x118] sm:$0xff]
    %v5091 = vld [vmem:[%s7 + $0x120] sm:$0xff]
    %v5092 = vld [vmem:[%s7 + $0x128] sm:$0xff]
    %v5093 = vld [vmem:[%s7 + $0x130] sm:$0xff]
    %v5094 = vld [vmem:[%s7 + $0x138] sm:$0xff]
    %v5095 = vld [vmem:[%s7 + $0x140] sm:$0xff]
    %v5096 = vld [vmem:[%s7 + $0x148] sm:$0xff]
    %v5097 = vld [vmem:[%s7 + $0x150] sm:$0xff]
    %v5098 = vld [vmem:[%s7 + $0x158] sm:$0xff]
    %v5099 = vld [vmem:[%s7 + $0x160] sm:$0xff]
    %v5100 = vld [vmem:[%s7 + $0x168] sm:$0xff]
    %v5101 = vld [vmem:[%s7 + $0x170] sm:$0xff]
    %v5102 = vld [vmem:[%s7 + $0x178] sm:$0xff]
    %v5103 = vld [vmem:[%s7 + $0x180] sm:$0xff]
    %v5104 = vld [vmem:[%s7 + $0x188] sm:$0xff]
    %v5105 = vld [vmem:[%s7 + $0x190] sm:$0xff]
    %v5106 = vld [vmem:[%s7 + $0x198] sm:$0xff]
    %v5107 = vld [vmem:[%s7 + $0x1a0] sm:$0xff]
    %v5108 = vld [vmem:[%s7 + $0x1a8] sm:$0xff]
    %v5109 = vld [vmem:[%s7 + $0x1b0] sm:$0xff]
    %v5110 = vld [vmem:[%s7 + $0x1b8] sm:$0xff]
    %v5111 = vld [vmem:[%s7 + $0x1c0] sm:$0xff]
    %v5112 = vld [vmem:[%s7 + $0x1c8] sm:$0xff]
    %v5113 = vld [vmem:[%s7 + $0x1d0] sm:$0xff]
    %v5114 = vld [vmem:[%s7 + $0x1d8] sm:$0xff]
    %5130 = vrot.lane.b32.xlu0 %v5055, 112
    %v5131 = vpop.permute.xlu0 %5130
    %5132 = vrot.lane.b32.xlu0 %v5059, 112
    %v5133 = vpop.permute.xlu0 %5132
    %5134 = vrot.lane.b32.xlu0 %v5063, 112
    %v5135 = vpop.permute.xlu0 %5134
    %5136 = vrot.lane.b32.xlu0 %v5067, 112
    %v5137 = vpop.permute.xlu0 %5136
    %5138 = vrot.lane.b32.xlu0 %v5071, 112
    %v5139 = vpop.permute.xlu0 %5138
    %5140 = vrot.lane.b32.xlu0 %v5075, 112
    %v5141 = vpop.permute.xlu0 %5140
    %5142 = vrot.lane.b32.xlu0 %v5079, 112
    %v5143 = vpop.permute.xlu0 %5142
    %5144 = vrot.lane.b32.xlu0 %v5083, 112
    %v5145 = vpop.permute.xlu0 %5144
    %5146 = vrot.lane.b32.xlu0 %v5087, 112
    %v5147 = vpop.permute.xlu0 %5146
    %5148 = vrot.lane.b32.xlu0 %v5091, 112
    %v5149 = vpop.permute.xlu0 %5148
    %5150 = vrot.lane.b32.xlu0 %v5095, 112
    %v5151 = vpop.permute.xlu0 %5150
    %5152 = vrot.lane.b32.xlu0 %v5099, 112
    %v5153 = vpop.permute.xlu0 %5152
    %5154 = vrot.lane.b32.xlu0 %v5103, 112
    %v5155 = vpop.permute.xlu0 %5154
    %5156 = vrot.lane.b32.xlu0 %v5107, 112
    %v5157 = vpop.permute.xlu0 %5156
    %5158 = vrot.lane.b32.xlu0 %v5111, 112
    %v5159 = vpop.permute.xlu0 %5158
    %5162 = vrot.lane.b32.xlu0 %v5047, 126
    %v5163 = vpop.permute.xlu0 %5162
    %5164 = vrot.lane.b32.xlu0 %v5052, 126
    %v5165 = vpop.permute.xlu0 %5164
    %vm5168 = vcmask 130048
    %v5169 = vsel %vm5168, %v5131, 0
    %v5171 = vsel %vm5168, %v5133, 0
    %v5173 = vsel %vm5168, %v5135, 0
    %v5175 = vsel %vm5168, %v5137, 0
    %v5177 = vsel %vm5168, %v5139, 0
    %v5179 = vsel %vm5168, %v5141, 0
    %v5181 = vsel %vm5168, %v5143, 0
    %v5183 = vsel %vm5168, %v5145, 0
    %v5185 = vsel %vm5168, %v5147, 0
    %v5187 = vsel %vm5168, %v5149, 0
    %v5189 = vsel %vm5168, %v5151, 0
    %v5191 = vsel %vm5168, %v5153, 0
    %v5193 = vsel %vm5168, %v5155, 0
    %v5195 = vsel %vm5168, %v5157, 0
    %v5197 = vsel %vm5168, %v5159, 0
    %5199 = vmatprep.subr.mxu0 0.0
    %5200 = vmatpush1.msra.mxu0 %v5163
    %5201 = vmatprep.subr.mxu0 0.0
    %5202 = vmatpush1.msra.mxu0 %v5165
    %5203 = vmatprep.subr.mxu0 0.0
    %5204 = vmatpush1.msra.mxu0 0.0
    %5205 = vmatprep.subr.mxu0 0.0
    %5206 = vmatpush1.msra.mxu0 0.0
    %5207 = vmatprep.subr.mxu0 0.0
    %5208 = vmatpush1.msra.mxu0 0.0
    %5209 = vmatprep.subr.mxu0 0.0
    %5210 = vmatpush1.msra.mxu0 0.0
    %5211 = vmatprep.subr.mxu0 0.0
    %5212 = vmatpush1.msra.mxu0 0.0
    %5213 = vmatprep.subr.mxu0 0.0
    %5214 = vmatpush1.msra.mxu0 0.0
    %5215 = vmatprep.subr.mxu0 0.0
    %5216 = vmatpush1.msra.mxu0 0.0
    %5217 = vmatprep.subr.mxu0 0.0
    %5218 = vmatpush1.msra.mxu0 0.0
    %5219 = vmatprep.subr.mxu0 0.0
    %5220 = vmatpush1.msra.mxu0 0.0
    %5221 = vmatprep.subr.mxu0 0.0
    %5222 = vmatpush1.msra.mxu0 0.0
    %5223 = vmatprep.subr.mxu0 0.0
    %5224 = vmatpush1.msra.mxu0 0.0
    %5225 = vmatprep.subr.mxu0 0.0
    %5226 = vmatpush1.msra.mxu0 0.0
    %5227 = vmatprep.subr.mxu0 0.0
    %5228 = vmatpush1.msra.mxu0 0.0
    %5229 = vmatprep.subr.mxu0 0.0
    %5230 = vmatpush1.msra.mxu0 0.0
    %5231 = vmatprep.subr.mxu0 0.0
    %5232 = vmatpush1.msra.mxu0 0.0
    %5233 = vmatprep.subr.mxu0 0.0
    %5234 = vmatpush1.msra.mxu0 0.0
    %5235 = vmatprep.subr.mxu0 0.0
    %5236 = vmatpush1.msra.mxu0 0.0
    %5237 = vmatprep.subr.mxu0 0.0
    %5238 = vmatpush1.msra.mxu0 0.0
    %5239 = vmatprep.subr.mxu0 0.0
    %5240 = vmatpush1.msra.mxu0 0.0
    %5241 = vmatprep.subr.mxu0 0.0
    %5242 = vmatpush1.msra.mxu0 0.0
    %5243 = vmatprep.subr.mxu0 0.0
    %5244 = vmatpush1.msra.mxu0 0.0
    %5245 = vmatprep.subr.mxu0 0.0
    %5246 = vmatpush1.msra.mxu0 0.0
    %5247 = vmatprep.subr.mxu0 0.0
    %5248 = vmatpush1.msra.mxu0 0.0
    %5249 = vmatprep.subr.mxu0 0.0
    %5250 = vmatpush1.msra.mxu0 0.0
    %5251 = vmatprep.subr.mxu0 0.0
    %5252 = vmatpush1.msra.mxu0 0.0
    %5253 = vmatprep.subr.mxu0 0.0
    %5254 = vmatpush1.msra.mxu0 0.0
    %5255 = vmatprep.subr.mxu0 0.0
    %5256 = vmatpush1.msra.mxu0 0.0
    %5257 = vmatprep.subr.mxu0 0.0
    %5258 = vmatpush1.msra.mxu0 0.0
    %5259 = vmatprep.subr.mxu0 0.0
    %5260 = vmatpush1.msra.mxu0 0.0
    %5261 = vmatprep.subr.mxu0 0.0
    %5262 = vmatpush1.msra.mxu0 0.0
    %5263 = vmatprep.mubr.f32.mxu0 0.0
    %5264 = vmatmul.mubr.f32.gmra.mrb[0].mxu0 %v5169
    %v5265 = vpop.f32.mrb[0].mxu0
    %v5266 = vadd.f32 0.0, %v5265
    %v5267 = vpop.f32.mrb[0].mxu0
    %5268 = vmatprep.mubr.f32.mxu0 0.0
    %5269 = vmatmul.mubr.f32.gmra.mrb[0].mxu0 %v5171
    %v5270 = vpop.f32.mrb[0].mxu0
    %v5271 = vadd.f32 0.0, %v5270
    %v5272 = vpop.f32.mrb[0].mxu0
    %5273 = vmatprep.mubr.f32.mxu0 0.0
    %5274 = vmatmul.mubr.f32.gmra.mrb[0].mxu0 %v5173
    %v5275 = vpop.f32.mrb[0].mxu0
    %v5276 = vadd.f32 0.0, %v5275
    %v5277 = vpop.f32.mrb[0].mxu0
    %5278 = vmatprep.mubr.f32.mxu0 0.0
    %5279 = vmatmul.mubr.f32.gmra.mrb[0].mxu0 %v5175
    %v5280 = vpop.f32.mrb[0].mxu0
    %v5281 = vadd.f32 0.0, %v5280
    %v5282 = vpop.f32.mrb[0].mxu0
    %5283 = vmatprep.mubr.f32.mxu0 0.0
    %5284 = vmatmul.mubr.f32.gmra.mrb[0].mxu0 %v5177
    %v5285 = vpop.f32.mrb[0].mxu0
    %v5286 = vadd.f32 0.0, %v5285
    %v5287 = vpop.f32.mrb[0].mxu0
    %5288 = vmatprep.mubr.f32.mxu0 0.0
    %5289 = vmatmul.mubr.f32.gmra.mrb[0].mxu0 %v5179
    %v5290 = vpop.f32.mrb[0].mxu0
    %v5291 = vadd.f32 0.0, %v5290
    %v5292 = vpop.f32.mrb[0].mxu0
    %5293 = vmatprep.mubr.f32.mxu0 0.0
    %5294 = vmatmul.mubr.f32.gmra.mrb[0].mxu0 %v5181
    %v5295 = vpop.f32.mrb[0].mxu0
    %v5296 = vadd.f32 0.0, %v5295
    %v5297 = vpop.f32.mrb[0].mxu0
    %5298 = vmatprep.mubr.f32.mxu0 0.0
    %5299 = vmatmul.mubr.f32.gmra.mrb[0].mxu0 %v5183
    %v5300 = vpop.f32.mrb[0].mxu0
    %v5301 = vadd.f32 0.0, %v5300
    %v5302 = vpop.f32.mrb[0].mxu0
    %5303 = vmatprep.mubr.f32.mxu0 0.0
    %5304 = vmatmul.mubr.f32.gmra.mrb[0].mxu0 %v5185
    %v5305 = vpop.f32.mrb[0].mxu0
    %v5306 = vadd.f32 0.0, %v5305
    %v5307 = vpop.f32.mrb[0].mxu0
    %5308 = vmatprep.mubr.f32.mxu0 0.0
    %5309 = vmatmul.mubr.f32.gmra.mrb[0].mxu0 %v5187
    %v5310 = vpop.f32.mrb[0].mxu0
    %v5311 = vadd.f32 0.0, %v5310
    %v5312 = vpop.f32.mrb[0].mxu0
    %5313 = vmatprep.mubr.f32.mxu0 0.0
    %5314 = vmatmul.mubr.f32.gmra.mrb[0].mxu0 %v5189
    %v5315 = vpop.f32.mrb[0].mxu0
    %v5316 = vadd.f32 0.0, %v5315
    %v5317 = vpop.f32.mrb[0].mxu0
    %5318 = vmatprep.mubr.f32.mxu0 0.0
    %5319 = vmatmul.mubr.f32.gmra.mrb[0].mxu0 %v5191
    %v5320 = vpop.f32.mrb[0].mxu0
    %v5321 = vadd.f32 0.0, %v5320
    %v5322 = vpop.f32.mrb[0].mxu0
    %5323 = vmatprep.mubr.f32.mxu0 0.0
    %5324 = vmatmul.mubr.f32.gmra.mrb[0].mxu0 %v5193
    %v5325 = vpop.f32.mrb[0].mxu0
    %v5326 = vadd.f32 0.0, %v5325
    %v5327 = vpop.f32.mrb[0].mxu0
    %5328 = vmatprep.mubr.f32.mxu0 0.0
    %5329 = vmatmul.mubr.f32.gmra.mrb[0].mxu0 %v5195
    %v5330 = vpop.f32.mrb[0].mxu0
    %v5331 = vadd.f32 0.0, %v5330
    %v5332 = vpop.f32.mrb[0].mxu0
    %5333 = vmatprep.mubr.f32.mxu0 0.0
    %5334 = vmatmul.mubr.f32.gmra.mrb[0].mxu0 %v5197
    %v5335 = vpop.f32.mrb[0].mxu0
    %v5336 = vadd.f32 0.0, %v5335
    %v5337 = vpop.f32.mrb[0].mxu0
    %5338 = vdwg.mxu0
    %v5339 = vsel %vm5168, %v5055, 0
    %v5341 = vsel %vm5168, %v5059, 0
    %v5343 = vsel %vm5168, %v5063, 0
    %v5345 = vsel %vm5168, %v5067, 0
    %v5347 = vsel %vm5168, %v5071, 0
    %v5349 = vsel %vm5168, %v5075, 0
    %v5351 = vsel %vm5168, %v5079, 0
    %v5353 = vsel %vm5168, %v5083, 0
    %v5355 = vsel %vm5168, %v5087, 0
    %v5357 = vsel %vm5168, %v5091, 0
    %v5359 = vsel %vm5168, %v5095, 0
    %v5361 = vsel %vm5168, %v5099, 0
    %v5363 = vsel %vm5168, %v5103, 0
    %v5365 = vsel %vm5168, %v5107, 0
    %v5367 = vsel %vm5168, %v5111, 0
    %5369 = vmatprep.subr.mxu0 0.0
    %5370 = vmatpush1.msra.mxu0 %v5047
    %5371 = vmatprep.subr.mxu0 0.0
    %5372 = vmatpush1.msra.mxu0 %v5052
    %5373 = vmatprep.subr.mxu0 0.0
    %5374 = vmatpush1.msra.mxu0 0.0
    %5375 = vmatprep.subr.mxu0 0.0
    %5376 = vmatpush1.msra.mxu0 0.0
    %5377 = vmatprep.subr.mxu0 0.0
    %5378 = vmatpush1.msra.mxu0 0.0
    %5379 = vmatprep.subr.mxu0 0.0
    %5380 = vmatpush1.msra.mxu0 0.0
    %5381 = vmatprep.subr.mxu0 0.0
    %5382 = vmatpush1.msra.mxu0 0.0
    %5383 = vmatprep.subr.mxu0 0.0
    %5384 = vmatpush1.msra.mxu0 0.0
    %5385 = vmatprep.subr.mxu0 0.0
    %5386 = vmatpush1.msra.mxu0 0.0
    %5387 = vmatprep.subr.mxu0 0.0
    %5388 = vmatpush1.msra.mxu0 0.0
    %5389 = vmatprep.subr.mxu0 0.0
    %5390 = vmatpush1.msra.mxu0 0.0
    %5391 = vmatprep.subr.mxu0 0.0
    %5392 = vmatpush1.msra.mxu0 0.0
    %5393 = vmatprep.subr.mxu0 0.0
    %5394 = vmatpush1.msra.mxu0 0.0
    %5395 = vmatprep.subr.mxu0 0.0
    %5396 = vmatpush1.msra.mxu0 0.0
    %5397 = vmatprep.subr.mxu0 0.0
    %5398 = vmatpush1.msra.mxu0 0.0
    %5399 = vmatprep.subr.mxu0 0.0
    %5400 = vmatpush1.msra.mxu0 0.0
    %5401 = vmatprep.subr.mxu0 0.0
    %5402 = vmatpush1.msra.mxu0 0.0
    %5403 = vmatprep.subr.mxu0 0.0
    %5404 = vmatpush1.msra.mxu0 0.0
    %5405 = vmatprep.subr.mxu0 0.0
    %5406 = vmatpush1.msra.mxu0 0.0
    %5407 = vmatprep.subr.mxu0 0.0
    %5408 = vmatpush1.msra.mxu0 0.0
    %5409 = vmatprep.subr.mxu0 0.0
    %5410 = vmatpush1.msra.mxu0 0.0
    %5411 = vmatprep.subr.mxu0 0.0
    %5412 = vmatpush1.msra.mxu0 0.0
    %5413 = vmatprep.subr.mxu0 0.0
    %5414 = vmatpush1.msra.mxu0 0.0
    %5415 = vmatprep.subr.mxu0 0.0
    %5416 = vmatpush1.msra.mxu0 0.0
    %5417 = vmatprep.subr.mxu0 0.0
    %5418 = vmatpush1.msra.mxu0 0.0
    %5419 = vmatprep.subr.mxu0 0.0
    %5420 = vmatpush1.msra.mxu0 0.0
    %5421 = vmatprep.subr.mxu0 0.0
    %5422 = vmatpush1.msra.mxu0 0.0
    %5423 = vmatprep.subr.mxu0 0.0
    %5424 = vmatpush1.msra.mxu0 0.0
    %5425 = vmatprep.subr.mxu0 0.0
    %5426 = vmatpush1.msra.mxu0 0.0
    %5427 = vmatprep.subr.mxu0 0.0
    %5428 = vmatpush1.msra.mxu0 0.0
    %5429 = vmatprep.subr.mxu0 0.0
    %5430 = vmatpush1.msra.mxu0 0.0
    %5431 = vmatprep.subr.mxu0 0.0
    %5432 = vmatpush1.msra.mxu0 0.0
    %5433 = vmatprep.mubr.f32.mxu0 0.0
    %5434 = vmatmul.mubr.f32.gmra.mrb[0].mxu0 %v5339
    %v5435 = vpop.f32.mrb[0].mxu0
    %v5436 = vadd.f32 %v5266, %v5435
    %v5437 = vpop.f32.mrb[0].mxu0
    %5438 = vmatprep.mubr.f32.mxu0 0.0
    %5439 = vmatmul.mubr.f32.gmra.mrb[0].mxu0 %v5341
    %v5440 = vpop.f32.mrb[0].mxu0
    %v5441 = vadd.f32 %v5271, %v5440
    %v5442 = vpop.f32.mrb[0].mxu0
    %5443 = vmatprep.mubr.f32.mxu0 0.0
    %5444 = vmatmul.mubr.f32.gmra.mrb[0].mxu0 %v5343
    %v5445 = vpop.f32.mrb[0].mxu0
    %v5446 = vadd.f32 %v5276, %v5445
    %v5447 = vpop.f32.mrb[0].mxu0
    %5448 = vmatprep.mubr.f32.mxu0 0.0
    %5449 = vmatmul.mubr.f32.gmra.mrb[0].mxu0 %v5345
    %v5450 = vpop.f32.mrb[0].mxu0
    %v5451 = vadd.f32 %v5281, %v5450
    %v5452 = vpop.f32.mrb[0].mxu0
    %5453 = vmatprep.mubr.f32.mxu0 0.0
    %5454 = vmatmul.mubr.f32.gmra.mrb[0].mxu0 %v5347
    %v5455 = vpop.f32.mrb[0].mxu0
    %v5456 = vadd.f32 %v5286, %v5455
    %v5457 = vpop.f32.mrb[0].mxu0
    %5458 = vmatprep.mubr.f32.mxu0 0.0
    %5459 = vmatmul.mubr.f32.gmra.mrb[0].mxu0 %v5349
    %v5460 = vpop.f32.mrb[0].mxu0
    %v5461 = vadd.f32 %v5291, %v5460
    %v5462 = vpop.f32.mrb[0].mxu0
    %5463 = vmatprep.mubr.f32.mxu0 0.0
    %5464 = vmatmul.mubr.f32.gmra.mrb[0].mxu0 %v5351
    %v5465 = vpop.f32.mrb[0].mxu0
    %v5466 = vadd.f32 %v5296, %v5465
    %v5467 = vpop.f32.mrb[0].mxu0
    %5468 = vmatprep.mubr.f32.mxu0 0.0
    %5469 = vmatmul.mubr.f32.gmra.mrb[0].mxu0 %v5353
    %v5470 = vpop.f32.mrb[0].mxu0
    %v5471 = vadd.f32 %v5301, %v5470
    %v5472 = vpop.f32.mrb[0].mxu0
    %5473 = vmatprep.mubr.f32.mxu0 0.0
    %5474 = vmatmul.mubr.f32.gmra.mrb[0].mxu0 %v5355
    %v5475 = vpop.f32.mrb[0].mxu0
    %v5476 = vadd.f32 %v5306, %v5475
    %v5477 = vpop.f32.mrb[0].mxu0
    %5478 = vmatprep.mubr.f32.mxu0 0.0
    %5479 = vmatmul.mubr.f32.gmra.mrb[0].mxu0 %v5357
    %v5480 = vpop.f32.mrb[0].mxu0
    %v5481 = vadd.f32 %v5311, %v5480
    %v5482 = vpop.f32.mrb[0].mxu0
    %5483 = vmatprep.mubr.f32.mxu0 0.0
    %5484 = vmatmul.mubr.f32.gmra.mrb[0].mxu0 %v5359
    %v5485 = vpop.f32.mrb[0].mxu0
    %v5486 = vadd.f32 %v5316, %v5485
    %v5487 = vpop.f32.mrb[0].mxu0
    %5488 = vmatprep.mubr.f32.mxu0 0.0
    %5489 = vmatmul.mubr.f32.gmra.mrb[0].mxu0 %v5361
    %v5490 = vpop.f32.mrb[0].mxu0
    %v5491 = vadd.f32 %v5321, %v5490
    %v5492 = vpop.f32.mrb[0].mxu0
    %5493 = vmatprep.mubr.f32.mxu0 0.0
    %5494 = vmatmul.mubr.f32.gmra.mrb[0].mxu0 %v5363
    %v5495 = vpop.f32.mrb[0].mxu0
    %v5496 = vadd.f32 %v5326, %v5495
    %v5497 = vpop.f32.mrb[0].mxu0
    %5498 = vmatprep.mubr.f32.mxu0 0.0
    %5499 = vmatmul.mubr.f32.gmra.mrb[0].mxu0 %v5365
    %v5500 = vpop.f32.mrb[0].mxu0
    %v5501 = vadd.f32 %v5331, %v5500
    %v5502 = vpop.f32.mrb[0].mxu0
    %5503 = vmatprep.mubr.f32.mxu0 0.0
    %5504 = vmatmul.mubr.f32.gmra.mrb[0].mxu0 %v5367
    %v5505 = vpop.f32.mrb[0].mxu0
    %v5506 = vadd.f32 %v5336, %v5505
    %v5507 = vpop.f32.mrb[0].mxu0
    %5508 = vdwg.mxu0
    %5509 = vrot.lane.b32.xlu0 %v5055, 96
    %v5510 = vpop.permute.xlu0 %5509
    %5511 = vrot.lane.b32.xlu0 %v5059, 96
    %v5512 = vpop.permute.xlu0 %5511
    %5513 = vrot.lane.b32.xlu0 %v5063, 96
    %v5514 = vpop.permute.xlu0 %5513
    %5515 = vrot.lane.b32.xlu0 %v5067, 96
    %v5516 = vpop.permute.xlu0 %5515
    %5517 = vrot.lane.b32.xlu0 %v5071, 96
    %v5518 = vpop.permute.xlu0 %5517
    %5519 = vrot.lane.b32.xlu0 %v5075, 96
    %v5520 = vpop.permute.xlu0 %5519
    %5521 = vrot.lane.b32.xlu0 %v5079, 96
    %v5522 = vpop.permute.xlu0 %5521
    %5523 = vrot.lane.b32.xlu0 %v5083, 96
    %v5524 = vpop.permute.xlu0 %5523
    %5525 = vrot.lane.b32.xlu0 %v5087, 96
    %v5526 = vpop.permute.xlu0 %5525
    %5527 = vrot.lane.b32.xlu0 %v5091, 96
    %v5528 = vpop.permute.xlu0 %5527
    %5529 = vrot.lane.b32.xlu0 %v5095, 96
    %v5530 = vpop.permute.xlu0 %5529
    %5531 = vrot.lane.b32.xlu0 %v5099, 96
    %v5532 = vpop.permute.xlu0 %5531
    %5533 = vrot.lane.b32.xlu0 %v5103, 96
    %v5534 = vpop.permute.xlu0 %5533
    %5535 = vrot.lane.b32.xlu0 %v5107, 96
    %v5536 = vpop.permute.xlu0 %5535
    %5537 = vrot.lane.b32.xlu0 %v5111, 96
    %v5538 = vpop.permute.xlu0 %5537
    %5539 = vrot.lane.b32.xlu0 %v5047, 124
    %v5540 = vpop.permute.xlu0 %5539
    %5541 = vrot.lane.b32.xlu0 %v5052, 124
    %v5542 = vpop.permute.xlu0 %5541
    %v5545 = vsel %vm5168, %v5510, 0
    %v5547 = vsel %vm5168, %v5512, 0
    %v5549 = vsel %vm5168, %v5514, 0
    %v5551 = vsel %vm5168, %v5516, 0
    %v5553 = vsel %vm5168, %v5518, 0
    %v5555 = vsel %vm5168, %v5520, 0
    %v5557 = vsel %vm5168, %v5522, 0
    %v5559 = vsel %vm5168, %v5524, 0
    %v5561 = vsel %vm5168, %v5526, 0
    %v5563 = vsel %vm5168, %v5528, 0
    %v5565 = vsel %vm5168, %v5530, 0
    %v5567 = vsel %vm5168, %v5532, 0
    %v5569 = vsel %vm5168, %v5534, 0
    %v5571 = vsel %vm5168, %v5536, 0
    %v5573 = vsel %vm5168, %v5538, 0
    %5575 = vmatprep.subr.mxu0 0.0
    %5576 = vmatpush1.msra.mxu0 %v5540
    %5577 = vmatprep.subr.mxu0 0.0
    %5578 = vmatpush1.msra.mxu0 %v5542
    %5579 = vmatprep.subr.mxu0 0.0
    %5580 = vmatpush1.msra.mxu0 0.0
    %5581 = vmatprep.subr.mxu0 0.0
    %5582 = vmatpush1.msra.mxu0 0.0
    %5583 = vmatprep.subr.mxu0 0.0
    %5584 = vmatpush1.msra.mxu0 0.0
    %5585 = vmatprep.subr.mxu0 0.0
    %5586 = vmatpush1.msra.mxu0 0.0
    %5587 = vmatprep.subr.mxu0 0.0
    %5588 = vmatpush1.msra.mxu0 0.0
    %5589 = vmatprep.subr.mxu0 0.0
    %5590 = vmatpush1.msra.mxu0 0.0
    %5591 = vmatprep.subr.mxu0 0.0
    %5592 = vmatpush1.msra.mxu0 0.0
    %5593 = vmatprep.subr.mxu0 0.0
    %5594 = vmatpush1.msra.mxu0 0.0
    %5595 = vmatprep.subr.mxu0 0.0
    %5596 = vmatpush1.msra.mxu0 0.0
    %5597 = vmatprep.subr.mxu0 0.0
    %5598 = vmatpush1.msra.mxu0 0.0
    %5599 = vmatprep.subr.mxu0 0.0
    %5600 = vmatpush1.msra.mxu0 0.0
    %5601 = vmatprep.subr.mxu0 0.0
    %5602 = vmatpush1.msra.mxu0 0.0
    %5603 = vmatprep.subr.mxu0 0.0
    %5604 = vmatpush1.msra.mxu0 0.0
    %5605 = vmatprep.subr.mxu0 0.0
    %5606 = vmatpush1.msra.mxu0 0.0
    %5607 = vmatprep.subr.mxu0 0.0
    %5608 = vmatpush1.msra.mxu0 0.0
    %5609 = vmatprep.subr.mxu0 0.0
    %5610 = vmatpush1.msra.mxu0 0.0
    %5611 = vmatprep.subr.mxu0 0.0
    %5612 = vmatpush1.msra.mxu0 0.0
    %5613 = vmatprep.subr.mxu0 0.0
    %5614 = vmatpush1.msra.mxu0 0.0
    %5615 = vmatprep.subr.mxu0 0.0
    %5616 = vmatpush1.msra.mxu0 0.0
    %5617 = vmatprep.subr.mxu0 0.0
    %5618 = vmatpush1.msra.mxu0 0.0
    %5619 = vmatprep.subr.mxu0 0.0
    %5620 = vmatpush1.msra.mxu0 0.0
    %5621 = vmatprep.subr.mxu0 0.0
    %5622 = vmatpush1.msra.mxu0 0.0
    %5623 = vmatprep.subr.mxu0 0.0
    %5624 = vmatpush1.msra.mxu0 0.0
    %5625 = vmatprep.subr.mxu0 0.0
    %5626 = vmatpush1.msra.mxu0 0.0
    %5627 = vmatprep.subr.mxu0 0.0
    %5628 = vmatpush1.msra.mxu0 0.0
    %5629 = vmatprep.subr.mxu0 0.0
    %5630 = vmatpush1.msra.mxu0 0.0
    %5631 = vmatprep.subr.mxu0 0.0
    %5632 = vmatpush1.msra.mxu0 0.0
    %5633 = vmatprep.subr.mxu0 0.0
    %5634 = vmatpush1.msra.mxu0 0.0
    %5635 = vmatprep.subr.mxu0 0.0
    %5636 = vmatpush1.msra.mxu0 0.0
    %5637 = vmatprep.subr.mxu0 0.0
    %5638 = vmatpush1.msra.mxu0 0.0
    %5639 = vmatprep.mubr.f32.mxu0 0.0
    %5640 = vmatmul.mubr.f32.gmra.mrb[0].mxu0 %v5545
    %v5641 = vpop.f32.mrb[0].mxu0
    %v5642 = vadd.f32 0.0, %v5641
    %v5643 = vpop.f32.mrb[0].mxu0
    %5644 = vmatprep.mubr.f32.mxu0 0.0
    %5645 = vmatmul.mubr.f32.gmra.mrb[0].mxu0 %v5547
    %v5646 = vpop.f32.mrb[0].mxu0
    %v5647 = vadd.f32 0.0, %v5646
    %v5648 = vpop.f32.mrb[0].mxu0
    %5649 = vmatprep.mubr.f32.mxu0 0.0
    %5650 = vmatmul.mubr.f32.gmra.mrb[0].mxu0 %v5549
    %v5651 = vpop.f32.mrb[0].mxu0
    %v5652 = vadd.f32 0.0, %v5651
    %v5653 = vpop.f32.mrb[0].mxu0
    %5654 = vmatprep.mubr.f32.mxu0 0.0
    %5655 = vmatmul.mubr.f32.gmra.mrb[0].mxu0 %v5551
    %v5656 = vpop.f32.mrb[0].mxu0
    %v5657 = vadd.f32 0.0, %v5656
    %v5658 = vpop.f32.mrb[0].mxu0
    %5659 = vmatprep.mubr.f32.mxu0 0.0
    %5660 = vmatmul.mubr.f32.gmra.mrb[0].mxu0 %v5553
    %v5661 = vpop.f32.mrb[0].mxu0
    %v5662 = vadd.f32 0.0, %v5661
    %v5663 = vpop.f32.mrb[0].mxu0
    %5664 = vmatprep.mubr.f32.mxu0 0.0
    %5665 = vmatmul.mubr.f32.gmra.mrb[0].mxu0 %v5555
    %v5666 = vpop.f32.mrb[0].mxu0
    %v5667 = vadd.f32 0.0, %v5666
    %v5668 = vpop.f32.mrb[0].mxu0
    %5669 = vmatprep.mubr.f32.mxu0 0.0
    %5670 = vmatmul.mubr.f32.gmra.mrb[0].mxu0 %v5557
    %v5671 = vpop.f32.mrb[0].mxu0
    %v5672 = vadd.f32 0.0, %v5671
    %v5673 = vpop.f32.mrb[0].mxu0
    %5674 = vmatprep.mubr.f32.mxu0 0.0
    %5675 = vmatmul.mubr.f32.gmra.mrb[0].mxu0 %v5559
    %v5676 = vpop.f32.mrb[0].mxu0
    %v5677 = vadd.f32 0.0, %v5676
    %v5678 = vpop.f32.mrb[0].mxu0
    %5679 = vmatprep.mubr.f32.mxu0 0.0
    %5680 = vmatmul.mubr.f32.gmra.mrb[0].mxu0 %v5561
    %v5681 = vpop.f32.mrb[0].mxu0
    %v5682 = vadd.f32 0.0, %v5681
    %v5683 = vpop.f32.mrb[0].mxu0
    %5684 = vmatprep.mubr.f32.mxu0 0.0
    %5685 = vmatmul.mubr.f32.gmra.mrb[0].mxu0 %v5563
    %v5686 = vpop.f32.mrb[0].mxu0
    %v5687 = vadd.f32 0.0, %v5686
    %v5688 = vpop.f32.mrb[0].mxu0
    %5689 = vmatprep.mubr.f32.mxu0 0.0
    %5690 = vmatmul.mubr.f32.gmra.mrb[0].mxu0 %v5565
    %v5691 = vpop.f32.mrb[0].mxu0
    %v5692 = vadd.f32 0.0, %v5691
    %v5693 = vpop.f32.mrb[0].mxu0
    %5694 = vmatprep.mubr.f32.mxu0 0.0
    %5695 = vmatmul.mubr.f32.gmra.mrb[0].mxu0 %v5567
    %v5696 = vpop.f32.mrb[0].mxu0
    %v5697 = vadd.f32 0.0, %v5696
    %v5698 = vpop.f32.mrb[0].mxu0
    %5699 = vmatprep.mubr.f32.mxu0 0.0
    %5700 = vmatmul.mubr.f32.gmra.mrb[0].mxu0 %v5569
    %v5701 = vpop.f32.mrb[0].mxu0
    %v5702 = vadd.f32 0.0, %v5701
    %v5703 = vpop.f32.mrb[0].mxu0
    %5704 = vmatprep.mubr.f32.mxu0 0.0
    %5705 = vmatmul.mubr.f32.gmra.mrb[0].mxu0 %v5571
    %v5706 = vpop.f32.mrb[0].mxu0
    %v5707 = vadd.f32 0.0, %v5706
    %v5708 = vpop.f32.mrb[0].mxu0
    %5709 = vmatprep.mubr.f32.mxu0 0.0
    %5710 = vmatmul.mubr.f32.gmra.mrb[0].mxu0 %v5573
    %v5711 = vpop.f32.mrb[0].mxu0
    %v5712 = vadd.f32 0.0, %v5711
    %v5713 = vpop.f32.mrb[0].mxu0
    %5714 = vdwg.mxu0
    %v5715 = vadd.f32 %v5436, %v5642
    %v5716 = vadd.f32 %v5441, %v5647
    %v5717 = vadd.f32 %v5446, %v5652
    %v5718 = vadd.f32 %v5451, %v5657
    %v5719 = vadd.f32 %v5456, %v5662
    %v5720 = vadd.f32 %v5461, %v5667
    %v5721 = vadd.f32 %v5466, %v5672
    %v5722 = vadd.f32 %v5471, %v5677
    %v5723 = vadd.f32 %v5476, %v5682
    %v5724 = vadd.f32 %v5481, %v5687
    %v5725 = vadd.f32 %v5486, %v5692
    %v5726 = vadd.f32 %v5491, %v5697
    %v5727 = vadd.f32 %v5496, %v5702
    %v5728 = vadd.f32 %v5501, %v5707
    %v5729 = vadd.f32 %v5506, %v5712
    %5730 = vrot.lane.b32.xlu0 %v5055, 80
    %v5731 = vpop.permute.xlu0 %5730
    %5732 = vrot.lane.b32.xlu0 %v5059, 80
    %v5733 = vpop.permute.xlu0 %5732
    %5734 = vrot.lane.b32.xlu0 %v5063, 80
    %v5735 = vpop.permute.xlu0 %5734
    %5736 = vrot.lane.b32.xlu0 %v5067, 80
    %v5737 = vpop.permute.xlu0 %5736
    %5738 = vrot.lane.b32.xlu0 %v5071, 80
    %v5739 = vpop.permute.xlu0 %5738
    %5740 = vrot.lane.b32.xlu0 %v5075, 80
    %v5741 = vpop.permute.xlu0 %5740
    %5742 = vrot.lane.b32.xlu0 %v5079, 80
    %v5743 = vpop.permute.xlu0 %5742
    %5744 = vrot.lane.b32.xlu0 %v5083, 80
    %v5745 = vpop.permute.xlu0 %5744
    %5746 = vrot.lane.b32.xlu0 %v5087, 80
    %v5747 = vpop.permute.xlu0 %5746
    %5748 = vrot.lane.b32.xlu0 %v5091, 80
    %v5749 = vpop.permute.xlu0 %5748
    %5750 = vrot.lane.b32.xlu0 %v5095, 80
    %v5751 = vpop.permute.xlu0 %5750
    %5752 = vrot.lane.b32.xlu0 %v5099, 80
    %v5753 = vpop.permute.xlu0 %5752
    %5754 = vrot.lane.b32.xlu0 %v5103, 80
    %v5755 = vpop.permute.xlu0 %5754
    %5756 = vrot.lane.b32.xlu0 %v5107, 80
    %v5757 = vpop.permute.xlu0 %5756
    %5758 = vrot.lane.b32.xlu0 %v5111, 80
    %v5759 = vpop.permute.xlu0 %5758
    %5760 = vrot.lane.b32.xlu0 %v5047, 122
    %v5761 = vpop.permute.xlu0 %5760
    %5762 = vrot.lane.b32.xlu0 %v5052, 122
    %v5763 = vpop.permute.xlu0 %5762
    %v5766 = vsel %vm5168, %v5731, 0
    %v5768 = vsel %vm5168, %v5733, 0
    %v5770 = vsel %vm5168, %v5735, 0
    %v5772 = vsel %vm5168, %v5737, 0
    %v5774 = vsel %vm5168, %v5739, 0
    %v5776 = vsel %vm5168, %v5741, 0
    %v5778 = vsel %vm5168, %v5743, 0
    %v5780 = vsel %vm5168, %v5745, 0
    %v5782 = vsel %vm5168, %v5747, 0
    %v5784 = vsel %vm5168, %v5749, 0
    %v5786 = vsel %vm5168, %v5751, 0
    %v5788 = vsel %vm5168, %v5753, 0
    %v5790 = vsel %vm5168, %v5755, 0
    %v5792 = vsel %vm5168, %v5757, 0
    %v5794 = vsel %vm5168, %v5759, 0
    %5796 = vmatprep.subr.mxu0 0.0
    %5797 = vmatpush1.msra.mxu0 %v5761
    %5798 = vmatprep.subr.mxu0 0.0
    %5799 = vmatpush1.msra.mxu0 %v5763
    %5800 = vmatprep.subr.mxu0 0.0
    %5801 = vmatpush1.msra.mxu0 0.0
    %5802 = vmatprep.subr.mxu0 0.0
    %5803 = vmatpush1.msra.mxu0 0.0
    %5804 = vmatprep.subr.mxu0 0.0
    %5805 = vmatpush1.msra.mxu0 0.0
    %5806 = vmatprep.subr.mxu0 0.0
    %5807 = vmatpush1.msra.mxu0 0.0
    %5808 = vmatprep.subr.mxu0 0.0
    %5809 = vmatpush1.msra.mxu0 0.0
    %5810 = vmatprep.subr.mxu0 0.0
    %5811 = vmatpush1.msra.mxu0 0.0
    %5812 = vmatprep.subr.mxu0 0.0
    %5813 = vmatpush1.msra.mxu0 0.0
    %5814 = vmatprep.subr.mxu0 0.0
    %5815 = vmatpush1.msra.mxu0 0.0
    %5816 = vmatprep.subr.mxu0 0.0
    %5817 = vmatpush1.msra.mxu0 0.0
    %5818 = vmatprep.subr.mxu0 0.0
    %5819 = vmatpush1.msra.mxu0 0.0
    %5820 = vmatprep.subr.mxu0 0.0
    %5821 = vmatpush1.msra.mxu0 0.0
    %5822 = vmatprep.subr.mxu0 0.0
    %5823 = vmatpush1.msra.mxu0 0.0
    %5824 = vmatprep.subr.mxu0 0.0
    %5825 = vmatpush1.msra.mxu0 0.0
    %5826 = vmatprep.subr.mxu0 0.0
    %5827 = vmatpush1.msra.mxu0 0.0
    %5828 = vmatprep.subr.mxu0 0.0
    %5829 = vmatpush1.msra.mxu0 0.0
    %5830 = vmatprep.subr.mxu0 0.0
    %5831 = vmatpush1.msra.mxu0 0.0
    %5832 = vmatprep.subr.mxu0 0.0
    %5833 = vmatpush1.msra.mxu0 0.0
    %5834 = vmatprep.subr.mxu0 0.0
    %5835 = vmatpush1.msra.mxu0 0.0
    %5836 = vmatprep.subr.mxu0 0.0
    %5837 = vmatpush1.msra.mxu0 0.0
    %5838 = vmatprep.subr.mxu0 0.0
    %5839 = vmatpush1.msra.mxu0 0.0
    %5840 = vmatprep.subr.mxu0 0.0
    %5841 = vmatpush1.msra.mxu0 0.0
    %5842 = vmatprep.subr.mxu0 0.0
    %5843 = vmatpush1.msra.mxu0 0.0
    %5844 = vmatprep.subr.mxu0 0.0
    %5845 = vmatpush1.msra.mxu0 0.0
    %5846 = vmatprep.subr.mxu0 0.0
    %5847 = vmatpush1.msra.mxu0 0.0
    %5848 = vmatprep.subr.mxu0 0.0
    %5849 = vmatpush1.msra.mxu0 0.0
    %5850 = vmatprep.subr.mxu0 0.0
    %5851 = vmatpush1.msra.mxu0 0.0
    %5852 = vmatprep.subr.mxu0 0.0
    %5853 = vmatpush1.msra.mxu0 0.0
    %5854 = vmatprep.subr.mxu0 0.0
    %5855 = vmatpush1.msra.mxu0 0.0
    %5856 = vmatprep.subr.mxu0 0.0
    %5857 = vmatpush1.msra.mxu0 0.0
    %5858 = vmatprep.subr.mxu0 0.0
    %5859 = vmatpush1.msra.mxu0 0.0
    %5860 = vmatprep.mubr.f32.mxu0 0.0
    %5861 = vmatmul.mubr.f32.gmra.mrb[0].mxu0 %v5766
    %v5862 = vpop.f32.mrb[0].mxu0
    %v5863 = vadd.f32 0.0, %v5862
    %v5864 = vpop.f32.mrb[0].mxu0
    %5865 = vmatprep.mubr.f32.mxu0 0.0
    %5866 = vmatmul.mubr.f32.gmra.mrb[0].mxu0 %v5768
    %v5867 = vpop.f32.mrb[0].mxu0
    %v5868 = vadd.f32 0.0, %v5867
    %v5869 = vpop.f32.mrb[0].mxu0
    %5870 = vmatprep.mubr.f32.mxu0 0.0
    %5871 = vmatmul.mubr.f32.gmra.mrb[0].mxu0 %v5770
    %v5872 = vpop.f32.mrb[0].mxu0
    %v5873 = vadd.f32 0.0, %v5872
    %v5874 = vpop.f32.mrb[0].mxu0
    %5875 = vmatprep.mubr.f32.mxu0 0.0
    %5876 = vmatmul.mubr.f32.gmra.mrb[0].mxu0 %v5772
    %v5877 = vpop.f32.mrb[0].mxu0
    %v5878 = vadd.f32 0.0, %v5877
    %v5879 = vpop.f32.mrb[0].mxu0
    %5880 = vmatprep.mubr.f32.mxu0 0.0
    %5881 = vmatmul.mubr.f32.gmra.mrb[0].mxu0 %v5774
    %v5882 = vpop.f32.mrb[0].mxu0
    %v5883 = vadd.f32 0.0, %v5882
    %v5884 = vpop.f32.mrb[0].mxu0
    %5885 = vmatprep.mubr.f32.mxu0 0.0
    %5886 = vmatmul.mubr.f32.gmra.mrb[0].mxu0 %v5776
    %v5887 = vpop.f32.mrb[0].mxu0
    %v5888 = vadd.f32 0.0, %v5887
    %v5889 = vpop.f32.mrb[0].mxu0
    %5890 = vmatprep.mubr.f32.mxu0 0.0
    %5891 = vmatmul.mubr.f32.gmra.mrb[0].mxu0 %v5778
    %v5892 = vpop.f32.mrb[0].mxu0
    %v5893 = vadd.f32 0.0, %v5892
    %v5894 = vpop.f32.mrb[0].mxu0
    %5895 = vmatprep.mubr.f32.mxu0 0.0
    %5896 = vmatmul.mubr.f32.gmra.mrb[0].mxu0 %v5780
    %v5897 = vpop.f32.mrb[0].mxu0
    %v5898 = vadd.f32 0.0, %v5897
    %v5899 = vpop.f32.mrb[0].mxu0
    %5900 = vmatprep.mubr.f32.mxu0 0.0
    %5901 = vmatmul.mubr.f32.gmra.mrb[0].mxu0 %v5782
    %v5902 = vpop.f32.mrb[0].mxu0
    %v5903 = vadd.f32 0.0, %v5902
    %v5904 = vpop.f32.mrb[0].mxu0
    %5905 = vmatprep.mubr.f32.mxu0 0.0
    %5906 = vmatmul.mubr.f32.gmra.mrb[0].mxu0 %v5784
    %v5907 = vpop.f32.mrb[0].mxu0
    %v5908 = vadd.f32 0.0, %v5907
    %v5909 = vpop.f32.mrb[0].mxu0
    %5910 = vmatprep.mubr.f32.mxu0 0.0
    %5911 = vmatmul.mubr.f32.gmra.mrb[0].mxu0 %v5786
    %v5912 = vpop.f32.mrb[0].mxu0
    %v5913 = vadd.f32 0.0, %v5912
    %v5914 = vpop.f32.mrb[0].mxu0
    %5915 = vmatprep.mubr.f32.mxu0 0.0
    %5916 = vmatmul.mubr.f32.gmra.mrb[0].mxu0 %v5788
    %v5917 = vpop.f32.mrb[0].mxu0
    %v5918 = vadd.f32 0.0, %v5917
    %v5919 = vpop.f32.mrb[0].mxu0
    %5920 = vmatprep.mubr.f32.mxu0 0.0
    %5921 = vmatmul.mubr.f32.gmra.mrb[0].mxu0 %v5790
    %v5922 = vpop.f32.mrb[0].mxu0
    %v5923 = vadd.f32 0.0, %v5922
    %v5924 = vpop.f32.mrb[0].mxu0
    %5925 = vmatprep.mubr.f32.mxu0 0.0
    %5926 = vmatmul.mubr.f32.gmra.mrb[0].mxu0 %v5792
    %v5927 = vpop.f32.mrb[0].mxu0
    %v5928 = vadd.f32 0.0, %v5927
    %v5929 = vpop.f32.mrb[0].mxu0
    %5930 = vmatprep.mubr.f32.mxu0 0.0
    %5931 = vmatmul.mubr.f32.gmra.mrb[0].mxu0 %v5794
    %v5932 = vpop.f32.mrb[0].mxu0
    %v5933 = vadd.f32 0.0, %v5932
    %v5934 = vpop.f32.mrb[0].mxu0
    %5935 = vdwg.mxu0
    %v5936 = vadd.f32 %v5715, %v5863
    %v5937 = vadd.f32 %v5716, %v5868
    %v5938 = vadd.f32 %v5717, %v5873
    %v5939 = vadd.f32 %v5718, %v5878
    %v5940 = vadd.f32 %v5719, %v5883
    %v5941 = vadd.f32 %v5720, %v5888
    %v5942 = vadd.f32 %v5721, %v5893
    %v5943 = vadd.f32 %v5722, %v5898
    %v5944 = vadd.f32 %v5723, %v5903
    %v5945 = vadd.f32 %v5724, %v5908
    %v5946 = vadd.f32 %v5725, %v5913
    %v5947 = vadd.f32 %v5726, %v5918
    %v5948 = vadd.f32 %v5727, %v5923
    %v5949 = vadd.f32 %v5728, %v5928
    %v5950 = vadd.f32 %v5729, %v5933
    %5951 = vrot.lane.b32.xlu0 %v5055, 64
    %v5952 = vpop.permute.xlu0 %5951
    %5953 = vrot.lane.b32.xlu0 %v5059, 64
    %v5954 = vpop.permute.xlu0 %5953
    %5955 = vrot.lane.b32.xlu0 %v5063, 64
    %v5956 = vpop.permute.xlu0 %5955
    %5957 = vrot.lane.b32.xlu0 %v5067, 64
    %v5958 = vpop.permute.xlu0 %5957
    %5959 = vrot.lane.b32.xlu0 %v5071, 64
    %v5960 = vpop.permute.xlu0 %5959
    %5961 = vrot.lane.b32.xlu0 %v5075, 64
    %v5962 = vpop.permute.xlu0 %5961
    %5963 = vrot.lane.b32.xlu0 %v5079, 64
    %v5964 = vpop.permute.xlu0 %5963
    %5965 = vrot.lane.b32.xlu0 %v5083, 64
    %v5966 = vpop.permute.xlu0 %5965
    %5967 = vrot.lane.b32.xlu0 %v5087, 64
    %v5968 = vpop.permute.xlu0 %5967
    %5969 = vrot.lane.b32.xlu0 %v5091, 64
    %v5970 = vpop.permute.xlu0 %5969
    %5971 = vrot.lane.b32.xlu0 %v5095, 64
    %v5972 = vpop.permute.xlu0 %5971
    %5973 = vrot.lane.b32.xlu0 %v5099, 64
    %v5974 = vpop.permute.xlu0 %5973
    %5975 = vrot.lane.b32.xlu0 %v5103, 64
    %v5976 = vpop.permute.xlu0 %5975
    %5977 = vrot.lane.b32.xlu0 %v5107, 64
    %v5978 = vpop.permute.xlu0 %5977
    %5979 = vrot.lane.b32.xlu0 %v5111, 64
    %v5980 = vpop.permute.xlu0 %5979
    %5981 = vrot.lane.b32.xlu0 %v5047, 120
    %v5982 = vpop.permute.xlu0 %5981
    %5983 = vrot.lane.b32.xlu0 %v5052, 120
    %v5984 = vpop.permute.xlu0 %5983
    %v5987 = vsel %vm5168, %v5952, 0
    %v5989 = vsel %vm5168, %v5954, 0
    %v5991 = vsel %vm5168, %v5956, 0
    %v5993 = vsel %vm5168, %v5958, 0
    %v5995 = vsel %vm5168, %v5960, 0
    %v5997 = vsel %vm5168, %v5962, 0
    %v5999 = vsel %vm5168, %v5964, 0
    %v6001 = vsel %vm5168, %v5966, 0
    %v6003 = vsel %vm5168, %v5968, 0
    %v6005 = vsel %vm5168, %v5970, 0
    %v6007 = vsel %vm5168, %v5972, 0
    %v6009 = vsel %vm5168, %v5974, 0
    %v6011 = vsel %vm5168, %v5976, 0
    %v6013 = vsel %vm5168, %v5978, 0
    %v6015 = vsel %vm5168, %v5980, 0
    %6017 = vmatprep.subr.mxu0 0.0
    %6018 = vmatpush1.msra.mxu0 %v5982
    %6019 = vmatprep.subr.mxu0 0.0
    %6020 = vmatpush1.msra.mxu0 %v5984
    %6021 = vmatprep.subr.mxu0 0.0
    %6022 = vmatpush1.msra.mxu0 0.0
    %6023 = vmatprep.subr.mxu0 0.0
    %6024 = vmatpush1.msra.mxu0 0.0
    %6025 = vmatprep.subr.mxu0 0.0
    %6026 = vmatpush1.msra.mxu0 0.0
    %6027 = vmatprep.subr.mxu0 0.0
    %6028 = vmatpush1.msra.mxu0 0.0
    %6029 = vmatprep.subr.mxu0 0.0
    %6030 = vmatpush1.msra.mxu0 0.0
    %6031 = vmatprep.subr.mxu0 0.0
    %6032 = vmatpush1.msra.mxu0 0.0
    %6033 = vmatprep.subr.mxu0 0.0
    %6034 = vmatpush1.msra.mxu0 0.0
    %6035 = vmatprep.subr.mxu0 0.0
    %6036 = vmatpush1.msra.mxu0 0.0
    %6037 = vmatprep.subr.mxu0 0.0
    %6038 = vmatpush1.msra.mxu0 0.0
    %6039 = vmatprep.subr.mxu0 0.0
    %6040 = vmatpush1.msra.mxu0 0.0
    %6041 = vmatprep.subr.mxu0 0.0
    %6042 = vmatpush1.msra.mxu0 0.0
    %6043 = vmatprep.subr.mxu0 0.0
    %6044 = vmatpush1.msra.mxu0 0.0
    %6045 = vmatprep.subr.mxu0 0.0
    %6046 = vmatpush1.msra.mxu0 0.0
    %6047 = vmatprep.subr.mxu0 0.0
    %6048 = vmatpush1.msra.mxu0 0.0
    %6049 = vmatprep.subr.mxu0 0.0
    %6050 = vmatpush1.msra.mxu0 0.0
    %6051 = vmatprep.subr.mxu0 0.0
    %6052 = vmatpush1.msra.mxu0 0.0
    %6053 = vmatprep.subr.mxu0 0.0
    %6054 = vmatpush1.msra.mxu0 0.0
    %6055 = vmatprep.subr.mxu0 0.0
    %6056 = vmatpush1.msra.mxu0 0.0
    %6057 = vmatprep.subr.mxu0 0.0
    %6058 = vmatpush1.msra.mxu0 0.0
    %6059 = vmatprep.subr.mxu0 0.0
    %6060 = vmatpush1.msra.mxu0 0.0
    %6061 = vmatprep.subr.mxu0 0.0
    %6062 = vmatpush1.msra.mxu0 0.0
    %6063 = vmatprep.subr.mxu0 0.0
    %6064 = vmatpush1.msra.mxu0 0.0
    %6065 = vmatprep.subr.mxu0 0.0
    %6066 = vmatpush1.msra.mxu0 0.0
    %6067 = vmatprep.subr.mxu0 0.0
    %6068 = vmatpush1.msra.mxu0 0.0
    %6069 = vmatprep.subr.mxu0 0.0
    %6070 = vmatpush1.msra.mxu0 0.0
    %6071 = vmatprep.subr.mxu0 0.0
    %6072 = vmatpush1.msra.mxu0 0.0
    %6073 = vmatprep.subr.mxu0 0.0
    %6074 = vmatpush1.msra.mxu0 0.0
    %6075 = vmatprep.subr.mxu0 0.0
    %6076 = vmatpush1.msra.mxu0 0.0
    %6077 = vmatprep.subr.mxu0 0.0
    %6078 = vmatpush1.msra.mxu0 0.0
    %6079 = vmatprep.subr.mxu0 0.0
    %6080 = vmatpush1.msra.mxu0 0.0
    %6081 = vmatprep.mubr.f32.mxu0 0.0
    %6082 = vmatmul.mubr.f32.gmra.mrb[0].mxu0 %v5987
    %v6083 = vpop.f32.mrb[0].mxu0
    %v6084 = vadd.f32 0.0, %v6083
    %v6085 = vpop.f32.mrb[0].mxu0
    %6086 = vmatprep.mubr.f32.mxu0 0.0
    %6087 = vmatmul.mubr.f32.gmra.mrb[0].mxu0 %v5989
    %v6088 = vpop.f32.mrb[0].mxu0
    %v6089 = vadd.f32 0.0, %v6088
    %v6090 = vpop.f32.mrb[0].mxu0
    %6091 = vmatprep.mubr.f32.mxu0 0.0
    %6092 = vmatmul.mubr.f32.gmra.mrb[0].mxu0 %v5991
    %v6093 = vpop.f32.mrb[0].mxu0
    %v6094 = vadd.f32 0.0, %v6093
    %v6095 = vpop.f32.mrb[0].mxu0
    %6096 = vmatprep.mubr.f32.mxu0 0.0
    %6097 = vmatmul.mubr.f32.gmra.mrb[0].mxu0 %v5993
    %v6098 = vpop.f32.mrb[0].mxu0
    %v6099 = vadd.f32 0.0, %v6098
    %v6100 = vpop.f32.mrb[0].mxu0
    %6101 = vmatprep.mubr.f32.mxu0 0.0
    %6102 = vmatmul.mubr.f32.gmra.mrb[0].mxu0 %v5995
    %v6103 = vpop.f32.mrb[0].mxu0
    %v6104 = vadd.f32 0.0, %v6103
    %v6105 = vpop.f32.mrb[0].mxu0
    %6106 = vmatprep.mubr.f32.mxu0 0.0
    %6107 = vmatmul.mubr.f32.gmra.mrb[0].mxu0 %v5997
    %v6108 = vpop.f32.mrb[0].mxu0
    %v6109 = vadd.f32 0.0, %v6108
    %v6110 = vpop.f32.mrb[0].mxu0
    %6111 = vmatprep.mubr.f32.mxu0 0.0
    %6112 = vmatmul.mubr.f32.gmra.mrb[0].mxu0 %v5999
    %v6113 = vpop.f32.mrb[0].mxu0
    %v6114 = vadd.f32 0.0, %v6113
    %v6115 = vpop.f32.mrb[0].mxu0
    %6116 = vmatprep.mubr.f32.mxu0 0.0
    %6117 = vmatmul.mubr.f32.gmra.mrb[0].mxu0 %v6001
    %v6118 = vpop.f32.mrb[0].mxu0
    %v6119 = vadd.f32 0.0, %v6118
    %v6120 = vpop.f32.mrb[0].mxu0
    %6121 = vmatprep.mubr.f32.mxu0 0.0
    %6122 = vmatmul.mubr.f32.gmra.mrb[0].mxu0 %v6003
    %v6123 = vpop.f32.mrb[0].mxu0
    %v6124 = vadd.f32 0.0, %v6123
    %v6125 = vpop.f32.mrb[0].mxu0
    %6126 = vmatprep.mubr.f32.mxu0 0.0
    %6127 = vmatmul.mubr.f32.gmra.mrb[0].mxu0 %v6005
    %v6128 = vpop.f32.mrb[0].mxu0
    %v6129 = vadd.f32 0.0, %v6128
    %v6130 = vpop.f32.mrb[0].mxu0
    %6131 = vmatprep.mubr.f32.mxu0 0.0
    %6132 = vmatmul.mubr.f32.gmra.mrb[0].mxu0 %v6007
    %v6133 = vpop.f32.mrb[0].mxu0
    %v6134 = vadd.f32 0.0, %v6133
    %v6135 = vpop.f32.mrb[0].mxu0
    %6136 = vmatprep.mubr.f32.mxu0 0.0
    %6137 = vmatmul.mubr.f32.gmra.mrb[0].mxu0 %v6009
    %v6138 = vpop.f32.mrb[0].mxu0
    %v6139 = vadd.f32 0.0, %v6138
    %v6140 = vpop.f32.mrb[0].mxu0
    %6141 = vmatprep.mubr.f32.mxu0 0.0
    %6142 = vmatmul.mubr.f32.gmra.mrb[0].mxu0 %v6011
    %v6143 = vpop.f32.mrb[0].mxu0
    %v6144 = vadd.f32 0.0, %v6143
    %v6145 = vpop.f32.mrb[0].mxu0
    %6146 = vmatprep.mubr.f32.mxu0 0.0
    %6147 = vmatmul.mubr.f32.gmra.mrb[0].mxu0 %v6013
    %v6148 = vpop.f32.mrb[0].mxu0
    %v6149 = vadd.f32 0.0, %v6148
    %v6150 = vpop.f32.mrb[0].mxu0
    %6151 = vmatprep.mubr.f32.mxu0 0.0
    %6152 = vmatmul.mubr.f32.gmra.mrb[0].mxu0 %v6015
    %v6153 = vpop.f32.mrb[0].mxu0
    %v6154 = vadd.f32 0.0, %v6153
    %v6155 = vpop.f32.mrb[0].mxu0
    %6156 = vdwg.mxu0
    %v6157 = vadd.f32 %v5936, %v6084
    %v6158 = vadd.f32 %v5937, %v6089
    %v6159 = vadd.f32 %v5938, %v6094
    %v6160 = vadd.f32 %v5939, %v6099
    %v6161 = vadd.f32 %v5940, %v6104
    %v6162 = vadd.f32 %v5941, %v6109
    %v6163 = vadd.f32 %v5942, %v6114
    %v6164 = vadd.f32 %v5943, %v6119
    %v6165 = vadd.f32 %v5944, %v6124
    %v6166 = vadd.f32 %v5945, %v6129
    %v6167 = vadd.f32 %v5946, %v6134
    %v6168 = vadd.f32 %v5947, %v6139
    %v6169 = vadd.f32 %v5948, %v6144
    %v6170 = vadd.f32 %v5949, %v6149
    %v6171 = vadd.f32 %v5950, %v6154
    %6172 = vrot.lane.b32.xlu0 %v5055, 48
    %v6173 = vpop.permute.xlu0 %6172
    %6174 = vrot.lane.b32.xlu0 %v5059, 48
    %v6175 = vpop.permute.xlu0 %6174
    %6176 = vrot.lane.b32.xlu0 %v5063, 48
    %v6177 = vpop.permute.xlu0 %6176
    %6178 = vrot.lane.b32.xlu0 %v5067, 48
    %v6179 = vpop.permute.xlu0 %6178
    %6180 = vrot.lane.b32.xlu0 %v5071, 48
    %v6181 = vpop.permute.xlu0 %6180
    %6182 = vrot.lane.b32.xlu0 %v5075, 48
    %v6183 = vpop.permute.xlu0 %6182
    %6184 = vrot.lane.b32.xlu0 %v5079, 48
    %v6185 = vpop.permute.xlu0 %6184
    %6186 = vrot.lane.b32.xlu0 %v5083, 48
    %v6187 = vpop.permute.xlu0 %6186
    %6188 = vrot.lane.b32.xlu0 %v5087, 48
    %v6189 = vpop.permute.xlu0 %6188
    %6190 = vrot.lane.b32.xlu0 %v5091, 48
    %v6191 = vpop.permute.xlu0 %6190
    %6192 = vrot.lane.b32.xlu0 %v5095, 48
    %v6193 = vpop.permute.xlu0 %6192
    %6194 = vrot.lane.b32.xlu0 %v5099, 48
    %v6195 = vpop.permute.xlu0 %6194
    %6196 = vrot.lane.b32.xlu0 %v5103, 48
    %v6197 = vpop.permute.xlu0 %6196
    %6198 = vrot.lane.b32.xlu0 %v5107, 48
    %v6199 = vpop.permute.xlu0 %6198
    %6200 = vrot.lane.b32.xlu0 %v5111, 48
    %v6201 = vpop.permute.xlu0 %6200
    %6202 = vrot.lane.b32.xlu0 %v5047, 118
    %v6203 = vpop.permute.xlu0 %6202
    %6204 = vrot.lane.b32.xlu0 %v5052, 118
    %v6205 = vpop.permute.xlu0 %6204
    %v6208 = vsel %vm5168, %v6173, 0
    %v6210 = vsel %vm5168, %v6175, 0
    %v6212 = vsel %vm5168, %v6177, 0
    %v6214 = vsel %vm5168, %v6179, 0
    %v6216 = vsel %vm5168, %v6181, 0
    %v6218 = vsel %vm5168, %v6183, 0
    %v6220 = vsel %vm5168, %v6185, 0
    %v6222 = vsel %vm5168, %v6187, 0
    %v6224 = vsel %vm5168, %v6189, 0
    %v6226 = vsel %vm5168, %v6191, 0
    %v6228 = vsel %vm5168, %v6193, 0
    %v6230 = vsel %vm5168, %v6195, 0
    %v6232 = vsel %vm5168, %v6197, 0
    %v6234 = vsel %vm5168, %v6199, 0
    %v6236 = vsel %vm5168, %v6201, 0
    %6238 = vmatprep.subr.mxu0 0.0
    %6239 = vmatpush1.msra.mxu0 %v6203
    %6240 = vmatprep.subr.mxu0 0.0
    %6241 = vmatpush1.msra.mxu0 %v6205
    %6242 = vmatprep.subr.mxu0 0.0
    %6243 = vmatpush1.msra.mxu0 0.0
    %6244 = vmatprep.subr.mxu0 0.0
    %6245 = vmatpush1.msra.mxu0 0.0
    %6246 = vmatprep.subr.mxu0 0.0
    %6247 = vmatpush1.msra.mxu0 0.0
    %6248 = vmatprep.subr.mxu0 0.0
    %6249 = vmatpush1.msra.mxu0 0.0
    %6250 = vmatprep.subr.mxu0 0.0
    %6251 = vmatpush1.msra.mxu0 0.0
    %6252 = vmatprep.subr.mxu0 0.0
    %6253 = vmatpush1.msra.mxu0 0.0
    %6254 = vmatprep.subr.mxu0 0.0
    %6255 = vmatpush1.msra.mxu0 0.0
    %6256 = vmatprep.subr.mxu0 0.0
    %6257 = vmatpush1.msra.mxu0 0.0
    %6258 = vmatprep.subr.mxu0 0.0
    %6259 = vmatpush1.msra.mxu0 0.0
    %6260 = vmatprep.subr.mxu0 0.0
    %6261 = vmatpush1.msra.mxu0 0.0
    %6262 = vmatprep.subr.mxu0 0.0
    %6263 = vmatpush1.msra.mxu0 0.0
    %6264 = vmatprep.subr.mxu0 0.0
    %6265 = vmatpush1.msra.mxu0 0.0
    %6266 = vmatprep.subr.mxu0 0.0
    %6267 = vmatpush1.msra.mxu0 0.0
    %6268 = vmatprep.subr.mxu0 0.0
    %6269 = vmatpush1.msra.mxu0 0.0
    %6270 = vmatprep.subr.mxu0 0.0
    %6271 = vmatpush1.msra.mxu0 0.0
    %6272 = vmatprep.subr.mxu0 0.0
    %6273 = vmatpush1.msra.mxu0 0.0
    %6274 = vmatprep.subr.mxu0 0.0
    %6275 = vmatpush1.msra.mxu0 0.0
    %6276 = vmatprep.subr.mxu0 0.0
    %6277 = vmatpush1.msra.mxu0 0.0
    %6278 = vmatprep.subr.mxu0 0.0
    %6279 = vmatpush1.msra.mxu0 0.0
    %6280 = vmatprep.subr.mxu0 0.0
    %6281 = vmatpush1.msra.mxu0 0.0
    %6282 = vmatprep.subr.mxu0 0.0
    %6283 = vmatpush1.msra.mxu0 0.0
    %6284 = vmatprep.subr.mxu0 0.0
    %6285 = vmatpush1.msra.mxu0 0.0
    %6286 = vmatprep.subr.mxu0 0.0
    %6287 = vmatpush1.msra.mxu0 0.0
    %6288 = vmatprep.subr.mxu0 0.0
    %6289 = vmatpush1.msra.mxu0 0.0
    %6290 = vmatprep.subr.mxu0 0.0
    %6291 = vmatpush1.msra.mxu0 0.0
    %6292 = vmatprep.subr.mxu0 0.0
    %6293 = vmatpush1.msra.mxu0 0.0
    %6294 = vmatprep.subr.mxu0 0.0
    %6295 = vmatpush1.msra.mxu0 0.0
    %6296 = vmatprep.subr.mxu0 0.0
    %6297 = vmatpush1.msra.mxu0 0.0
    %6298 = vmatprep.subr.mxu0 0.0
    %6299 = vmatpush1.msra.mxu0 0.0
    %6300 = vmatprep.subr.mxu0 0.0
    %6301 = vmatpush1.msra.mxu0 0.0
    %6302 = vmatprep.mubr.f32.mxu0 0.0
    %6303 = vmatmul.mubr.f32.gmra.mrb[0].mxu0 %v6208
    %v6304 = vpop.f32.mrb[0].mxu0
    %v6305 = vadd.f32 0.0, %v6304
    %v6306 = vpop.f32.mrb[0].mxu0
    %6307 = vmatprep.mubr.f32.mxu0 0.0
    %6308 = vmatmul.mubr.f32.gmra.mrb[0].mxu0 %v6210
    %v6309 = vpop.f32.mrb[0].mxu0
    %v6310 = vadd.f32 0.0, %v6309
    %v6311 = vpop.f32.mrb[0].mxu0
    %6312 = vmatprep.mubr.f32.mxu0 0.0
    %6313 = vmatmul.mubr.f32.gmra.mrb[0].mxu0 %v6212
    %v6314 = vpop.f32.mrb[0].mxu0
    %v6315 = vadd.f32 0.0, %v6314
    %v6316 = vpop.f32.mrb[0].mxu0
    %6317 = vmatprep.mubr.f32.mxu0 0.0
    %6318 = vmatmul.mubr.f32.gmra.mrb[0].mxu0 %v6214
    %v6319 = vpop.f32.mrb[0].mxu0
    %v6320 = vadd.f32 0.0, %v6319
    %v6321 = vpop.f32.mrb[0].mxu0
    %6322 = vmatprep.mubr.f32.mxu0 0.0
    %6323 = vmatmul.mubr.f32.gmra.mrb[0].mxu0 %v6216
    %v6324 = vpop.f32.mrb[0].mxu0
    %v6325 = vadd.f32 0.0, %v6324
    %v6326 = vpop.f32.mrb[0].mxu0
    %6327 = vmatprep.mubr.f32.mxu0 0.0
    %6328 = vmatmul.mubr.f32.gmra.mrb[0].mxu0 %v6218
    %v6329 = vpop.f32.mrb[0].mxu0
    %v6330 = vadd.f32 0.0, %v6329
    %v6331 = vpop.f32.mrb[0].mxu0
    %6332 = vmatprep.mubr.f32.mxu0 0.0
    %6333 = vmatmul.mubr.f32.gmra.mrb[0].mxu0 %v6220
    %v6334 = vpop.f32.mrb[0].mxu0
    %v6335 = vadd.f32 0.0, %v6334
    %v6336 = vpop.f32.mrb[0].mxu0
    %6337 = vmatprep.mubr.f32.mxu0 0.0
    %6338 = vmatmul.mubr.f32.gmra.mrb[0].mxu0 %v6222
    %v6339 = vpop.f32.mrb[0].mxu0
    %v6340 = vadd.f32 0.0, %v6339
    %v6341 = vpop.f32.mrb[0].mxu0
    %6342 = vmatprep.mubr.f32.mxu0 0.0
    %6343 = vmatmul.mubr.f32.gmra.mrb[0].mxu0 %v6224
    %v6344 = vpop.f32.mrb[0].mxu0
    %v6345 = vadd.f32 0.0, %v6344
    %v6346 = vpop.f32.mrb[0].mxu0
    %6347 = vmatprep.mubr.f32.mxu0 0.0
    %6348 = vmatmul.mubr.f32.gmra.mrb[0].mxu0 %v6226
    %v6349 = vpop.f32.mrb[0].mxu0
    %v6350 = vadd.f32 0.0, %v6349
    %v6351 = vpop.f32.mrb[0].mxu0
    %6352 = vmatprep.mubr.f32.mxu0 0.0
    %6353 = vmatmul.mubr.f32.gmra.mrb[0].mxu0 %v6228
    %v6354 = vpop.f32.mrb[0].mxu0
    %v6355 = vadd.f32 0.0, %v6354
    %v6356 = vpop.f32.mrb[0].mxu0
    %6357 = vmatprep.mubr.f32.mxu0 0.0
    %6358 = vmatmul.mubr.f32.gmra.mrb[0].mxu0 %v6230
    %v6359 = vpop.f32.mrb[0].mxu0
    %v6360 = vadd.f32 0.0, %v6359
    %v6361 = vpop.f32.mrb[0].mxu0
    %6362 = vmatprep.mubr.f32.mxu0 0.0
    %6363 = vmatmul.mubr.f32.gmra.mrb[0].mxu0 %v6232
    %v6364 = vpop.f32.mrb[0].mxu0
    %v6365 = vadd.f32 0.0, %v6364
    %v6366 = vpop.f32.mrb[0].mxu0
    %6367 = vmatprep.mubr.f32.mxu0 0.0
    %6368 = vmatmul.mubr.f32.gmra.mrb[0].mxu0 %v6234
    %v6369 = vpop.f32.mrb[0].mxu0
    %v6370 = vadd.f32 0.0, %v6369
    %v6371 = vpop.f32.mrb[0].mxu0
    %6372 = vmatprep.mubr.f32.mxu0 0.0
    %6373 = vmatmul.mubr.f32.gmra.mrb[0].mxu0 %v6236
    %v6374 = vpop.f32.mrb[0].mxu0
    %v6375 = vadd.f32 0.0, %v6374
    %v6376 = vpop.f32.mrb[0].mxu0
    %6377 = vdwg.mxu0
    %v6378 = vadd.f32 %v6157, %v6305
    %v6379 = vadd.f32 %v6158, %v6310
    %v6380 = vadd.f32 %v6159, %v6315
    %v6381 = vadd.f32 %v6160, %v6320
    %v6382 = vadd.f32 %v6161, %v6325
    %v6383 = vadd.f32 %v6162, %v6330
    %v6384 = vadd.f32 %v6163, %v6335
    %v6385 = vadd.f32 %v6164, %v6340
    %v6386 = vadd.f32 %v6165, %v6345
    %v6387 = vadd.f32 %v6166, %v6350
    %v6388 = vadd.f32 %v6167, %v6355
    %v6389 = vadd.f32 %v6168, %v6360
    %v6390 = vadd.f32 %v6169, %v6365
    %v6391 = vadd.f32 %v6170, %v6370
    %v6392 = vadd.f32 %v6171, %v6375
    %6393 = vrot.lane.b32.xlu0 %v5055, 32
    %v6394 = vpop.permute.xlu0 %6393
    %6395 = vrot.lane.b32.xlu0 %v5059, 32
    %v6396 = vpop.permute.xlu0 %6395
    %6397 = vrot.lane.b32.xlu0 %v5063, 32
    %v6398 = vpop.permute.xlu0 %6397
    %6399 = vrot.lane.b32.xlu0 %v5067, 32
    %v6400 = vpop.permute.xlu0 %6399
    %6401 = vrot.lane.b32.xlu0 %v5071, 32
    %v6402 = vpop.permute.xlu0 %6401
    %6403 = vrot.lane.b32.xlu0 %v5075, 32
    %v6404 = vpop.permute.xlu0 %6403
    %6405 = vrot.lane.b32.xlu0 %v5079, 32
    %v6406 = vpop.permute.xlu0 %6405
    %6407 = vrot.lane.b32.xlu0 %v5083, 32
    %v6408 = vpop.permute.xlu0 %6407
    %6409 = vrot.lane.b32.xlu0 %v5087, 32
    %v6410 = vpop.permute.xlu0 %6409
    %6411 = vrot.lane.b32.xlu0 %v5091, 32
    %v6412 = vpop.permute.xlu0 %6411
    %6413 = vrot.lane.b32.xlu0 %v5095, 32
    %v6414 = vpop.permute.xlu0 %6413
    %6415 = vrot.lane.b32.xlu0 %v5099, 32
    %v6416 = vpop.permute.xlu0 %6415
    %6417 = vrot.lane.b32.xlu0 %v5103, 32
    %v6418 = vpop.permute.xlu0 %6417
    %6419 = vrot.lane.b32.xlu0 %v5107, 32
    %v6420 = vpop.permute.xlu0 %6419
    %6421 = vrot.lane.b32.xlu0 %v5111, 32
    %v6422 = vpop.permute.xlu0 %6421
    %6423 = vrot.lane.b32.xlu0 %v5047, 116
    %v6424 = vpop.permute.xlu0 %6423
    %6425 = vrot.lane.b32.xlu0 %v5052, 116
    %v6426 = vpop.permute.xlu0 %6425
    %v6429 = vsel %vm5168, %v6394, 0
    %v6431 = vsel %vm5168, %v6396, 0
    %v6433 = vsel %vm5168, %v6398, 0
    %v6435 = vsel %vm5168, %v6400, 0
    %v6437 = vsel %vm5168, %v6402, 0
    %v6439 = vsel %vm5168, %v6404, 0
    %v6441 = vsel %vm5168, %v6406, 0
    %v6443 = vsel %vm5168, %v6408, 0
    %v6445 = vsel %vm5168, %v6410, 0
    %v6447 = vsel %vm5168, %v6412, 0
    %v6449 = vsel %vm5168, %v6414, 0
    %v6451 = vsel %vm5168, %v6416, 0
    %v6453 = vsel %vm5168, %v6418, 0
    %v6455 = vsel %vm5168, %v6420, 0
    %v6457 = vsel %vm5168, %v6422, 0
    %6459 = vmatprep.subr.mxu0 0.0
    %6460 = vmatpush1.msra.mxu0 %v6424
    %6461 = vmatprep.subr.mxu0 0.0
    %6462 = vmatpush1.msra.mxu0 %v6426
    %6463 = vmatprep.subr.mxu0 0.0
    %6464 = vmatpush1.msra.mxu0 0.0
    %6465 = vmatprep.subr.mxu0 0.0
    %6466 = vmatpush1.msra.mxu0 0.0
    %6467 = vmatprep.subr.mxu0 0.0
    %6468 = vmatpush1.msra.mxu0 0.0
    %6469 = vmatprep.subr.mxu0 0.0
    %6470 = vmatpush1.msra.mxu0 0.0
    %6471 = vmatprep.subr.mxu0 0.0
    %6472 = vmatpush1.msra.mxu0 0.0
    %6473 = vmatprep.subr.mxu0 0.0
    %6474 = vmatpush1.msra.mxu0 0.0
    %6475 = vmatprep.subr.mxu0 0.0
    %6476 = vmatpush1.msra.mxu0 0.0
    %6477 = vmatprep.subr.mxu0 0.0
    %6478 = vmatpush1.msra.mxu0 0.0
    %6479 = vmatprep.subr.mxu0 0.0
    %6480 = vmatpush1.msra.mxu0 0.0
    %6481 = vmatprep.subr.mxu0 0.0
    %6482 = vmatpush1.msra.mxu0 0.0
    %6483 = vmatprep.subr.mxu0 0.0
    %6484 = vmatpush1.msra.mxu0 0.0
    %6485 = vmatprep.subr.mxu0 0.0
    %6486 = vmatpush1.msra.mxu0 0.0
    %6487 = vmatprep.subr.mxu0 0.0
    %6488 = vmatpush1.msra.mxu0 0.0
    %6489 = vmatprep.subr.mxu0 0.0
    %6490 = vmatpush1.msra.mxu0 0.0
    %6491 = vmatprep.subr.mxu0 0.0
    %6492 = vmatpush1.msra.mxu0 0.0
    %6493 = vmatprep.subr.mxu0 0.0
    %6494 = vmatpush1.msra.mxu0 0.0
    %6495 = vmatprep.subr.mxu0 0.0
    %6496 = vmatpush1.msra.mxu0 0.0
    %6497 = vmatprep.subr.mxu0 0.0
    %6498 = vmatpush1.msra.mxu0 0.0
    %6499 = vmatprep.subr.mxu0 0.0
    %6500 = vmatpush1.msra.mxu0 0.0
    %6501 = vmatprep.subr.mxu0 0.0
    %6502 = vmatpush1.msra.mxu0 0.0
    %6503 = vmatprep.subr.mxu0 0.0
    %6504 = vmatpush1.msra.mxu0 0.0
    %6505 = vmatprep.subr.mxu0 0.0
    %6506 = vmatpush1.msra.mxu0 0.0
    %6507 = vmatprep.subr.mxu0 0.0
    %6508 = vmatpush1.msra.mxu0 0.0
    %6509 = vmatprep.subr.mxu0 0.0
    %6510 = vmatpush1.msra.mxu0 0.0
    %6511 = vmatprep.subr.mxu0 0.0
    %6512 = vmatpush1.msra.mxu0 0.0
    %6513 = vmatprep.subr.mxu0 0.0
    %6514 = vmatpush1.msra.mxu0 0.0
    %6515 = vmatprep.subr.mxu0 0.0
    %6516 = vmatpush1.msra.mxu0 0.0
    %6517 = vmatprep.subr.mxu0 0.0
    %6518 = vmatpush1.msra.mxu0 0.0
    %6519 = vmatprep.subr.mxu0 0.0
    %6520 = vmatpush1.msra.mxu0 0.0
    %6521 = vmatprep.subr.mxu0 0.0
    %6522 = vmatpush1.msra.mxu0 0.0
    %6523 = vmatprep.mubr.f32.mxu0 0.0
    %6524 = vmatmul.mubr.f32.gmra.mrb[0].mxu0 %v6429
    %v6525 = vpop.f32.mrb[0].mxu0
    %v6526 = vadd.f32 0.0, %v6525
    %v6527 = vpop.f32.mrb[0].mxu0
    %6528 = vmatprep.mubr.f32.mxu0 0.0
    %6529 = vmatmul.mubr.f32.gmra.mrb[0].mxu0 %v6431
    %v6530 = vpop.f32.mrb[0].mxu0
    %v6531 = vadd.f32 0.0, %v6530
    %v6532 = vpop.f32.mrb[0].mxu0
    %6533 = vmatprep.mubr.f32.mxu0 0.0
    %6534 = vmatmul.mubr.f32.gmra.mrb[0].mxu0 %v6433
    %v6535 = vpop.f32.mrb[0].mxu0
    %v6536 = vadd.f32 0.0, %v6535
    %v6537 = vpop.f32.mrb[0].mxu0
    %6538 = vmatprep.mubr.f32.mxu0 0.0
    %6539 = vmatmul.mubr.f32.gmra.mrb[0].mxu0 %v6435
    %v6540 = vpop.f32.mrb[0].mxu0
    %v6541 = vadd.f32 0.0, %v6540
    %v6542 = vpop.f32.mrb[0].mxu0
    %6543 = vmatprep.mubr.f32.mxu0 0.0
    %6544 = vmatmul.mubr.f32.gmra.mrb[0].mxu0 %v6437
    %v6545 = vpop.f32.mrb[0].mxu0
    %v6546 = vadd.f32 0.0, %v6545
    %v6547 = vpop.f32.mrb[0].mxu0
    %6548 = vmatprep.mubr.f32.mxu0 0.0
    %6549 = vmatmul.mubr.f32.gmra.mrb[0].mxu0 %v6439
    %v6550 = vpop.f32.mrb[0].mxu0
    %v6551 = vadd.f32 0.0, %v6550
    %v6552 = vpop.f32.mrb[0].mxu0
    %6553 = vmatprep.mubr.f32.mxu0 0.0
    %6554 = vmatmul.mubr.f32.gmra.mrb[0].mxu0 %v6441
    %v6555 = vpop.f32.mrb[0].mxu0
    %v6556 = vadd.f32 0.0, %v6555
    %v6557 = vpop.f32.mrb[0].mxu0
    %6558 = vmatprep.mubr.f32.mxu0 0.0
    %6559 = vmatmul.mubr.f32.gmra.mrb[0].mxu0 %v6443
    %v6560 = vpop.f32.mrb[0].mxu0
    %v6561 = vadd.f32 0.0, %v6560
    %v6562 = vpop.f32.mrb[0].mxu0
    %6563 = vmatprep.mubr.f32.mxu0 0.0
    %6564 = vmatmul.mubr.f32.gmra.mrb[0].mxu0 %v6445
    %v6565 = vpop.f32.mrb[0].mxu0
    %v6566 = vadd.f32 0.0, %v6565
    %v6567 = vpop.f32.mrb[0].mxu0
    %6568 = vmatprep.mubr.f32.mxu0 0.0
    %6569 = vmatmul.mubr.f32.gmra.mrb[0].mxu0 %v6447
    %v6570 = vpop.f32.mrb[0].mxu0
    %v6571 = vadd.f32 0.0, %v6570
    %v6572 = vpop.f32.mrb[0].mxu0
    %6573 = vmatprep.mubr.f32.mxu0 0.0
    %6574 = vmatmul.mubr.f32.gmra.mrb[0].mxu0 %v6449
    %v6575 = vpop.f32.mrb[0].mxu0
    %v6576 = vadd.f32 0.0, %v6575
    %v6577 = vpop.f32.mrb[0].mxu0
    %6578 = vmatprep.mubr.f32.mxu0 0.0
    %6579 = vmatmul.mubr.f32.gmra.mrb[0].mxu0 %v6451
    %v6580 = vpop.f32.mrb[0].mxu0
    %v6581 = vadd.f32 0.0, %v6580
    %v6582 = vpop.f32.mrb[0].mxu0
    %6583 = vmatprep.mubr.f32.mxu0 0.0
    %6584 = vmatmul.mubr.f32.gmra.mrb[0].mxu0 %v6453
    %v6585 = vpop.f32.mrb[0].mxu0
    %v6586 = vadd.f32 0.0, %v6585
    %v6587 = vpop.f32.mrb[0].mxu0
    %6588 = vmatprep.mubr.f32.mxu0 0.0
    %6589 = vmatmul.mubr.f32.gmra.mrb[0].mxu0 %v6455
    %v6590 = vpop.f32.mrb[0].mxu0
    %v6591 = vadd.f32 0.0, %v6590
    %v6592 = vpop.f32.mrb[0].mxu0
    %6593 = vmatprep.mubr.f32.mxu0 0.0
    %6594 = vmatmul.mubr.f32.gmra.mrb[0].mxu0 %v6457
    %v6595 = vpop.f32.mrb[0].mxu0
    %v6596 = vadd.f32 0.0, %v6595
    %v6597 = vpop.f32.mrb[0].mxu0
    %6598 = vdwg.mxu0
    %v6599 = vadd.f32 %v6378, %v6526
    %v6600 = vadd.f32 %v6379, %v6531
    %v6601 = vadd.f32 %v6380, %v6536
    %v6602 = vadd.f32 %v6381, %v6541
    %v6603 = vadd.f32 %v6382, %v6546
    %v6604 = vadd.f32 %v6383, %v6551
    %v6605 = vadd.f32 %v6384, %v6556
    %v6606 = vadd.f32 %v6385, %v6561
    %v6607 = vadd.f32 %v6386, %v6566
    %v6608 = vadd.f32 %v6387, %v6571
    %v6609 = vadd.f32 %v6388, %v6576
    %v6610 = vadd.f32 %v6389, %v6581
    %v6611 = vadd.f32 %v6390, %v6586
    %v6612 = vadd.f32 %v6391, %v6591
    %v6613 = vadd.f32 %v6392, %v6596
    %6614 = vrot.lane.b32.xlu0 %v5055, 16
    %v6615 = vpop.permute.xlu0 %6614
    %6616 = vrot.lane.b32.xlu0 %v5059, 16
    %v6617 = vpop.permute.xlu0 %6616
    %6618 = vrot.lane.b32.xlu0 %v5063, 16
    %v6619 = vpop.permute.xlu0 %6618
    %6620 = vrot.lane.b32.xlu0 %v5067, 16
    %v6621 = vpop.permute.xlu0 %6620
    %6622 = vrot.lane.b32.xlu0 %v5071, 16
    %v6623 = vpop.permute.xlu0 %6622
    %6624 = vrot.lane.b32.xlu0 %v5075, 16
    %v6625 = vpop.permute.xlu0 %6624
    %6626 = vrot.lane.b32.xlu0 %v5079, 16
    %v6627 = vpop.permute.xlu0 %6626
    %6628 = vrot.lane.b32.xlu0 %v5083, 16
    %v6629 = vpop.permute.xlu0 %6628
    %6630 = vrot.lane.b32.xlu0 %v5087, 16
    %v6631 = vpop.permute.xlu0 %6630
    %6632 = vrot.lane.b32.xlu0 %v5091, 16
    %v6633 = vpop.permute.xlu0 %6632
    %6634 = vrot.lane.b32.xlu0 %v5095, 16
    %v6635 = vpop.permute.xlu0 %6634
    %6636 = vrot.lane.b32.xlu0 %v5099, 16
    %v6637 = vpop.permute.xlu0 %6636
    %6638 = vrot.lane.b32.xlu0 %v5103, 16
    %v6639 = vpop.permute.xlu0 %6638
    %6640 = vrot.lane.b32.xlu0 %v5107, 16
    %v6641 = vpop.permute.xlu0 %6640
    %6642 = vrot.lane.b32.xlu0 %v5111, 16
    %v6643 = vpop.permute.xlu0 %6642
    %6644 = vrot.lane.b32.xlu0 %v5047, 114
    %v6645 = vpop.permute.xlu0 %6644
    %6646 = vrot.lane.b32.xlu0 %v5052, 114
    %v6647 = vpop.permute.xlu0 %6646
    %v6650 = vsel %vm5168, %v6615, 0
    %v6652 = vsel %vm5168, %v6617, 0
    %v6654 = vsel %vm5168, %v6619, 0
    %v6656 = vsel %vm5168, %v6621, 0
    %v6658 = vsel %vm5168, %v6623, 0
    %v6660 = vsel %vm5168, %v6625, 0
    %v6662 = vsel %vm5168, %v6627, 0
    %v6664 = vsel %vm5168, %v6629, 0
    %v6666 = vsel %vm5168, %v6631, 0
    %v6668 = vsel %vm5168, %v6633, 0
    %v6670 = vsel %vm5168, %v6635, 0
    %v6672 = vsel %vm5168, %v6637, 0
    %v6674 = vsel %vm5168, %v6639, 0
    %v6676 = vsel %vm5168, %v6641, 0
    %v6678 = vsel %vm5168, %v6643, 0
    %6680 = vmatprep.subr.mxu0 0.0
    %6681 = vmatpush1.msra.mxu0 %v6645
    %6682 = vmatprep.subr.mxu0 0.0
    %6683 = vmatpush1.msra.mxu0 %v6647
    %6684 = vmatprep.subr.mxu0 0.0
    %6685 = vmatpush1.msra.mxu0 0.0
    %6686 = vmatprep.subr.mxu0 0.0
    %6687 = vmatpush1.msra.mxu0 0.0
    %6688 = vmatprep.subr.mxu0 0.0
    %6689 = vmatpush1.msra.mxu0 0.0
    %6690 = vmatprep.subr.mxu0 0.0
    %6691 = vmatpush1.msra.mxu0 0.0
    %6692 = vmatprep.subr.mxu0 0.0
    %6693 = vmatpush1.msra.mxu0 0.0
    %6694 = vmatprep.subr.mxu0 0.0
    %6695 = vmatpush1.msra.mxu0 0.0
    %6696 = vmatprep.subr.mxu0 0.0
    %6697 = vmatpush1.msra.mxu0 0.0
    %6698 = vmatprep.subr.mxu0 0.0
    %6699 = vmatpush1.msra.mxu0 0.0
    %6700 = vmatprep.subr.mxu0 0.0
    %6701 = vmatpush1.msra.mxu0 0.0
    %6702 = vmatprep.subr.mxu0 0.0
    %6703 = vmatpush1.msra.mxu0 0.0
    %6704 = vmatprep.subr.mxu0 0.0
    %6705 = vmatpush1.msra.mxu0 0.0
    %6706 = vmatprep.subr.mxu0 0.0
    %6707 = vmatpush1.msra.mxu0 0.0
    %6708 = vmatprep.subr.mxu0 0.0
    %6709 = vmatpush1.msra.mxu0 0.0
    %6710 = vmatprep.subr.mxu0 0.0
    %6711 = vmatpush1.msra.mxu0 0.0
    %6712 = vmatprep.subr.mxu0 0.0
    %6713 = vmatpush1.msra.mxu0 0.0
    %6714 = vmatprep.subr.mxu0 0.0
    %6715 = vmatpush1.msra.mxu0 0.0
    %6716 = vmatprep.subr.mxu0 0.0
    %6717 = vmatpush1.msra.mxu0 0.0
    %6718 = vmatprep.subr.mxu0 0.0
    %6719 = vmatpush1.msra.mxu0 0.0
    %6720 = vmatprep.subr.mxu0 0.0
    %6721 = vmatpush1.msra.mxu0 0.0
    %6722 = vmatprep.subr.mxu0 0.0
    %6723 = vmatpush1.msra.mxu0 0.0
    %6724 = vmatprep.subr.mxu0 0.0
    %6725 = vmatpush1.msra.mxu0 0.0
    %6726 = vmatprep.subr.mxu0 0.0
    %6727 = vmatpush1.msra.mxu0 0.0
    %6728 = vmatprep.subr.mxu0 0.0
    %6729 = vmatpush1.msra.mxu0 0.0
    %6730 = vmatprep.subr.mxu0 0.0
    %6731 = vmatpush1.msra.mxu0 0.0
    %6732 = vmatprep.subr.mxu0 0.0
    %6733 = vmatpush1.msra.mxu0 0.0
    %6734 = vmatprep.subr.mxu0 0.0
    %6735 = vmatpush1.msra.mxu0 0.0
    %6736 = vmatprep.subr.mxu0 0.0
    %6737 = vmatpush1.msra.mxu0 0.0
    %6738 = vmatprep.subr.mxu0 0.0
    %6739 = vmatpush1.msra.mxu0 0.0
    %6740 = vmatprep.subr.mxu0 0.0
    %6741 = vmatpush1.msra.mxu0 0.0
    %6742 = vmatprep.subr.mxu0 0.0
    %6743 = vmatpush1.msra.mxu0 0.0
    %6744 = vmatprep.mubr.f32.mxu0 0.0
    %6745 = vmatmul.mubr.f32.gmra.mrb[0].mxu0 %v6650
    %v6746 = vpop.f32.mrb[0].mxu0
    %v6747 = vadd.f32 0.0, %v6746
    %v6748 = vpop.f32.mrb[0].mxu0
    %6749 = vmatprep.mubr.f32.mxu0 0.0
    %6750 = vmatmul.mubr.f32.gmra.mrb[0].mxu0 %v6652
    %v6751 = vpop.f32.mrb[0].mxu0
    %v6752 = vadd.f32 0.0, %v6751
    %v6753 = vpop.f32.mrb[0].mxu0
    %6754 = vmatprep.mubr.f32.mxu0 0.0
    %6755 = vmatmul.mubr.f32.gmra.mrb[0].mxu0 %v6654
    %v6756 = vpop.f32.mrb[0].mxu0
    %v6757 = vadd.f32 0.0, %v6756
    %v6758 = vpop.f32.mrb[0].mxu0
    %6759 = vmatprep.mubr.f32.mxu0 0.0
    %6760 = vmatmul.mubr.f32.gmra.mrb[0].mxu0 %v6656
    %v6761 = vpop.f32.mrb[0].mxu0
    %v6762 = vadd.f32 0.0, %v6761
    %v6763 = vpop.f32.mrb[0].mxu0
    %6764 = vmatprep.mubr.f32.mxu0 0.0
    %6765 = vmatmul.mubr.f32.gmra.mrb[0].mxu0 %v6658
    %v6766 = vpop.f32.mrb[0].mxu0
    %v6767 = vadd.f32 0.0, %v6766
    %v6768 = vpop.f32.mrb[0].mxu0
    %6769 = vmatprep.mubr.f32.mxu0 0.0
    %6770 = vmatmul.mubr.f32.gmra.mrb[0].mxu0 %v6660
    %v6771 = vpop.f32.mrb[0].mxu0
    %v6772 = vadd.f32 0.0, %v6771
    %v6773 = vpop.f32.mrb[0].mxu0
    %6774 = vmatprep.mubr.f32.mxu0 0.0
    %6775 = vmatmul.mubr.f32.gmra.mrb[0].mxu0 %v6662
    %v6776 = vpop.f32.mrb[0].mxu0
    %v6777 = vadd.f32 0.0, %v6776
    %v6778 = vpop.f32.mrb[0].mxu0
    %6779 = vmatprep.mubr.f32.mxu0 0.0
    %6780 = vmatmul.mubr.f32.gmra.mrb[0].mxu0 %v6664
    %v6781 = vpop.f32.mrb[0].mxu0
    %v6782 = vadd.f32 0.0, %v6781
    %v6783 = vpop.f32.mrb[0].mxu0
    %6784 = vmatprep.mubr.f32.mxu0 0.0
    %6785 = vmatmul.mubr.f32.gmra.mrb[0].mxu0 %v6666
    %v6786 = vpop.f32.mrb[0].mxu0
    %v6787 = vadd.f32 0.0, %v6786
    %v6788 = vpop.f32.mrb[0].mxu0
    %6789 = vmatprep.mubr.f32.mxu0 0.0
    %6790 = vmatmul.mubr.f32.gmra.mrb[0].mxu0 %v6668
    %v6791 = vpop.f32.mrb[0].mxu0
    %v6792 = vadd.f32 0.0, %v6791
    %v6793 = vpop.f32.mrb[0].mxu0
    %6794 = vmatprep.mubr.f32.mxu0 0.0
    %6795 = vmatmul.mubr.f32.gmra.mrb[0].mxu0 %v6670
    %v6796 = vpop.f32.mrb[0].mxu0
    %v6797 = vadd.f32 0.0, %v6796
    %v6798 = vpop.f32.mrb[0].mxu0
    %6799 = vmatprep.mubr.f32.mxu0 0.0
    %6800 = vmatmul.mubr.f32.gmra.mrb[0].mxu0 %v6672
    %v6801 = vpop.f32.mrb[0].mxu0
    %v6802 = vadd.f32 0.0, %v6801
    %v6803 = vpop.f32.mrb[0].mxu0
    %6804 = vmatprep.mubr.f32.mxu0 0.0
    %6805 = vmatmul.mubr.f32.gmra.mrb[0].mxu0 %v6674
    %v6806 = vpop.f32.mrb[0].mxu0
    %v6807 = vadd.f32 0.0, %v6806
    %v6808 = vpop.f32.mrb[0].mxu0
    %6809 = vmatprep.mubr.f32.mxu0 0.0
    %6810 = vmatmul.mubr.f32.gmra.mrb[0].mxu0 %v6676
    %v6811 = vpop.f32.mrb[0].mxu0
    %v6812 = vadd.f32 0.0, %v6811
    %v6813 = vpop.f32.mrb[0].mxu0
    %6814 = vmatprep.mubr.f32.mxu0 0.0
    %6815 = vmatmul.mubr.f32.gmra.mrb[0].mxu0 %v6678
    %v6816 = vpop.f32.mrb[0].mxu0
    %v6817 = vadd.f32 0.0, %v6816
    %v6818 = vpop.f32.mrb[0].mxu0
    %6819 = vdwg.mxu0
    %v6820 = vadd.f32 %v6599, %v6747
    %v6821 = vadd.f32 %v6600, %v6752
    %v6822 = vadd.f32 %v6601, %v6757
    %v6823 = vadd.f32 %v6602, %v6762
    %v6824 = vadd.f32 %v6603, %v6767
    %v6825 = vadd.f32 %v6604, %v6772
    %v6826 = vadd.f32 %v6605, %v6777
    %v6827 = vadd.f32 %v6606, %v6782
    %v6828 = vadd.f32 %v6607, %v6787
    %v6829 = vadd.f32 %v6608, %v6792
    %v6830 = vadd.f32 %v6609, %v6797
    %v6831 = vadd.f32 %v6610, %v6802
    %v6832 = vadd.f32 %v6611, %v6807
    %v6833 = vadd.f32 %v6612, %v6812
    %v6834 = vadd.f32 %v6613, %v6817
    %6835 = vrot.lane.b32.xlu0 %v5047, 112
    %v6836 = vpop.permute.xlu0 %6835
    %6837 = vrot.lane.b32.xlu0 %v5052, 112
    %v6838 = vpop.permute.xlu0 %6837
    %v6842 = vsel %vm5168, %v5056, 0
    %v6845 = vsel %vm5168, %v5060, 0
    %v6848 = vsel %vm5168, %v5064, 0
    %v6851 = vsel %vm5168, %v5068, 0
    %v6854 = vsel %vm5168, %v5072, 0
    %v6857 = vsel %vm5168, %v5076, 0
    %v6860 = vsel %vm5168, %v5080, 0
    %v6863 = vsel %vm5168, %v5084, 0
    %v6866 = vsel %vm5168, %v5088, 0
    %v6869 = vsel %vm5168, %v5092, 0
    %v6872 = vsel %vm5168, %v5096, 0
    %v6875 = vsel %vm5168, %v5100, 0
    %v6878 = vsel %vm5168, %v5104, 0
    %v6881 = vsel %vm5168, %v5108, 0
    %v6884 = vsel %vm5168, %v5112, 0
    %6886 = vmatprep.subr.mxu0 0.0
    %6887 = vmatpush1.msra.mxu0 %v6836
    %6888 = vmatprep.subr.mxu0 0.0
    %6889 = vmatpush1.msra.mxu0 %v6838
    %6890 = vmatprep.subr.mxu0 0.0
    %6891 = vmatpush1.msra.mxu0 0.0
    %6892 = vmatprep.subr.mxu0 0.0
    %6893 = vmatpush1.msra.mxu0 0.0
    %6894 = vmatprep.subr.mxu0 0.0
    %6895 = vmatpush1.msra.mxu0 0.0
    %6896 = vmatprep.subr.mxu0 0.0
    %6897 = vmatpush1.msra.mxu0 0.0
    %6898 = vmatprep.subr.mxu0 0.0
    %6899 = vmatpush1.msra.mxu0 0.0
    %6900 = vmatprep.subr.mxu0 0.0
    %6901 = vmatpush1.msra.mxu0 0.0
    %6902 = vmatprep.subr.mxu0 0.0
    %6903 = vmatpush1.msra.mxu0 0.0
    %6904 = vmatprep.subr.mxu0 0.0
    %6905 = vmatpush1.msra.mxu0 0.0
    %6906 = vmatprep.subr.mxu0 0.0
    %6907 = vmatpush1.msra.mxu0 0.0
    %6908 = vmatprep.subr.mxu0 0.0
    %6909 = vmatpush1.msra.mxu0 0.0
    %6910 = vmatprep.subr.mxu0 0.0
    %6911 = vmatpush1.msra.mxu0 0.0
    %6912 = vmatprep.subr.mxu0 0.0
    %6913 = vmatpush1.msra.mxu0 0.0
    %6914 = vmatprep.subr.mxu0 0.0
    %6915 = vmatpush1.msra.mxu0 0.0
    %6916 = vmatprep.subr.mxu0 0.0
    %6917 = vmatpush1.msra.mxu0 0.0
    %6918 = vmatprep.subr.mxu0 0.0
    %6919 = vmatpush1.msra.mxu0 0.0
    %6920 = vmatprep.subr.mxu0 0.0
    %6921 = vmatpush1.msra.mxu0 0.0
    %6922 = vmatprep.subr.mxu0 0.0
    %6923 = vmatpush1.msra.mxu0 0.0
    %6924 = vmatprep.subr.mxu0 0.0
    %6925 = vmatpush1.msra.mxu0 0.0
    %6926 = vmatprep.subr.mxu0 0.0
    %6927 = vmatpush1.msra.mxu0 0.0
    %6928 = vmatprep.subr.mxu0 0.0
    %6929 = vmatpush1.msra.mxu0 0.0
    %6930 = vmatprep.subr.mxu0 0.0
    %6931 = vmatpush1.msra.mxu0 0.0
    %6932 = vmatprep.subr.mxu0 0.0
    %6933 = vmatpush1.msra.mxu0 0.0
    %6934 = vmatprep.subr.mxu0 0.0
    %6935 = vmatpush1.msra.mxu0 0.0
    %6936 = vmatprep.subr.mxu0 0.0
    %6937 = vmatpush1.msra.mxu0 0.0
    %6938 = vmatprep.subr.mxu0 0.0
    %6939 = vmatpush1.msra.mxu0 0.0
    %6940 = vmatprep.subr.mxu0 0.0
    %6941 = vmatpush1.msra.mxu0 0.0
    %6942 = vmatprep.subr.mxu0 0.0
    %6943 = vmatpush1.msra.mxu0 0.0
    %6944 = vmatprep.subr.mxu0 0.0
    %6945 = vmatpush1.msra.mxu0 0.0
    %6946 = vmatprep.subr.mxu0 0.0
    %6947 = vmatpush1.msra.mxu0 0.0
    %6948 = vmatprep.subr.mxu0 0.0
    %6949 = vmatpush1.msra.mxu0 0.0
    %6950 = vmatprep.mubr.f32.mxu0 0.0
    %6951 = vmatmul.mubr.f32.gmra.mrb[0].mxu0 %v6842
    %v6952 = vpop.f32.mrb[0].mxu0
    %v6953 = vadd.f32 0.0, %v6952
    %v6954 = vpop.f32.mrb[0].mxu0
    %6955 = vmatprep.mubr.f32.mxu0 0.0
    %6956 = vmatmul.mubr.f32.gmra.mrb[0].mxu0 %v6845
    %v6957 = vpop.f32.mrb[0].mxu0
    %v6958 = vadd.f32 0.0, %v6957
    %v6959 = vpop.f32.mrb[0].mxu0
    %6960 = vmatprep.mubr.f32.mxu0 0.0
    %6961 = vmatmul.mubr.f32.gmra.mrb[0].mxu0 %v6848
    %v6962 = vpop.f32.mrb[0].mxu0
    %v6963 = vadd.f32 0.0, %v6962
    %v6964 = vpop.f32.mrb[0].mxu0
    %6965 = vmatprep.mubr.f32.mxu0 0.0
    %6966 = vmatmul.mubr.f32.gmra.mrb[0].mxu0 %v6851
    %v6967 = vpop.f32.mrb[0].mxu0
    %v6968 = vadd.f32 0.0, %v6967
    %v6969 = vpop.f32.mrb[0].mxu0
    %6970 = vmatprep.mubr.f32.mxu0 0.0
    %6971 = vmatmul.mubr.f32.gmra.mrb[0].mxu0 %v6854
    %v6972 = vpop.f32.mrb[0].mxu0
    %v6973 = vadd.f32 0.0, %v6972
    %v6974 = vpop.f32.mrb[0].mxu0
    %6975 = vmatprep.mubr.f32.mxu0 0.0
    %6976 = vmatmul.mubr.f32.gmra.mrb[0].mxu0 %v6857
    %v6977 = vpop.f32.mrb[0].mxu0
    %v6978 = vadd.f32 0.0, %v6977
    %v6979 = vpop.f32.mrb[0].mxu0
    %6980 = vmatprep.mubr.f32.mxu0 0.0
    %6981 = vmatmul.mubr.f32.gmra.mrb[0].mxu0 %v6860
    %v6982 = vpop.f32.mrb[0].mxu0
    %v6983 = vadd.f32 0.0, %v6982
    %v6984 = vpop.f32.mrb[0].mxu0
    %6985 = vmatprep.mubr.f32.mxu0 0.0
    %6986 = vmatmul.mubr.f32.gmra.mrb[0].mxu0 %v6863
    %v6987 = vpop.f32.mrb[0].mxu0
    %v6988 = vadd.f32 0.0, %v6987
    %v6989 = vpop.f32.mrb[0].mxu0
    %6990 = vmatprep.mubr.f32.mxu0 0.0
    %6991 = vmatmul.mubr.f32.gmra.mrb[0].mxu0 %v6866
    %v6992 = vpop.f32.mrb[0].mxu0
    %v6993 = vadd.f32 0.0, %v6992
    %v6994 = vpop.f32.mrb[0].mxu0
    %6995 = vmatprep.mubr.f32.mxu0 0.0
    %6996 = vmatmul.mubr.f32.gmra.mrb[0].mxu0 %v6869
    %v6997 = vpop.f32.mrb[0].mxu0
    %v6998 = vadd.f32 0.0, %v6997
    %v6999 = vpop.f32.mrb[0].mxu0
    %7000 = vmatprep.mubr.f32.mxu0 0.0
    %7001 = vmatmul.mubr.f32.gmra.mrb[0].mxu0 %v6872
    %v7002 = vpop.f32.mrb[0].mxu0
    %v7003 = vadd.f32 0.0, %v7002
    %v7004 = vpop.f32.mrb[0].mxu0
    %7005 = vmatprep.mubr.f32.mxu0 0.0
    %7006 = vmatmul.mubr.f32.gmra.mrb[0].mxu0 %v6875
    %v7007 = vpop.f32.mrb[0].mxu0
    %v7008 = vadd.f32 0.0, %v7007
    %v7009 = vpop.f32.mrb[0].mxu0
    %7010 = vmatprep.mubr.f32.mxu0 0.0
    %7011 = vmatmul.mubr.f32.gmra.mrb[0].mxu0 %v6878
    %v7012 = vpop.f32.mrb[0].mxu0
    %v7013 = vadd.f32 0.0, %v7012
    %v7014 = vpop.f32.mrb[0].mxu0
    %7015 = vmatprep.mubr.f32.mxu0 0.0
    %7016 = vmatmul.mubr.f32.gmra.mrb[0].mxu0 %v6881
    %v7017 = vpop.f32.mrb[0].mxu0
    %v7018 = vadd.f32 0.0, %v7017
    %v7019 = vpop.f32.mrb[0].mxu0
    %7020 = vmatprep.mubr.f32.mxu0 0.0
    %7021 = vmatmul.mubr.f32.gmra.mrb[0].mxu0 %v6884
    %v7022 = vpop.f32.mrb[0].mxu0
    %v7023 = vadd.f32 0.0, %v7022
    %v7024 = vpop.f32.mrb[0].mxu0
    %7025 = vdwg.mxu0
    %v7026 = vadd.f32 %v6820, %v6953
    %v7027 = vadd.f32 %v6821, %v6958
    %v7028 = vadd.f32 %v6822, %v6963
    %v7029 = vadd.f32 %v6823, %v6968
    %v7030 = vadd.f32 %v6824, %v6973
    %v7031 = vadd.f32 %v6825, %v6978
    %v7032 = vadd.f32 %v6826, %v6983
    %v7033 = vadd.f32 %v6827, %v6988
    %v7034 = vadd.f32 %v6828, %v6993
    %v7035 = vadd.f32 %v6829, %v6998
    %v7036 = vadd.f32 %v6830, %v7003
    %v7037 = vadd.f32 %v6831, %v7008
    %v7038 = vadd.f32 %v6832, %v7013
    %v7039 = vadd.f32 %v6833, %v7018
    %v7040 = vadd.f32 %v6834, %v7023
    %7041 = vrot.lane.b32.xlu0 %v5056, 112
    %v7042 = vpop.permute.xlu0 %7041
    %7043 = vrot.lane.b32.xlu0 %v5060, 112
    %v7044 = vpop.permute.xlu0 %7043
    %7045 = vrot.lane.b32.xlu0 %v5064, 112
    %v7046 = vpop.permute.xlu0 %7045
    %7047 = vrot.lane.b32.xlu0 %v5068, 112
    %v7048 = vpop.permute.xlu0 %7047
    %7049 = vrot.lane.b32.xlu0 %v5072, 112
    %v7050 = vpop.permute.xlu0 %7049
    %7051 = vrot.lane.b32.xlu0 %v5076, 112
    %v7052 = vpop.permute.xlu0 %7051
    %7053 = vrot.lane.b32.xlu0 %v5080, 112
    %v7054 = vpop.permute.xlu0 %7053
    %7055 = vrot.lane.b32.xlu0 %v5084, 112
    %v7056 = vpop.permute.xlu0 %7055
    %7057 = vrot.lane.b32.xlu0 %v5088, 112
    %v7058 = vpop.permute.xlu0 %7057
    %7059 = vrot.lane.b32.xlu0 %v5092, 112
    %v7060 = vpop.permute.xlu0 %7059
    %7061 = vrot.lane.b32.xlu0 %v5096, 112
    %v7062 = vpop.permute.xlu0 %7061
    %7063 = vrot.lane.b32.xlu0 %v5100, 112
    %v7064 = vpop.permute.xlu0 %7063
    %7065 = vrot.lane.b32.xlu0 %v5104, 112
    %v7066 = vpop.permute.xlu0 %7065
    %7067 = vrot.lane.b32.xlu0 %v5108, 112
    %v7068 = vpop.permute.xlu0 %7067
    %7069 = vrot.lane.b32.xlu0 %v5112, 112
    %v7070 = vpop.permute.xlu0 %7069
    %7071 = vrot.lane.b32.xlu0 %v5047, 110
    %v7072 = vpop.permute.xlu0 %7071
    %7073 = vrot.lane.b32.xlu0 %v5052, 110
    %v7074 = vpop.permute.xlu0 %7073
    %v7077 = vsel %vm5168, %v7042, 0
    %v7079 = vsel %vm5168, %v7044, 0
    %v7081 = vsel %vm5168, %v7046, 0
    %v7083 = vsel %vm5168, %v7048, 0
    %v7085 = vsel %vm5168, %v7050, 0
    %v7087 = vsel %vm5168, %v7052, 0
    %v7089 = vsel %vm5168, %v7054, 0
    %v7091 = vsel %vm5168, %v7056, 0
    %v7093 = vsel %vm5168, %v7058, 0
    %v7095 = vsel %vm5168, %v7060, 0
    %v7097 = vsel %vm5168, %v7062, 0
    %v7099 = vsel %vm5168, %v7064, 0
    %v7101 = vsel %vm5168, %v7066, 0
    %v7103 = vsel %vm5168, %v7068, 0
    %v7105 = vsel %vm5168, %v7070, 0
    %7107 = vmatprep.subr.mxu0 0.0
    %7108 = vmatpush1.msra.mxu0 %v7072
    %7109 = vmatprep.subr.mxu0 0.0
    %7110 = vmatpush1.msra.mxu0 %v7074
    %7111 = vmatprep.subr.mxu0 0.0
    %7112 = vmatpush1.msra.mxu0 0.0
    %7113 = vmatprep.subr.mxu0 0.0
    %7114 = vmatpush1.msra.mxu0 0.0
    %7115 = vmatprep.subr.mxu0 0.0
    %7116 = vmatpush1.msra.mxu0 0.0
    %7117 = vmatprep.subr.mxu0 0.0
    %7118 = vmatpush1.msra.mxu0 0.0
    %7119 = vmatprep.subr.mxu0 0.0
    %7120 = vmatpush1.msra.mxu0 0.0
    %7121 = vmatprep.subr.mxu0 0.0
    %7122 = vmatpush1.msra.mxu0 0.0
    %7123 = vmatprep.subr.mxu0 0.0
    %7124 = vmatpush1.msra.mxu0 0.0
    %7125 = vmatprep.subr.mxu0 0.0
    %7126 = vmatpush1.msra.mxu0 0.0
    %7127 = vmatprep.subr.mxu0 0.0
    %7128 = vmatpush1.msra.mxu0 0.0
    %7129 = vmatprep.subr.mxu0 0.0
    %7130 = vmatpush1.msra.mxu0 0.0
    %7131 = vmatprep.subr.mxu0 0.0
    %7132 = vmatpush1.msra.mxu0 0.0
    %7133 = vmatprep.subr.mxu0 0.0
    %7134 = vmatpush1.msra.mxu0 0.0
    %7135 = vmatprep.subr.mxu0 0.0
    %7136 = vmatpush1.msra.mxu0 0.0
    %7137 = vmatprep.subr.mxu0 0.0
    %7138 = vmatpush1.msra.mxu0 0.0
    %7139 = vmatprep.subr.mxu0 0.0
    %7140 = vmatpush1.msra.mxu0 0.0
    %7141 = vmatprep.subr.mxu0 0.0
    %7142 = vmatpush1.msra.mxu0 0.0
    %7143 = vmatprep.subr.mxu0 0.0
    %7144 = vmatpush1.msra.mxu0 0.0
    %7145 = vmatprep.subr.mxu0 0.0
    %7146 = vmatpush1.msra.mxu0 0.0
    %7147 = vmatprep.subr.mxu0 0.0
    %7148 = vmatpush1.msra.mxu0 0.0
    %7149 = vmatprep.subr.mxu0 0.0
    %7150 = vmatpush1.msra.mxu0 0.0
    %7151 = vmatprep.subr.mxu0 0.0
    %7152 = vmatpush1.msra.mxu0 0.0
    %7153 = vmatprep.subr.mxu0 0.0
    %7154 = vmatpush1.msra.mxu0 0.0
    %7155 = vmatprep.subr.mxu0 0.0
    %7156 = vmatpush1.msra.mxu0 0.0
    %7157 = vmatprep.subr.mxu0 0.0
    %7158 = vmatpush1.msra.mxu0 0.0
    %7159 = vmatprep.subr.mxu0 0.0
    %7160 = vmatpush1.msra.mxu0 0.0
    %7161 = vmatprep.subr.mxu0 0.0
    %7162 = vmatpush1.msra.mxu0 0.0
    %7163 = vmatprep.subr.mxu0 0.0
    %7164 = vmatpush1.msra.mxu0 0.0
    %7165 = vmatprep.subr.mxu0 0.0
    %7166 = vmatpush1.msra.mxu0 0.0
    %7167 = vmatprep.subr.mxu0 0.0
    %7168 = vmatpush1.msra.mxu0 0.0
    %7169 = vmatprep.subr.mxu0 0.0
    %7170 = vmatpush1.msra.mxu0 0.0
    %7171 = vmatprep.mubr.f32.mxu0 0.0
    %7172 = vmatmul.mubr.f32.gmra.mrb[0].mxu0 %v7077
    %v7173 = vpop.f32.mrb[0].mxu0
    %v7174 = vadd.f32 0.0, %v7173
    %v7175 = vpop.f32.mrb[0].mxu0
    %7176 = vmatprep.mubr.f32.mxu0 0.0
    %7177 = vmatmul.mubr.f32.gmra.mrb[0].mxu0 %v7079
    %v7178 = vpop.f32.mrb[0].mxu0
    %v7179 = vadd.f32 0.0, %v7178
    %v7180 = vpop.f32.mrb[0].mxu0
    %7181 = vmatprep.mubr.f32.mxu0 0.0
    %7182 = vmatmul.mubr.f32.gmra.mrb[0].mxu0 %v7081
    %v7183 = vpop.f32.mrb[0].mxu0
    %v7184 = vadd.f32 0.0, %v7183
    %v7185 = vpop.f32.mrb[0].mxu0
    %7186 = vmatprep.mubr.f32.mxu0 0.0
    %7187 = vmatmul.mubr.f32.gmra.mrb[0].mxu0 %v7083
    %v7188 = vpop.f32.mrb[0].mxu0
    %v7189 = vadd.f32 0.0, %v7188
    %v7190 = vpop.f32.mrb[0].mxu0
    %7191 = vmatprep.mubr.f32.mxu0 0.0
    %7192 = vmatmul.mubr.f32.gmra.mrb[0].mxu0 %v7085
    %v7193 = vpop.f32.mrb[0].mxu0
    %v7194 = vadd.f32 0.0, %v7193
    %v7195 = vpop.f32.mrb[0].mxu0
    %7196 = vmatprep.mubr.f32.mxu0 0.0
    %7197 = vmatmul.mubr.f32.gmra.mrb[0].mxu0 %v7087
    %v7198 = vpop.f32.mrb[0].mxu0
    %v7199 = vadd.f32 0.0, %v7198
    %v7200 = vpop.f32.mrb[0].mxu0
    %7201 = vmatprep.mubr.f32.mxu0 0.0
    %7202 = vmatmul.mubr.f32.gmra.mrb[0].mxu0 %v7089
    %v7203 = vpop.f32.mrb[0].mxu0
    %v7204 = vadd.f32 0.0, %v7203
    %v7205 = vpop.f32.mrb[0].mxu0
    %7206 = vmatprep.mubr.f32.mxu0 0.0
    %7207 = vmatmul.mubr.f32.gmra.mrb[0].mxu0 %v7091
    %v7208 = vpop.f32.mrb[0].mxu0
    %v7209 = vadd.f32 0.0, %v7208
    %v7210 = vpop.f32.mrb[0].mxu0
    %7211 = vmatprep.mubr.f32.mxu0 0.0
    %7212 = vmatmul.mubr.f32.gmra.mrb[0].mxu0 %v7093
    %v7213 = vpop.f32.mrb[0].mxu0
    %v7214 = vadd.f32 0.0, %v7213
    %v7215 = vpop.f32.mrb[0].mxu0
    %7216 = vmatprep.mubr.f32.mxu0 0.0
    %7217 = vmatmul.mubr.f32.gmra.mrb[0].mxu0 %v7095
    %v7218 = vpop.f32.mrb[0].mxu0
    %v7219 = vadd.f32 0.0, %v7218
    %v7220 = vpop.f32.mrb[0].mxu0
    %7221 = vmatprep.mubr.f32.mxu0 0.0
    %7222 = vmatmul.mubr.f32.gmra.mrb[0].mxu0 %v7097
    %v7223 = vpop.f32.mrb[0].mxu0
    %v7224 = vadd.f32 0.0, %v7223
    %v7225 = vpop.f32.mrb[0].mxu0
    %7226 = vmatprep.mubr.f32.mxu0 0.0
    %7227 = vmatmul.mubr.f32.gmra.mrb[0].mxu0 %v7099
    %v7228 = vpop.f32.mrb[0].mxu0
    %v7229 = vadd.f32 0.0, %v7228
    %v7230 = vpop.f32.mrb[0].mxu0
    %7231 = vmatprep.mubr.f32.mxu0 0.0
    %7232 = vmatmul.mubr.f32.gmra.mrb[0].mxu0 %v7101
    %v7233 = vpop.f32.mrb[0].mxu0
    %v7234 = vadd.f32 0.0, %v7233
    %v7235 = vpop.f32.mrb[0].mxu0
    %7236 = vmatprep.mubr.f32.mxu0 0.0
    %7237 = vmatmul.mubr.f32.gmra.mrb[0].mxu0 %v7103
    %v7238 = vpop.f32.mrb[0].mxu0
    %v7239 = vadd.f32 0.0, %v7238
    %v7240 = vpop.f32.mrb[0].mxu0
    %7241 = vmatprep.mubr.f32.mxu0 0.0
    %7242 = vmatmul.mubr.f32.gmra.mrb[0].mxu0 %v7105
    %v7243 = vpop.f32.mrb[0].mxu0
    %v7244 = vadd.f32 0.0, %v7243
    %v7245 = vpop.f32.mrb[0].mxu0
    %7246 = vdwg.mxu0
    %v7247 = vadd.f32 %v7026, %v7174
    %v7248 = vadd.f32 %v7027, %v7179
    %v7249 = vadd.f32 %v7028, %v7184
    %v7250 = vadd.f32 %v7029, %v7189
    %v7251 = vadd.f32 %v7030, %v7194
    %v7252 = vadd.f32 %v7031, %v7199
    %v7253 = vadd.f32 %v7032, %v7204
    %v7254 = vadd.f32 %v7033, %v7209
    %v7255 = vadd.f32 %v7034, %v7214
    %v7256 = vadd.f32 %v7035, %v7219
    %v7257 = vadd.f32 %v7036, %v7224
    %v7258 = vadd.f32 %v7037, %v7229
    %v7259 = vadd.f32 %v7038, %v7234
    %v7260 = vadd.f32 %v7039, %v7239
    %v7261 = vadd.f32 %v7040, %v7244
    %7262 = vrot.lane.b32.xlu0 %v5056, 96
    %v7263 = vpop.permute.xlu0 %7262
    %7264 = vrot.lane.b32.xlu0 %v5060, 96
    %v7265 = vpop.permute.xlu0 %7264
    %7266 = vrot.lane.b32.xlu0 %v5064, 96
    %v7267 = vpop.permute.xlu0 %7266
    %7268 = vrot.lane.b32.xlu0 %v5068, 96
    %v7269 = vpop.permute.xlu0 %7268
    %7270 = vrot.lane.b32.xlu0 %v5072, 96
    %v7271 = vpop.permute.xlu0 %7270
    %7272 = vrot.lane.b32.xlu0 %v5076, 96
    %v7273 = vpop.permute.xlu0 %7272
    %7274 = vrot.lane.b32.xlu0 %v5080, 96
    %v7275 = vpop.permute.xlu0 %7274
    %7276 = vrot.lane.b32.xlu0 %v5084, 96
    %v7277 = vpop.permute.xlu0 %7276
    %7278 = vrot.lane.b32.xlu0 %v5088, 96
    %v7279 = vpop.permute.xlu0 %7278
    %7280 = vrot.lane.b32.xlu0 %v5092, 96
    %v7281 = vpop.permute.xlu0 %7280
    %7282 = vrot.lane.b32.xlu0 %v5096, 96
    %v7283 = vpop.permute.xlu0 %7282
    %7284 = vrot.lane.b32.xlu0 %v5100, 96
    %v7285 = vpop.permute.xlu0 %7284
    %7286 = vrot.lane.b32.xlu0 %v5104, 96
    %v7287 = vpop.permute.xlu0 %7286
    %7288 = vrot.lane.b32.xlu0 %v5108, 96
    %v7289 = vpop.permute.xlu0 %7288
    %7290 = vrot.lane.b32.xlu0 %v5112, 96
    %v7291 = vpop.permute.xlu0 %7290
    %7292 = vrot.lane.b32.xlu0 %v5047, 108
    %v7293 = vpop.permute.xlu0 %7292
    %7294 = vrot.lane.b32.xlu0 %v5052, 108
    %v7295 = vpop.permute.xlu0 %7294
    %v7298 = vsel %vm5168, %v7263, 0
    %v7300 = vsel %vm5168, %v7265, 0
    %v7302 = vsel %vm5168, %v7267, 0
    %v7304 = vsel %vm5168, %v7269, 0
    %v7306 = vsel %vm5168, %v7271, 0
    %v7308 = vsel %vm5168, %v7273, 0
    %v7310 = vsel %vm5168, %v7275, 0
    %v7312 = vsel %vm5168, %v7277, 0
    %v7314 = vsel %vm5168, %v7279, 0
    %v7316 = vsel %vm5168, %v7281, 0
    %v7318 = vsel %vm5168, %v7283, 0
    %v7320 = vsel %vm5168, %v7285, 0
    %v7322 = vsel %vm5168, %v7287, 0
    %v7324 = vsel %vm5168, %v7289, 0
    %v7326 = vsel %vm5168, %v7291, 0
    %7328 = vmatprep.subr.mxu0 0.0
    %7329 = vmatpush1.msra.mxu0 %v7293
    %7330 = vmatprep.subr.mxu0 0.0
    %7331 = vmatpush1.msra.mxu0 %v7295
    %7332 = vmatprep.subr.mxu0 0.0
    %7333 = vmatpush1.msra.mxu0 0.0
    %7334 = vmatprep.subr.mxu0 0.0
    %7335 = vmatpush1.msra.mxu0 0.0
    %7336 = vmatprep.subr.mxu0 0.0
    %7337 = vmatpush1.msra.mxu0 0.0
    %7338 = vmatprep.subr.mxu0 0.0
    %7339 = vmatpush1.msra.mxu0 0.0
    %7340 = vmatprep.subr.mxu0 0.0
    %7341 = vmatpush1.msra.mxu0 0.0
    %7342 = vmatprep.subr.mxu0 0.0
    %7343 = vmatpush1.msra.mxu0 0.0
    %7344 = vmatprep.subr.mxu0 0.0
    %7345 = vmatpush1.msra.mxu0 0.0
    %7346 = vmatprep.subr.mxu0 0.0
    %7347 = vmatpush1.msra.mxu0 0.0
    %7348 = vmatprep.subr.mxu0 0.0
    %7349 = vmatpush1.msra.mxu0 0.0
    %7350 = vmatprep.subr.mxu0 0.0
    %7351 = vmatpush1.msra.mxu0 0.0
    %7352 = vmatprep.subr.mxu0 0.0
    %7353 = vmatpush1.msra.mxu0 0.0
    %7354 = vmatprep.subr.mxu0 0.0
    %7355 = vmatpush1.msra.mxu0 0.0
    %7356 = vmatprep.subr.mxu0 0.0
    %7357 = vmatpush1.msra.mxu0 0.0
    %7358 = vmatprep.subr.mxu0 0.0
    %7359 = vmatpush1.msra.mxu0 0.0
    %7360 = vmatprep.subr.mxu0 0.0
    %7361 = vmatpush1.msra.mxu0 0.0
    %7362 = vmatprep.subr.mxu0 0.0
    %7363 = vmatpush1.msra.mxu0 0.0
    %7364 = vmatprep.subr.mxu0 0.0
    %7365 = vmatpush1.msra.mxu0 0.0
    %7366 = vmatprep.subr.mxu0 0.0
    %7367 = vmatpush1.msra.mxu0 0.0
    %7368 = vmatprep.subr.mxu0 0.0
    %7369 = vmatpush1.msra.mxu0 0.0
    %7370 = vmatprep.subr.mxu0 0.0
    %7371 = vmatpush1.msra.mxu0 0.0
    %7372 = vmatprep.subr.mxu0 0.0
    %7373 = vmatpush1.msra.mxu0 0.0
    %7374 = vmatprep.subr.mxu0 0.0
    %7375 = vmatpush1.msra.mxu0 0.0
    %7376 = vmatprep.subr.mxu0 0.0
    %7377 = vmatpush1.msra.mxu0 0.0
    %7378 = vmatprep.subr.mxu0 0.0
    %7379 = vmatpush1.msra.mxu0 0.0
    %7380 = vmatprep.subr.mxu0 0.0
    %7381 = vmatpush1.msra.mxu0 0.0
    %7382 = vmatprep.subr.mxu0 0.0
    %7383 = vmatpush1.msra.mxu0 0.0
    %7384 = vmatprep.subr.mxu0 0.0
    %7385 = vmatpush1.msra.mxu0 0.0
    %7386 = vmatprep.subr.mxu0 0.0
    %7387 = vmatpush1.msra.mxu0 0.0
    %7388 = vmatprep.subr.mxu0 0.0
    %7389 = vmatpush1.msra.mxu0 0.0
    %7390 = vmatprep.subr.mxu0 0.0
    %7391 = vmatpush1.msra.mxu0 0.0
    %7392 = vmatprep.mubr.f32.mxu0 0.0
    %7393 = vmatmul.mubr.f32.gmra.mrb[0].mxu0 %v7298
    %v7394 = vpop.f32.mrb[0].mxu0
    %v7395 = vadd.f32 0.0, %v7394
    %v7396 = vpop.f32.mrb[0].mxu0
    %7397 = vmatprep.mubr.f32.mxu0 0.0
    %7398 = vmatmul.mubr.f32.gmra.mrb[0].mxu0 %v7300
    %v7399 = vpop.f32.mrb[0].mxu0
    %v7400 = vadd.f32 0.0, %v7399
    %v7401 = vpop.f32.mrb[0].mxu0
    %7402 = vmatprep.mubr.f32.mxu0 0.0
    %7403 = vmatmul.mubr.f32.gmra.mrb[0].mxu0 %v7302
    %v7404 = vpop.f32.mrb[0].mxu0
    %v7405 = vadd.f32 0.0, %v7404
    %v7406 = vpop.f32.mrb[0].mxu0
    %7407 = vmatprep.mubr.f32.mxu0 0.0
    %7408 = vmatmul.mubr.f32.gmra.mrb[0].mxu0 %v7304
    %v7409 = vpop.f32.mrb[0].mxu0
    %v7410 = vadd.f32 0.0, %v7409
    %v7411 = vpop.f32.mrb[0].mxu0
    %7412 = vmatprep.mubr.f32.mxu0 0.0
    %7413 = vmatmul.mubr.f32.gmra.mrb[0].mxu0 %v7306
    %v7414 = vpop.f32.mrb[0].mxu0
    %v7415 = vadd.f32 0.0, %v7414
    %v7416 = vpop.f32.mrb[0].mxu0
    %7417 = vmatprep.mubr.f32.mxu0 0.0
    %7418 = vmatmul.mubr.f32.gmra.mrb[0].mxu0 %v7308
    %v7419 = vpop.f32.mrb[0].mxu0
    %v7420 = vadd.f32 0.0, %v7419
    %v7421 = vpop.f32.mrb[0].mxu0
    %7422 = vmatprep.mubr.f32.mxu0 0.0
    %7423 = vmatmul.mubr.f32.gmra.mrb[0].mxu0 %v7310
    %v7424 = vpop.f32.mrb[0].mxu0
    %v7425 = vadd.f32 0.0, %v7424
    %v7426 = vpop.f32.mrb[0].mxu0
    %7427 = vmatprep.mubr.f32.mxu0 0.0
    %7428 = vmatmul.mubr.f32.gmra.mrb[0].mxu0 %v7312
    %v7429 = vpop.f32.mrb[0].mxu0
    %v7430 = vadd.f32 0.0, %v7429
    %v7431 = vpop.f32.mrb[0].mxu0
    %7432 = vmatprep.mubr.f32.mxu0 0.0
    %7433 = vmatmul.mubr.f32.gmra.mrb[0].mxu0 %v7314
    %v7434 = vpop.f32.mrb[0].mxu0
    %v7435 = vadd.f32 0.0, %v7434
    %v7436 = vpop.f32.mrb[0].mxu0
    %7437 = vmatprep.mubr.f32.mxu0 0.0
    %7438 = vmatmul.mubr.f32.gmra.mrb[0].mxu0 %v7316
    %v7439 = vpop.f32.mrb[0].mxu0
    %v7440 = vadd.f32 0.0, %v7439
    %v7441 = vpop.f32.mrb[0].mxu0
    %7442 = vmatprep.mubr.f32.mxu0 0.0
    %7443 = vmatmul.mubr.f32.gmra.mrb[0].mxu0 %v7318
    %v7444 = vpop.f32.mrb[0].mxu0
    %v7445 = vadd.f32 0.0, %v7444
    %v7446 = vpop.f32.mrb[0].mxu0
    %7447 = vmatprep.mubr.f32.mxu0 0.0
    %7448 = vmatmul.mubr.f32.gmra.mrb[0].mxu0 %v7320
    %v7449 = vpop.f32.mrb[0].mxu0
    %v7450 = vadd.f32 0.0, %v7449
    %v7451 = vpop.f32.mrb[0].mxu0
    %7452 = vmatprep.mubr.f32.mxu0 0.0
    %7453 = vmatmul.mubr.f32.gmra.mrb[0].mxu0 %v7322
    %v7454 = vpop.f32.mrb[0].mxu0
    %v7455 = vadd.f32 0.0, %v7454
    %v7456 = vpop.f32.mrb[0].mxu0
    %7457 = vmatprep.mubr.f32.mxu0 0.0
    %7458 = vmatmul.mubr.f32.gmra.mrb[0].mxu0 %v7324
    %v7459 = vpop.f32.mrb[0].mxu0
    %v7460 = vadd.f32 0.0, %v7459
    %v7461 = vpop.f32.mrb[0].mxu0
    %7462 = vmatprep.mubr.f32.mxu0 0.0
    %7463 = vmatmul.mubr.f32.gmra.mrb[0].mxu0 %v7326
    %v7464 = vpop.f32.mrb[0].mxu0
    %v7465 = vadd.f32 0.0, %v7464
    %v7466 = vpop.f32.mrb[0].mxu0
    %7467 = vdwg.mxu0
    %v7468 = vadd.f32 %v7247, %v7395
    %v7469 = vadd.f32 %v7248, %v7400
    %v7470 = vadd.f32 %v7249, %v7405
    %v7471 = vadd.f32 %v7250, %v7410
    %v7472 = vadd.f32 %v7251, %v7415
    %v7473 = vadd.f32 %v7252, %v7420
    %v7474 = vadd.f32 %v7253, %v7425
    %v7475 = vadd.f32 %v7254, %v7430
    %v7476 = vadd.f32 %v7255, %v7435
    %v7477 = vadd.f32 %v7256, %v7440
    %v7478 = vadd.f32 %v7257, %v7445
    %v7479 = vadd.f32 %v7258, %v7450
    %v7480 = vadd.f32 %v7259, %v7455
    %v7481 = vadd.f32 %v7260, %v7460
    %v7482 = vadd.f32 %v7261, %v7465
    %7483 = vrot.lane.b32.xlu0 %v5056, 80
    %v7484 = vpop.permute.xlu0 %7483
    %7485 = vrot.lane.b32.xlu0 %v5060, 80
    %v7486 = vpop.permute.xlu0 %7485
    %7487 = vrot.lane.b32.xlu0 %v5064, 80
    %v7488 = vpop.permute.xlu0 %7487
    %7489 = vrot.lane.b32.xlu0 %v5068, 80
    %v7490 = vpop.permute.xlu0 %7489
    %7491 = vrot.lane.b32.xlu0 %v5072, 80
    %v7492 = vpop.permute.xlu0 %7491
    %7493 = vrot.lane.b32.xlu0 %v5076, 80
    %v7494 = vpop.permute.xlu0 %7493
    %7495 = vrot.lane.b32.xlu0 %v5080, 80
    %v7496 = vpop.permute.xlu0 %7495
    %7497 = vrot.lane.b32.xlu0 %v5084, 80
    %v7498 = vpop.permute.xlu0 %7497
    %7499 = vrot.lane.b32.xlu0 %v5088, 80
    %v7500 = vpop.permute.xlu0 %7499
    %7501 = vrot.lane.b32.xlu0 %v5092, 80
    %v7502 = vpop.permute.xlu0 %7501
    %7503 = vrot.lane.b32.xlu0 %v5096, 80
    %v7504 = vpop.permute.xlu0 %7503
    %7505 = vrot.lane.b32.xlu0 %v5100, 80
    %v7506 = vpop.permute.xlu0 %7505
    %7507 = vrot.lane.b32.xlu0 %v5104, 80
    %v7508 = vpop.permute.xlu0 %7507
    %7509 = vrot.lane.b32.xlu0 %v5108, 80
    %v7510 = vpop.permute.xlu0 %7509
    %7511 = vrot.lane.b32.xlu0 %v5112, 80
    %v7512 = vpop.permute.xlu0 %7511
    %7513 = vrot.lane.b32.xlu0 %v5047, 106
    %v7514 = vpop.permute.xlu0 %7513
    %7515 = vrot.lane.b32.xlu0 %v5052, 106
    %v7516 = vpop.permute.xlu0 %7515
    %v7519 = vsel %vm5168, %v7484, 0
    %v7521 = vsel %vm5168, %v7486, 0
    %v7523 = vsel %vm5168, %v7488, 0
    %v7525 = vsel %vm5168, %v7490, 0
    %v7527 = vsel %vm5168, %v7492, 0
    %v7529 = vsel %vm5168, %v7494, 0
    %v7531 = vsel %vm5168, %v7496, 0
    %v7533 = vsel %vm5168, %v7498, 0
    %v7535 = vsel %vm5168, %v7500, 0
    %v7537 = vsel %vm5168, %v7502, 0
    %v7539 = vsel %vm5168, %v7504, 0
    %v7541 = vsel %vm5168, %v7506, 0
    %v7543 = vsel %vm5168, %v7508, 0
    %v7545 = vsel %vm5168, %v7510, 0
    %v7547 = vsel %vm5168, %v7512, 0
    %7549 = vmatprep.subr.mxu0 0.0
    %7550 = vmatpush1.msra.mxu0 %v7514
    %7551 = vmatprep.subr.mxu0 0.0
    %7552 = vmatpush1.msra.mxu0 %v7516
    %7553 = vmatprep.subr.mxu0 0.0
    %7554 = vmatpush1.msra.mxu0 0.0
    %7555 = vmatprep.subr.mxu0 0.0
    %7556 = vmatpush1.msra.mxu0 0.0
    %7557 = vmatprep.subr.mxu0 0.0
    %7558 = vmatpush1.msra.mxu0 0.0
    %7559 = vmatprep.subr.mxu0 0.0
    %7560 = vmatpush1.msra.mxu0 0.0
    %7561 = vmatprep.subr.mxu0 0.0
    %7562 = vmatpush1.msra.mxu0 0.0
    %7563 = vmatprep.subr.mxu0 0.0
    %7564 = vmatpush1.msra.mxu0 0.0
    %7565 = vmatprep.subr.mxu0 0.0
    %7566 = vmatpush1.msra.mxu0 0.0
    %7567 = vmatprep.subr.mxu0 0.0
    %7568 = vmatpush1.msra.mxu0 0.0
    %7569 = vmatprep.subr.mxu0 0.0
    %7570 = vmatpush1.msra.mxu0 0.0
    %7571 = vmatprep.subr.mxu0 0.0
    %7572 = vmatpush1.msra.mxu0 0.0
    %7573 = vmatprep.subr.mxu0 0.0
    %7574 = vmatpush1.msra.mxu0 0.0
    %7575 = vmatprep.subr.mxu0 0.0
    %7576 = vmatpush1.msra.mxu0 0.0
    %7577 = vmatprep.subr.mxu0 0.0
    %7578 = vmatpush1.msra.mxu0 0.0
    %7579 = vmatprep.subr.mxu0 0.0
    %7580 = vmatpush1.msra.mxu0 0.0
    %7581 = vmatprep.subr.mxu0 0.0
    %7582 = vmatpush1.msra.mxu0 0.0
    %7583 = vmatprep.subr.mxu0 0.0
    %7584 = vmatpush1.msra.mxu0 0.0
    %7585 = vmatprep.subr.mxu0 0.0
    %7586 = vmatpush1.msra.mxu0 0.0
    %7587 = vmatprep.subr.mxu0 0.0
    %7588 = vmatpush1.msra.mxu0 0.0
    %7589 = vmatprep.subr.mxu0 0.0
    %7590 = vmatpush1.msra.mxu0 0.0
    %7591 = vmatprep.subr.mxu0 0.0
    %7592 = vmatpush1.msra.mxu0 0.0
    %7593 = vmatprep.subr.mxu0 0.0
    %7594 = vmatpush1.msra.mxu0 0.0
    %7595 = vmatprep.subr.mxu0 0.0
    %7596 = vmatpush1.msra.mxu0 0.0
    %7597 = vmatprep.subr.mxu0 0.0
    %7598 = vmatpush1.msra.mxu0 0.0
    %7599 = vmatprep.subr.mxu0 0.0
    %7600 = vmatpush1.msra.mxu0 0.0
    %7601 = vmatprep.subr.mxu0 0.0
    %7602 = vmatpush1.msra.mxu0 0.0
    %7603 = vmatprep.subr.mxu0 0.0
    %7604 = vmatpush1.msra.mxu0 0.0
    %7605 = vmatprep.subr.mxu0 0.0
    %7606 = vmatpush1.msra.mxu0 0.0
    %7607 = vmatprep.subr.mxu0 0.0
    %7608 = vmatpush1.msra.mxu0 0.0
    %7609 = vmatprep.subr.mxu0 0.0
    %7610 = vmatpush1.msra.mxu0 0.0
    %7611 = vmatprep.subr.mxu0 0.0
    %7612 = vmatpush1.msra.mxu0 0.0
    %7613 = vmatprep.mubr.f32.mxu0 0.0
    %7614 = vmatmul.mubr.f32.gmra.mrb[0].mxu0 %v7519
    %v7615 = vpop.f32.mrb[0].mxu0
    %v7616 = vadd.f32 0.0, %v7615
    %v7617 = vpop.f32.mrb[0].mxu0
    %7618 = vmatprep.mubr.f32.mxu0 0.0
    %7619 = vmatmul.mubr.f32.gmra.mrb[0].mxu0 %v7521
    %v7620 = vpop.f32.mrb[0].mxu0
    %v7621 = vadd.f32 0.0, %v7620
    %v7622 = vpop.f32.mrb[0].mxu0
    %7623 = vmatprep.mubr.f32.mxu0 0.0
    %7624 = vmatmul.mubr.f32.gmra.mrb[0].mxu0 %v7523
    %v7625 = vpop.f32.mrb[0].mxu0
    %v7626 = vadd.f32 0.0, %v7625
    %v7627 = vpop.f32.mrb[0].mxu0
    %7628 = vmatprep.mubr.f32.mxu0 0.0
    %7629 = vmatmul.mubr.f32.gmra.mrb[0].mxu0 %v7525
    %v7630 = vpop.f32.mrb[0].mxu0
    %v7631 = vadd.f32 0.0, %v7630
    %v7632 = vpop.f32.mrb[0].mxu0
    %7633 = vmatprep.mubr.f32.mxu0 0.0
    %7634 = vmatmul.mubr.f32.gmra.mrb[0].mxu0 %v7527
    %v7635 = vpop.f32.mrb[0].mxu0
    %v7636 = vadd.f32 0.0, %v7635
    %v7637 = vpop.f32.mrb[0].mxu0
    %7638 = vmatprep.mubr.f32.mxu0 0.0
    %7639 = vmatmul.mubr.f32.gmra.mrb[0].mxu0 %v7529
    %v7640 = vpop.f32.mrb[0].mxu0
    %v7641 = vadd.f32 0.0, %v7640
    %v7642 = vpop.f32.mrb[0].mxu0
    %7643 = vmatprep.mubr.f32.mxu0 0.0
    %7644 = vmatmul.mubr.f32.gmra.mrb[0].mxu0 %v7531
    %v7645 = vpop.f32.mrb[0].mxu0
    %v7646 = vadd.f32 0.0, %v7645
    %v7647 = vpop.f32.mrb[0].mxu0
    %7648 = vmatprep.mubr.f32.mxu0 0.0
    %7649 = vmatmul.mubr.f32.gmra.mrb[0].mxu0 %v7533
    %v7650 = vpop.f32.mrb[0].mxu0
    %v7651 = vadd.f32 0.0, %v7650
    %v7652 = vpop.f32.mrb[0].mxu0
    %7653 = vmatprep.mubr.f32.mxu0 0.0
    %7654 = vmatmul.mubr.f32.gmra.mrb[0].mxu0 %v7535
    %v7655 = vpop.f32.mrb[0].mxu0
    %v7656 = vadd.f32 0.0, %v7655
    %v7657 = vpop.f32.mrb[0].mxu0
    %7658 = vmatprep.mubr.f32.mxu0 0.0
    %7659 = vmatmul.mubr.f32.gmra.mrb[0].mxu0 %v7537
    %v7660 = vpop.f32.mrb[0].mxu0
    %v7661 = vadd.f32 0.0, %v7660
    %v7662 = vpop.f32.mrb[0].mxu0
    %7663 = vmatprep.mubr.f32.mxu0 0.0
    %7664 = vmatmul.mubr.f32.gmra.mrb[0].mxu0 %v7539
    %v7665 = vpop.f32.mrb[0].mxu0
    %v7666 = vadd.f32 0.0, %v7665
    %v7667 = vpop.f32.mrb[0].mxu0
    %7668 = vmatprep.mubr.f32.mxu0 0.0
    %7669 = vmatmul.mubr.f32.gmra.mrb[0].mxu0 %v7541
    %v7670 = vpop.f32.mrb[0].mxu0
    %v7671 = vadd.f32 0.0, %v7670
    %v7672 = vpop.f32.mrb[0].mxu0
    %7673 = vmatprep.mubr.f32.mxu0 0.0
    %7674 = vmatmul.mubr.f32.gmra.mrb[0].mxu0 %v7543
    %v7675 = vpop.f32.mrb[0].mxu0
    %v7676 = vadd.f32 0.0, %v7675
    %v7677 = vpop.f32.mrb[0].mxu0
    %7678 = vmatprep.mubr.f32.mxu0 0.0
    %7679 = vmatmul.mubr.f32.gmra.mrb[0].mxu0 %v7545
    %v7680 = vpop.f32.mrb[0].mxu0
    %v7681 = vadd.f32 0.0, %v7680
    %v7682 = vpop.f32.mrb[0].mxu0
    %7683 = vmatprep.mubr.f32.mxu0 0.0
    %7684 = vmatmul.mubr.f32.gmra.mrb[0].mxu0 %v7547
    %v7685 = vpop.f32.mrb[0].mxu0
    %v7686 = vadd.f32 0.0, %v7685
    %v7687 = vpop.f32.mrb[0].mxu0
    %7688 = vdwg.mxu0
    %v7689 = vadd.f32 %v7468, %v7616
    %v7690 = vadd.f32 %v7469, %v7621
    %v7691 = vadd.f32 %v7470, %v7626
    %v7692 = vadd.f32 %v7471, %v7631
    %v7693 = vadd.f32 %v7472, %v7636
    %v7694 = vadd.f32 %v7473, %v7641
    %v7695 = vadd.f32 %v7474, %v7646
    %v7696 = vadd.f32 %v7475, %v7651
    %v7697 = vadd.f32 %v7476, %v7656
    %v7698 = vadd.f32 %v7477, %v7661
    %v7699 = vadd.f32 %v7478, %v7666
    %v7700 = vadd.f32 %v7479, %v7671
    %v7701 = vadd.f32 %v7480, %v7676
    %v7702 = vadd.f32 %v7481, %v7681
    %v7703 = vadd.f32 %v7482, %v7686
    %7704 = vrot.lane.b32.xlu0 %v5056, 64
    %v7705 = vpop.permute.xlu0 %7704
    %7706 = vrot.lane.b32.xlu0 %v5060, 64
    %v7707 = vpop.permute.xlu0 %7706
    %7708 = vrot.lane.b32.xlu0 %v5064, 64
    %v7709 = vpop.permute.xlu0 %7708
    %7710 = vrot.lane.b32.xlu0 %v5068, 64
    %v7711 = vpop.permute.xlu0 %7710
    %7712 = vrot.lane.b32.xlu0 %v5072, 64
    %v7713 = vpop.permute.xlu0 %7712
    %7714 = vrot.lane.b32.xlu0 %v5076, 64
    %v7715 = vpop.permute.xlu0 %7714
    %7716 = vrot.lane.b32.xlu0 %v5080, 64
    %v7717 = vpop.permute.xlu0 %7716
    %7718 = vrot.lane.b32.xlu0 %v5084, 64
    %v7719 = vpop.permute.xlu0 %7718
    %7720 = vrot.lane.b32.xlu0 %v5088, 64
    %v7721 = vpop.permute.xlu0 %7720
    %7722 = vrot.lane.b32.xlu0 %v5092, 64
    %v7723 = vpop.permute.xlu0 %7722
    %7724 = vrot.lane.b32.xlu0 %v5096, 64
    %v7725 = vpop.permute.xlu0 %7724
    %7726 = vrot.lane.b32.xlu0 %v5100, 64
    %v7727 = vpop.permute.xlu0 %7726
    %7728 = vrot.lane.b32.xlu0 %v5104, 64
    %v7729 = vpop.permute.xlu0 %7728
    %7730 = vrot.lane.b32.xlu0 %v5108, 64
    %v7731 = vpop.permute.xlu0 %7730
    %7732 = vrot.lane.b32.xlu0 %v5112, 64
    %v7733 = vpop.permute.xlu0 %7732
    %7734 = vrot.lane.b32.xlu0 %v5047, 104
    %v7735 = vpop.permute.xlu0 %7734
    %7736 = vrot.lane.b32.xlu0 %v5052, 104
    %v7737 = vpop.permute.xlu0 %7736
    %v7740 = vsel %vm5168, %v7705, 0
    %v7742 = vsel %vm5168, %v7707, 0
    %v7744 = vsel %vm5168, %v7709, 0
    %v7746 = vsel %vm5168, %v7711, 0
    %v7748 = vsel %vm5168, %v7713, 0
    %v7750 = vsel %vm5168, %v7715, 0
    %v7752 = vsel %vm5168, %v7717, 0
    %v7754 = vsel %vm5168, %v7719, 0
    %v7756 = vsel %vm5168, %v7721, 0
    %v7758 = vsel %vm5168, %v7723, 0
    %v7760 = vsel %vm5168, %v7725, 0
    %v7762 = vsel %vm5168, %v7727, 0
    %v7764 = vsel %vm5168, %v7729, 0
    %v7766 = vsel %vm5168, %v7731, 0
    %v7768 = vsel %vm5168, %v7733, 0
    %7770 = vmatprep.subr.mxu0 0.0
    %7771 = vmatpush1.msra.mxu0 %v7735
    %7772 = vmatprep.subr.mxu0 0.0
    %7773 = vmatpush1.msra.mxu0 %v7737
    %7774 = vmatprep.subr.mxu0 0.0
    %7775 = vmatpush1.msra.mxu0 0.0
    %7776 = vmatprep.subr.mxu0 0.0
    %7777 = vmatpush1.msra.mxu0 0.0
    %7778 = vmatprep.subr.mxu0 0.0
    %7779 = vmatpush1.msra.mxu0 0.0
    %7780 = vmatprep.subr.mxu0 0.0
    %7781 = vmatpush1.msra.mxu0 0.0
    %7782 = vmatprep.subr.mxu0 0.0
    %7783 = vmatpush1.msra.mxu0 0.0
    %7784 = vmatprep.subr.mxu0 0.0
    %7785 = vmatpush1.msra.mxu0 0.0
    %7786 = vmatprep.subr.mxu0 0.0
    %7787 = vmatpush1.msra.mxu0 0.0
    %7788 = vmatprep.subr.mxu0 0.0
    %7789 = vmatpush1.msra.mxu0 0.0
    %7790 = vmatprep.subr.mxu0 0.0
    %7791 = vmatpush1.msra.mxu0 0.0
    %7792 = vmatprep.subr.mxu0 0.0
    %7793 = vmatpush1.msra.mxu0 0.0
    %7794 = vmatprep.subr.mxu0 0.0
    %7795 = vmatpush1.msra.mxu0 0.0
    %7796 = vmatprep.subr.mxu0 0.0
    %7797 = vmatpush1.msra.mxu0 0.0
    %7798 = vmatprep.subr.mxu0 0.0
    %7799 = vmatpush1.msra.mxu0 0.0
    %7800 = vmatprep.subr.mxu0 0.0
    %7801 = vmatpush1.msra.mxu0 0.0
    %7802 = vmatprep.subr.mxu0 0.0
    %7803 = vmatpush1.msra.mxu0 0.0
    %7804 = vmatprep.subr.mxu0 0.0
    %7805 = vmatpush1.msra.mxu0 0.0
    %7806 = vmatprep.subr.mxu0 0.0
    %7807 = vmatpush1.msra.mxu0 0.0
    %7808 = vmatprep.subr.mxu0 0.0
    %7809 = vmatpush1.msra.mxu0 0.0
    %7810 = vmatprep.subr.mxu0 0.0
    %7811 = vmatpush1.msra.mxu0 0.0
    %7812 = vmatprep.subr.mxu0 0.0
    %7813 = vmatpush1.msra.mxu0 0.0
    %7814 = vmatprep.subr.mxu0 0.0
    %7815 = vmatpush1.msra.mxu0 0.0
    %7816 = vmatprep.subr.mxu0 0.0
    %7817 = vmatpush1.msra.mxu0 0.0
    %7818 = vmatprep.subr.mxu0 0.0
    %7819 = vmatpush1.msra.mxu0 0.0
    %7820 = vmatprep.subr.mxu0 0.0
    %7821 = vmatpush1.msra.mxu0 0.0
    %7822 = vmatprep.subr.mxu0 0.0
    %7823 = vmatpush1.msra.mxu0 0.0
    %7824 = vmatprep.subr.mxu0 0.0
    %7825 = vmatpush1.msra.mxu0 0.0
    %7826 = vmatprep.subr.mxu0 0.0
    %7827 = vmatpush1.msra.mxu0 0.0
    %7828 = vmatprep.subr.mxu0 0.0
    %7829 = vmatpush1.msra.mxu0 0.0
    %7830 = vmatprep.subr.mxu0 0.0
    %7831 = vmatpush1.msra.mxu0 0.0
    %7832 = vmatprep.subr.mxu0 0.0
    %7833 = vmatpush1.msra.mxu0 0.0
    %7834 = vmatprep.mubr.f32.mxu0 0.0
    %7835 = vmatmul.mubr.f32.gmra.mrb[0].mxu0 %v7740
    %v7836 = vpop.f32.mrb[0].mxu0
    %v7837 = vadd.f32 0.0, %v7836
    %v7838 = vpop.f32.mrb[0].mxu0
    %7839 = vmatprep.mubr.f32.mxu0 0.0
    %7840 = vmatmul.mubr.f32.gmra.mrb[0].mxu0 %v7742
    %v7841 = vpop.f32.mrb[0].mxu0
    %v7842 = vadd.f32 0.0, %v7841
    %v7843 = vpop.f32.mrb[0].mxu0
    %7844 = vmatprep.mubr.f32.mxu0 0.0
    %7845 = vmatmul.mubr.f32.gmra.mrb[0].mxu0 %v7744
    %v7846 = vpop.f32.mrb[0].mxu0
    %v7847 = vadd.f32 0.0, %v7846
    %v7848 = vpop.f32.mrb[0].mxu0
    %7849 = vmatprep.mubr.f32.mxu0 0.0
    %7850 = vmatmul.mubr.f32.gmra.mrb[0].mxu0 %v7746
    %v7851 = vpop.f32.mrb[0].mxu0
    %v7852 = vadd.f32 0.0, %v7851
    %v7853 = vpop.f32.mrb[0].mxu0
    %7854 = vmatprep.mubr.f32.mxu0 0.0
    %7855 = vmatmul.mubr.f32.gmra.mrb[0].mxu0 %v7748
    %v7856 = vpop.f32.mrb[0].mxu0
    %v7857 = vadd.f32 0.0, %v7856
    %v7858 = vpop.f32.mrb[0].mxu0
    %7859 = vmatprep.mubr.f32.mxu0 0.0
    %7860 = vmatmul.mubr.f32.gmra.mrb[0].mxu0 %v7750
    %v7861 = vpop.f32.mrb[0].mxu0
    %v7862 = vadd.f32 0.0, %v7861
    %v7863 = vpop.f32.mrb[0].mxu0
    %7864 = vmatprep.mubr.f32.mxu0 0.0
    %7865 = vmatmul.mubr.f32.gmra.mrb[0].mxu0 %v7752
    %v7866 = vpop.f32.mrb[0].mxu0
    %v7867 = vadd.f32 0.0, %v7866
    %v7868 = vpop.f32.mrb[0].mxu0
    %7869 = vmatprep.mubr.f32.mxu0 0.0
    %7870 = vmatmul.mubr.f32.gmra.mrb[0].mxu0 %v7754
    %v7871 = vpop.f32.mrb[0].mxu0
    %v7872 = vadd.f32 0.0, %v7871
    %v7873 = vpop.f32.mrb[0].mxu0
    %7874 = vmatprep.mubr.f32.mxu0 0.0
    %7875 = vmatmul.mubr.f32.gmra.mrb[0].mxu0 %v7756
    %v7876 = vpop.f32.mrb[0].mxu0
    %v7877 = vadd.f32 0.0, %v7876
    %v7878 = vpop.f32.mrb[0].mxu0
    %7879 = vmatprep.mubr.f32.mxu0 0.0
    %7880 = vmatmul.mubr.f32.gmra.mrb[0].mxu0 %v7758
    %v7881 = vpop.f32.mrb[0].mxu0
    %v7882 = vadd.f32 0.0, %v7881
    %v7883 = vpop.f32.mrb[0].mxu0
    %7884 = vmatprep.mubr.f32.mxu0 0.0
    %7885 = vmatmul.mubr.f32.gmra.mrb[0].mxu0 %v7760
    %v7886 = vpop.f32.mrb[0].mxu0
    %v7887 = vadd.f32 0.0, %v7886
    %v7888 = vpop.f32.mrb[0].mxu0
    %7889 = vmatprep.mubr.f32.mxu0 0.0
    %7890 = vmatmul.mubr.f32.gmra.mrb[0].mxu0 %v7762
    %v7891 = vpop.f32.mrb[0].mxu0
    %v7892 = vadd.f32 0.0, %v7891
    %v7893 = vpop.f32.mrb[0].mxu0
    %7894 = vmatprep.mubr.f32.mxu0 0.0
    %7895 = vmatmul.mubr.f32.gmra.mrb[0].mxu0 %v7764
    %v7896 = vpop.f32.mrb[0].mxu0
    %v7897 = vadd.f32 0.0, %v7896
    %v7898 = vpop.f32.mrb[0].mxu0
    %7899 = vmatprep.mubr.f32.mxu0 0.0
    %7900 = vmatmul.mubr.f32.gmra.mrb[0].mxu0 %v7766
    %v7901 = vpop.f32.mrb[0].mxu0
    %v7902 = vadd.f32 0.0, %v7901
    %v7903 = vpop.f32.mrb[0].mxu0
    %7904 = vmatprep.mubr.f32.mxu0 0.0
    %7905 = vmatmul.mubr.f32.gmra.mrb[0].mxu0 %v7768
    %v7906 = vpop.f32.mrb[0].mxu0
    %v7907 = vadd.f32 0.0, %v7906
    %v7908 = vpop.f32.mrb[0].mxu0
    %7909 = vdwg.mxu0
    %v7910 = vadd.f32 %v7689, %v7837
    %v7911 = vadd.f32 %v7690, %v7842
    %v7912 = vadd.f32 %v7691, %v7847
    %v7913 = vadd.f32 %v7692, %v7852
    %v7914 = vadd.f32 %v7693, %v7857
    %v7915 = vadd.f32 %v7694, %v7862
    %v7916 = vadd.f32 %v7695, %v7867
    %v7917 = vadd.f32 %v7696, %v7872
    %v7918 = vadd.f32 %v7697, %v7877
    %v7919 = vadd.f32 %v7698, %v7882
    %v7920 = vadd.f32 %v7699, %v7887
    %v7921 = vadd.f32 %v7700, %v7892
    %v7922 = vadd.f32 %v7701, %v7897
    %v7923 = vadd.f32 %v7702, %v7902
    %v7924 = vadd.f32 %v7703, %v7907
    %7925 = vrot.lane.b32.xlu0 %v5056, 48
    %v7926 = vpop.permute.xlu0 %7925
    %7927 = vrot.lane.b32.xlu0 %v5060, 48
    %v7928 = vpop.permute.xlu0 %7927
    %7929 = vrot.lane.b32.xlu0 %v5064, 48
    %v7930 = vpop.permute.xlu0 %7929
    %7931 = vrot.lane.b32.xlu0 %v5068, 48
    %v7932 = vpop.permute.xlu0 %7931
    %7933 = vrot.lane.b32.xlu0 %v5072, 48
    %v7934 = vpop.permute.xlu0 %7933
    %7935 = vrot.lane.b32.xlu0 %v5076, 48
    %v7936 = vpop.permute.xlu0 %7935
    %7937 = vrot.lane.b32.xlu0 %v5080, 48
    %v7938 = vpop.permute.xlu0 %7937
    %7939 = vrot.lane.b32.xlu0 %v5084, 48
    %v7940 = vpop.permute.xlu0 %7939
    %7941 = vrot.lane.b32.xlu0 %v5088, 48
    %v7942 = vpop.permute.xlu0 %7941
    %7943 = vrot.lane.b32.xlu0 %v5092, 48
    %v7944 = vpop.permute.xlu0 %7943
    %7945 = vrot.lane.b32.xlu0 %v5096, 48
    %v7946 = vpop.permute.xlu0 %7945
    %7947 = vrot.lane.b32.xlu0 %v5100, 48
    %v7948 = vpop.permute.xlu0 %7947
    %7949 = vrot.lane.b32.xlu0 %v5104, 48
    %v7950 = vpop.permute.xlu0 %7949
    %7951 = vrot.lane.b32.xlu0 %v5108, 48
    %v7952 = vpop.permute.xlu0 %7951
    %7953 = vrot.lane.b32.xlu0 %v5112, 48
    %v7954 = vpop.permute.xlu0 %7953
    %7955 = vrot.lane.b32.xlu0 %v5047, 102
    %v7956 = vpop.permute.xlu0 %7955
    %7957 = vrot.lane.b32.xlu0 %v5052, 102
    %v7958 = vpop.permute.xlu0 %7957
    %v7961 = vsel %vm5168, %v7926, 0
    %v7963 = vsel %vm5168, %v7928, 0
    %v7965 = vsel %vm5168, %v7930, 0
    %v7967 = vsel %vm5168, %v7932, 0
    %v7969 = vsel %vm5168, %v7934, 0
    %v7971 = vsel %vm5168, %v7936, 0
    %v7973 = vsel %vm5168, %v7938, 0
    %v7975 = vsel %vm5168, %v7940, 0
    %v7977 = vsel %vm5168, %v7942, 0
    %v7979 = vsel %vm5168, %v7944, 0
    %v7981 = vsel %vm5168, %v7946, 0
    %v7983 = vsel %vm5168, %v7948, 0
    %v7985 = vsel %vm5168, %v7950, 0
    %v7987 = vsel %vm5168, %v7952, 0
    %v7989 = vsel %vm5168, %v7954, 0
    %7991 = vmatprep.subr.mxu0 0.0
    %7992 = vmatpush1.msra.mxu0 %v7956
    %7993 = vmatprep.subr.mxu0 0.0
    %7994 = vmatpush1.msra.mxu0 %v7958
    %7995 = vmatprep.subr.mxu0 0.0
    %7996 = vmatpush1.msra.mxu0 0.0
    %7997 = vmatprep.subr.mxu0 0.0
    %7998 = vmatpush1.msra.mxu0 0.0
    %7999 = vmatprep.subr.mxu0 0.0
    %8000 = vmatpush1.msra.mxu0 0.0
    %8001 = vmatprep.subr.mxu0 0.0
    %8002 = vmatpush1.msra.mxu0 0.0
    %8003 = vmatprep.subr.mxu0 0.0
    %8004 = vmatpush1.msra.mxu0 0.0
    %8005 = vmatprep.subr.mxu0 0.0
    %8006 = vmatpush1.msra.mxu0 0.0
    %8007 = vmatprep.subr.mxu0 0.0
    %8008 = vmatpush1.msra.mxu0 0.0
    %8009 = vmatprep.subr.mxu0 0.0
    %8010 = vmatpush1.msra.mxu0 0.0
    %8011 = vmatprep.subr.mxu0 0.0
    %8012 = vmatpush1.msra.mxu0 0.0
    %8013 = vmatprep.subr.mxu0 0.0
    %8014 = vmatpush1.msra.mxu0 0.0
    %8015 = vmatprep.subr.mxu0 0.0
    %8016 = vmatpush1.msra.mxu0 0.0
    %8017 = vmatprep.subr.mxu0 0.0
    %8018 = vmatpush1.msra.mxu0 0.0
    %8019 = vmatprep.subr.mxu0 0.0
    %8020 = vmatpush1.msra.mxu0 0.0
    %8021 = vmatprep.subr.mxu0 0.0
    %8022 = vmatpush1.msra.mxu0 0.0
    %8023 = vmatprep.subr.mxu0 0.0
    %8024 = vmatpush1.msra.mxu0 0.0
    %8025 = vmatprep.subr.mxu0 0.0
    %8026 = vmatpush1.msra.mxu0 0.0
    %8027 = vmatprep.subr.mxu0 0.0
    %8028 = vmatpush1.msra.mxu0 0.0
    %8029 = vmatprep.subr.mxu0 0.0
    %8030 = vmatpush1.msra.mxu0 0.0
    %8031 = vmatprep.subr.mxu0 0.0
    %8032 = vmatpush1.msra.mxu0 0.0
    %8033 = vmatprep.subr.mxu0 0.0
    %8034 = vmatpush1.msra.mxu0 0.0
    %8035 = vmatprep.subr.mxu0 0.0
    %8036 = vmatpush1.msra.mxu0 0.0
    %8037 = vmatprep.subr.mxu0 0.0
    %8038 = vmatpush1.msra.mxu0 0.0
    %8039 = vmatprep.subr.mxu0 0.0
    %8040 = vmatpush1.msra.mxu0 0.0
    %8041 = vmatprep.subr.mxu0 0.0
    %8042 = vmatpush1.msra.mxu0 0.0
    %8043 = vmatprep.subr.mxu0 0.0
    %8044 = vmatpush1.msra.mxu0 0.0
    %8045 = vmatprep.subr.mxu0 0.0
    %8046 = vmatpush1.msra.mxu0 0.0
    %8047 = vmatprep.subr.mxu0 0.0
    %8048 = vmatpush1.msra.mxu0 0.0
    %8049 = vmatprep.subr.mxu0 0.0
    %8050 = vmatpush1.msra.mxu0 0.0
    %8051 = vmatprep.subr.mxu0 0.0
    %8052 = vmatpush1.msra.mxu0 0.0
    %8053 = vmatprep.subr.mxu0 0.0
    %8054 = vmatpush1.msra.mxu0 0.0
    %8055 = vmatprep.mubr.f32.mxu0 0.0
    %8056 = vmatmul.mubr.f32.gmra.mrb[0].mxu0 %v7961
    %v8057 = vpop.f32.mrb[0].mxu0
    %v8058 = vadd.f32 0.0, %v8057
    %v8059 = vpop.f32.mrb[0].mxu0
    %8060 = vmatprep.mubr.f32.mxu0 0.0
    %8061 = vmatmul.mubr.f32.gmra.mrb[0].mxu0 %v7963
    %v8062 = vpop.f32.mrb[0].mxu0
    %v8063 = vadd.f32 0.0, %v8062
    %v8064 = vpop.f32.mrb[0].mxu0
    %8065 = vmatprep.mubr.f32.mxu0 0.0
    %8066 = vmatmul.mubr.f32.gmra.mrb[0].mxu0 %v7965
    %v8067 = vpop.f32.mrb[0].mxu0
    %v8068 = vadd.f32 0.0, %v8067
    %v8069 = vpop.f32.mrb[0].mxu0
    %8070 = vmatprep.mubr.f32.mxu0 0.0
    %8071 = vmatmul.mubr.f32.gmra.mrb[0].mxu0 %v7967
    %v8072 = vpop.f32.mrb[0].mxu0
    %v8073 = vadd.f32 0.0, %v8072
    %v8074 = vpop.f32.mrb[0].mxu0
    %8075 = vmatprep.mubr.f32.mxu0 0.0
    %8076 = vmatmul.mubr.f32.gmra.mrb[0].mxu0 %v7969
    %v8077 = vpop.f32.mrb[0].mxu0
    %v8078 = vadd.f32 0.0, %v8077
    %v8079 = vpop.f32.mrb[0].mxu0
    %8080 = vmatprep.mubr.f32.mxu0 0.0
    %8081 = vmatmul.mubr.f32.gmra.mrb[0].mxu0 %v7971
    %v8082 = vpop.f32.mrb[0].mxu0
    %v8083 = vadd.f32 0.0, %v8082
    %v8084 = vpop.f32.mrb[0].mxu0
    %8085 = vmatprep.mubr.f32.mxu0 0.0
    %8086 = vmatmul.mubr.f32.gmra.mrb[0].mxu0 %v7973
    %v8087 = vpop.f32.mrb[0].mxu0
    %v8088 = vadd.f32 0.0, %v8087
    %v8089 = vpop.f32.mrb[0].mxu0
    %8090 = vmatprep.mubr.f32.mxu0 0.0
    %8091 = vmatmul.mubr.f32.gmra.mrb[0].mxu0 %v7975
    %v8092 = vpop.f32.mrb[0].mxu0
    %v8093 = vadd.f32 0.0, %v8092
    %v8094 = vpop.f32.mrb[0].mxu0
    %8095 = vmatprep.mubr.f32.mxu0 0.0
    %8096 = vmatmul.mubr.f32.gmra.mrb[0].mxu0 %v7977
    %v8097 = vpop.f32.mrb[0].mxu0
    %v8098 = vadd.f32 0.0, %v8097
    %v8099 = vpop.f32.mrb[0].mxu0
    %8100 = vmatprep.mubr.f32.mxu0 0.0
    %8101 = vmatmul.mubr.f32.gmra.mrb[0].mxu0 %v7979
    %v8102 = vpop.f32.mrb[0].mxu0
    %v8103 = vadd.f32 0.0, %v8102
    %v8104 = vpop.f32.mrb[0].mxu0
    %8105 = vmatprep.mubr.f32.mxu0 0.0
    %8106 = vmatmul.mubr.f32.gmra.mrb[0].mxu0 %v7981
    %v8107 = vpop.f32.mrb[0].mxu0
    %v8108 = vadd.f32 0.0, %v8107
    %v8109 = vpop.f32.mrb[0].mxu0
    %8110 = vmatprep.mubr.f32.mxu0 0.0
    %8111 = vmatmul.mubr.f32.gmra.mrb[0].mxu0 %v7983
    %v8112 = vpop.f32.mrb[0].mxu0
    %v8113 = vadd.f32 0.0, %v8112
    %v8114 = vpop.f32.mrb[0].mxu0
    %8115 = vmatprep.mubr.f32.mxu0 0.0
    %8116 = vmatmul.mubr.f32.gmra.mrb[0].mxu0 %v7985
    %v8117 = vpop.f32.mrb[0].mxu0
    %v8118 = vadd.f32 0.0, %v8117
    %v8119 = vpop.f32.mrb[0].mxu0
    %8120 = vmatprep.mubr.f32.mxu0 0.0
    %8121 = vmatmul.mubr.f32.gmra.mrb[0].mxu0 %v7987
    %v8122 = vpop.f32.mrb[0].mxu0
    %v8123 = vadd.f32 0.0, %v8122
    %v8124 = vpop.f32.mrb[0].mxu0
    %8125 = vmatprep.mubr.f32.mxu0 0.0
    %8126 = vmatmul.mubr.f32.gmra.mrb[0].mxu0 %v7989
    %v8127 = vpop.f32.mrb[0].mxu0
    %v8128 = vadd.f32 0.0, %v8127
    %v8129 = vpop.f32.mrb[0].mxu0
    %8130 = vdwg.mxu0
    %v8131 = vadd.f32 %v7910, %v8058
    %v8132 = vadd.f32 %v7911, %v8063
    %v8133 = vadd.f32 %v7912, %v8068
    %v8134 = vadd.f32 %v7913, %v8073
    %v8135 = vadd.f32 %v7914, %v8078
    %v8136 = vadd.f32 %v7915, %v8083
    %v8137 = vadd.f32 %v7916, %v8088
    %v8138 = vadd.f32 %v7917, %v8093
    %v8139 = vadd.f32 %v7918, %v8098
    %v8140 = vadd.f32 %v7919, %v8103
    %v8141 = vadd.f32 %v7920, %v8108
    %v8142 = vadd.f32 %v7921, %v8113
    %v8143 = vadd.f32 %v7922, %v8118
    %v8144 = vadd.f32 %v7923, %v8123
    %v8145 = vadd.f32 %v7924, %v8128
    %8146 = vrot.lane.b32.xlu0 %v5056, 32
    %v8147 = vpop.permute.xlu0 %8146
    %8148 = vrot.lane.b32.xlu0 %v5060, 32
    %v8149 = vpop.permute.xlu0 %8148
    %8150 = vrot.lane.b32.xlu0 %v5064, 32
    %v8151 = vpop.permute.xlu0 %8150
    %8152 = vrot.lane.b32.xlu0 %v5068, 32
    %v8153 = vpop.permute.xlu0 %8152
    %8154 = vrot.lane.b32.xlu0 %v5072, 32
    %v8155 = vpop.permute.xlu0 %8154
    %8156 = vrot.lane.b32.xlu0 %v5076, 32
    %v8157 = vpop.permute.xlu0 %8156
    %8158 = vrot.lane.b32.xlu0 %v5080, 32
    %v8159 = vpop.permute.xlu0 %8158
    %8160 = vrot.lane.b32.xlu0 %v5084, 32
    %v8161 = vpop.permute.xlu0 %8160
    %8162 = vrot.lane.b32.xlu0 %v5088, 32
    %v8163 = vpop.permute.xlu0 %8162
    %8164 = vrot.lane.b32.xlu0 %v5092, 32
    %v8165 = vpop.permute.xlu0 %8164
    %8166 = vrot.lane.b32.xlu0 %v5096, 32
    %v8167 = vpop.permute.xlu0 %8166
    %8168 = vrot.lane.b32.xlu0 %v5100, 32
    %v8169 = vpop.permute.xlu0 %8168
    %8170 = vrot.lane.b32.xlu0 %v5104, 32
    %v8171 = vpop.permute.xlu0 %8170
    %8172 = vrot.lane.b32.xlu0 %v5108, 32
    %v8173 = vpop.permute.xlu0 %8172
    %8174 = vrot.lane.b32.xlu0 %v5112, 32
    %v8175 = vpop.permute.xlu0 %8174
    %8176 = vrot.lane.b32.xlu0 %v5047, 100
    %v8177 = vpop.permute.xlu0 %8176
    %8178 = vrot.lane.b32.xlu0 %v5052, 100
    %v8179 = vpop.permute.xlu0 %8178
    %v8182 = vsel %vm5168, %v8147, 0
    %v8184 = vsel %vm5168, %v8149, 0
    %v8186 = vsel %vm5168, %v8151, 0
    %v8188 = vsel %vm5168, %v8153, 0
    %v8190 = vsel %vm5168, %v8155, 0
    %v8192 = vsel %vm5168, %v8157, 0
    %v8194 = vsel %vm5168, %v8159, 0
    %v8196 = vsel %vm5168, %v8161, 0
    %v8198 = vsel %vm5168, %v8163, 0
    %v8200 = vsel %vm5168, %v8165, 0
    %v8202 = vsel %vm5168, %v8167, 0
    %v8204 = vsel %vm5168, %v8169, 0
    %v8206 = vsel %vm5168, %v8171, 0
    %v8208 = vsel %vm5168, %v8173, 0
    %v8210 = vsel %vm5168, %v8175, 0
    %8212 = vmatprep.subr.mxu0 0.0
    %8213 = vmatpush1.msra.mxu0 %v8177
    %8214 = vmatprep.subr.mxu0 0.0
    %8215 = vmatpush1.msra.mxu0 %v8179
    %8216 = vmatprep.subr.mxu0 0.0
    %8217 = vmatpush1.msra.mxu0 0.0
    %8218 = vmatprep.subr.mxu0 0.0
    %8219 = vmatpush1.msra.mxu0 0.0
    %8220 = vmatprep.subr.mxu0 0.0
    %8221 = vmatpush1.msra.mxu0 0.0
    %8222 = vmatprep.subr.mxu0 0.0
    %8223 = vmatpush1.msra.mxu0 0.0
    %8224 = vmatprep.subr.mxu0 0.0
    %8225 = vmatpush1.msra.mxu0 0.0
    %8226 = vmatprep.subr.mxu0 0.0
    %8227 = vmatpush1.msra.mxu0 0.0
    %8228 = vmatprep.subr.mxu0 0.0
    %8229 = vmatpush1.msra.mxu0 0.0
    %8230 = vmatprep.subr.mxu0 0.0
    %8231 = vmatpush1.msra.mxu0 0.0
    %8232 = vmatprep.subr.mxu0 0.0
    %8233 = vmatpush1.msra.mxu0 0.0
    %8234 = vmatprep.subr.mxu0 0.0
    %8235 = vmatpush1.msra.mxu0 0.0
    %8236 = vmatprep.subr.mxu0 0.0
    %8237 = vmatpush1.msra.mxu0 0.0
    %8238 = vmatprep.subr.mxu0 0.0
    %8239 = vmatpush1.msra.mxu0 0.0
    %8240 = vmatprep.subr.mxu0 0.0
    %8241 = vmatpush1.msra.mxu0 0.0
    %8242 = vmatprep.subr.mxu0 0.0
    %8243 = vmatpush1.msra.mxu0 0.0
    %8244 = vmatprep.subr.mxu0 0.0
    %8245 = vmatpush1.msra.mxu0 0.0
    %8246 = vmatprep.subr.mxu0 0.0
    %8247 = vmatpush1.msra.mxu0 0.0
    %8248 = vmatprep.subr.mxu0 0.0
    %8249 = vmatpush1.msra.mxu0 0.0
    %8250 = vmatprep.subr.mxu0 0.0
    %8251 = vmatpush1.msra.mxu0 0.0
    %8252 = vmatprep.subr.mxu0 0.0
    %8253 = vmatpush1.msra.mxu0 0.0
    %8254 = vmatprep.subr.mxu0 0.0
    %8255 = vmatpush1.msra.mxu0 0.0
    %8256 = vmatprep.subr.mxu0 0.0
    %8257 = vmatpush1.msra.mxu0 0.0
    %8258 = vmatprep.subr.mxu0 0.0
    %8259 = vmatpush1.msra.mxu0 0.0
    %8260 = vmatprep.subr.mxu0 0.0
    %8261 = vmatpush1.msra.mxu0 0.0
    %8262 = vmatprep.subr.mxu0 0.0
    %8263 = vmatpush1.msra.mxu0 0.0
    %8264 = vmatprep.subr.mxu0 0.0
    %8265 = vmatpush1.msra.mxu0 0.0
    %8266 = vmatprep.subr.mxu0 0.0
    %8267 = vmatpush1.msra.mxu0 0.0
    %8268 = vmatprep.subr.mxu0 0.0
    %8269 = vmatpush1.msra.mxu0 0.0
    %8270 = vmatprep.subr.mxu0 0.0
    %8271 = vmatpush1.msra.mxu0 0.0
    %8272 = vmatprep.subr.mxu0 0.0
    %8273 = vmatpush1.msra.mxu0 0.0
    %8274 = vmatprep.subr.mxu0 0.0
    %8275 = vmatpush1.msra.mxu0 0.0
    %8276 = vmatprep.mubr.f32.mxu0 0.0
    %8277 = vmatmul.mubr.f32.gmra.mrb[0].mxu0 %v8182
    %v8278 = vpop.f32.mrb[0].mxu0
    %v8279 = vadd.f32 0.0, %v8278
    %v8280 = vpop.f32.mrb[0].mxu0
    %8281 = vmatprep.mubr.f32.mxu0 0.0
    %8282 = vmatmul.mubr.f32.gmra.mrb[0].mxu0 %v8184
    %v8283 = vpop.f32.mrb[0].mxu0
    %v8284 = vadd.f32 0.0, %v8283
    %v8285 = vpop.f32.mrb[0].mxu0
    %8286 = vmatprep.mubr.f32.mxu0 0.0
    %8287 = vmatmul.mubr.f32.gmra.mrb[0].mxu0 %v8186
    %v8288 = vpop.f32.mrb[0].mxu0
    %v8289 = vadd.f32 0.0, %v8288
    %v8290 = vpop.f32.mrb[0].mxu0
    %8291 = vmatprep.mubr.f32.mxu0 0.0
    %8292 = vmatmul.mubr.f32.gmra.mrb[0].mxu0 %v8188
    %v8293 = vpop.f32.mrb[0].mxu0
    %v8294 = vadd.f32 0.0, %v8293
    %v8295 = vpop.f32.mrb[0].mxu0
    %8296 = vmatprep.mubr.f32.mxu0 0.0
    %8297 = vmatmul.mubr.f32.gmra.mrb[0].mxu0 %v8190
    %v8298 = vpop.f32.mrb[0].mxu0
    %v8299 = vadd.f32 0.0, %v8298
    %v8300 = vpop.f32.mrb[0].mxu0
    %8301 = vmatprep.mubr.f32.mxu0 0.0
    %8302 = vmatmul.mubr.f32.gmra.mrb[0].mxu0 %v8192
    %v8303 = vpop.f32.mrb[0].mxu0
    %v8304 = vadd.f32 0.0, %v8303
    %v8305 = vpop.f32.mrb[0].mxu0
    %8306 = vmatprep.mubr.f32.mxu0 0.0
    %8307 = vmatmul.mubr.f32.gmra.mrb[0].mxu0 %v8194
    %v8308 = vpop.f32.mrb[0].mxu0
    %v8309 = vadd.f32 0.0, %v8308
    %v8310 = vpop.f32.mrb[0].mxu0
    %8311 = vmatprep.mubr.f32.mxu0 0.0
    %8312 = vmatmul.mubr.f32.gmra.mrb[0].mxu0 %v8196
    %v8313 = vpop.f32.mrb[0].mxu0
    %v8314 = vadd.f32 0.0, %v8313
    %v8315 = vpop.f32.mrb[0].mxu0
    %8316 = vmatprep.mubr.f32.mxu0 0.0
    %8317 = vmatmul.mubr.f32.gmra.mrb[0].mxu0 %v8198
    %v8318 = vpop.f32.mrb[0].mxu0
    %v8319 = vadd.f32 0.0, %v8318
    %v8320 = vpop.f32.mrb[0].mxu0
    %8321 = vmatprep.mubr.f32.mxu0 0.0
    %8322 = vmatmul.mubr.f32.gmra.mrb[0].mxu0 %v8200
    %v8323 = vpop.f32.mrb[0].mxu0
    %v8324 = vadd.f32 0.0, %v8323
    %v8325 = vpop.f32.mrb[0].mxu0
    %8326 = vmatprep.mubr.f32.mxu0 0.0
    %8327 = vmatmul.mubr.f32.gmra.mrb[0].mxu0 %v8202
    %v8328 = vpop.f32.mrb[0].mxu0
    %v8329 = vadd.f32 0.0, %v8328
    %v8330 = vpop.f32.mrb[0].mxu0
    %8331 = vmatprep.mubr.f32.mxu0 0.0
    %8332 = vmatmul.mubr.f32.gmra.mrb[0].mxu0 %v8204
    %v8333 = vpop.f32.mrb[0].mxu0
    %v8334 = vadd.f32 0.0, %v8333
    %v8335 = vpop.f32.mrb[0].mxu0
    %8336 = vmatprep.mubr.f32.mxu0 0.0
    %8337 = vmatmul.mubr.f32.gmra.mrb[0].mxu0 %v8206
    %v8338 = vpop.f32.mrb[0].mxu0
    %v8339 = vadd.f32 0.0, %v8338
    %v8340 = vpop.f32.mrb[0].mxu0
    %8341 = vmatprep.mubr.f32.mxu0 0.0
    %8342 = vmatmul.mubr.f32.gmra.mrb[0].mxu0 %v8208
    %v8343 = vpop.f32.mrb[0].mxu0
    %v8344 = vadd.f32 0.0, %v8343
    %v8345 = vpop.f32.mrb[0].mxu0
    %8346 = vmatprep.mubr.f32.mxu0 0.0
    %8347 = vmatmul.mubr.f32.gmra.mrb[0].mxu0 %v8210
    %v8348 = vpop.f32.mrb[0].mxu0
    %v8349 = vadd.f32 0.0, %v8348
    %v8350 = vpop.f32.mrb[0].mxu0
    %8351 = vdwg.mxu0
    %v8352 = vadd.f32 %v8131, %v8279
    %v8353 = vadd.f32 %v8132, %v8284
    %v8354 = vadd.f32 %v8133, %v8289
    %v8355 = vadd.f32 %v8134, %v8294
    %v8356 = vadd.f32 %v8135, %v8299
    %v8357 = vadd.f32 %v8136, %v8304
    %v8358 = vadd.f32 %v8137, %v8309
    %v8359 = vadd.f32 %v8138, %v8314
    %v8360 = vadd.f32 %v8139, %v8319
    %v8361 = vadd.f32 %v8140, %v8324
    %v8362 = vadd.f32 %v8141, %v8329
    %v8363 = vadd.f32 %v8142, %v8334
    %v8364 = vadd.f32 %v8143, %v8339
    %v8365 = vadd.f32 %v8144, %v8344
    %v8366 = vadd.f32 %v8145, %v8349
    %8367 = vrot.lane.b32.xlu0 %v5056, 16
    %v8368 = vpop.permute.xlu0 %8367
    %8369 = vrot.lane.b32.xlu0 %v5060, 16
    %v8370 = vpop.permute.xlu0 %8369
    %8371 = vrot.lane.b32.xlu0 %v5064, 16
    %v8372 = vpop.permute.xlu0 %8371
    %8373 = vrot.lane.b32.xlu0 %v5068, 16
    %v8374 = vpop.permute.xlu0 %8373
    %8375 = vrot.lane.b32.xlu0 %v5072, 16
    %v8376 = vpop.permute.xlu0 %8375
    %8377 = vrot.lane.b32.xlu0 %v5076, 16
    %v8378 = vpop.permute.xlu0 %8377
    %8379 = vrot.lane.b32.xlu0 %v5080, 16
    %v8380 = vpop.permute.xlu0 %8379
    %8381 = vrot.lane.b32.xlu0 %v5084, 16
    %v8382 = vpop.permute.xlu0 %8381
    %8383 = vrot.lane.b32.xlu0 %v5088, 16
    %v8384 = vpop.permute.xlu0 %8383
    %8385 = vrot.lane.b32.xlu0 %v5092, 16
    %v8386 = vpop.permute.xlu0 %8385
    %8387 = vrot.lane.b32.xlu0 %v5096, 16
    %v8388 = vpop.permute.xlu0 %8387
    %8389 = vrot.lane.b32.xlu0 %v5100, 16
    %v8390 = vpop.permute.xlu0 %8389
    %8391 = vrot.lane.b32.xlu0 %v5104, 16
    %v8392 = vpop.permute.xlu0 %8391
    %8393 = vrot.lane.b32.xlu0 %v5108, 16
    %v8394 = vpop.permute.xlu0 %8393
    %8395 = vrot.lane.b32.xlu0 %v5112, 16
    %v8396 = vpop.permute.xlu0 %8395
    %8397 = vrot.lane.b32.xlu0 %v5047, 98
    %v8398 = vpop.permute.xlu0 %8397
    %8399 = vrot.lane.b32.xlu0 %v5052, 98
    %v8400 = vpop.permute.xlu0 %8399
    %v8403 = vsel %vm5168, %v8368, 0
    %v8405 = vsel %vm5168, %v8370, 0
    %v8407 = vsel %vm5168, %v8372, 0
    %v8409 = vsel %vm5168, %v8374, 0
    %v8411 = vsel %vm5168, %v8376, 0
    %v8413 = vsel %vm5168, %v8378, 0
    %v8415 = vsel %vm5168, %v8380, 0
    %v8417 = vsel %vm5168, %v8382, 0
    %v8419 = vsel %vm5168, %v8384, 0
    %v8421 = vsel %vm5168, %v8386, 0
    %v8423 = vsel %vm5168, %v8388, 0
    %v8425 = vsel %vm5168, %v8390, 0
    %v8427 = vsel %vm5168, %v8392, 0
    %v8429 = vsel %vm5168, %v8394, 0
    %v8431 = vsel %vm5168, %v8396, 0
    %8433 = vmatprep.subr.mxu0 0.0
    %8434 = vmatpush1.msra.mxu0 %v8398
    %8435 = vmatprep.subr.mxu0 0.0
    %8436 = vmatpush1.msra.mxu0 %v8400
    %8437 = vmatprep.subr.mxu0 0.0
    %8438 = vmatpush1.msra.mxu0 0.0
    %8439 = vmatprep.subr.mxu0 0.0
    %8440 = vmatpush1.msra.mxu0 0.0
    %8441 = vmatprep.subr.mxu0 0.0
    %8442 = vmatpush1.msra.mxu0 0.0
    %8443 = vmatprep.subr.mxu0 0.0
    %8444 = vmatpush1.msra.mxu0 0.0
    %8445 = vmatprep.subr.mxu0 0.0
    %8446 = vmatpush1.msra.mxu0 0.0
    %8447 = vmatprep.subr.mxu0 0.0
    %8448 = vmatpush1.msra.mxu0 0.0
    %8449 = vmatprep.subr.mxu0 0.0
    %8450 = vmatpush1.msra.mxu0 0.0
    %8451 = vmatprep.subr.mxu0 0.0
    %8452 = vmatpush1.msra.mxu0 0.0
    %8453 = vmatprep.subr.mxu0 0.0
    %8454 = vmatpush1.msra.mxu0 0.0
    %8455 = vmatprep.subr.mxu0 0.0
    %8456 = vmatpush1.msra.mxu0 0.0
    %8457 = vmatprep.subr.mxu0 0.0
    %8458 = vmatpush1.msra.mxu0 0.0
    %8459 = vmatprep.subr.mxu0 0.0
    %8460 = vmatpush1.msra.mxu0 0.0
    %8461 = vmatprep.subr.mxu0 0.0
    %8462 = vmatpush1.msra.mxu0 0.0
    %8463 = vmatprep.subr.mxu0 0.0
    %8464 = vmatpush1.msra.mxu0 0.0
    %8465 = vmatprep.subr.mxu0 0.0
    %8466 = vmatpush1.msra.mxu0 0.0
    %8467 = vmatprep.subr.mxu0 0.0
    %8468 = vmatpush1.msra.mxu0 0.0
    %8469 = vmatprep.subr.mxu0 0.0
    %8470 = vmatpush1.msra.mxu0 0.0
    %8471 = vmatprep.subr.mxu0 0.0
    %8472 = vmatpush1.msra.mxu0 0.0
    %8473 = vmatprep.subr.mxu0 0.0
    %8474 = vmatpush1.msra.mxu0 0.0
    %8475 = vmatprep.subr.mxu0 0.0
    %8476 = vmatpush1.msra.mxu0 0.0
    %8477 = vmatprep.subr.mxu0 0.0
    %8478 = vmatpush1.msra.mxu0 0.0
    %8479 = vmatprep.subr.mxu0 0.0
    %8480 = vmatpush1.msra.mxu0 0.0
    %8481 = vmatprep.subr.mxu0 0.0
    %8482 = vmatpush1.msra.mxu0 0.0
    %8483 = vmatprep.subr.mxu0 0.0
    %8484 = vmatpush1.msra.mxu0 0.0
    %8485 = vmatprep.subr.mxu0 0.0
    %8486 = vmatpush1.msra.mxu0 0.0
    %8487 = vmatprep.subr.mxu0 0.0
    %8488 = vmatpush1.msra.mxu0 0.0
    %8489 = vmatprep.subr.mxu0 0.0
    %8490 = vmatpush1.msra.mxu0 0.0
    %8491 = vmatprep.subr.mxu0 0.0
    %8492 = vmatpush1.msra.mxu0 0.0
    %8493 = vmatprep.subr.mxu0 0.0
    %8494 = vmatpush1.msra.mxu0 0.0
    %8495 = vmatprep.subr.mxu0 0.0
    %8496 = vmatpush1.msra.mxu0 0.0
    %8497 = vmatprep.mubr.f32.mxu0 0.0
    %8498 = vmatmul.mubr.f32.gmra.mrb[0].mxu0 %v8403
    %v8499 = vpop.f32.mrb[0].mxu0
    %v8500 = vadd.f32 0.0, %v8499
    %v8501 = vpop.f32.mrb[0].mxu0
    %8502 = vmatprep.mubr.f32.mxu0 0.0
    %8503 = vmatmul.mubr.f32.gmra.mrb[0].mxu0 %v8405
    %v8504 = vpop.f32.mrb[0].mxu0
    %v8505 = vadd.f32 0.0, %v8504
    %v8506 = vpop.f32.mrb[0].mxu0
    %8507 = vmatprep.mubr.f32.mxu0 0.0
    %8508 = vmatmul.mubr.f32.gmra.mrb[0].mxu0 %v8407
    %v8509 = vpop.f32.mrb[0].mxu0
    %v8510 = vadd.f32 0.0, %v8509
    %v8511 = vpop.f32.mrb[0].mxu0
    %8512 = vmatprep.mubr.f32.mxu0 0.0
    %8513 = vmatmul.mubr.f32.gmra.mrb[0].mxu0 %v8409
    %v8514 = vpop.f32.mrb[0].mxu0
    %v8515 = vadd.f32 0.0, %v8514
    %v8516 = vpop.f32.mrb[0].mxu0
    %8517 = vmatprep.mubr.f32.mxu0 0.0
    %8518 = vmatmul.mubr.f32.gmra.mrb[0].mxu0 %v8411
    %v8519 = vpop.f32.mrb[0].mxu0
    %v8520 = vadd.f32 0.0, %v8519
    %v8521 = vpop.f32.mrb[0].mxu0
    %8522 = vmatprep.mubr.f32.mxu0 0.0
    %8523 = vmatmul.mubr.f32.gmra.mrb[0].mxu0 %v8413
    %v8524 = vpop.f32.mrb[0].mxu0
    %v8525 = vadd.f32 0.0, %v8524
    %v8526 = vpop.f32.mrb[0].mxu0
    %8527 = vmatprep.mubr.f32.mxu0 0.0
    %8528 = vmatmul.mubr.f32.gmra.mrb[0].mxu0 %v8415
    %v8529 = vpop.f32.mrb[0].mxu0
    %v8530 = vadd.f32 0.0, %v8529
    %v8531 = vpop.f32.mrb[0].mxu0
    %8532 = vmatprep.mubr.f32.mxu0 0.0
    %8533 = vmatmul.mubr.f32.gmra.mrb[0].mxu0 %v8417
    %v8534 = vpop.f32.mrb[0].mxu0
    %v8535 = vadd.f32 0.0, %v8534
    %v8536 = vpop.f32.mrb[0].mxu0
    %8537 = vmatprep.mubr.f32.mxu0 0.0
    %8538 = vmatmul.mubr.f32.gmra.mrb[0].mxu0 %v8419
    %v8539 = vpop.f32.mrb[0].mxu0
    %v8540 = vadd.f32 0.0, %v8539
    %v8541 = vpop.f32.mrb[0].mxu0
    %8542 = vmatprep.mubr.f32.mxu0 0.0
    %8543 = vmatmul.mubr.f32.gmra.mrb[0].mxu0 %v8421
    %v8544 = vpop.f32.mrb[0].mxu0
    %v8545 = vadd.f32 0.0, %v8544
    %v8546 = vpop.f32.mrb[0].mxu0
    %8547 = vmatprep.mubr.f32.mxu0 0.0
    %8548 = vmatmul.mubr.f32.gmra.mrb[0].mxu0 %v8423
    %v8549 = vpop.f32.mrb[0].mxu0
    %v8550 = vadd.f32 0.0, %v8549
    %v8551 = vpop.f32.mrb[0].mxu0
    %8552 = vmatprep.mubr.f32.mxu0 0.0
    %8553 = vmatmul.mubr.f32.gmra.mrb[0].mxu0 %v8425
    %v8554 = vpop.f32.mrb[0].mxu0
    %v8555 = vadd.f32 0.0, %v8554
    %v8556 = vpop.f32.mrb[0].mxu0
    %8557 = vmatprep.mubr.f32.mxu0 0.0
    %8558 = vmatmul.mubr.f32.gmra.mrb[0].mxu0 %v8427
    %v8559 = vpop.f32.mrb[0].mxu0
    %v8560 = vadd.f32 0.0, %v8559
    %v8561 = vpop.f32.mrb[0].mxu0
    %8562 = vmatprep.mubr.f32.mxu0 0.0
    %8563 = vmatmul.mubr.f32.gmra.mrb[0].mxu0 %v8429
    %v8564 = vpop.f32.mrb[0].mxu0
    %v8565 = vadd.f32 0.0, %v8564
    %v8566 = vpop.f32.mrb[0].mxu0
    %8567 = vmatprep.mubr.f32.mxu0 0.0
    %8568 = vmatmul.mubr.f32.gmra.mrb[0].mxu0 %v8431
    %v8569 = vpop.f32.mrb[0].mxu0
    %v8570 = vadd.f32 0.0, %v8569
    %v8571 = vpop.f32.mrb[0].mxu0
    %8572 = vdwg.mxu0
    %v8573 = vadd.f32 %v8352, %v8500
    %v8574 = vadd.f32 %v8353, %v8505
    %v8575 = vadd.f32 %v8354, %v8510
    %v8576 = vadd.f32 %v8355, %v8515
    %v8577 = vadd.f32 %v8356, %v8520
    %v8578 = vadd.f32 %v8357, %v8525
    %v8579 = vadd.f32 %v8358, %v8530
    %v8580 = vadd.f32 %v8359, %v8535
    %v8581 = vadd.f32 %v8360, %v8540
    %v8582 = vadd.f32 %v8361, %v8545
    %v8583 = vadd.f32 %v8362, %v8550
    %v8584 = vadd.f32 %v8363, %v8555
    %v8585 = vadd.f32 %v8364, %v8560
    %v8586 = vadd.f32 %v8365, %v8565
    %v8587 = vadd.f32 %v8366, %v8570
    %8588 = vrot.lane.b32.xlu0 %v5047, 96
    %v8589 = vpop.permute.xlu0 %8588
    %8590 = vrot.lane.b32.xlu0 %v5052, 96
    %v8591 = vpop.permute.xlu0 %8590
    %v8595 = vsel %vm5168, %v5057, 0
    %v8598 = vsel %vm5168, %v5061, 0
    %v8601 = vsel %vm5168, %v5065, 0
    %v8604 = vsel %vm5168, %v5069, 0
    %v8607 = vsel %vm5168, %v5073, 0
    %v8610 = vsel %vm5168, %v5077, 0
    %v8613 = vsel %vm5168, %v5081, 0
    %v8616 = vsel %vm5168, %v5085, 0
    %v8619 = vsel %vm5168, %v5089, 0
    %v8622 = vsel %vm5168, %v5093, 0
    %v8625 = vsel %vm5168, %v5097, 0
    %v8628 = vsel %vm5168, %v5101, 0
    %v8631 = vsel %vm5168, %v5105, 0
    %v8634 = vsel %vm5168, %v5109, 0
    %v8637 = vsel %vm5168, %v5113, 0
    %8639 = vmatprep.subr.mxu0 0.0
    %8640 = vmatpush1.msra.mxu0 %v8589
    %8641 = vmatprep.subr.mxu0 0.0
    %8642 = vmatpush1.msra.mxu0 %v8591
    %8643 = vmatprep.subr.mxu0 0.0
    %8644 = vmatpush1.msra.mxu0 0.0
    %8645 = vmatprep.subr.mxu0 0.0
    %8646 = vmatpush1.msra.mxu0 0.0
    %8647 = vmatprep.subr.mxu0 0.0
    %8648 = vmatpush1.msra.mxu0 0.0
    %8649 = vmatprep.subr.mxu0 0.0
    %8650 = vmatpush1.msra.mxu0 0.0
    %8651 = vmatprep.subr.mxu0 0.0
    %8652 = vmatpush1.msra.mxu0 0.0
    %8653 = vmatprep.subr.mxu0 0.0
    %8654 = vmatpush1.msra.mxu0 0.0
    %8655 = vmatprep.subr.mxu0 0.0
    %8656 = vmatpush1.msra.mxu0 0.0
    %8657 = vmatprep.subr.mxu0 0.0
    %8658 = vmatpush1.msra.mxu0 0.0
    %8659 = vmatprep.subr.mxu0 0.0
    %8660 = vmatpush1.msra.mxu0 0.0
    %8661 = vmatprep.subr.mxu0 0.0
    %8662 = vmatpush1.msra.mxu0 0.0
    %8663 = vmatprep.subr.mxu0 0.0
    %8664 = vmatpush1.msra.mxu0 0.0
    %8665 = vmatprep.subr.mxu0 0.0
    %8666 = vmatpush1.msra.mxu0 0.0
    %8667 = vmatprep.subr.mxu0 0.0
    %8668 = vmatpush1.msra.mxu0 0.0
    %8669 = vmatprep.subr.mxu0 0.0
    %8670 = vmatpush1.msra.mxu0 0.0
    %8671 = vmatprep.subr.mxu0 0.0
    %8672 = vmatpush1.msra.mxu0 0.0
    %8673 = vmatprep.subr.mxu0 0.0
    %8674 = vmatpush1.msra.mxu0 0.0
    %8675 = vmatprep.subr.mxu0 0.0
    %8676 = vmatpush1.msra.mxu0 0.0
    %8677 = vmatprep.subr.mxu0 0.0
    %8678 = vmatpush1.msra.mxu0 0.0
    %8679 = vmatprep.subr.mxu0 0.0
    %8680 = vmatpush1.msra.mxu0 0.0
    %8681 = vmatprep.subr.mxu0 0.0
    %8682 = vmatpush1.msra.mxu0 0.0
    %8683 = vmatprep.subr.mxu0 0.0
    %8684 = vmatpush1.msra.mxu0 0.0
    %8685 = vmatprep.subr.mxu0 0.0
    %8686 = vmatpush1.msra.mxu0 0.0
    %8687 = vmatprep.subr.mxu0 0.0
    %8688 = vmatpush1.msra.mxu0 0.0
    %8689 = vmatprep.subr.mxu0 0.0
    %8690 = vmatpush1.msra.mxu0 0.0
    %8691 = vmatprep.subr.mxu0 0.0
    %8692 = vmatpush1.msra.mxu0 0.0
    %8693 = vmatprep.subr.mxu0 0.0
    %8694 = vmatpush1.msra.mxu0 0.0
    %8695 = vmatprep.subr.mxu0 0.0
    %8696 = vmatpush1.msra.mxu0 0.0
    %8697 = vmatprep.subr.mxu0 0.0
    %8698 = vmatpush1.msra.mxu0 0.0
    %8699 = vmatprep.subr.mxu0 0.0
    %8700 = vmatpush1.msra.mxu0 0.0
    %8701 = vmatprep.subr.mxu0 0.0
    %8702 = vmatpush1.msra.mxu0 0.0
    %8703 = vmatprep.mubr.f32.mxu0 0.0
    %8704 = vmatmul.mubr.f32.gmra.mrb[0].mxu0 %v8595
    %v8705 = vpop.f32.mrb[0].mxu0
    %v8706 = vadd.f32 0.0, %v8705
    %v8707 = vpop.f32.mrb[0].mxu0
    %8708 = vmatprep.mubr.f32.mxu0 0.0
    %8709 = vmatmul.mubr.f32.gmra.mrb[0].mxu0 %v8598
    %v8710 = vpop.f32.mrb[0].mxu0
    %v8711 = vadd.f32 0.0, %v8710
    %v8712 = vpop.f32.mrb[0].mxu0
    %8713 = vmatprep.mubr.f32.mxu0 0.0
    %8714 = vmatmul.mubr.f32.gmra.mrb[0].mxu0 %v8601
    %v8715 = vpop.f32.mrb[0].mxu0
    %v8716 = vadd.f32 0.0, %v8715
    %v8717 = vpop.f32.mrb[0].mxu0
    %8718 = vmatprep.mubr.f32.mxu0 0.0
    %8719 = vmatmul.mubr.f32.gmra.mrb[0].mxu0 %v8604
    %v8720 = vpop.f32.mrb[0].mxu0
    %v8721 = vadd.f32 0.0, %v8720
    %v8722 = vpop.f32.mrb[0].mxu0
    %8723 = vmatprep.mubr.f32.mxu0 0.0
    %8724 = vmatmul.mubr.f32.gmra.mrb[0].mxu0 %v8607
    %v8725 = vpop.f32.mrb[0].mxu0
    %v8726 = vadd.f32 0.0, %v8725
    %v8727 = vpop.f32.mrb[0].mxu0
    %8728 = vmatprep.mubr.f32.mxu0 0.0
    %8729 = vmatmul.mubr.f32.gmra.mrb[0].mxu0 %v8610
    %v8730 = vpop.f32.mrb[0].mxu0
    %v8731 = vadd.f32 0.0, %v8730
    %v8732 = vpop.f32.mrb[0].mxu0
    %8733 = vmatprep.mubr.f32.mxu0 0.0
    %8734 = vmatmul.mubr.f32.gmra.mrb[0].mxu0 %v8613
    %v8735 = vpop.f32.mrb[0].mxu0
    %v8736 = vadd.f32 0.0, %v8735
    %v8737 = vpop.f32.mrb[0].mxu0
    %8738 = vmatprep.mubr.f32.mxu0 0.0
    %8739 = vmatmul.mubr.f32.gmra.mrb[0].mxu0 %v8616
    %v8740 = vpop.f32.mrb[0].mxu0
    %v8741 = vadd.f32 0.0, %v8740
    %v8742 = vpop.f32.mrb[0].mxu0
    %8743 = vmatprep.mubr.f32.mxu0 0.0
    %8744 = vmatmul.mubr.f32.gmra.mrb[0].mxu0 %v8619
    %v8745 = vpop.f32.mrb[0].mxu0
    %v8746 = vadd.f32 0.0, %v8745
    %v8747 = vpop.f32.mrb[0].mxu0
    %8748 = vmatprep.mubr.f32.mxu0 0.0
    %8749 = vmatmul.mubr.f32.gmra.mrb[0].mxu0 %v8622
    %v8750 = vpop.f32.mrb[0].mxu0
    %v8751 = vadd.f32 0.0, %v8750
    %v8752 = vpop.f32.mrb[0].mxu0
    %8753 = vmatprep.mubr.f32.mxu0 0.0
    %8754 = vmatmul.mubr.f32.gmra.mrb[0].mxu0 %v8625
    %v8755 = vpop.f32.mrb[0].mxu0
    %v8756 = vadd.f32 0.0, %v8755
    %v8757 = vpop.f32.mrb[0].mxu0
    %8758 = vmatprep.mubr.f32.mxu0 0.0
    %8759 = vmatmul.mubr.f32.gmra.mrb[0].mxu0 %v8628
    %v8760 = vpop.f32.mrb[0].mxu0
    %v8761 = vadd.f32 0.0, %v8760
    %v8762 = vpop.f32.mrb[0].mxu0
    %8763 = vmatprep.mubr.f32.mxu0 0.0
    %8764 = vmatmul.mubr.f32.gmra.mrb[0].mxu0 %v8631
    %v8765 = vpop.f32.mrb[0].mxu0
    %v8766 = vadd.f32 0.0, %v8765
    %v8767 = vpop.f32.mrb[0].mxu0
    %8768 = vmatprep.mubr.f32.mxu0 0.0
    %8769 = vmatmul.mubr.f32.gmra.mrb[0].mxu0 %v8634
    %v8770 = vpop.f32.mrb[0].mxu0
    %v8771 = vadd.f32 0.0, %v8770
    %v8772 = vpop.f32.mrb[0].mxu0
    %8773 = vmatprep.mubr.f32.mxu0 0.0
    %8774 = vmatmul.mubr.f32.gmra.mrb[0].mxu0 %v8637
    %v8775 = vpop.f32.mrb[0].mxu0
    %v8776 = vadd.f32 0.0, %v8775
    %v8777 = vpop.f32.mrb[0].mxu0
    %8778 = vdwg.mxu0
    %v8779 = vadd.f32 %v8573, %v8706
    %v8780 = vadd.f32 %v8574, %v8711
    %v8781 = vadd.f32 %v8575, %v8716
    %v8782 = vadd.f32 %v8576, %v8721
    %v8783 = vadd.f32 %v8577, %v8726
    %v8784 = vadd.f32 %v8578, %v8731
    %v8785 = vadd.f32 %v8579, %v8736
    %v8786 = vadd.f32 %v8580, %v8741
    %v8787 = vadd.f32 %v8581, %v8746
    %v8788 = vadd.f32 %v8582, %v8751
    %v8789 = vadd.f32 %v8583, %v8756
    %v8790 = vadd.f32 %v8584, %v8761
    %v8791 = vadd.f32 %v8585, %v8766
    %v8792 = vadd.f32 %v8586, %v8771
    %v8793 = vadd.f32 %v8587, %v8776
    %8794 = vrot.lane.b32.xlu0 %v5057, 112
    %v8795 = vpop.permute.xlu0 %8794
    %8796 = vrot.lane.b32.xlu0 %v5061, 112
    %v8797 = vpop.permute.xlu0 %8796
    %8798 = vrot.lane.b32.xlu0 %v5065, 112
    %v8799 = vpop.permute.xlu0 %8798
    %8800 = vrot.lane.b32.xlu0 %v5069, 112
    %v8801 = vpop.permute.xlu0 %8800
    %8802 = vrot.lane.b32.xlu0 %v5073, 112
    %v8803 = vpop.permute.xlu0 %8802
    %8804 = vrot.lane.b32.xlu0 %v5077, 112
    %v8805 = vpop.permute.xlu0 %8804
    %8806 = vrot.lane.b32.xlu0 %v5081, 112
    %v8807 = vpop.permute.xlu0 %8806
    %8808 = vrot.lane.b32.xlu0 %v5085, 112
    %v8809 = vpop.permute.xlu0 %8808
    %8810 = vrot.lane.b32.xlu0 %v5089, 112
    %v8811 = vpop.permute.xlu0 %8810
    %8812 = vrot.lane.b32.xlu0 %v5093, 112
    %v8813 = vpop.permute.xlu0 %8812
    %8814 = vrot.lane.b32.xlu0 %v5097, 112
    %v8815 = vpop.permute.xlu0 %8814
    %8816 = vrot.lane.b32.xlu0 %v5101, 112
    %v8817 = vpop.permute.xlu0 %8816
    %8818 = vrot.lane.b32.xlu0 %v5105, 112
    %v8819 = vpop.permute.xlu0 %8818
    %8820 = vrot.lane.b32.xlu0 %v5109, 112
    %v8821 = vpop.permute.xlu0 %8820
    %8822 = vrot.lane.b32.xlu0 %v5113, 112
    %v8823 = vpop.permute.xlu0 %8822
    %8824 = vrot.lane.b32.xlu0 %v5047, 94
    %v8825 = vpop.permute.xlu0 %8824
    %8826 = vrot.lane.b32.xlu0 %v5052, 94
    %v8827 = vpop.permute.xlu0 %8826
    %v8830 = vsel %vm5168, %v8795, 0
    %v8832 = vsel %vm5168, %v8797, 0
    %v8834 = vsel %vm5168, %v8799, 0
    %v8836 = vsel %vm5168, %v8801, 0
    %v8838 = vsel %vm5168, %v8803, 0
    %v8840 = vsel %vm5168, %v8805, 0
    %v8842 = vsel %vm5168, %v8807, 0
    %v8844 = vsel %vm5168, %v8809, 0
    %v8846 = vsel %vm5168, %v8811, 0
    %v8848 = vsel %vm5168, %v8813, 0
    %v8850 = vsel %vm5168, %v8815, 0
    %v8852 = vsel %vm5168, %v8817, 0
    %v8854 = vsel %vm5168, %v8819, 0
    %v8856 = vsel %vm5168, %v8821, 0
    %v8858 = vsel %vm5168, %v8823, 0
    %8860 = vmatprep.subr.mxu0 0.0
    %8861 = vmatpush1.msra.mxu0 %v8825
    %8862 = vmatprep.subr.mxu0 0.0
    %8863 = vmatpush1.msra.mxu0 %v8827
    %8864 = vmatprep.subr.mxu0 0.0
    %8865 = vmatpush1.msra.mxu0 0.0
    %8866 = vmatprep.subr.mxu0 0.0
    %8867 = vmatpush1.msra.mxu0 0.0
    %8868 = vmatprep.subr.mxu0 0.0
    %8869 = vmatpush1.msra.mxu0 0.0
    %8870 = vmatprep.subr.mxu0 0.0
    %8871 = vmatpush1.msra.mxu0 0.0
    %8872 = vmatprep.subr.mxu0 0.0
    %8873 = vmatpush1.msra.mxu0 0.0
    %8874 = vmatprep.subr.mxu0 0.0
    %8875 = vmatpush1.msra.mxu0 0.0
    %8876 = vmatprep.subr.mxu0 0.0
    %8877 = vmatpush1.msra.mxu0 0.0
    %8878 = vmatprep.subr.mxu0 0.0
    %8879 = vmatpush1.msra.mxu0 0.0
    %8880 = vmatprep.subr.mxu0 0.0
    %8881 = vmatpush1.msra.mxu0 0.0
    %8882 = vmatprep.subr.mxu0 0.0
    %8883 = vmatpush1.msra.mxu0 0.0
    %8884 = vmatprep.subr.mxu0 0.0
    %8885 = vmatpush1.msra.mxu0 0.0
    %8886 = vmatprep.subr.mxu0 0.0
    %8887 = vmatpush1.msra.mxu0 0.0
    %8888 = vmatprep.subr.mxu0 0.0
    %8889 = vmatpush1.msra.mxu0 0.0
    %8890 = vmatprep.subr.mxu0 0.0
    %8891 = vmatpush1.msra.mxu0 0.0
    %8892 = vmatprep.subr.mxu0 0.0
    %8893 = vmatpush1.msra.mxu0 0.0
    %8894 = vmatprep.subr.mxu0 0.0
    %8895 = vmatpush1.msra.mxu0 0.0
    %8896 = vmatprep.subr.mxu0 0.0
    %8897 = vmatpush1.msra.mxu0 0.0
    %8898 = vmatprep.subr.mxu0 0.0
    %8899 = vmatpush1.msra.mxu0 0.0
    %8900 = vmatprep.subr.mxu0 0.0
    %8901 = vmatpush1.msra.mxu0 0.0
    %8902 = vmatprep.subr.mxu0 0.0
    %8903 = vmatpush1.msra.mxu0 0.0
    %8904 = vmatprep.subr.mxu0 0.0
    %8905 = vmatpush1.msra.mxu0 0.0
    %8906 = vmatprep.subr.mxu0 0.0
    %8907 = vmatpush1.msra.mxu0 0.0
    %8908 = vmatprep.subr.mxu0 0.0
    %8909 = vmatpush1.msra.mxu0 0.0
    %8910 = vmatprep.subr.mxu0 0.0
    %8911 = vmatpush1.msra.mxu0 0.0
    %8912 = vmatprep.subr.mxu0 0.0
    %8913 = vmatpush1.msra.mxu0 0.0
    %8914 = vmatprep.subr.mxu0 0.0
    %8915 = vmatpush1.msra.mxu0 0.0
    %8916 = vmatprep.subr.mxu0 0.0
    %8917 = vmatpush1.msra.mxu0 0.0
    %8918 = vmatprep.subr.mxu0 0.0
    %8919 = vmatpush1.msra.mxu0 0.0
    %8920 = vmatprep.subr.mxu0 0.0
    %8921 = vmatpush1.msra.mxu0 0.0
    %8922 = vmatprep.subr.mxu0 0.0
    %8923 = vmatpush1.msra.mxu0 0.0
    %8924 = vmatprep.mubr.f32.mxu0 0.0
    %8925 = vmatmul.mubr.f32.gmra.mrb[0].mxu0 %v8830
    %v8926 = vpop.f32.mrb[0].mxu0
    %v8927 = vadd.f32 0.0, %v8926
    %v8928 = vpop.f32.mrb[0].mxu0
    %8929 = vmatprep.mubr.f32.mxu0 0.0
    %8930 = vmatmul.mubr.f32.gmra.mrb[0].mxu0 %v8832
    %v8931 = vpop.f32.mrb[0].mxu0
    %v8932 = vadd.f32 0.0, %v8931
    %v8933 = vpop.f32.mrb[0].mxu0
    %8934 = vmatprep.mubr.f32.mxu0 0.0
    %8935 = vmatmul.mubr.f32.gmra.mrb[0].mxu0 %v8834
    %v8936 = vpop.f32.mrb[0].mxu0
    %v8937 = vadd.f32 0.0, %v8936
    %v8938 = vpop.f32.mrb[0].mxu0
    %8939 = vmatprep.mubr.f32.mxu0 0.0
    %8940 = vmatmul.mubr.f32.gmra.mrb[0].mxu0 %v8836
    %v8941 = vpop.f32.mrb[0].mxu0
    %v8942 = vadd.f32 0.0, %v8941
    %v8943 = vpop.f32.mrb[0].mxu0
    %8944 = vmatprep.mubr.f32.mxu0 0.0
    %8945 = vmatmul.mubr.f32.gmra.mrb[0].mxu0 %v8838
    %v8946 = vpop.f32.mrb[0].mxu0
    %v8947 = vadd.f32 0.0, %v8946
    %v8948 = vpop.f32.mrb[0].mxu0
    %8949 = vmatprep.mubr.f32.mxu0 0.0
    %8950 = vmatmul.mubr.f32.gmra.mrb[0].mxu0 %v8840
    %v8951 = vpop.f32.mrb[0].mxu0
    %v8952 = vadd.f32 0.0, %v8951
    %v8953 = vpop.f32.mrb[0].mxu0
    %8954 = vmatprep.mubr.f32.mxu0 0.0
    %8955 = vmatmul.mubr.f32.gmra.mrb[0].mxu0 %v8842
    %v8956 = vpop.f32.mrb[0].mxu0
    %v8957 = vadd.f32 0.0, %v8956
    %v8958 = vpop.f32.mrb[0].mxu0
    %8959 = vmatprep.mubr.f32.mxu0 0.0
    %8960 = vmatmul.mubr.f32.gmra.mrb[0].mxu0 %v8844
    %v8961 = vpop.f32.mrb[0].mxu0
    %v8962 = vadd.f32 0.0, %v8961
    %v8963 = vpop.f32.mrb[0].mxu0
    %8964 = vmatprep.mubr.f32.mxu0 0.0
    %8965 = vmatmul.mubr.f32.gmra.mrb[0].mxu0 %v8846
    %v8966 = vpop.f32.mrb[0].mxu0
    %v8967 = vadd.f32 0.0, %v8966
    %v8968 = vpop.f32.mrb[0].mxu0
    %8969 = vmatprep.mubr.f32.mxu0 0.0
    %8970 = vmatmul.mubr.f32.gmra.mrb[0].mxu0 %v8848
    %v8971 = vpop.f32.mrb[0].mxu0
    %v8972 = vadd.f32 0.0, %v8971
    %v8973 = vpop.f32.mrb[0].mxu0
    %8974 = vmatprep.mubr.f32.mxu0 0.0
    %8975 = vmatmul.mubr.f32.gmra.mrb[0].mxu0 %v8850
    %v8976 = vpop.f32.mrb[0].mxu0
    %v8977 = vadd.f32 0.0, %v8976
    %v8978 = vpop.f32.mrb[0].mxu0
    %8979 = vmatprep.mubr.f32.mxu0 0.0
    %8980 = vmatmul.mubr.f32.gmra.mrb[0].mxu0 %v8852
    %v8981 = vpop.f32.mrb[0].mxu0
    %v8982 = vadd.f32 0.0, %v8981
    %v8983 = vpop.f32.mrb[0].mxu0
    %8984 = vmatprep.mubr.f32.mxu0 0.0
    %8985 = vmatmul.mubr.f32.gmra.mrb[0].mxu0 %v8854
    %v8986 = vpop.f32.mrb[0].mxu0
    %v8987 = vadd.f32 0.0, %v8986
    %v8988 = vpop.f32.mrb[0].mxu0
    %8989 = vmatprep.mubr.f32.mxu0 0.0
    %8990 = vmatmul.mubr.f32.gmra.mrb[0].mxu0 %v8856
    %v8991 = vpop.f32.mrb[0].mxu0
    %v8992 = vadd.f32 0.0, %v8991
    %v8993 = vpop.f32.mrb[0].mxu0
    %8994 = vmatprep.mubr.f32.mxu0 0.0
    %8995 = vmatmul.mubr.f32.gmra.mrb[0].mxu0 %v8858
    %v8996 = vpop.f32.mrb[0].mxu0
    %v8997 = vadd.f32 0.0, %v8996
    %v8998 = vpop.f32.mrb[0].mxu0
    %8999 = vdwg.mxu0
    %v9000 = vadd.f32 %v8779, %v8927
    %v9001 = vadd.f32 %v8780, %v8932
    %v9002 = vadd.f32 %v8781, %v8937
    %v9003 = vadd.f32 %v8782, %v8942
    %v9004 = vadd.f32 %v8783, %v8947
    %v9005 = vadd.f32 %v8784, %v8952
    %v9006 = vadd.f32 %v8785, %v8957
    %v9007 = vadd.f32 %v8786, %v8962
    %v9008 = vadd.f32 %v8787, %v8967
    %v9009 = vadd.f32 %v8788, %v8972
    %v9010 = vadd.f32 %v8789, %v8977
    %v9011 = vadd.f32 %v8790, %v8982
    %v9012 = vadd.f32 %v8791, %v8987
    %v9013 = vadd.f32 %v8792, %v8992
    %v9014 = vadd.f32 %v8793, %v8997
    %9015 = vrot.lane.b32.xlu0 %v5057, 96
    %v9016 = vpop.permute.xlu0 %9015
    %9017 = vrot.lane.b32.xlu0 %v5061, 96
    %v9018 = vpop.permute.xlu0 %9017
    %9019 = vrot.lane.b32.xlu0 %v5065, 96
    %v9020 = vpop.permute.xlu0 %9019
    %9021 = vrot.lane.b32.xlu0 %v5069, 96
    %v9022 = vpop.permute.xlu0 %9021
    %9023 = vrot.lane.b32.xlu0 %v5073, 96
    %v9024 = vpop.permute.xlu0 %9023
    %9025 = vrot.lane.b32.xlu0 %v5077, 96
    %v9026 = vpop.permute.xlu0 %9025
    %9027 = vrot.lane.b32.xlu0 %v5081, 96
    %v9028 = vpop.permute.xlu0 %9027
    %9029 = vrot.lane.b32.xlu0 %v5085, 96
    %v9030 = vpop.permute.xlu0 %9029
    %9031 = vrot.lane.b32.xlu0 %v5089, 96
    %v9032 = vpop.permute.xlu0 %9031
    %9033 = vrot.lane.b32.xlu0 %v5093, 96
    %v9034 = vpop.permute.xlu0 %9033
    %9035 = vrot.lane.b32.xlu0 %v5097, 96
    %v9036 = vpop.permute.xlu0 %9035
    %9037 = vrot.lane.b32.xlu0 %v5101, 96
    %v9038 = vpop.permute.xlu0 %9037
    %9039 = vrot.lane.b32.xlu0 %v5105, 96
    %v9040 = vpop.permute.xlu0 %9039
    %9041 = vrot.lane.b32.xlu0 %v5109, 96
    %v9042 = vpop.permute.xlu0 %9041
    %9043 = vrot.lane.b32.xlu0 %v5113, 96
    %v9044 = vpop.permute.xlu0 %9043
    %9045 = vrot.lane.b32.xlu0 %v5047, 92
    %v9046 = vpop.permute.xlu0 %9045
    %9047 = vrot.lane.b32.xlu0 %v5052, 92
    %v9048 = vpop.permute.xlu0 %9047
    %v9051 = vsel %vm5168, %v9016, 0
    %v9053 = vsel %vm5168, %v9018, 0
    %v9055 = vsel %vm5168, %v9020, 0
    %v9057 = vsel %vm5168, %v9022, 0
    %v9059 = vsel %vm5168, %v9024, 0
    %v9061 = vsel %vm5168, %v9026, 0
    %v9063 = vsel %vm5168, %v9028, 0
    %v9065 = vsel %vm5168, %v9030, 0
    %v9067 = vsel %vm5168, %v9032, 0
    %v9069 = vsel %vm5168, %v9034, 0
    %v9071 = vsel %vm5168, %v9036, 0
    %v9073 = vsel %vm5168, %v9038, 0
    %v9075 = vsel %vm5168, %v9040, 0
    %v9077 = vsel %vm5168, %v9042, 0
    %v9079 = vsel %vm5168, %v9044, 0
    %9081 = vmatprep.subr.mxu0 0.0
    %9082 = vmatpush1.msra.mxu0 %v9046
    %9083 = vmatprep.subr.mxu0 0.0
    %9084 = vmatpush1.msra.mxu0 %v9048
    %9085 = vmatprep.subr.mxu0 0.0
    %9086 = vmatpush1.msra.mxu0 0.0
    %9087 = vmatprep.subr.mxu0 0.0
    %9088 = vmatpush1.msra.mxu0 0.0
    %9089 = vmatprep.subr.mxu0 0.0
    %9090 = vmatpush1.msra.mxu0 0.0
    %9091 = vmatprep.subr.mxu0 0.0
    %9092 = vmatpush1.msra.mxu0 0.0
    %9093 = vmatprep.subr.mxu0 0.0
    %9094 = vmatpush1.msra.mxu0 0.0
    %9095 = vmatprep.subr.mxu0 0.0
    %9096 = vmatpush1.msra.mxu0 0.0
    %9097 = vmatprep.subr.mxu0 0.0
    %9098 = vmatpush1.msra.mxu0 0.0
    %9099 = vmatprep.subr.mxu0 0.0
    %9100 = vmatpush1.msra.mxu0 0.0
    %9101 = vmatprep.subr.mxu0 0.0
    %9102 = vmatpush1.msra.mxu0 0.0
    %9103 = vmatprep.subr.mxu0 0.0
    %9104 = vmatpush1.msra.mxu0 0.0
    %9105 = vmatprep.subr.mxu0 0.0
    %9106 = vmatpush1.msra.mxu0 0.0
    %9107 = vmatprep.subr.mxu0 0.0
    %9108 = vmatpush1.msra.mxu0 0.0
    %9109 = vmatprep.subr.mxu0 0.0
    %9110 = vmatpush1.msra.mxu0 0.0
    %9111 = vmatprep.subr.mxu0 0.0
    %9112 = vmatpush1.msra.mxu0 0.0
    %9113 = vmatprep.subr.mxu0 0.0
    %9114 = vmatpush1.msra.mxu0 0.0
    %9115 = vmatprep.subr.mxu0 0.0
    %9116 = vmatpush1.msra.mxu0 0.0
    %9117 = vmatprep.subr.mxu0 0.0
    %9118 = vmatpush1.msra.mxu0 0.0
    %9119 = vmatprep.subr.mxu0 0.0
    %9120 = vmatpush1.msra.mxu0 0.0
    %9121 = vmatprep.subr.mxu0 0.0
    %9122 = vmatpush1.msra.mxu0 0.0
    %9123 = vmatprep.subr.mxu0 0.0
    %9124 = vmatpush1.msra.mxu0 0.0
    %9125 = vmatprep.subr.mxu0 0.0
    %9126 = vmatpush1.msra.mxu0 0.0
    %9127 = vmatprep.subr.mxu0 0.0
    %9128 = vmatpush1.msra.mxu0 0.0
    %9129 = vmatprep.subr.mxu0 0.0
    %9130 = vmatpush1.msra.mxu0 0.0
    %9131 = vmatprep.subr.mxu0 0.0
    %9132 = vmatpush1.msra.mxu0 0.0
    %9133 = vmatprep.subr.mxu0 0.0
    %9134 = vmatpush1.msra.mxu0 0.0
    %9135 = vmatprep.subr.mxu0 0.0
    %9136 = vmatpush1.msra.mxu0 0.0
    %9137 = vmatprep.subr.mxu0 0.0
    %9138 = vmatpush1.msra.mxu0 0.0
    %9139 = vmatprep.subr.mxu0 0.0
    %9140 = vmatpush1.msra.mxu0 0.0
    %9141 = vmatprep.subr.mxu0 0.0
    %9142 = vmatpush1.msra.mxu0 0.0
    %9143 = vmatprep.subr.mxu0 0.0
    %9144 = vmatpush1.msra.mxu0 0.0
    %9145 = vmatprep.mubr.f32.mxu0 0.0
    %9146 = vmatmul.mubr.f32.gmra.mrb[0].mxu0 %v9051
    %v9147 = vpop.f32.mrb[0].mxu0
    %v9148 = vadd.f32 0.0, %v9147
    %v9149 = vpop.f32.mrb[0].mxu0
    %9150 = vmatprep.mubr.f32.mxu0 0.0
    %9151 = vmatmul.mubr.f32.gmra.mrb[0].mxu0 %v9053
    %v9152 = vpop.f32.mrb[0].mxu0
    %v9153 = vadd.f32 0.0, %v9152
    %v9154 = vpop.f32.mrb[0].mxu0
    %9155 = vmatprep.mubr.f32.mxu0 0.0
    %9156 = vmatmul.mubr.f32.gmra.mrb[0].mxu0 %v9055
    %v9157 = vpop.f32.mrb[0].mxu0
    %v9158 = vadd.f32 0.0, %v9157
    %v9159 = vpop.f32.mrb[0].mxu0
    %9160 = vmatprep.mubr.f32.mxu0 0.0
    %9161 = vmatmul.mubr.f32.gmra.mrb[0].mxu0 %v9057
    %v9162 = vpop.f32.mrb[0].mxu0
    %v9163 = vadd.f32 0.0, %v9162
    %v9164 = vpop.f32.mrb[0].mxu0
    %9165 = vmatprep.mubr.f32.mxu0 0.0
    %9166 = vmatmul.mubr.f32.gmra.mrb[0].mxu0 %v9059
    %v9167 = vpop.f32.mrb[0].mxu0
    %v9168 = vadd.f32 0.0, %v9167
    %v9169 = vpop.f32.mrb[0].mxu0
    %9170 = vmatprep.mubr.f32.mxu0 0.0
    %9171 = vmatmul.mubr.f32.gmra.mrb[0].mxu0 %v9061
    %v9172 = vpop.f32.mrb[0].mxu0
    %v9173 = vadd.f32 0.0, %v9172
    %v9174 = vpop.f32.mrb[0].mxu0
    %9175 = vmatprep.mubr.f32.mxu0 0.0
    %9176 = vmatmul.mubr.f32.gmra.mrb[0].mxu0 %v9063
    %v9177 = vpop.f32.mrb[0].mxu0
    %v9178 = vadd.f32 0.0, %v9177
    %v9179 = vpop.f32.mrb[0].mxu0
    %9180 = vmatprep.mubr.f32.mxu0 0.0
    %9181 = vmatmul.mubr.f32.gmra.mrb[0].mxu0 %v9065
    %v9182 = vpop.f32.mrb[0].mxu0
    %v9183 = vadd.f32 0.0, %v9182
    %v9184 = vpop.f32.mrb[0].mxu0
    %9185 = vmatprep.mubr.f32.mxu0 0.0
    %9186 = vmatmul.mubr.f32.gmra.mrb[0].mxu0 %v9067
    %v9187 = vpop.f32.mrb[0].mxu0
    %v9188 = vadd.f32 0.0, %v9187
    %v9189 = vpop.f32.mrb[0].mxu0
    %9190 = vmatprep.mubr.f32.mxu0 0.0
    %9191 = vmatmul.mubr.f32.gmra.mrb[0].mxu0 %v9069
    %v9192 = vpop.f32.mrb[0].mxu0
    %v9193 = vadd.f32 0.0, %v9192
    %v9194 = vpop.f32.mrb[0].mxu0
    %9195 = vmatprep.mubr.f32.mxu0 0.0
    %9196 = vmatmul.mubr.f32.gmra.mrb[0].mxu0 %v9071
    %v9197 = vpop.f32.mrb[0].mxu0
    %v9198 = vadd.f32 0.0, %v9197
    %v9199 = vpop.f32.mrb[0].mxu0
    %9200 = vmatprep.mubr.f32.mxu0 0.0
    %9201 = vmatmul.mubr.f32.gmra.mrb[0].mxu0 %v9073
    %v9202 = vpop.f32.mrb[0].mxu0
    %v9203 = vadd.f32 0.0, %v9202
    %v9204 = vpop.f32.mrb[0].mxu0
    %9205 = vmatprep.mubr.f32.mxu0 0.0
    %9206 = vmatmul.mubr.f32.gmra.mrb[0].mxu0 %v9075
    %v9207 = vpop.f32.mrb[0].mxu0
    %v9208 = vadd.f32 0.0, %v9207
    %v9209 = vpop.f32.mrb[0].mxu0
    %9210 = vmatprep.mubr.f32.mxu0 0.0
    %9211 = vmatmul.mubr.f32.gmra.mrb[0].mxu0 %v9077
    %v9212 = vpop.f32.mrb[0].mxu0
    %v9213 = vadd.f32 0.0, %v9212
    %v9214 = vpop.f32.mrb[0].mxu0
    %9215 = vmatprep.mubr.f32.mxu0 0.0
    %9216 = vmatmul.mubr.f32.gmra.mrb[0].mxu0 %v9079
    %v9217 = vpop.f32.mrb[0].mxu0
    %v9218 = vadd.f32 0.0, %v9217
    %v9219 = vpop.f32.mrb[0].mxu0
    %9220 = vdwg.mxu0
    %v9221 = vadd.f32 %v9000, %v9148
    %v9222 = vadd.f32 %v9001, %v9153
    %v9223 = vadd.f32 %v9002, %v9158
    %v9224 = vadd.f32 %v9003, %v9163
    %v9225 = vadd.f32 %v9004, %v9168
    %v9226 = vadd.f32 %v9005, %v9173
    %v9227 = vadd.f32 %v9006, %v9178
    %v9228 = vadd.f32 %v9007, %v9183
    %v9229 = vadd.f32 %v9008, %v9188
    %v9230 = vadd.f32 %v9009, %v9193
    %v9231 = vadd.f32 %v9010, %v9198
    %v9232 = vadd.f32 %v9011, %v9203
    %v9233 = vadd.f32 %v9012, %v9208
    %v9234 = vadd.f32 %v9013, %v9213
    %v9235 = vadd.f32 %v9014, %v9218
    %9236 = vrot.lane.b32.xlu0 %v5057, 80
    %v9237 = vpop.permute.xlu0 %9236
    %9238 = vrot.lane.b32.xlu0 %v5061, 80
    %v9239 = vpop.permute.xlu0 %9238
    %9240 = vrot.lane.b32.xlu0 %v5065, 80
    %v9241 = vpop.permute.xlu0 %9240
    %9242 = vrot.lane.b32.xlu0 %v5069, 80
    %v9243 = vpop.permute.xlu0 %9242
    %9244 = vrot.lane.b32.xlu0 %v5073, 80
    %v9245 = vpop.permute.xlu0 %9244
    %9246 = vrot.lane.b32.xlu0 %v5077, 80
    %v9247 = vpop.permute.xlu0 %9246
    %9248 = vrot.lane.b32.xlu0 %v5081, 80
    %v9249 = vpop.permute.xlu0 %9248
    %9250 = vrot.lane.b32.xlu0 %v5085, 80
    %v9251 = vpop.permute.xlu0 %9250
    %9252 = vrot.lane.b32.xlu0 %v5089, 80
    %v9253 = vpop.permute.xlu0 %9252
    %9254 = vrot.lane.b32.xlu0 %v5093, 80
    %v9255 = vpop.permute.xlu0 %9254
    %9256 = vrot.lane.b32.xlu0 %v5097, 80
    %v9257 = vpop.permute.xlu0 %9256
    %9258 = vrot.lane.b32.xlu0 %v5101, 80
    %v9259 = vpop.permute.xlu0 %9258
    %9260 = vrot.lane.b32.xlu0 %v5105, 80
    %v9261 = vpop.permute.xlu0 %9260
    %9262 = vrot.lane.b32.xlu0 %v5109, 80
    %v9263 = vpop.permute.xlu0 %9262
    %9264 = vrot.lane.b32.xlu0 %v5113, 80
    %v9265 = vpop.permute.xlu0 %9264
    %9266 = vrot.lane.b32.xlu0 %v5047, 90
    %v9267 = vpop.permute.xlu0 %9266
    %9268 = vrot.lane.b32.xlu0 %v5052, 90
    %v9269 = vpop.permute.xlu0 %9268
    %v9272 = vsel %vm5168, %v9237, 0
    %v9274 = vsel %vm5168, %v9239, 0
    %v9276 = vsel %vm5168, %v9241, 0
    %v9278 = vsel %vm5168, %v9243, 0
    %v9280 = vsel %vm5168, %v9245, 0
    %v9282 = vsel %vm5168, %v9247, 0
    %v9284 = vsel %vm5168, %v9249, 0
    %v9286 = vsel %vm5168, %v9251, 0
    %v9288 = vsel %vm5168, %v9253, 0
    %v9290 = vsel %vm5168, %v9255, 0
    %v9292 = vsel %vm5168, %v9257, 0
    %v9294 = vsel %vm5168, %v9259, 0
    %v9296 = vsel %vm5168, %v9261, 0
    %v9298 = vsel %vm5168, %v9263, 0
    %v9300 = vsel %vm5168, %v9265, 0
    %9302 = vmatprep.subr.mxu0 0.0
    %9303 = vmatpush1.msra.mxu0 %v9267
    %9304 = vmatprep.subr.mxu0 0.0
    %9305 = vmatpush1.msra.mxu0 %v9269
    %9306 = vmatprep.subr.mxu0 0.0
    %9307 = vmatpush1.msra.mxu0 0.0
    %9308 = vmatprep.subr.mxu0 0.0
    %9309 = vmatpush1.msra.mxu0 0.0
    %9310 = vmatprep.subr.mxu0 0.0
    %9311 = vmatpush1.msra.mxu0 0.0
    %9312 = vmatprep.subr.mxu0 0.0
    %9313 = vmatpush1.msra.mxu0 0.0
    %9314 = vmatprep.subr.mxu0 0.0
    %9315 = vmatpush1.msra.mxu0 0.0
    %9316 = vmatprep.subr.mxu0 0.0
    %9317 = vmatpush1.msra.mxu0 0.0
    %9318 = vmatprep.subr.mxu0 0.0
    %9319 = vmatpush1.msra.mxu0 0.0
    %9320 = vmatprep.subr.mxu0 0.0
    %9321 = vmatpush1.msra.mxu0 0.0
    %9322 = vmatprep.subr.mxu0 0.0
    %9323 = vmatpush1.msra.mxu0 0.0
    %9324 = vmatprep.subr.mxu0 0.0
    %9325 = vmatpush1.msra.mxu0 0.0
    %9326 = vmatprep.subr.mxu0 0.0
    %9327 = vmatpush1.msra.mxu0 0.0
    %9328 = vmatprep.subr.mxu0 0.0
    %9329 = vmatpush1.msra.mxu0 0.0
    %9330 = vmatprep.subr.mxu0 0.0
    %9331 = vmatpush1.msra.mxu0 0.0
    %9332 = vmatprep.subr.mxu0 0.0
    %9333 = vmatpush1.msra.mxu0 0.0
    %9334 = vmatprep.subr.mxu0 0.0
    %9335 = vmatpush1.msra.mxu0 0.0
    %9336 = vmatprep.subr.mxu0 0.0
    %9337 = vmatpush1.msra.mxu0 0.0
    %9338 = vmatprep.subr.mxu0 0.0
    %9339 = vmatpush1.msra.mxu0 0.0
    %9340 = vmatprep.subr.mxu0 0.0
    %9341 = vmatpush1.msra.mxu0 0.0
    %9342 = vmatprep.subr.mxu0 0.0
    %9343 = vmatpush1.msra.mxu0 0.0
    %9344 = vmatprep.subr.mxu0 0.0
    %9345 = vmatpush1.msra.mxu0 0.0
    %9346 = vmatprep.subr.mxu0 0.0
    %9347 = vmatpush1.msra.mxu0 0.0
    %9348 = vmatprep.subr.mxu0 0.0
    %9349 = vmatpush1.msra.mxu0 0.0
    %9350 = vmatprep.subr.mxu0 0.0
    %9351 = vmatpush1.msra.mxu0 0.0
    %9352 = vmatprep.subr.mxu0 0.0
    %9353 = vmatpush1.msra.mxu0 0.0
    %9354 = vmatprep.subr.mxu0 0.0
    %9355 = vmatpush1.msra.mxu0 0.0
    %9356 = vmatprep.subr.mxu0 0.0
    %9357 = vmatpush1.msra.mxu0 0.0
    %9358 = vmatprep.subr.mxu0 0.0
    %9359 = vmatpush1.msra.mxu0 0.0
    %9360 = vmatprep.subr.mxu0 0.0
    %9361 = vmatpush1.msra.mxu0 0.0
    %9362 = vmatprep.subr.mxu0 0.0
    %9363 = vmatpush1.msra.mxu0 0.0
    %9364 = vmatprep.subr.mxu0 0.0
    %9365 = vmatpush1.msra.mxu0 0.0
    %9366 = vmatprep.mubr.f32.mxu0 0.0
    %9367 = vmatmul.mubr.f32.gmra.mrb[0].mxu0 %v9272
    %v9368 = vpop.f32.mrb[0].mxu0
    %v9369 = vadd.f32 0.0, %v9368
    %v9370 = vpop.f32.mrb[0].mxu0
    %9371 = vmatprep.mubr.f32.mxu0 0.0
    %9372 = vmatmul.mubr.f32.gmra.mrb[0].mxu0 %v9274
    %v9373 = vpop.f32.mrb[0].mxu0
    %v9374 = vadd.f32 0.0, %v9373
    %v9375 = vpop.f32.mrb[0].mxu0
    %9376 = vmatprep.mubr.f32.mxu0 0.0
    %9377 = vmatmul.mubr.f32.gmra.mrb[0].mxu0 %v9276
    %v9378 = vpop.f32.mrb[0].mxu0
    %v9379 = vadd.f32 0.0, %v9378
    %v9380 = vpop.f32.mrb[0].mxu0
    %9381 = vmatprep.mubr.f32.mxu0 0.0
    %9382 = vmatmul.mubr.f32.gmra.mrb[0].mxu0 %v9278
    %v9383 = vpop.f32.mrb[0].mxu0
    %v9384 = vadd.f32 0.0, %v9383
    %v9385 = vpop.f32.mrb[0].mxu0
    %9386 = vmatprep.mubr.f32.mxu0 0.0
    %9387 = vmatmul.mubr.f32.gmra.mrb[0].mxu0 %v9280
    %v9388 = vpop.f32.mrb[0].mxu0
    %v9389 = vadd.f32 0.0, %v9388
    %v9390 = vpop.f32.mrb[0].mxu0
    %9391 = vmatprep.mubr.f32.mxu0 0.0
    %9392 = vmatmul.mubr.f32.gmra.mrb[0].mxu0 %v9282
    %v9393 = vpop.f32.mrb[0].mxu0
    %v9394 = vadd.f32 0.0, %v9393
    %v9395 = vpop.f32.mrb[0].mxu0
    %9396 = vmatprep.mubr.f32.mxu0 0.0
    %9397 = vmatmul.mubr.f32.gmra.mrb[0].mxu0 %v9284
    %v9398 = vpop.f32.mrb[0].mxu0
    %v9399 = vadd.f32 0.0, %v9398
    %v9400 = vpop.f32.mrb[0].mxu0
    %9401 = vmatprep.mubr.f32.mxu0 0.0
    %9402 = vmatmul.mubr.f32.gmra.mrb[0].mxu0 %v9286
    %v9403 = vpop.f32.mrb[0].mxu0
    %v9404 = vadd.f32 0.0, %v9403
    %v9405 = vpop.f32.mrb[0].mxu0
    %9406 = vmatprep.mubr.f32.mxu0 0.0
    %9407 = vmatmul.mubr.f32.gmra.mrb[0].mxu0 %v9288
    %v9408 = vpop.f32.mrb[0].mxu0
    %v9409 = vadd.f32 0.0, %v9408
    %v9410 = vpop.f32.mrb[0].mxu0
    %9411 = vmatprep.mubr.f32.mxu0 0.0
    %9412 = vmatmul.mubr.f32.gmra.mrb[0].mxu0 %v9290
    %v9413 = vpop.f32.mrb[0].mxu0
    %v9414 = vadd.f32 0.0, %v9413
    %v9415 = vpop.f32.mrb[0].mxu0
    %9416 = vmatprep.mubr.f32.mxu0 0.0
    %9417 = vmatmul.mubr.f32.gmra.mrb[0].mxu0 %v9292
    %v9418 = vpop.f32.mrb[0].mxu0
    %v9419 = vadd.f32 0.0, %v9418
    %v9420 = vpop.f32.mrb[0].mxu0
    %9421 = vmatprep.mubr.f32.mxu0 0.0
    %9422 = vmatmul.mubr.f32.gmra.mrb[0].mxu0 %v9294
    %v9423 = vpop.f32.mrb[0].mxu0
    %v9424 = vadd.f32 0.0, %v9423
    %v9425 = vpop.f32.mrb[0].mxu0
    %9426 = vmatprep.mubr.f32.mxu0 0.0
    %9427 = vmatmul.mubr.f32.gmra.mrb[0].mxu0 %v9296
    %v9428 = vpop.f32.mrb[0].mxu0
    %v9429 = vadd.f32 0.0, %v9428
    %v9430 = vpop.f32.mrb[0].mxu0
    %9431 = vmatprep.mubr.f32.mxu0 0.0
    %9432 = vmatmul.mubr.f32.gmra.mrb[0].mxu0 %v9298
    %v9433 = vpop.f32.mrb[0].mxu0
    %v9434 = vadd.f32 0.0, %v9433
    %v9435 = vpop.f32.mrb[0].mxu0
    %9436 = vmatprep.mubr.f32.mxu0 0.0
    %9437 = vmatmul.mubr.f32.gmra.mrb[0].mxu0 %v9300
    %v9438 = vpop.f32.mrb[0].mxu0
    %v9439 = vadd.f32 0.0, %v9438
    %v9440 = vpop.f32.mrb[0].mxu0
    %9441 = vdwg.mxu0
    %v9442 = vadd.f32 %v9221, %v9369
    %v9443 = vadd.f32 %v9222, %v9374
    %v9444 = vadd.f32 %v9223, %v9379
    %v9445 = vadd.f32 %v9224, %v9384
    %v9446 = vadd.f32 %v9225, %v9389
    %v9447 = vadd.f32 %v9226, %v9394
    %v9448 = vadd.f32 %v9227, %v9399
    %v9449 = vadd.f32 %v9228, %v9404
    %v9450 = vadd.f32 %v9229, %v9409
    %v9451 = vadd.f32 %v9230, %v9414
    %v9452 = vadd.f32 %v9231, %v9419
    %v9453 = vadd.f32 %v9232, %v9424
    %v9454 = vadd.f32 %v9233, %v9429
    %v9455 = vadd.f32 %v9234, %v9434
    %v9456 = vadd.f32 %v9235, %v9439
    %9457 = vrot.lane.b32.xlu0 %v5057, 64
    %v9458 = vpop.permute.xlu0 %9457
    %9459 = vrot.lane.b32.xlu0 %v5061, 64
    %v9460 = vpop.permute.xlu0 %9459
    %9461 = vrot.lane.b32.xlu0 %v5065, 64
    %v9462 = vpop.permute.xlu0 %9461
    %9463 = vrot.lane.b32.xlu0 %v5069, 64
    %v9464 = vpop.permute.xlu0 %9463
    %9465 = vrot.lane.b32.xlu0 %v5073, 64
    %v9466 = vpop.permute.xlu0 %9465
    %9467 = vrot.lane.b32.xlu0 %v5077, 64
    %v9468 = vpop.permute.xlu0 %9467
    %9469 = vrot.lane.b32.xlu0 %v5081, 64
    %v9470 = vpop.permute.xlu0 %9469
    %9471 = vrot.lane.b32.xlu0 %v5085, 64
    %v9472 = vpop.permute.xlu0 %9471
    %9473 = vrot.lane.b32.xlu0 %v5089, 64
    %v9474 = vpop.permute.xlu0 %9473
    %9475 = vrot.lane.b32.xlu0 %v5093, 64
    %v9476 = vpop.permute.xlu0 %9475
    %9477 = vrot.lane.b32.xlu0 %v5097, 64
    %v9478 = vpop.permute.xlu0 %9477
    %9479 = vrot.lane.b32.xlu0 %v5101, 64
    %v9480 = vpop.permute.xlu0 %9479
    %9481 = vrot.lane.b32.xlu0 %v5105, 64
    %v9482 = vpop.permute.xlu0 %9481
    %9483 = vrot.lane.b32.xlu0 %v5109, 64
    %v9484 = vpop.permute.xlu0 %9483
    %9485 = vrot.lane.b32.xlu0 %v5113, 64
    %v9486 = vpop.permute.xlu0 %9485
    %9487 = vrot.lane.b32.xlu0 %v5047, 88
    %v9488 = vpop.permute.xlu0 %9487
    %9489 = vrot.lane.b32.xlu0 %v5052, 88
    %v9490 = vpop.permute.xlu0 %9489
    %v9493 = vsel %vm5168, %v9458, 0
    %v9495 = vsel %vm5168, %v9460, 0
    %v9497 = vsel %vm5168, %v9462, 0
    %v9499 = vsel %vm5168, %v9464, 0
    %v9501 = vsel %vm5168, %v9466, 0
    %v9503 = vsel %vm5168, %v9468, 0
    %v9505 = vsel %vm5168, %v9470, 0
    %v9507 = vsel %vm5168, %v9472, 0
    %v9509 = vsel %vm5168, %v9474, 0
    %v9511 = vsel %vm5168, %v9476, 0
    %v9513 = vsel %vm5168, %v9478, 0
    %v9515 = vsel %vm5168, %v9480, 0
    %v9517 = vsel %vm5168, %v9482, 0
    %v9519 = vsel %vm5168, %v9484, 0
    %v9521 = vsel %vm5168, %v9486, 0
    %9523 = vmatprep.subr.mxu0 0.0
    %9524 = vmatpush1.msra.mxu0 %v9488
    %9525 = vmatprep.subr.mxu0 0.0
    %9526 = vmatpush1.msra.mxu0 %v9490
    %9527 = vmatprep.subr.mxu0 0.0
    %9528 = vmatpush1.msra.mxu0 0.0
    %9529 = vmatprep.subr.mxu0 0.0
    %9530 = vmatpush1.msra.mxu0 0.0
    %9531 = vmatprep.subr.mxu0 0.0
    %9532 = vmatpush1.msra.mxu0 0.0
    %9533 = vmatprep.subr.mxu0 0.0
    %9534 = vmatpush1.msra.mxu0 0.0
    %9535 = vmatprep.subr.mxu0 0.0
    %9536 = vmatpush1.msra.mxu0 0.0
    %9537 = vmatprep.subr.mxu0 0.0
    %9538 = vmatpush1.msra.mxu0 0.0
    %9539 = vmatprep.subr.mxu0 0.0
    %9540 = vmatpush1.msra.mxu0 0.0
    %9541 = vmatprep.subr.mxu0 0.0
    %9542 = vmatpush1.msra.mxu0 0.0
    %9543 = vmatprep.subr.mxu0 0.0
    %9544 = vmatpush1.msra.mxu0 0.0
    %9545 = vmatprep.subr.mxu0 0.0
    %9546 = vmatpush1.msra.mxu0 0.0
    %9547 = vmatprep.subr.mxu0 0.0
    %9548 = vmatpush1.msra.mxu0 0.0
    %9549 = vmatprep.subr.mxu0 0.0
    %9550 = vmatpush1.msra.mxu0 0.0
    %9551 = vmatprep.subr.mxu0 0.0
    %9552 = vmatpush1.msra.mxu0 0.0
    %9553 = vmatprep.subr.mxu0 0.0
    %9554 = vmatpush1.msra.mxu0 0.0
    %9555 = vmatprep.subr.mxu0 0.0
    %9556 = vmatpush1.msra.mxu0 0.0
    %9557 = vmatprep.subr.mxu0 0.0
    %9558 = vmatpush1.msra.mxu0 0.0
    %9559 = vmatprep.subr.mxu0 0.0
    %9560 = vmatpush1.msra.mxu0 0.0
    %9561 = vmatprep.subr.mxu0 0.0
    %9562 = vmatpush1.msra.mxu0 0.0
    %9563 = vmatprep.subr.mxu0 0.0
    %9564 = vmatpush1.msra.mxu0 0.0
    %9565 = vmatprep.subr.mxu0 0.0
    %9566 = vmatpush1.msra.mxu0 0.0
    %9567 = vmatprep.subr.mxu0 0.0
    %9568 = vmatpush1.msra.mxu0 0.0
    %9569 = vmatprep.subr.mxu0 0.0
    %9570 = vmatpush1.msra.mxu0 0.0
    %9571 = vmatprep.subr.mxu0 0.0
    %9572 = vmatpush1.msra.mxu0 0.0
    %9573 = vmatprep.subr.mxu0 0.0
    %9574 = vmatpush1.msra.mxu0 0.0
    %9575 = vmatprep.subr.mxu0 0.0
    %9576 = vmatpush1.msra.mxu0 0.0
    %9577 = vmatprep.subr.mxu0 0.0
    %9578 = vmatpush1.msra.mxu0 0.0
    %9579 = vmatprep.subr.mxu0 0.0
    %9580 = vmatpush1.msra.mxu0 0.0
    %9581 = vmatprep.subr.mxu0 0.0
    %9582 = vmatpush1.msra.mxu0 0.0
    %9583 = vmatprep.subr.mxu0 0.0
    %9584 = vmatpush1.msra.mxu0 0.0
    %9585 = vmatprep.subr.mxu0 0.0
    %9586 = vmatpush1.msra.mxu0 0.0
    %9587 = vmatprep.mubr.f32.mxu0 0.0
    %9588 = vmatmul.mubr.f32.gmra.mrb[0].mxu0 %v9493
    %v9589 = vpop.f32.mrb[0].mxu0
    %v9590 = vadd.f32 0.0, %v9589
    %v9591 = vpop.f32.mrb[0].mxu0
    %9592 = vmatprep.mubr.f32.mxu0 0.0
    %9593 = vmatmul.mubr.f32.gmra.mrb[0].mxu0 %v9495
    %v9594 = vpop.f32.mrb[0].mxu0
    %v9595 = vadd.f32 0.0, %v9594
    %v9596 = vpop.f32.mrb[0].mxu0
    %9597 = vmatprep.mubr.f32.mxu0 0.0
    %9598 = vmatmul.mubr.f32.gmra.mrb[0].mxu0 %v9497
    %v9599 = vpop.f32.mrb[0].mxu0
    %v9600 = vadd.f32 0.0, %v9599
    %v9601 = vpop.f32.mrb[0].mxu0
    %9602 = vmatprep.mubr.f32.mxu0 0.0
    %9603 = vmatmul.mubr.f32.gmra.mrb[0].mxu0 %v9499
    %v9604 = vpop.f32.mrb[0].mxu0
    %v9605 = vadd.f32 0.0, %v9604
    %v9606 = vpop.f32.mrb[0].mxu0
    %9607 = vmatprep.mubr.f32.mxu0 0.0
    %9608 = vmatmul.mubr.f32.gmra.mrb[0].mxu0 %v9501
    %v9609 = vpop.f32.mrb[0].mxu0
    %v9610 = vadd.f32 0.0, %v9609
    %v9611 = vpop.f32.mrb[0].mxu0
    %9612 = vmatprep.mubr.f32.mxu0 0.0
    %9613 = vmatmul.mubr.f32.gmra.mrb[0].mxu0 %v9503
    %v9614 = vpop.f32.mrb[0].mxu0
    %v9615 = vadd.f32 0.0, %v9614
    %v9616 = vpop.f32.mrb[0].mxu0
    %9617 = vmatprep.mubr.f32.mxu0 0.0
    %9618 = vmatmul.mubr.f32.gmra.mrb[0].mxu0 %v9505
    %v9619 = vpop.f32.mrb[0].mxu0
    %v9620 = vadd.f32 0.0, %v9619
    %v9621 = vpop.f32.mrb[0].mxu0
    %9622 = vmatprep.mubr.f32.mxu0 0.0
    %9623 = vmatmul.mubr.f32.gmra.mrb[0].mxu0 %v9507
    %v9624 = vpop.f32.mrb[0].mxu0
    %v9625 = vadd.f32 0.0, %v9624
    %v9626 = vpop.f32.mrb[0].mxu0
    %9627 = vmatprep.mubr.f32.mxu0 0.0
    %9628 = vmatmul.mubr.f32.gmra.mrb[0].mxu0 %v9509
    %v9629 = vpop.f32.mrb[0].mxu0
    %v9630 = vadd.f32 0.0, %v9629
    %v9631 = vpop.f32.mrb[0].mxu0
    %9632 = vmatprep.mubr.f32.mxu0 0.0
    %9633 = vmatmul.mubr.f32.gmra.mrb[0].mxu0 %v9511
    %v9634 = vpop.f32.mrb[0].mxu0
    %v9635 = vadd.f32 0.0, %v9634
    %v9636 = vpop.f32.mrb[0].mxu0
    %9637 = vmatprep.mubr.f32.mxu0 0.0
    %9638 = vmatmul.mubr.f32.gmra.mrb[0].mxu0 %v9513
    %v9639 = vpop.f32.mrb[0].mxu0
    %v9640 = vadd.f32 0.0, %v9639
    %v9641 = vpop.f32.mrb[0].mxu0
    %9642 = vmatprep.mubr.f32.mxu0 0.0
    %9643 = vmatmul.mubr.f32.gmra.mrb[0].mxu0 %v9515
    %v9644 = vpop.f32.mrb[0].mxu0
    %v9645 = vadd.f32 0.0, %v9644
    %v9646 = vpop.f32.mrb[0].mxu0
    %9647 = vmatprep.mubr.f32.mxu0 0.0
    %9648 = vmatmul.mubr.f32.gmra.mrb[0].mxu0 %v9517
    %v9649 = vpop.f32.mrb[0].mxu0
    %v9650 = vadd.f32 0.0, %v9649
    %v9651 = vpop.f32.mrb[0].mxu0
    %9652 = vmatprep.mubr.f32.mxu0 0.0
    %9653 = vmatmul.mubr.f32.gmra.mrb[0].mxu0 %v9519
    %v9654 = vpop.f32.mrb[0].mxu0
    %v9655 = vadd.f32 0.0, %v9654
    %v9656 = vpop.f32.mrb[0].mxu0
    %9657 = vmatprep.mubr.f32.mxu0 0.0
    %9658 = vmatmul.mubr.f32.gmra.mrb[0].mxu0 %v9521
    %v9659 = vpop.f32.mrb[0].mxu0
    %v9660 = vadd.f32 0.0, %v9659
    %v9661 = vpop.f32.mrb[0].mxu0
    %9662 = vdwg.mxu0
    %v9663 = vadd.f32 %v9442, %v9590
    %v9664 = vadd.f32 %v9443, %v9595
    %v9665 = vadd.f32 %v9444, %v9600
    %v9666 = vadd.f32 %v9445, %v9605
    %v9667 = vadd.f32 %v9446, %v9610
    %v9668 = vadd.f32 %v9447, %v9615
    %v9669 = vadd.f32 %v9448, %v9620
    %v9670 = vadd.f32 %v9449, %v9625
    %v9671 = vadd.f32 %v9450, %v9630
    %v9672 = vadd.f32 %v9451, %v9635
    %v9673 = vadd.f32 %v9452, %v9640
    %v9674 = vadd.f32 %v9453, %v9645
    %v9675 = vadd.f32 %v9454, %v9650
    %v9676 = vadd.f32 %v9455, %v9655
    %v9677 = vadd.f32 %v9456, %v9660
    %9678 = vrot.lane.b32.xlu0 %v5057, 48
    %v9679 = vpop.permute.xlu0 %9678
    %9680 = vrot.lane.b32.xlu0 %v5061, 48
    %v9681 = vpop.permute.xlu0 %9680
    %9682 = vrot.lane.b32.xlu0 %v5065, 48
    %v9683 = vpop.permute.xlu0 %9682
    %9684 = vrot.lane.b32.xlu0 %v5069, 48
    %v9685 = vpop.permute.xlu0 %9684
    %9686 = vrot.lane.b32.xlu0 %v5073, 48
    %v9687 = vpop.permute.xlu0 %9686
    %9688 = vrot.lane.b32.xlu0 %v5077, 48
    %v9689 = vpop.permute.xlu0 %9688
    %9690 = vrot.lane.b32.xlu0 %v5081, 48
    %v9691 = vpop.permute.xlu0 %9690
    %9692 = vrot.lane.b32.xlu0 %v5085, 48
    %v9693 = vpop.permute.xlu0 %9692
    %9694 = vrot.lane.b32.xlu0 %v5089, 48
    %v9695 = vpop.permute.xlu0 %9694
    %9696 = vrot.lane.b32.xlu0 %v5093, 48
    %v9697 = vpop.permute.xlu0 %9696
    %9698 = vrot.lane.b32.xlu0 %v5097, 48
    %v9699 = vpop.permute.xlu0 %9698
    %9700 = vrot.lane.b32.xlu0 %v5101, 48
    %v9701 = vpop.permute.xlu0 %9700
    %9702 = vrot.lane.b32.xlu0 %v5105, 48
    %v9703 = vpop.permute.xlu0 %9702
    %9704 = vrot.lane.b32.xlu0 %v5109, 48
    %v9705 = vpop.permute.xlu0 %9704
    %9706 = vrot.lane.b32.xlu0 %v5113, 48
    %v9707 = vpop.permute.xlu0 %9706
    %9708 = vrot.lane.b32.xlu0 %v5047, 86
    %v9709 = vpop.permute.xlu0 %9708
    %9710 = vrot.lane.b32.xlu0 %v5052, 86
    %v9711 = vpop.permute.xlu0 %9710
    %v9714 = vsel %vm5168, %v9679, 0
    %v9716 = vsel %vm5168, %v9681, 0
    %v9718 = vsel %vm5168, %v9683, 0
    %v9720 = vsel %vm5168, %v9685, 0
    %v9722 = vsel %vm5168, %v9687, 0
    %v9724 = vsel %vm5168, %v9689, 0
    %v9726 = vsel %vm5168, %v9691, 0
    %v9728 = vsel %vm5168, %v9693, 0
    %v9730 = vsel %vm5168, %v9695, 0
    %v9732 = vsel %vm5168, %v9697, 0
    %v9734 = vsel %vm5168, %v9699, 0
    %v9736 = vsel %vm5168, %v9701, 0
    %v9738 = vsel %vm5168, %v9703, 0
    %v9740 = vsel %vm5168, %v9705, 0
    %v9742 = vsel %vm5168, %v9707, 0
    %9744 = vmatprep.subr.mxu0 0.0
    %9745 = vmatpush1.msra.mxu0 %v9709
    %9746 = vmatprep.subr.mxu0 0.0
    %9747 = vmatpush1.msra.mxu0 %v9711
    %9748 = vmatprep.subr.mxu0 0.0
    %9749 = vmatpush1.msra.mxu0 0.0
    %9750 = vmatprep.subr.mxu0 0.0
    %9751 = vmatpush1.msra.mxu0 0.0
    %9752 = vmatprep.subr.mxu0 0.0
    %9753 = vmatpush1.msra.mxu0 0.0
    %9754 = vmatprep.subr.mxu0 0.0
    %9755 = vmatpush1.msra.mxu0 0.0
    %9756 = vmatprep.subr.mxu0 0.0
    %9757 = vmatpush1.msra.mxu0 0.0
    %9758 = vmatprep.subr.mxu0 0.0
    %9759 = vmatpush1.msra.mxu0 0.0
    %9760 = vmatprep.subr.mxu0 0.0
    %9761 = vmatpush1.msra.mxu0 0.0
    %9762 = vmatprep.subr.mxu0 0.0
    %9763 = vmatpush1.msra.mxu0 0.0
    %9764 = vmatprep.subr.mxu0 0.0
    %9765 = vmatpush1.msra.mxu0 0.0
    %9766 = vmatprep.subr.mxu0 0.0
    %9767 = vmatpush1.msra.mxu0 0.0
    %9768 = vmatprep.subr.mxu0 0.0
    %9769 = vmatpush1.msra.mxu0 0.0
    %9770 = vmatprep.subr.mxu0 0.0
    %9771 = vmatpush1.msra.mxu0 0.0
    %9772 = vmatprep.subr.mxu0 0.0
    %9773 = vmatpush1.msra.mxu0 0.0
    %9774 = vmatprep.subr.mxu0 0.0
    %9775 = vmatpush1.msra.mxu0 0.0
    %9776 = vmatprep.subr.mxu0 0.0
    %9777 = vmatpush1.msra.mxu0 0.0
    %9778 = vmatprep.subr.mxu0 0.0
    %9779 = vmatpush1.msra.mxu0 0.0
    %9780 = vmatprep.subr.mxu0 0.0
    %9781 = vmatpush1.msra.mxu0 0.0
    %9782 = vmatprep.subr.mxu0 0.0
    %9783 = vmatpush1.msra.mxu0 0.0
    %9784 = vmatprep.subr.mxu0 0.0
    %9785 = vmatpush1.msra.mxu0 0.0
    %9786 = vmatprep.subr.mxu0 0.0
    %9787 = vmatpush1.msra.mxu0 0.0
    %9788 = vmatprep.subr.mxu0 0.0
    %9789 = vmatpush1.msra.mxu0 0.0
    %9790 = vmatprep.subr.mxu0 0.0
    %9791 = vmatpush1.msra.mxu0 0.0
    %9792 = vmatprep.subr.mxu0 0.0
    %9793 = vmatpush1.msra.mxu0 0.0
    %9794 = vmatprep.subr.mxu0 0.0
    %9795 = vmatpush1.msra.mxu0 0.0
    %9796 = vmatprep.subr.mxu0 0.0
    %9797 = vmatpush1.msra.mxu0 0.0
    %9798 = vmatprep.subr.mxu0 0.0
    %9799 = vmatpush1.msra.mxu0 0.0
    %9800 = vmatprep.subr.mxu0 0.0
    %9801 = vmatpush1.msra.mxu0 0.0
    %9802 = vmatprep.subr.mxu0 0.0
    %9803 = vmatpush1.msra.mxu0 0.0
    %9804 = vmatprep.subr.mxu0 0.0
    %9805 = vmatpush1.msra.mxu0 0.0
    %9806 = vmatprep.subr.mxu0 0.0
    %9807 = vmatpush1.msra.mxu0 0.0
    %9808 = vmatprep.mubr.f32.mxu0 0.0
    %9809 = vmatmul.mubr.f32.gmra.mrb[0].mxu0 %v9714
    %v9810 = vpop.f32.mrb[0].mxu0
    %v9811 = vadd.f32 0.0, %v9810
    %v9812 = vpop.f32.mrb[0].mxu0
    %9813 = vmatprep.mubr.f32.mxu0 0.0
    %9814 = vmatmul.mubr.f32.gmra.mrb[0].mxu0 %v9716
    %v9815 = vpop.f32.mrb[0].mxu0
    %v9816 = vadd.f32 0.0, %v9815
    %v9817 = vpop.f32.mrb[0].mxu0
    %9818 = vmatprep.mubr.f32.mxu0 0.0
    %9819 = vmatmul.mubr.f32.gmra.mrb[0].mxu0 %v9718
    %v9820 = vpop.f32.mrb[0].mxu0
    %v9821 = vadd.f32 0.0, %v9820
    %v9822 = vpop.f32.mrb[0].mxu0
    %9823 = vmatprep.mubr.f32.mxu0 0.0
    %9824 = vmatmul.mubr.f32.gmra.mrb[0].mxu0 %v9720
    %v9825 = vpop.f32.mrb[0].mxu0
    %v9826 = vadd.f32 0.0, %v9825
    %v9827 = vpop.f32.mrb[0].mxu0
    %9828 = vmatprep.mubr.f32.mxu0 0.0
    %9829 = vmatmul.mubr.f32.gmra.mrb[0].mxu0 %v9722
    %v9830 = vpop.f32.mrb[0].mxu0
    %v9831 = vadd.f32 0.0, %v9830
    %v9832 = vpop.f32.mrb[0].mxu0
    %9833 = vmatprep.mubr.f32.mxu0 0.0
    %9834 = vmatmul.mubr.f32.gmra.mrb[0].mxu0 %v9724
    %v9835 = vpop.f32.mrb[0].mxu0
    %v9836 = vadd.f32 0.0, %v9835
    %v9837 = vpop.f32.mrb[0].mxu0
    %9838 = vmatprep.mubr.f32.mxu0 0.0
    %9839 = vmatmul.mubr.f32.gmra.mrb[0].mxu0 %v9726
    %v9840 = vpop.f32.mrb[0].mxu0
    %v9841 = vadd.f32 0.0, %v9840
    %v9842 = vpop.f32.mrb[0].mxu0
    %9843 = vmatprep.mubr.f32.mxu0 0.0
    %9844 = vmatmul.mubr.f32.gmra.mrb[0].mxu0 %v9728
    %v9845 = vpop.f32.mrb[0].mxu0
    %v9846 = vadd.f32 0.0, %v9845
    %v9847 = vpop.f32.mrb[0].mxu0
    %9848 = vmatprep.mubr.f32.mxu0 0.0
    %9849 = vmatmul.mubr.f32.gmra.mrb[0].mxu0 %v9730
    %v9850 = vpop.f32.mrb[0].mxu0
    %v9851 = vadd.f32 0.0, %v9850
    %v9852 = vpop.f32.mrb[0].mxu0
    %9853 = vmatprep.mubr.f32.mxu0 0.0
    %9854 = vmatmul.mubr.f32.gmra.mrb[0].mxu0 %v9732
    %v9855 = vpop.f32.mrb[0].mxu0
    %v9856 = vadd.f32 0.0, %v9855
    %v9857 = vpop.f32.mrb[0].mxu0
    %9858 = vmatprep.mubr.f32.mxu0 0.0
    %9859 = vmatmul.mubr.f32.gmra.mrb[0].mxu0 %v9734
    %v9860 = vpop.f32.mrb[0].mxu0
    %v9861 = vadd.f32 0.0, %v9860
    %v9862 = vpop.f32.mrb[0].mxu0
    %9863 = vmatprep.mubr.f32.mxu0 0.0
    %9864 = vmatmul.mubr.f32.gmra.mrb[0].mxu0 %v9736
    %v9865 = vpop.f32.mrb[0].mxu0
    %v9866 = vadd.f32 0.0, %v9865
    %v9867 = vpop.f32.mrb[0].mxu0
    %9868 = vmatprep.mubr.f32.mxu0 0.0
    %9869 = vmatmul.mubr.f32.gmra.mrb[0].mxu0 %v9738
    %v9870 = vpop.f32.mrb[0].mxu0
    %v9871 = vadd.f32 0.0, %v9870
    %v9872 = vpop.f32.mrb[0].mxu0
    %9873 = vmatprep.mubr.f32.mxu0 0.0
    %9874 = vmatmul.mubr.f32.gmra.mrb[0].mxu0 %v9740
    %v9875 = vpop.f32.mrb[0].mxu0
    %v9876 = vadd.f32 0.0, %v9875
    %v9877 = vpop.f32.mrb[0].mxu0
    %9878 = vmatprep.mubr.f32.mxu0 0.0
    %9879 = vmatmul.mubr.f32.gmra.mrb[0].mxu0 %v9742
    %v9880 = vpop.f32.mrb[0].mxu0
    %v9881 = vadd.f32 0.0, %v9880
    %v9882 = vpop.f32.mrb[0].mxu0
    %9883 = vdwg.mxu0
    %v9884 = vadd.f32 %v9663, %v9811
    %v9885 = vadd.f32 %v9664, %v9816
    %v9886 = vadd.f32 %v9665, %v9821
    %v9887 = vadd.f32 %v9666, %v9826
    %v9888 = vadd.f32 %v9667, %v9831
    %v9889 = vadd.f32 %v9668, %v9836
    %v9890 = vadd.f32 %v9669, %v9841
    %v9891 = vadd.f32 %v9670, %v9846
    %v9892 = vadd.f32 %v9671, %v9851
    %v9893 = vadd.f32 %v9672, %v9856
    %v9894 = vadd.f32 %v9673, %v9861
    %v9895 = vadd.f32 %v9674, %v9866
    %v9896 = vadd.f32 %v9675, %v9871
    %v9897 = vadd.f32 %v9676, %v9876
    %v9898 = vadd.f32 %v9677, %v9881
    %9899 = vrot.lane.b32.xlu0 %v5057, 32
    %v9900 = vpop.permute.xlu0 %9899
    %9901 = vrot.lane.b32.xlu0 %v5061, 32
    %v9902 = vpop.permute.xlu0 %9901
    %9903 = vrot.lane.b32.xlu0 %v5065, 32
    %v9904 = vpop.permute.xlu0 %9903
    %9905 = vrot.lane.b32.xlu0 %v5069, 32
    %v9906 = vpop.permute.xlu0 %9905
    %9907 = vrot.lane.b32.xlu0 %v5073, 32
    %v9908 = vpop.permute.xlu0 %9907
    %9909 = vrot.lane.b32.xlu0 %v5077, 32
    %v9910 = vpop.permute.xlu0 %9909
    %9911 = vrot.lane.b32.xlu0 %v5081, 32
    %v9912 = vpop.permute.xlu0 %9911
    %9913 = vrot.lane.b32.xlu0 %v5085, 32
    %v9914 = vpop.permute.xlu0 %9913
    %9915 = vrot.lane.b32.xlu0 %v5089, 32
    %v9916 = vpop.permute.xlu0 %9915
    %9917 = vrot.lane.b32.xlu0 %v5093, 32
    %v9918 = vpop.permute.xlu0 %9917
    %9919 = vrot.lane.b32.xlu0 %v5097, 32
    %v9920 = vpop.permute.xlu0 %9919
    %9921 = vrot.lane.b32.xlu0 %v5101, 32
    %v9922 = vpop.permute.xlu0 %9921
    %9923 = vrot.lane.b32.xlu0 %v5105, 32
    %v9924 = vpop.permute.xlu0 %9923
    %9925 = vrot.lane.b32.xlu0 %v5109, 32
    %v9926 = vpop.permute.xlu0 %9925
    %9927 = vrot.lane.b32.xlu0 %v5113, 32
    %v9928 = vpop.permute.xlu0 %9927
    %9929 = vrot.lane.b32.xlu0 %v5047, 84
    %v9930 = vpop.permute.xlu0 %9929
    %9931 = vrot.lane.b32.xlu0 %v5052, 84
    %v9932 = vpop.permute.xlu0 %9931
    %v9935 = vsel %vm5168, %v9900, 0
    %v9937 = vsel %vm5168, %v9902, 0
    %v9939 = vsel %vm5168, %v9904, 0
    %v9941 = vsel %vm5168, %v9906, 0
    %v9943 = vsel %vm5168, %v9908, 0
    %v9945 = vsel %vm5168, %v9910, 0
    %v9947 = vsel %vm5168, %v9912, 0
    %v9949 = vsel %vm5168, %v9914, 0
    %v9951 = vsel %vm5168, %v9916, 0
    %v9953 = vsel %vm5168, %v9918, 0
    %v9955 = vsel %vm5168, %v9920, 0
    %v9957 = vsel %vm5168, %v9922, 0
    %v9959 = vsel %vm5168, %v9924, 0
    %v9961 = vsel %vm5168, %v9926, 0
    %v9963 = vsel %vm5168, %v9928, 0
    %9965 = vmatprep.subr.mxu0 0.0
    %9966 = vmatpush1.msra.mxu0 %v9930
    %9967 = vmatprep.subr.mxu0 0.0
    %9968 = vmatpush1.msra.mxu0 %v9932
    %9969 = vmatprep.subr.mxu0 0.0
    %9970 = vmatpush1.msra.mxu0 0.0
    %9971 = vmatprep.subr.mxu0 0.0
    %9972 = vmatpush1.msra.mxu0 0.0
    %9973 = vmatprep.subr.mxu0 0.0
    %9974 = vmatpush1.msra.mxu0 0.0
    %9975 = vmatprep.subr.mxu0 0.0
    %9976 = vmatpush1.msra.mxu0 0.0
    %9977 = vmatprep.subr.mxu0 0.0
    %9978 = vmatpush1.msra.mxu0 0.0
    %9979 = vmatprep.subr.mxu0 0.0
    %9980 = vmatpush1.msra.mxu0 0.0
    %9981 = vmatprep.subr.mxu0 0.0
    %9982 = vmatpush1.msra.mxu0 0.0
    %9983 = vmatprep.subr.mxu0 0.0
    %9984 = vmatpush1.msra.mxu0 0.0
    %9985 = vmatprep.subr.mxu0 0.0
    %9986 = vmatpush1.msra.mxu0 0.0
    %9987 = vmatprep.subr.mxu0 0.0
    %9988 = vmatpush1.msra.mxu0 0.0
    %9989 = vmatprep.subr.mxu0 0.0
    %9990 = vmatpush1.msra.mxu0 0.0
    %9991 = vmatprep.subr.mxu0 0.0
    %9992 = vmatpush1.msra.mxu0 0.0
    %9993 = vmatprep.subr.mxu0 0.0
    %9994 = vmatpush1.msra.mxu0 0.0
    %9995 = vmatprep.subr.mxu0 0.0
    %9996 = vmatpush1.msra.mxu0 0.0
    %9997 = vmatprep.subr.mxu0 0.0
    %9998 = vmatpush1.msra.mxu0 0.0
    %9999 = vmatprep.subr.mxu0 0.0
    %10000 = vmatpush1.msra.mxu0 0.0
    %10001 = vmatprep.subr.mxu0 0.0
    %10002 = vmatpush1.msra.mxu0 0.0
    %10003 = vmatprep.subr.mxu0 0.0
    %10004 = vmatpush1.msra.mxu0 0.0
    %10005 = vmatprep.subr.mxu0 0.0
    %10006 = vmatpush1.msra.mxu0 0.0
    %10007 = vmatprep.subr.mxu0 0.0
    %10008 = vmatpush1.msra.mxu0 0.0
    %10009 = vmatprep.subr.mxu0 0.0
    %10010 = vmatpush1.msra.mxu0 0.0
    %10011 = vmatprep.subr.mxu0 0.0
    %10012 = vmatpush1.msra.mxu0 0.0
    %10013 = vmatprep.subr.mxu0 0.0
    %10014 = vmatpush1.msra.mxu0 0.0
    %10015 = vmatprep.subr.mxu0 0.0
    %10016 = vmatpush1.msra.mxu0 0.0
    %10017 = vmatprep.subr.mxu0 0.0
    %10018 = vmatpush1.msra.mxu0 0.0
    %10019 = vmatprep.subr.mxu0 0.0
    %10020 = vmatpush1.msra.mxu0 0.0
    %10021 = vmatprep.subr.mxu0 0.0
    %10022 = vmatpush1.msra.mxu0 0.0
    %10023 = vmatprep.subr.mxu0 0.0
    %10024 = vmatpush1.msra.mxu0 0.0
    %10025 = vmatprep.subr.mxu0 0.0
    %10026 = vmatpush1.msra.mxu0 0.0
    %10027 = vmatprep.subr.mxu0 0.0
    %10028 = vmatpush1.msra.mxu0 0.0
    %10029 = vmatprep.mubr.f32.mxu0 0.0
    %10030 = vmatmul.mubr.f32.gmra.mrb[0].mxu0 %v9935
    %v10031 = vpop.f32.mrb[0].mxu0
    %v10032 = vadd.f32 0.0, %v10031
    %v10033 = vpop.f32.mrb[0].mxu0
    %10034 = vmatprep.mubr.f32.mxu0 0.0
    %10035 = vmatmul.mubr.f32.gmra.mrb[0].mxu0 %v9937
    %v10036 = vpop.f32.mrb[0].mxu0
    %v10037 = vadd.f32 0.0, %v10036
    %v10038 = vpop.f32.mrb[0].mxu0
    %10039 = vmatprep.mubr.f32.mxu0 0.0
    %10040 = vmatmul.mubr.f32.gmra.mrb[0].mxu0 %v9939
    %v10041 = vpop.f32.mrb[0].mxu0
    %v10042 = vadd.f32 0.0, %v10041
    %v10043 = vpop.f32.mrb[0].mxu0
    %10044 = vmatprep.mubr.f32.mxu0 0.0
    %10045 = vmatmul.mubr.f32.gmra.mrb[0].mxu0 %v9941
    %v10046 = vpop.f32.mrb[0].mxu0
    %v10047 = vadd.f32 0.0, %v10046
    %v10048 = vpop.f32.mrb[0].mxu0
    %10049 = vmatprep.mubr.f32.mxu0 0.0
    %10050 = vmatmul.mubr.f32.gmra.mrb[0].mxu0 %v9943
    %v10051 = vpop.f32.mrb[0].mxu0
    %v10052 = vadd.f32 0.0, %v10051
    %v10053 = vpop.f32.mrb[0].mxu0
    %10054 = vmatprep.mubr.f32.mxu0 0.0
    %10055 = vmatmul.mubr.f32.gmra.mrb[0].mxu0 %v9945
    %v10056 = vpop.f32.mrb[0].mxu0
    %v10057 = vadd.f32 0.0, %v10056
    %v10058 = vpop.f32.mrb[0].mxu0
    %10059 = vmatprep.mubr.f32.mxu0 0.0
    %10060 = vmatmul.mubr.f32.gmra.mrb[0].mxu0 %v9947
    %v10061 = vpop.f32.mrb[0].mxu0
    %v10062 = vadd.f32 0.0, %v10061
    %v10063 = vpop.f32.mrb[0].mxu0
    %10064 = vmatprep.mubr.f32.mxu0 0.0
    %10065 = vmatmul.mubr.f32.gmra.mrb[0].mxu0 %v9949
    %v10066 = vpop.f32.mrb[0].mxu0
    %v10067 = vadd.f32 0.0, %v10066
    %v10068 = vpop.f32.mrb[0].mxu0
    %10069 = vmatprep.mubr.f32.mxu0 0.0
    %10070 = vmatmul.mubr.f32.gmra.mrb[0].mxu0 %v9951
    %v10071 = vpop.f32.mrb[0].mxu0
    %v10072 = vadd.f32 0.0, %v10071
    %v10073 = vpop.f32.mrb[0].mxu0
    %10074 = vmatprep.mubr.f32.mxu0 0.0
    %10075 = vmatmul.mubr.f32.gmra.mrb[0].mxu0 %v9953
    %v10076 = vpop.f32.mrb[0].mxu0
    %v10077 = vadd.f32 0.0, %v10076
    %v10078 = vpop.f32.mrb[0].mxu0
    %10079 = vmatprep.mubr.f32.mxu0 0.0
    %10080 = vmatmul.mubr.f32.gmra.mrb[0].mxu0 %v9955
    %v10081 = vpop.f32.mrb[0].mxu0
    %v10082 = vadd.f32 0.0, %v10081
    %v10083 = vpop.f32.mrb[0].mxu0
    %10084 = vmatprep.mubr.f32.mxu0 0.0
    %10085 = vmatmul.mubr.f32.gmra.mrb[0].mxu0 %v9957
    %v10086 = vpop.f32.mrb[0].mxu0
    %v10087 = vadd.f32 0.0, %v10086
    %v10088 = vpop.f32.mrb[0].mxu0
    %10089 = vmatprep.mubr.f32.mxu0 0.0
    %10090 = vmatmul.mubr.f32.gmra.mrb[0].mxu0 %v9959
    %v10091 = vpop.f32.mrb[0].mxu0
    %v10092 = vadd.f32 0.0, %v10091
    %v10093 = vpop.f32.mrb[0].mxu0
    %10094 = vmatprep.mubr.f32.mxu0 0.0
    %10095 = vmatmul.mubr.f32.gmra.mrb[0].mxu0 %v9961
    %v10096 = vpop.f32.mrb[0].mxu0
    %v10097 = vadd.f32 0.0, %v10096
    %v10098 = vpop.f32.mrb[0].mxu0
    %10099 = vmatprep.mubr.f32.mxu0 0.0
    %10100 = vmatmul.mubr.f32.gmra.mrb[0].mxu0 %v9963
    %v10101 = vpop.f32.mrb[0].mxu0
    %v10102 = vadd.f32 0.0, %v10101
    %v10103 = vpop.f32.mrb[0].mxu0
    %10104 = vdwg.mxu0
    %v10105 = vadd.f32 %v9884, %v10032
    %v10106 = vadd.f32 %v9885, %v10037
    %v10107 = vadd.f32 %v9886, %v10042
    %v10108 = vadd.f32 %v9887, %v10047
    %v10109 = vadd.f32 %v9888, %v10052
    %v10110 = vadd.f32 %v9889, %v10057
    %v10111 = vadd.f32 %v9890, %v10062
    %v10112 = vadd.f32 %v9891, %v10067
    %v10113 = vadd.f32 %v9892, %v10072
    %v10114 = vadd.f32 %v9893, %v10077
    %v10115 = vadd.f32 %v9894, %v10082
    %v10116 = vadd.f32 %v9895, %v10087
    %v10117 = vadd.f32 %v9896, %v10092
    %v10118 = vadd.f32 %v9897, %v10097
    %v10119 = vadd.f32 %v9898, %v10102
    %10120 = vrot.lane.b32.xlu0 %v5057, 16
    %v10121 = vpop.permute.xlu0 %10120
    %10122 = vrot.lane.b32.xlu0 %v5061, 16
    %v10123 = vpop.permute.xlu0 %10122
    %10124 = vrot.lane.b32.xlu0 %v5065, 16
    %v10125 = vpop.permute.xlu0 %10124
    %10126 = vrot.lane.b32.xlu0 %v5069, 16
    %v10127 = vpop.permute.xlu0 %10126
    %10128 = vrot.lane.b32.xlu0 %v5073, 16
    %v10129 = vpop.permute.xlu0 %10128
    %10130 = vrot.lane.b32.xlu0 %v5077, 16
    %v10131 = vpop.permute.xlu0 %10130
    %10132 = vrot.lane.b32.xlu0 %v5081, 16
    %v10133 = vpop.permute.xlu0 %10132
    %10134 = vrot.lane.b32.xlu0 %v5085, 16
    %v10135 = vpop.permute.xlu0 %10134
    %10136 = vrot.lane.b32.xlu0 %v5089, 16
    %v10137 = vpop.permute.xlu0 %10136
    %10138 = vrot.lane.b32.xlu0 %v5093, 16
    %v10139 = vpop.permute.xlu0 %10138
    %10140 = vrot.lane.b32.xlu0 %v5097, 16
    %v10141 = vpop.permute.xlu0 %10140
    %10142 = vrot.lane.b32.xlu0 %v5101, 16
    %v10143 = vpop.permute.xlu0 %10142
    %10144 = vrot.lane.b32.xlu0 %v5105, 16
    %v10145 = vpop.permute.xlu0 %10144
    %10146 = vrot.lane.b32.xlu0 %v5109, 16
    %v10147 = vpop.permute.xlu0 %10146
    %10148 = vrot.lane.b32.xlu0 %v5113, 16
    %v10149 = vpop.permute.xlu0 %10148
    %10150 = vrot.lane.b32.xlu0 %v5047, 82
    %v10151 = vpop.permute.xlu0 %10150
    %10152 = vrot.lane.b32.xlu0 %v5052, 82
    %v10153 = vpop.permute.xlu0 %10152
    %v10156 = vsel %vm5168, %v10121, 0
    %v10158 = vsel %vm5168, %v10123, 0
    %v10160 = vsel %vm5168, %v10125, 0
    %v10162 = vsel %vm5168, %v10127, 0
    %v10164 = vsel %vm5168, %v10129, 0
    %v10166 = vsel %vm5168, %v10131, 0
    %v10168 = vsel %vm5168, %v10133, 0
    %v10170 = vsel %vm5168, %v10135, 0
    %v10172 = vsel %vm5168, %v10137, 0
    %v10174 = vsel %vm5168, %v10139, 0
    %v10176 = vsel %vm5168, %v10141, 0
    %v10178 = vsel %vm5168, %v10143, 0
    %v10180 = vsel %vm5168, %v10145, 0
    %v10182 = vsel %vm5168, %v10147, 0
    %v10184 = vsel %vm5168, %v10149, 0
    %10186 = vmatprep.subr.mxu0 0.0
    %10187 = vmatpush1.msra.mxu0 %v10151
    %10188 = vmatprep.subr.mxu0 0.0
    %10189 = vmatpush1.msra.mxu0 %v10153
    %10190 = vmatprep.subr.mxu0 0.0
    %10191 = vmatpush1.msra.mxu0 0.0
    %10192 = vmatprep.subr.mxu0 0.0
    %10193 = vmatpush1.msra.mxu0 0.0
    %10194 = vmatprep.subr.mxu0 0.0
    %10195 = vmatpush1.msra.mxu0 0.0
    %10196 = vmatprep.subr.mxu0 0.0
    %10197 = vmatpush1.msra.mxu0 0.0
    %10198 = vmatprep.subr.mxu0 0.0
    %10199 = vmatpush1.msra.mxu0 0.0
    %10200 = vmatprep.subr.mxu0 0.0
    %10201 = vmatpush1.msra.mxu0 0.0
    %10202 = vmatprep.subr.mxu0 0.0
    %10203 = vmatpush1.msra.mxu0 0.0
    %10204 = vmatprep.subr.mxu0 0.0
    %10205 = vmatpush1.msra.mxu0 0.0
    %10206 = vmatprep.subr.mxu0 0.0
    %10207 = vmatpush1.msra.mxu0 0.0
    %10208 = vmatprep.subr.mxu0 0.0
    %10209 = vmatpush1.msra.mxu0 0.0
    %10210 = vmatprep.subr.mxu0 0.0
    %10211 = vmatpush1.msra.mxu0 0.0
    %10212 = vmatprep.subr.mxu0 0.0
    %10213 = vmatpush1.msra.mxu0 0.0
    %10214 = vmatprep.subr.mxu0 0.0
    %10215 = vmatpush1.msra.mxu0 0.0
    %10216 = vmatprep.subr.mxu0 0.0
    %10217 = vmatpush1.msra.mxu0 0.0
    %10218 = vmatprep.subr.mxu0 0.0
    %10219 = vmatpush1.msra.mxu0 0.0
    %10220 = vmatprep.subr.mxu0 0.0
    %10221 = vmatpush1.msra.mxu0 0.0
    %10222 = vmatprep.subr.mxu0 0.0
    %10223 = vmatpush1.msra.mxu0 0.0
    %10224 = vmatprep.subr.mxu0 0.0
    %10225 = vmatpush1.msra.mxu0 0.0
    %10226 = vmatprep.subr.mxu0 0.0
    %10227 = vmatpush1.msra.mxu0 0.0
    %10228 = vmatprep.subr.mxu0 0.0
    %10229 = vmatpush1.msra.mxu0 0.0
    %10230 = vmatprep.subr.mxu0 0.0
    %10231 = vmatpush1.msra.mxu0 0.0
    %10232 = vmatprep.subr.mxu0 0.0
    %10233 = vmatpush1.msra.mxu0 0.0
    %10234 = vmatprep.subr.mxu0 0.0
    %10235 = vmatpush1.msra.mxu0 0.0
    %10236 = vmatprep.subr.mxu0 0.0
    %10237 = vmatpush1.msra.mxu0 0.0
    %10238 = vmatprep.subr.mxu0 0.0
    %10239 = vmatpush1.msra.mxu0 0.0
    %10240 = vmatprep.subr.mxu0 0.0
    %10241 = vmatpush1.msra.mxu0 0.0
    %10242 = vmatprep.subr.mxu0 0.0
    %10243 = vmatpush1.msra.mxu0 0.0
    %10244 = vmatprep.subr.mxu0 0.0
    %10245 = vmatpush1.msra.mxu0 0.0
    %10246 = vmatprep.subr.mxu0 0.0
    %10247 = vmatpush1.msra.mxu0 0.0
    %10248 = vmatprep.subr.mxu0 0.0
    %10249 = vmatpush1.msra.mxu0 0.0
    %10250 = vmatprep.mubr.f32.mxu0 0.0
    %10251 = vmatmul.mubr.f32.gmra.mrb[0].mxu0 %v10156
    %v10252 = vpop.f32.mrb[0].mxu0
    %v10253 = vadd.f32 0.0, %v10252
    %v10254 = vpop.f32.mrb[0].mxu0
    %10255 = vmatprep.mubr.f32.mxu0 0.0
    %10256 = vmatmul.mubr.f32.gmra.mrb[0].mxu0 %v10158
    %v10257 = vpop.f32.mrb[0].mxu0
    %v10258 = vadd.f32 0.0, %v10257
    %v10259 = vpop.f32.mrb[0].mxu0
    %10260 = vmatprep.mubr.f32.mxu0 0.0
    %10261 = vmatmul.mubr.f32.gmra.mrb[0].mxu0 %v10160
    %v10262 = vpop.f32.mrb[0].mxu0
    %v10263 = vadd.f32 0.0, %v10262
    %v10264 = vpop.f32.mrb[0].mxu0
    %10265 = vmatprep.mubr.f32.mxu0 0.0
    %10266 = vmatmul.mubr.f32.gmra.mrb[0].mxu0 %v10162
    %v10267 = vpop.f32.mrb[0].mxu0
    %v10268 = vadd.f32 0.0, %v10267
    %v10269 = vpop.f32.mrb[0].mxu0
    %10270 = vmatprep.mubr.f32.mxu0 0.0
    %10271 = vmatmul.mubr.f32.gmra.mrb[0].mxu0 %v10164
    %v10272 = vpop.f32.mrb[0].mxu0
    %v10273 = vadd.f32 0.0, %v10272
    %v10274 = vpop.f32.mrb[0].mxu0
    %10275 = vmatprep.mubr.f32.mxu0 0.0
    %10276 = vmatmul.mubr.f32.gmra.mrb[0].mxu0 %v10166
    %v10277 = vpop.f32.mrb[0].mxu0
    %v10278 = vadd.f32 0.0, %v10277
    %v10279 = vpop.f32.mrb[0].mxu0
    %10280 = vmatprep.mubr.f32.mxu0 0.0
    %10281 = vmatmul.mubr.f32.gmra.mrb[0].mxu0 %v10168
    %v10282 = vpop.f32.mrb[0].mxu0
    %v10283 = vadd.f32 0.0, %v10282
    %v10284 = vpop.f32.mrb[0].mxu0
    %10285 = vmatprep.mubr.f32.mxu0 0.0
    %10286 = vmatmul.mubr.f32.gmra.mrb[0].mxu0 %v10170
    %v10287 = vpop.f32.mrb[0].mxu0
    %v10288 = vadd.f32 0.0, %v10287
    %v10289 = vpop.f32.mrb[0].mxu0
    %10290 = vmatprep.mubr.f32.mxu0 0.0
    %10291 = vmatmul.mubr.f32.gmra.mrb[0].mxu0 %v10172
    %v10292 = vpop.f32.mrb[0].mxu0
    %v10293 = vadd.f32 0.0, %v10292
    %v10294 = vpop.f32.mrb[0].mxu0
    %10295 = vmatprep.mubr.f32.mxu0 0.0
    %10296 = vmatmul.mubr.f32.gmra.mrb[0].mxu0 %v10174
    %v10297 = vpop.f32.mrb[0].mxu0
    %v10298 = vadd.f32 0.0, %v10297
    %v10299 = vpop.f32.mrb[0].mxu0
    %10300 = vmatprep.mubr.f32.mxu0 0.0
    %10301 = vmatmul.mubr.f32.gmra.mrb[0].mxu0 %v10176
    %v10302 = vpop.f32.mrb[0].mxu0
    %v10303 = vadd.f32 0.0, %v10302
    %v10304 = vpop.f32.mrb[0].mxu0
    %10305 = vmatprep.mubr.f32.mxu0 0.0
    %10306 = vmatmul.mubr.f32.gmra.mrb[0].mxu0 %v10178
    %v10307 = vpop.f32.mrb[0].mxu0
    %v10308 = vadd.f32 0.0, %v10307
    %v10309 = vpop.f32.mrb[0].mxu0
    %10310 = vmatprep.mubr.f32.mxu0 0.0
    %10311 = vmatmul.mubr.f32.gmra.mrb[0].mxu0 %v10180
    %v10312 = vpop.f32.mrb[0].mxu0
    %v10313 = vadd.f32 0.0, %v10312
    %v10314 = vpop.f32.mrb[0].mxu0
    %10315 = vmatprep.mubr.f32.mxu0 0.0
    %10316 = vmatmul.mubr.f32.gmra.mrb[0].mxu0 %v10182
    %v10317 = vpop.f32.mrb[0].mxu0
    %v10318 = vadd.f32 0.0, %v10317
    %v10319 = vpop.f32.mrb[0].mxu0
    %10320 = vmatprep.mubr.f32.mxu0 0.0
    %10321 = vmatmul.mubr.f32.gmra.mrb[0].mxu0 %v10184
    %v10322 = vpop.f32.mrb[0].mxu0
    %v10323 = vadd.f32 0.0, %v10322
    %v10324 = vpop.f32.mrb[0].mxu0
    %10325 = vdwg.mxu0
    %v10326 = vadd.f32 %v10105, %v10253
    %v10327 = vadd.f32 %v10106, %v10258
    %v10328 = vadd.f32 %v10107, %v10263
    %v10329 = vadd.f32 %v10108, %v10268
    %v10330 = vadd.f32 %v10109, %v10273
    %v10331 = vadd.f32 %v10110, %v10278
    %v10332 = vadd.f32 %v10111, %v10283
    %v10333 = vadd.f32 %v10112, %v10288
    %v10334 = vadd.f32 %v10113, %v10293
    %v10335 = vadd.f32 %v10114, %v10298
    %v10336 = vadd.f32 %v10115, %v10303
    %v10337 = vadd.f32 %v10116, %v10308
    %v10338 = vadd.f32 %v10117, %v10313
    %v10339 = vadd.f32 %v10118, %v10318
    %v10340 = vadd.f32 %v10119, %v10323
    %10341 = vrot.lane.b32.xlu0 %v5047, 80
    %v10342 = vpop.permute.xlu0 %10341
    %10343 = vrot.lane.b32.xlu0 %v5052, 80
    %v10344 = vpop.permute.xlu0 %10343
    %v10348 = vsel %vm5168, %v5058, 0
    %v10351 = vsel %vm5168, %v5062, 0
    %v10354 = vsel %vm5168, %v5066, 0
    %v10357 = vsel %vm5168, %v5070, 0
    %v10360 = vsel %vm5168, %v5074, 0
    %v10363 = vsel %vm5168, %v5078, 0
    %v10366 = vsel %vm5168, %v5082, 0
    %v10369 = vsel %vm5168, %v5086, 0
    %v10372 = vsel %vm5168, %v5090, 0
    %v10375 = vsel %vm5168, %v5094, 0
    %v10378 = vsel %vm5168, %v5098, 0
    %v10381 = vsel %vm5168, %v5102, 0
    %v10384 = vsel %vm5168, %v5106, 0
    %v10387 = vsel %vm5168, %v5110, 0
    %v10390 = vsel %vm5168, %v5114, 0
    %10392 = vmatprep.subr.mxu0 0.0
    %10393 = vmatpush1.msra.mxu0 %v10342
    %10394 = vmatprep.subr.mxu0 0.0
    %10395 = vmatpush1.msra.mxu0 %v10344
    %10396 = vmatprep.subr.mxu0 0.0
    %10397 = vmatpush1.msra.mxu0 0.0
    %10398 = vmatprep.subr.mxu0 0.0
    %10399 = vmatpush1.msra.mxu0 0.0
    %10400 = vmatprep.subr.mxu0 0.0
    %10401 = vmatpush1.msra.mxu0 0.0
    %10402 = vmatprep.subr.mxu0 0.0
    %10403 = vmatpush1.msra.mxu0 0.0
    %10404 = vmatprep.subr.mxu0 0.0
    %10405 = vmatpush1.msra.mxu0 0.0
    %10406 = vmatprep.subr.mxu0 0.0
    %10407 = vmatpush1.msra.mxu0 0.0
    %10408 = vmatprep.subr.mxu0 0.0
    %10409 = vmatpush1.msra.mxu0 0.0
    %10410 = vmatprep.subr.mxu0 0.0
    %10411 = vmatpush1.msra.mxu0 0.0
    %10412 = vmatprep.subr.mxu0 0.0
    %10413 = vmatpush1.msra.mxu0 0.0
    %10414 = vmatprep.subr.mxu0 0.0
    %10415 = vmatpush1.msra.mxu0 0.0
    %10416 = vmatprep.subr.mxu0 0.0
    %10417 = vmatpush1.msra.mxu0 0.0
    %10418 = vmatprep.subr.mxu0 0.0
    %10419 = vmatpush1.msra.mxu0 0.0
    %10420 = vmatprep.subr.mxu0 0.0
    %10421 = vmatpush1.msra.mxu0 0.0
    %10422 = vmatprep.subr.mxu0 0.0
    %10423 = vmatpush1.msra.mxu0 0.0
    %10424 = vmatprep.subr.mxu0 0.0
    %10425 = vmatpush1.msra.mxu0 0.0
    %10426 = vmatprep.subr.mxu0 0.0
    %10427 = vmatpush1.msra.mxu0 0.0
    %10428 = vmatprep.subr.mxu0 0.0
    %10429 = vmatpush1.msra.mxu0 0.0
    %10430 = vmatprep.subr.mxu0 0.0
    %10431 = vmatpush1.msra.mxu0 0.0
    %10432 = vmatprep.subr.mxu0 0.0
    %10433 = vmatpush1.msra.mxu0 0.0
    %10434 = vmatprep.subr.mxu0 0.0
    %10435 = vmatpush1.msra.mxu0 0.0
    %10436 = vmatprep.subr.mxu0 0.0
    %10437 = vmatpush1.msra.mxu0 0.0
    %10438 = vmatprep.subr.mxu0 0.0
    %10439 = vmatpush1.msra.mxu0 0.0
    %10440 = vmatprep.subr.mxu0 0.0
    %10441 = vmatpush1.msra.mxu0 0.0
    %10442 = vmatprep.subr.mxu0 0.0
    %10443 = vmatpush1.msra.mxu0 0.0
    %10444 = vmatprep.subr.mxu0 0.0
    %10445 = vmatpush1.msra.mxu0 0.0
    %10446 = vmatprep.subr.mxu0 0.0
    %10447 = vmatpush1.msra.mxu0 0.0
    %10448 = vmatprep.subr.mxu0 0.0
    %10449 = vmatpush1.msra.mxu0 0.0
    %10450 = vmatprep.subr.mxu0 0.0
    %10451 = vmatpush1.msra.mxu0 0.0
    %10452 = vmatprep.subr.mxu0 0.0
    %10453 = vmatpush1.msra.mxu0 0.0
    %10454 = vmatprep.subr.mxu0 0.0
    %10455 = vmatpush1.msra.mxu0 0.0
    %10456 = vmatprep.mubr.f32.mxu0 0.0
    %10457 = vmatmul.mubr.f32.gmra.mrb[0].mxu0 %v10348
    %v10458 = vpop.f32.mrb[0].mxu0
    %v10459 = vadd.f32 0.0, %v10458
    %v10460 = vpop.f32.mrb[0].mxu0
    %10461 = vmatprep.mubr.f32.mxu0 0.0
    %10462 = vmatmul.mubr.f32.gmra.mrb[0].mxu0 %v10351
    %v10463 = vpop.f32.mrb[0].mxu0
    %v10464 = vadd.f32 0.0, %v10463
    %v10465 = vpop.f32.mrb[0].mxu0
    %10466 = vmatprep.mubr.f32.mxu0 0.0
    %10467 = vmatmul.mubr.f32.gmra.mrb[0].mxu0 %v10354
    %v10468 = vpop.f32.mrb[0].mxu0
    %v10469 = vadd.f32 0.0, %v10468
    %v10470 = vpop.f32.mrb[0].mxu0
    %10471 = vmatprep.mubr.f32.mxu0 0.0
    %10472 = vmatmul.mubr.f32.gmra.mrb[0].mxu0 %v10357
    %v10473 = vpop.f32.mrb[0].mxu0
    %v10474 = vadd.f32 0.0, %v10473
    %v10475 = vpop.f32.mrb[0].mxu0
    %10476 = vmatprep.mubr.f32.mxu0 0.0
    %10477 = vmatmul.mubr.f32.gmra.mrb[0].mxu0 %v10360
    %v10478 = vpop.f32.mrb[0].mxu0
    %v10479 = vadd.f32 0.0, %v10478
    %v10480 = vpop.f32.mrb[0].mxu0
    %10481 = vmatprep.mubr.f32.mxu0 0.0
    %10482 = vmatmul.mubr.f32.gmra.mrb[0].mxu0 %v10363
    %v10483 = vpop.f32.mrb[0].mxu0
    %v10484 = vadd.f32 0.0, %v10483
    %v10485 = vpop.f32.mrb[0].mxu0
    %10486 = vmatprep.mubr.f32.mxu0 0.0
    %10487 = vmatmul.mubr.f32.gmra.mrb[0].mxu0 %v10366
    %v10488 = vpop.f32.mrb[0].mxu0
    %v10489 = vadd.f32 0.0, %v10488
    %v10490 = vpop.f32.mrb[0].mxu0
    %10491 = vmatprep.mubr.f32.mxu0 0.0
    %10492 = vmatmul.mubr.f32.gmra.mrb[0].mxu0 %v10369
    %v10493 = vpop.f32.mrb[0].mxu0
    %v10494 = vadd.f32 0.0, %v10493
    %v10495 = vpop.f32.mrb[0].mxu0
    %10496 = vmatprep.mubr.f32.mxu0 0.0
    %10497 = vmatmul.mubr.f32.gmra.mrb[0].mxu0 %v10372
    %v10498 = vpop.f32.mrb[0].mxu0
    %v10499 = vadd.f32 0.0, %v10498
    %v10500 = vpop.f32.mrb[0].mxu0
    %10501 = vmatprep.mubr.f32.mxu0 0.0
    %10502 = vmatmul.mubr.f32.gmra.mrb[0].mxu0 %v10375
    %v10503 = vpop.f32.mrb[0].mxu0
    %v10504 = vadd.f32 0.0, %v10503
    %v10505 = vpop.f32.mrb[0].mxu0
    %10506 = vmatprep.mubr.f32.mxu0 0.0
    %10507 = vmatmul.mubr.f32.gmra.mrb[0].mxu0 %v10378
    %v10508 = vpop.f32.mrb[0].mxu0
    %v10509 = vadd.f32 0.0, %v10508
    %v10510 = vpop.f32.mrb[0].mxu0
    %10511 = vmatprep.mubr.f32.mxu0 0.0
    %10512 = vmatmul.mubr.f32.gmra.mrb[0].mxu0 %v10381
    %v10513 = vpop.f32.mrb[0].mxu0
    %v10514 = vadd.f32 0.0, %v10513
    %v10515 = vpop.f32.mrb[0].mxu0
    %10516 = vmatprep.mubr.f32.mxu0 0.0
    %10517 = vmatmul.mubr.f32.gmra.mrb[0].mxu0 %v10384
    %v10518 = vpop.f32.mrb[0].mxu0
    %v10519 = vadd.f32 0.0, %v10518
    %v10520 = vpop.f32.mrb[0].mxu0
    %10521 = vmatprep.mubr.f32.mxu0 0.0
    %10522 = vmatmul.mubr.f32.gmra.mrb[0].mxu0 %v10387
    %v10523 = vpop.f32.mrb[0].mxu0
    %v10524 = vadd.f32 0.0, %v10523
    %v10525 = vpop.f32.mrb[0].mxu0
    %10526 = vmatprep.mubr.f32.mxu0 0.0
    %10527 = vmatmul.mubr.f32.gmra.mrb[0].mxu0 %v10390
    %v10528 = vpop.f32.mrb[0].mxu0
    %v10529 = vadd.f32 0.0, %v10528
    %v10530 = vpop.f32.mrb[0].mxu0
    %10531 = vdwg.mxu0
    %v10532 = vadd.f32 %v10326, %v10459
    %v10533 = vadd.f32 %v10327, %v10464
    %v10534 = vadd.f32 %v10328, %v10469
    %v10535 = vadd.f32 %v10329, %v10474
    %v10536 = vadd.f32 %v10330, %v10479
    %v10537 = vadd.f32 %v10331, %v10484
    %v10538 = vadd.f32 %v10332, %v10489
    %v10539 = vadd.f32 %v10333, %v10494
    %v10540 = vadd.f32 %v10334, %v10499
    %v10541 = vadd.f32 %v10335, %v10504
    %v10542 = vadd.f32 %v10336, %v10509
    %v10543 = vadd.f32 %v10337, %v10514
    %v10544 = vadd.f32 %v10338, %v10519
    %v10545 = vadd.f32 %v10339, %v10524
    %v10546 = vadd.f32 %v10340, %v10529
    %v10547 = vld [vmem:[%s8] sm:$0xff]
    %v10548 = vld [vmem:[%s8 + $0x8] sm:$0xff]
    %v10549 = vld [vmem:[%s8 + $0x10] sm:$0xff]
    %v10550 = vld [vmem:[%s8 + $0x18] sm:$0xff]
    %v10551 = vld [vmem:[%s8 + $0x20] sm:$0xff]
    %v10552 = vld [vmem:[%s8 + $0x28] sm:$0xff]
    %v10553 = vld [vmem:[%s8 + $0x30] sm:$0xff]
    %v10554 = vld [vmem:[%s8 + $0x38] sm:$0xff]
    %v10555 = vld [vmem:[%s8 + $0x40] sm:$0xff]
    %v10556 = vld [vmem:[%s8 + $0x48] sm:$0xff]
    %v10557 = vld [vmem:[%s8 + $0x50] sm:$0xff]
    %v10558 = vld [vmem:[%s8 + $0x58] sm:$0xff]
    %v10559 = vld [vmem:[%s8 + $0x60] sm:$0xff]
    %v10560 = vld [vmem:[%s8 + $0x68] sm:$0xff]
    %v10561 = vld [vmem:[%s8 + $0x70] sm:$0xff]
    %10563 = vset.pattern.permute.xlu0 0
    %10564 = vperm.xlu0 %10563, %v10547
    %v10565 = vpop.permute.xlu0 %10564
    %10568 = vset.pattern.permute.xlu0 0
    %10569 = vperm.xlu0 %10568, %v10548
    %v10570 = vpop.permute.xlu0 %10569
    %10573 = vset.pattern.permute.xlu0 0
    %10574 = vperm.xlu0 %10573, %v10549
    %v10575 = vpop.permute.xlu0 %10574
    %10578 = vset.pattern.permute.xlu0 0
    %10579 = vperm.xlu0 %10578, %v10550
    %v10580 = vpop.permute.xlu0 %10579
    %10583 = vset.pattern.permute.xlu0 0
    %10584 = vperm.xlu0 %10583, %v10551
    %v10585 = vpop.permute.xlu0 %10584
    %10588 = vset.pattern.permute.xlu0 0
    %10589 = vperm.xlu0 %10588, %v10552
    %v10590 = vpop.permute.xlu0 %10589
    %10593 = vset.pattern.permute.xlu0 0
    %10594 = vperm.xlu0 %10593, %v10553
    %v10595 = vpop.permute.xlu0 %10594
    %10598 = vset.pattern.permute.xlu0 0
    %10599 = vperm.xlu0 %10598, %v10554
    %v10600 = vpop.permute.xlu0 %10599
    %10603 = vset.pattern.permute.xlu0 0
    %10604 = vperm.xlu0 %10603, %v10555
    %v10605 = vpop.permute.xlu0 %10604
    %10608 = vset.pattern.permute.xlu0 0
    %10609 = vperm.xlu0 %10608, %v10556
    %v10610 = vpop.permute.xlu0 %10609
    %10613 = vset.pattern.permute.xlu0 0
    %10614 = vperm.xlu0 %10613, %v10557
    %v10615 = vpop.permute.xlu0 %10614
    %10618 = vset.pattern.permute.xlu0 0
    %10619 = vperm.xlu0 %10618, %v10558
    %v10620 = vpop.permute.xlu0 %10619
    %10623 = vset.pattern.permute.xlu0 0
    %10624 = vperm.xlu0 %10623, %v10559
    %v10625 = vpop.permute.xlu0 %10624
    %10628 = vset.pattern.permute.xlu0 0
    %10629 = vperm.xlu0 %10628, %v10560
    %v10630 = vpop.permute.xlu0 %10629
    %10633 = vset.pattern.permute.xlu0 0
    %10634 = vperm.xlu0 %10633, %v10561
    %v10635 = vpop.permute.xlu0 %10634
    %v10637 = vadd.f32 %v10532, %v10565
    %v10638 = vadd.f32 %v10533, %v10570
    %v10639 = vadd.f32 %v10534, %v10575
    %v10640 = vadd.f32 %v10535, %v10580
    %v10641 = vadd.f32 %v10536, %v10585
    %v10642 = vadd.f32 %v10537, %v10590
    %v10643 = vadd.f32 %v10538, %v10595
    %v10644 = vadd.f32 %v10539, %v10600
    %v10645 = vadd.f32 %v10540, %v10605
    %v10646 = vadd.f32 %v10541, %v10610
    %v10647 = vadd.f32 %v10542, %v10615
    %v10648 = vadd.f32 %v10543, %v10620
    %v10649 = vadd.f32 %v10544, %v10625
    %v10650 = vadd.f32 %v10545, %v10630
    %v10651 = vadd.f32 %v10546, %v10635
    %v10652 = vmax.f32 %v10637, 0.0
    %v10653 = vmax.f32 %v10638, 0.0
    %v10654 = vmax.f32 %v10639, 0.0
    %v10655 = vmax.f32 %v10640, 0.0
    %v10656 = vmax.f32 %v10641, 0.0
    %v10657 = vmax.f32 %v10642, 0.0
    %v10658 = vmax.f32 %v10643, 0.0
    %v10659 = vmax.f32 %v10644, 0.0
    %v10660 = vmax.f32 %v10645, 0.0
    %v10661 = vmax.f32 %v10646, 0.0
    %v10662 = vmax.f32 %v10647, 0.0
    %v10663 = vmax.f32 %v10648, 0.0
    %v10664 = vmax.f32 %v10649, 0.0
    %v10665 = vmax.f32 %v10650, 0.0
    %v10666 = vmax.f32 %v10651, 0.0
    %v10667 = vld [vmem:[#allocation6] sm:$0xff]
    %v10668 = vld [vmem:[#allocation6 + $0x8] sm:$0xff]
    %v10669 = vld [vmem:[#allocation6 + $0x10] sm:$0xff]
    %v10670 = vld [vmem:[#allocation6 + $0x18] sm:$0xff]
    %v10671 = vld [vmem:[#allocation6 + $0x20] sm:$0xff]
    %v10672 = vld [vmem:[#allocation6 + $0x28] sm:$0xff]
    %v10673 = vld [vmem:[#allocation6 + $0x30] sm:$0xff]
    %v10674 = vld [vmem:[#allocation6 + $0x38] sm:$0xff]
    %v10675 = vld [vmem:[#allocation6 + $0x40] sm:$0xff]
    %v10676 = vld [vmem:[#allocation6 + $0x48] sm:$0xff]
    %v10677 = vld [vmem:[#allocation6 + $0x50] sm:$0xf]
    %v10678 = vld [vmem:[%s10] sm:$0xff]
    %v10679 = vld [vmem:[%s10 + $0x8] sm:$0xff]
    %v10680 = vld [vmem:[%s10 + $0x10] sm:$0xff]
    %v10681 = vld [vmem:[%s10 + $0x18] sm:$0xff]
    %v10682 = vld [vmem:[%s10 + $0x20] sm:$0xff]
    %v10683 = vld [vmem:[%s10 + $0x28] sm:$0xff]
    %v10684 = vld [vmem:[%s10 + $0x30] sm:$0xff]
    %v10685 = vld [vmem:[%s10 + $0x38] sm:$0xff]
    %v10686 = vld [vmem:[%s10 + $0x40] sm:$0xff]
    %v10687 = vld [vmem:[%s10 + $0x48] sm:$0xff]
    %v10688 = vld [vmem:[%s10 + $0x50] sm:$0xf]
    %10690 = vset.pattern.permute.xlu0 0
    %10691 = vperm.xlu0 %10690, %v10678
    %v10692 = vpop.permute.xlu0 %10691
    %10695 = vset.pattern.permute.xlu0 0
    %10696 = vperm.xlu0 %10695, %v10679
    %v10697 = vpop.permute.xlu0 %10696
    %10700 = vset.pattern.permute.xlu0 0
    %10701 = vperm.xlu0 %10700, %v10680
    %v10702 = vpop.permute.xlu0 %10701
    %10705 = vset.pattern.permute.xlu0 0
    %10706 = vperm.xlu0 %10705, %v10681
    %v10707 = vpop.permute.xlu0 %10706
    %10710 = vset.pattern.permute.xlu0 0
    %10711 = vperm.xlu0 %10710, %v10682
    %v10712 = vpop.permute.xlu0 %10711
    %10715 = vset.pattern.permute.xlu0 0
    %10716 = vperm.xlu0 %10715, %v10683
    %v10717 = vpop.permute.xlu0 %10716
    %10720 = vset.pattern.permute.xlu0 0
    %10721 = vperm.xlu0 %10720, %v10684
    %v10722 = vpop.permute.xlu0 %10721
    %10725 = vset.pattern.permute.xlu0 0
    %10726 = vperm.xlu0 %10725, %v10685
    %v10727 = vpop.permute.xlu0 %10726
    %10730 = vset.pattern.permute.xlu0 0
    %10731 = vperm.xlu0 %10730, %v10686
    %v10732 = vpop.permute.xlu0 %10731
    %10735 = vset.pattern.permute.xlu0 0
    %10736 = vperm.xlu0 %10735, %v10687
    %v10737 = vpop.permute.xlu0 %10736
    %10740 = vset.pattern.permute.xlu0 0
    %10741 = vperm.xlu0 %10740, %v10688
    %v10742 = vpop.permute.xlu0 %10741
    %vm10744 = vcmask 982016
    %v10746 = vsel %vm10744, %v10667, 0
    %v10749 = vsel %vm10744, %v10668, 0
    %v10752 = vsel %vm10744, %v10669, 0
    %v10755 = vsel %vm10744, %v10670, 0
    %v10758 = vsel %vm10744, %v10671, 0
    %v10761 = vsel %vm10744, %v10672, 0
    %v10764 = vsel %vm10744, %v10673, 0
    %v10767 = vsel %vm10744, %v10674, 0
    %v10770 = vsel %vm10744, %v10675, 0
    %v10773 = vsel %vm10744, %v10676, 0
    %v10776 = vsel %vm10744, %v10677, 0
    %10778 = vmatprep.subr.mxu0 0.0
    %10779 = vmatpush1.msra.mxu0 %v10652
    %10780 = vmatprep.subr.mxu0 0.0
    %10781 = vmatpush1.msra.mxu0 %v10653
    %10782 = vmatprep.subr.mxu0 0.0
    %10783 = vmatpush1.msra.mxu0 %v10654
    %10784 = vmatprep.subr.mxu0 0.0
    %10785 = vmatpush1.msra.mxu0 %v10655
    %10786 = vmatprep.subr.mxu0 0.0
    %10787 = vmatpush1.msra.mxu0 %v10656
    %10788 = vmatprep.subr.mxu0 0.0
    %10789 = vmatpush1.msra.mxu0 %v10657
    %10790 = vmatprep.subr.mxu0 0.0
    %10791 = vmatpush1.msra.mxu0 %v10658
    %10792 = vmatprep.subr.mxu0 0.0
    %10793 = vmatpush1.msra.mxu0 %v10659
    %10794 = vmatprep.subr.mxu0 0.0
    %10795 = vmatpush1.msra.mxu0 %v10660
    %10796 = vmatprep.subr.mxu0 0.0
    %10797 = vmatpush1.msra.mxu0 %v10661
    %10798 = vmatprep.subr.mxu0 0.0
    %10799 = vmatpush1.msra.mxu0 %v10662
    %10800 = vmatprep.subr.mxu0 0.0
    %10801 = vmatpush1.msra.mxu0 %v10663
    %10802 = vmatprep.subr.mxu0 0.0
    %10803 = vmatpush1.msra.mxu0 %v10664
    %10804 = vmatprep.subr.mxu0 0.0
    %10805 = vmatpush1.msra.mxu0 %v10665
    %10806 = vmatprep.subr.mxu0 0.0
    %10807 = vmatpush1.msra.mxu0 %v10666
    %10808 = vmatprep.subr.mxu0 0.0
    %10809 = vmatpush1.msra.mxu0 0.0
    %10810 = vmatprep.subr.mxu0 0.0
    %10811 = vmatpush1.msra.mxu0 0.0
    %10812 = vmatprep.subr.mxu0 0.0
    %10813 = vmatpush1.msra.mxu0 0.0
    %10814 = vmatprep.subr.mxu0 0.0
    %10815 = vmatpush1.msra.mxu0 0.0
    %10816 = vmatprep.subr.mxu0 0.0
    %10817 = vmatpush1.msra.mxu0 0.0
    %10818 = vmatprep.subr.mxu0 0.0
    %10819 = vmatpush1.msra.mxu0 0.0
    %10820 = vmatprep.subr.mxu0 0.0
    %10821 = vmatpush1.msra.mxu0 0.0
    %10822 = vmatprep.subr.mxu0 0.0
    %10823 = vmatpush1.msra.mxu0 0.0
    %10824 = vmatprep.subr.mxu0 0.0
    %10825 = vmatpush1.msra.mxu0 0.0
    %10826 = vmatprep.subr.mxu0 0.0
    %10827 = vmatpush1.msra.mxu0 0.0
    %10828 = vmatprep.subr.mxu0 0.0
    %10829 = vmatpush1.msra.mxu0 0.0
    %10830 = vmatprep.subr.mxu0 0.0
    %10831 = vmatpush1.msra.mxu0 0.0
    %10832 = vmatprep.subr.mxu0 0.0
    %10833 = vmatpush1.msra.mxu0 0.0
    %10834 = vmatprep.subr.mxu0 0.0
    %10835 = vmatpush1.msra.mxu0 0.0
    %10836 = vmatprep.subr.mxu0 0.0
    %10837 = vmatpush1.msra.mxu0 0.0
    %10838 = vmatprep.subr.mxu0 0.0
    %10839 = vmatpush1.msra.mxu0 0.0
    %10840 = vmatprep.subr.mxu0 0.0
    %10841 = vmatpush1.msra.mxu0 0.0
    %10842 = vmatprep.mubr.f32.mxu0 0.0
    %10843 = vmatmul.mubr.f32.gmra.mrb[0].mxu0 %v10746
    %v10844 = vpop.f32.mrb[0].mxu0
    %v10845 = vadd.f32 %v10692, %v10844
    %v10846 = vpop.f32.mrb[0].mxu0
    %10847 = vmatprep.mubr.f32.mxu0 0.0
    %10848 = vmatmul.mubr.f32.gmra.mrb[0].mxu0 %v10749
    %v10849 = vpop.f32.mrb[0].mxu0
    %v10850 = vadd.f32 %v10697, %v10849
    %v10851 = vpop.f32.mrb[0].mxu0
    %10852 = vmatprep.mubr.f32.mxu0 0.0
    %10853 = vmatmul.mubr.f32.gmra.mrb[0].mxu0 %v10752
    %v10854 = vpop.f32.mrb[0].mxu0
    %v10855 = vadd.f32 %v10702, %v10854
    %v10856 = vpop.f32.mrb[0].mxu0
    %10857 = vmatprep.mubr.f32.mxu0 0.0
    %10858 = vmatmul.mubr.f32.gmra.mrb[0].mxu0 %v10755
    %v10859 = vpop.f32.mrb[0].mxu0
    %v10860 = vadd.f32 %v10707, %v10859
    %v10861 = vpop.f32.mrb[0].mxu0
    %10862 = vmatprep.mubr.f32.mxu0 0.0
    %10863 = vmatmul.mubr.f32.gmra.mrb[0].mxu0 %v10758
    %v10864 = vpop.f32.mrb[0].mxu0
    %v10865 = vadd.f32 %v10712, %v10864
    %v10866 = vpop.f32.mrb[0].mxu0
    %10867 = vmatprep.mubr.f32.mxu0 0.0
    %10868 = vmatmul.mubr.f32.gmra.mrb[0].mxu0 %v10761
    %v10869 = vpop.f32.mrb[0].mxu0
    %v10870 = vadd.f32 %v10717, %v10869
    %v10871 = vpop.f32.mrb[0].mxu0
    %10872 = vmatprep.mubr.f32.mxu0 0.0
    %10873 = vmatmul.mubr.f32.gmra.mrb[0].mxu0 %v10764
    %v10874 = vpop.f32.mrb[0].mxu0
    %v10875 = vadd.f32 %v10722, %v10874
    %v10876 = vpop.f32.mrb[0].mxu0
    %10877 = vmatprep.mubr.f32.mxu0 0.0
    %10878 = vmatmul.mubr.f32.gmra.mrb[0].mxu0 %v10767
    %v10879 = vpop.f32.mrb[0].mxu0
    %v10880 = vadd.f32 %v10727, %v10879
    %v10881 = vpop.f32.mrb[0].mxu0
    %10882 = vmatprep.mubr.f32.mxu0 0.0
    %10883 = vmatmul.mubr.f32.gmra.mrb[0].mxu0 %v10770
    %v10884 = vpop.f32.mrb[0].mxu0
    %v10885 = vadd.f32 %v10732, %v10884
    %v10886 = vpop.f32.mrb[0].mxu0
    %10887 = vmatprep.mubr.f32.mxu0 0.0
    %10888 = vmatmul.mubr.f32.gmra.mrb[0].mxu0 %v10773
    %v10889 = vpop.f32.mrb[0].mxu0
    %v10890 = vadd.f32 %v10737, %v10889
    %v10891 = vpop.f32.mrb[0].mxu0
    %10892 = vmatprep.mubr.f32.mxu0 0.0
    %10893 = vmatmul.mubr.f32.gmra.mrb[0].mxu0 %v10776
    %v10894 = vpop.f32.mrb[0].mxu0
    %v10895 = vadd.f32 %v10742, %v10894
    %v10896 = vpop.f32.mrb[0].mxu0
    %10897 = vdwg.mxu0
    %v10898 = vmax.f32 %v10845, 0.0
    %v10899 = vmax.f32 %v10850, 0.0
    %v10900 = vmax.f32 %v10855, 0.0
    %v10901 = vmax.f32 %v10860, 0.0
    %v10902 = vmax.f32 %v10865, 0.0
    %v10903 = vmax.f32 %v10870, 0.0
    %v10904 = vmax.f32 %v10875, 0.0
    %v10905 = vmax.f32 %v10880, 0.0
    %v10906 = vmax.f32 %v10885, 0.0
    %v10907 = vmax.f32 %v10890, 0.0
    %v10908 = vmax.f32 %v10895, 0.0
    %v10909 = vld [vmem:[#allocation7] sm:$0xff]
    %v10910 = vld [vmem:[#allocation7 + $0x8] sm:$0x3]
    %v10911 = vld [vmem:[%s12] sm:$0xff]
    %v10912 = vld [vmem:[%s12 + $0x8] sm:$0x3]
    %10914 = vset.pattern.permute.xlu0 0
    %10915 = vperm.xlu0 %10914, %v10911
    %v10916 = vpop.permute.xlu0 %10915
    %10919 = vset.pattern.permute.xlu0 0
    %10920 = vperm.xlu0 %10919, %v10912
    %v10921 = vpop.permute.xlu0 %10920
    %vm10923 = vcmask 687104
    %v10925 = vsel %vm10923, %v10909, 0
    %v10928 = vsel %vm10923, %v10910, 0
    %v10931 = vsel %vm4901, %v10908, 0
    %10933 = vmatprep.subr.mxu0 0.0
    %10934 = vmatpush1.msra.mxu0 %v10898
    %10935 = vmatprep.subr.mxu0 0.0
    %10936 = vmatpush1.msra.mxu0 %v10899
    %10937 = vmatprep.subr.mxu0 0.0
    %10938 = vmatpush1.msra.mxu0 %v10900
    %10939 = vmatprep.subr.mxu0 0.0
    %10940 = vmatpush1.msra.mxu0 %v10901
    %10941 = vmatprep.subr.mxu0 0.0
    %10942 = vmatpush1.msra.mxu0 %v10902
    %10943 = vmatprep.subr.mxu0 0.0
    %10944 = vmatpush1.msra.mxu0 %v10903
    %10945 = vmatprep.subr.mxu0 0.0
    %10946 = vmatpush1.msra.mxu0 %v10904
    %10947 = vmatprep.subr.mxu0 0.0
    %10948 = vmatpush1.msra.mxu0 %v10905
    %10949 = vmatprep.subr.mxu0 0.0
    %10950 = vmatpush1.msra.mxu0 %v10906
    %10951 = vmatprep.subr.mxu0 0.0
    %10952 = vmatpush1.msra.mxu0 %v10907
    %10953 = vmatprep.subr.mxu0 0.0
    %10954 = vmatpush1.msra.mxu0 %v10931
    %10955 = vmatprep.subr.mxu0 0.0
    %10956 = vmatpush1.msra.mxu0 0.0
    %10957 = vmatprep.subr.mxu0 0.0
    %10958 = vmatpush1.msra.mxu0 0.0
    %10959 = vmatprep.subr.mxu0 0.0
    %10960 = vmatpush1.msra.mxu0 0.0
    %10961 = vmatprep.subr.mxu0 0.0
    %10962 = vmatpush1.msra.mxu0 0.0
    %10963 = vmatprep.subr.mxu0 0.0
    %10964 = vmatpush1.msra.mxu0 0.0
    %10965 = vmatprep.subr.mxu0 0.0
    %10966 = vmatpush1.msra.mxu0 0.0
    %10967 = vmatprep.subr.mxu0 0.0
    %10968 = vmatpush1.msra.mxu0 0.0
    %10969 = vmatprep.subr.mxu0 0.0
    %10970 = vmatpush1.msra.mxu0 0.0
    %10971 = vmatprep.subr.mxu0 0.0
    %10972 = vmatpush1.msra.mxu0 0.0
    %10973 = vmatprep.subr.mxu0 0.0
    %10974 = vmatpush1.msra.mxu0 0.0
    %10975 = vmatprep.subr.mxu0 0.0
    %10976 = vmatpush1.msra.mxu0 0.0
    %10977 = vmatprep.subr.mxu0 0.0
    %10978 = vmatpush1.msra.mxu0 0.0
    %10979 = vmatprep.subr.mxu0 0.0
    %10980 = vmatpush1.msra.mxu0 0.0
    %10981 = vmatprep.subr.mxu0 0.0
    %10982 = vmatpush1.msra.mxu0 0.0
    %10983 = vmatprep.subr.mxu0 0.0
    %10984 = vmatpush1.msra.mxu0 0.0
    %10985 = vmatprep.subr.mxu0 0.0
    %10986 = vmatpush1.msra.mxu0 0.0
    %10987 = vmatprep.subr.mxu0 0.0
    %10988 = vmatpush1.msra.mxu0 0.0
    %10989 = vmatprep.subr.mxu0 0.0
    %10990 = vmatpush1.msra.mxu0 0.0
    %10991 = vmatprep.subr.mxu0 0.0
    %10992 = vmatpush1.msra.mxu0 0.0
    %10993 = vmatprep.subr.mxu0 0.0
    %10994 = vmatpush1.msra.mxu0 0.0
    %10995 = vmatprep.subr.mxu0 0.0
    %10996 = vmatpush1.msra.mxu0 0.0
    %10997 = vmatprep.mubr.f32.mxu0 0.0
    %10998 = vmatmul.mubr.f32.gmra.mrb[0].mxu0 %v10925
    %v10999 = vpop.f32.mrb[0].mxu0
    %v11000 = vadd.f32 %v10916, %v10999
    %v11001 = vpop.f32.mrb[0].mxu0
    %11002 = vmatprep.mubr.f32.mxu0 0.0
    %11003 = vmatmul.mubr.f32.gmra.mrb[0].mxu0 %v10928
    %v11004 = vpop.f32.mrb[0].mxu0
    %v11005 = vadd.f32 %v10921, %v11004
    %v11006 = vpop.f32.mrb[0].mxu0
    %11007 = vdwg.mxu0
    %vm11008 = vcmask 15360
    %11009 = vst.msk [vmem:[%s13] sm:$0xff] %vm11008, %v11000
    %vm11010 = vcmask 9216
    %11011 = vst.msk [vmem:[%s13 + $0x8] sm:$0x3] %vm11010, %v11005
    // Predicated region
    $region70: #{forward.1} parent=1 // pred_check
      _
    $region71: #{forward.1} parent=1 // pred_check_branch
      %11013 = sbr.rel (0) target = $region73
    $region72: #{forward.1} parent=1 // pred_region
      _
    $region73: #{forward.1} parent=1 // pred_fallthru
      _
    // Predicated region
    $region74: #{forward.1} parent=1 // pred_check
      _
    $region75: #{forward.1} parent=1 // pred_check_branch
      %11015 = sbr.rel (0) target = $region77
    $region76: #{forward.1} parent=1 // pred_region
      _
    $region77: #{forward.1} parent=1 // pred_fallthru
      _
    %11016 = vsyncpa [#allocation3], 1
    %11017 = vsyncpa [#allocation5], 1
    %11018 = vsyncpa [#allocation8], 1

</llo_original>
